<compile_context>
chip_gen: v5e
topology: v5e:2x2
jax: 0.10.0
libtpu: 0.0.40
codegen_flags: <defaults>
</compile_context>

<pallas_src>
import jax
import jax.numpy as jnp
from jax.experimental import pallas as pl
from jax.experimental.pallas import tpu as pltpu

CH = 10        # ch_num in the PyTorch module
EPS = 1e-5     # nn.BatchNorm2d default eps
PB = 128       # lanes per image block (padded board Hp*Wp rounded up to a lane tile)
MARGIN = 128   # left margin of the shift scratch (keeps the data window lane-aligned)


# ----------------------------------------------------------------------------
# Fused kernel: 7x (conv3x3 + BN + relu [+ residual]) trunk, the two conv
# heads (policy tanh / value relu), the dense spatial compaction and the
# value-head FC layers -- single grid-less invocation (everything << VMEM).
# ----------------------------------------------------------------------------
def _make_kernel(N, H, W):
    Hp, Wpd = H + 2, W + 2
    L = N * PB
    HW = H * W
    inv_cnt = 1.0 / float(N * HW)
    # tap offset in flattened padded coords, tap index k = ky*3 + kx
    offsets = [(ky - 1) * Wpd + (kx - 1) for ky in range(3) for kx in range(3)]

    def kernel(x_ref, wt_ref, bt_ref, gt_ref, bet_ref, wh_ref, hh_ref,
               gmat_ref, mask_ref, w2_ref, b2_ref, w3_ref, b3_ref,
               outp_ref, outv_ref, ext_ref):
        mask = mask_ref[...]                       # (1, L): 1.0 at real pixels

        # Zero the shift scratch ONCE; its margins stay zero for the whole
        # forward (the data window is fully overwritten every layer).
        ext_ref[...] = jnp.zeros_like(ext_ref)

        def conv3x3(a, get_w, bias):
            # a: (Cin, L) with exact zeros at all non-interior lanes.
            ext_ref[:, MARGIN:MARGIN + L] = a      # lane-tile-aligned store
            acc = None
            for k, d in enumerate(offsets):
                shifted = ext_ref[:, MARGIN + d:MARGIN + d + L]   # (Cin, L)
                t = jnp.dot(get_w(k), shifted,
                            preferred_element_type=jnp.float32)   # (Cout, L)
                acc = t if acc is None else acc + t
            return acc + bias                      # bias: (Cout, 1) broadcast

        def bn(y, gamma, beta):
            # Training-mode batchnorm over the N*H*W interior positions,
            # single pass: var = E[x^2] - mu^2, then one scale*y+shift sweep.
            ym = y * mask
            s1 = jnp.sum(ym, axis=1, keepdims=True)
            s2 = jnp.sum(ym * ym, axis=1, keepdims=True)
            mu = s1 * inv_cnt
            var = s2 * inv_cnt - mu * mu
            scale = gamma * jax.lax.rsqrt(var + EPS)
            shift = beta - scale * mu
            return scale * y + shift

        relu = lambda v: jnp.maximum(v, 0.0)

        def cbr(a, i):      # conv_{i+1} -> bn_{i+1}
            y = conv3x3(a, lambda k: wt_ref[i, k], bt_ref[i])
            return bn(y, gt_ref[i], bet_ref[i])

        a0 = x_ref[...]                                     # (CH, L)
        out1 = relu(cbr(a0, 0)) * mask
        out2 = relu(cbr(out1, 1)) * mask
        out3 = relu(cbr(out2, 2) + out1) * mask
        out4 = relu(cbr(out3, 3)) * mask
        out5 = relu(cbr(out4, 4) + out3) * mask
        out6 = relu(cbr(out5, 5)) * mask
        out7 = relu(cbr(out6, 6) + out5) * mask

        # Heads: channel 0 = conv_p1, channel 1 = conv_v1, done as one Cout=2
        # conv; BN per channel with interior-masked batch stats.
        yh = conv3x3(out7, lambda k: wh_ref[k], hh_ref[:, 0:1])   # (2, L)
        yh = bn(yh, hh_ref[:, 1:2], hh_ref[:, 2:3])

        # Per-image 128-lane blocks -> (N, PB) rows (lane-tile-aligned slices).
        p_rows = jnp.concatenate(
            [yh[0:1, n * PB:(n + 1) * PB] for n in range(N)], axis=0)
        v_rows = jnp.concatenate(
            [yh[1:2, n * PB:(n + 1) * PB] for n in range(N)], axis=0)

        G = gmat_ref[...]                                   # (PB, HW) 0/1 select
        # policy head: tanh(bn_p1(conv_p1)) flattened to (N, H*W)
        outp_ref[...] = jnp.tanh(
            jnp.dot(p_rows, G, preferred_element_type=jnp.float32))
        # value head: relu(bn_v1(conv_v1)) -> fc_v2 -> relu -> fc_v3 -> tanh
        v1 = jnp.dot(relu(v_rows), G, preferred_element_type=jnp.float32)
        h = relu(jnp.dot(v1, w2_ref[...],
                         preferred_element_type=jnp.float32) + b2_ref[...])
        outv_ref[...] = jnp.tanh(
            jnp.dot(h, w3_ref[...],
                    preferred_element_type=jnp.float32) + b3_ref[...])

    return kernel


# ----------------------------------------------------------------------------
# Wrapper: builds the lane-dense padded-flat input layout + constant mask /
# selection matrix, then launches the single fused pallas_call.
# ----------------------------------------------------------------------------
def neuralnet_cnn_forward(x_nchw, p):
    N, cin, H, W = x_nchw.shape
    Hp, Wpd = H + 2, W + 2
    HW = H * W
    L = N * PB
    assert Hp * Wpd <= PB and MARGIN >= Wpd + 1

    # NCHW -> channel-major flattened padded layout (CH, N*PB): image n uses
    # lanes [n*PB, n*PB + Hp*Wpd); pixel (y, x) sits at n*PB + (y+1)*Wpd+(x+1);
    # the conv zero-pad ring, the filler lanes and channels 3..9 are zero.
    # TODO(synk): this tiny (~1.5 KB) relayout could be folded into the kernel.
    xt = jnp.transpose(x_nchw, (1, 0, 2, 3)).astype(jnp.float32)   # (cin,N,H,W)
    xt = jnp.pad(xt, ((0, CH - cin), (0, 0), (1, 1), (1, 1)))      # (CH,N,Hp,Wpd)
    xt = xt.reshape(CH, N, Hp * Wpd)
    xt = jnp.pad(xt, ((0, 0), (0, 0), (0, PB - Hp * Wpd)))
    x_flat = xt.reshape(CH, L)

    # interior mask (1.0 at real pixels, 0.0 at padding ring / filler lanes)
    pos = jnp.arange(PB)
    yy, xx = pos // Wpd, pos % Wpd
    inter = (yy >= 1) & (yy <= H) & (xx >= 1) & (xx <= W)
    mask = jnp.tile(inter.astype(jnp.float32), (N,)).reshape(1, L)

    # 0/1 selection matrix: dense q = y*W + x  <-  padded flat p = (y+1)*Wpd+(x+1)
    q = jnp.arange(HW)
    tgt = (q // W + 1) * Wpd + (q % W + 1)
    gmat = (jnp.arange(PB)[:, None] == tgt[None, :]).astype(jnp.float32)

    vmem = pl.BlockSpec(memory_space=pltpu.MemorySpace.VMEM)

    out_p, out_v = pl.pallas_call(
        _make_kernel(N, H, W),
        out_shape=(jax.ShapeDtypeStruct((N, HW), jnp.float32),
                   jax.ShapeDtypeStruct((N, 1), jnp.float32)),
        in_specs=[vmem] * 13,
        out_specs=(vmem, vmem),
        scratch_shapes=[pltpu.VMEM((CH, MARGIN + L + MARGIN), jnp.float32)],
    )(x_flat, p['wt'], p['bt'], p['gt'], p['bet'],
      p['wh'], p['hh'], gmat, mask,
      p['w_fc_v2'], p['b_fc_v2'], p['w_fc_v3'], p['b_fc_v3'])
    return out_p, out_v


# ----------------------------------------------------------------------------
# Deterministic synthetic parameters (shapes from the module __init__)
# ----------------------------------------------------------------------------
def init_params(key, banhen, cin=3):
    ks = jax.random.split(key, 10)
    nrm = lambda k, s, sc: (sc * jax.random.normal(k, s)).astype(jnp.float32)

    # trunk conv1..conv7: (layer, tap=ky*3+kx, out_ch, in_ch)
    wt = nrm(ks[0], (7, 9, CH, CH), 0.1)
    wt = wt.at[0, :, :, cin:].set(0.0)        # conv1 only has 3 real in-chans
    bt = nrm(ks[1], (7, CH, 1), 0.05)
    gt = 1.0 + nrm(ks[2], (7, CH, 1), 0.05)   # bn1..bn7 gamma
    bet = nrm(ks[3], (7, CH, 1), 0.05)        # bn1..bn7 beta

    # heads: channel 0 = conv_p1, channel 1 = conv_v1; (tap, out_ch, in_ch)
    wh = nrm(ks[4], (9, 2, CH), 0.1)
    # per-head (bias, gamma, beta) rows: [conv_p1/bn_p1, conv_v1/bn_v1]
    hh = jnp.array([[0.02, 1.03, -0.01],
                    [-0.01, 0.97, 0.02]], jnp.float32)

    hw = banhen * banhen
    w_fc_v2 = nrm(ks[5], (hw, hw), 1.0 / float(hw) ** 0.5)
    b_fc_v2 = nrm(ks[6], (1, hw), 0.05)
    w_fc_v3 = nrm(ks[7], (hw, 1), 1.0 / float(hw) ** 0.5)
    b_fc_v3 = nrm(ks[8], (1, 1), 0.05)

    return dict(wt=wt, bt=bt, gt=gt, bet=bet, wh=wh, hh=hh,
                w_fc_v2=w_fc_v2, b_fc_v2=b_fc_v2,
                w_fc_v3=w_fc_v3, b_fc_v3=b_fc_v3)


# ----------------------------------------------------------------------------
# Pure-JAX reference (for the correctness check)
# ----------------------------------------------------------------------------
def reference_forward(x_nchw, p):
    N, cin, H, W = x_nchw.shape
    x = jnp.transpose(x_nchw, (0, 2, 3, 1)).astype(jnp.float32)
    x = jnp.pad(x, ((0, 0), (0, 0), (0, 0), (0, CH - cin)))

    def conv(v, w9, b):
        # w9: (9, out, in) with tap k = ky*3+kx  ->  HWIO
        co, ci = w9.shape[1], w9.shape[2]
        w4 = jnp.transpose(w9, (0, 2, 1)).reshape(3, 3, ci, co)
        y = jax.lax.conv_general_dilated(
            v, w4, (1, 1), 'SAME',
            dimension_numbers=('NHWC', 'HWIO', 'NHWC'))
        return y + b

    def bn(y, g, be):
        mu = y.mean(axis=(0, 1, 2), keepdims=True)
        var = ((y - mu) ** 2).mean(axis=(0, 1, 2), keepdims=True)
        return g * (y - mu) / jnp.sqrt(var + EPS) + be

    relu = jax.nn.relu
    cbr = lambda v, i: bn(conv(v, p['wt'][i], p['bt'][i][:, 0]),
                          p['gt'][i][:, 0], p['bet'][i][:, 0])

    out1 = relu(cbr(x, 0))
    out2 = relu(cbr(out1, 1))
    out3 = relu(cbr(out2, 2) + out1)
    out4 = relu(cbr(out3, 3))
    out5 = relu(cbr(out4, 4) + out3)
    out6 = relu(cbr(out5, 5))
    out7 = relu(cbr(out6, 6) + out5)

    yp = bn(conv(out7, p['wh'][:, 0:1, :], p['hh'][0, 0]),
            p['hh'][0, 1], p['hh'][0, 2])
    out_p = jnp.tanh(yp).reshape(N, H * W)

    yv = relu(bn(conv(out7, p['wh'][:, 1:2, :], p['hh'][1, 0]),
                 p['hh'][1, 1], p['hh'][1, 2]))
    v1 = yv.reshape(N, H * W)
    v2 = relu(v1 @ p['w_fc_v2'] + p['b_fc_v2'])
    out_v = jnp.tanh(v2 @ p['w_fc_v3'] + p['b_fc_v3'])
    return out_p, out_v


if __name__ == "__main__":
    BANHEN = 8                      # board edge -> 8x8 spatial
    N = 2

    key = jax.random.PRNGKey(0)
    kx, kp = jax.random.split(key)
    x = jax.random.normal(kx, (N, 3, BANHEN, BANHEN), jnp.float32)
    params = init_params(kp, BANHEN)

    fwd = jax.jit(neuralnet_cnn_forward)
    out_p, out_v = jax.block_until_ready(fwd(x, params))
    assert out_p.shape == (N, BANHEN * BANHEN) and out_v.shape == (N, 1)

    ref_p, ref_v = reference_forward(x, params)
    assert jnp.allclose(out_p, ref_p, atol=2e-3, rtol=2e-3)
    assert jnp.allclose(out_v, ref_v, atol=2e-3, rtol=2e-3)

    print("KERNEL_OK")
</pallas_src>

<mosaic_0001>
module attributes {stable_mosaic.version = 11 : i64} {
  func.func @kernel(%arg0: memref<10x256xf32, #tpu.memory_space<vmem>>, %arg1: memref<7x9x10x10xf32, #tpu.memory_space<vmem>>, %arg2: memref<7x10x1xf32, #tpu.memory_space<vmem>>, %arg3: memref<7x10x1xf32, #tpu.memory_space<vmem>>, %arg4: memref<7x10x1xf32, #tpu.memory_space<vmem>>, %arg5: memref<9x2x10xf32, #tpu.memory_space<vmem>>, %arg6: memref<2x3xf32, #tpu.memory_space<vmem>>, %arg7: memref<128x64xf32, #tpu.memory_space<vmem>>, %arg8: memref<1x256xf32, #tpu.memory_space<vmem>>, %arg9: memref<64x64xf32, #tpu.memory_space<vmem>>, %arg10: memref<1x64xf32, #tpu.memory_space<vmem>>, %arg11: memref<64x1xf32, #tpu.memory_space<vmem>>, %arg12: memref<1x1xf32, #tpu.memory_space<vmem>>, %arg13: memref<2x64xf32, #tpu.memory_space<vmem>>, %arg14: memref<2x1xf32, #tpu.memory_space<vmem>>, %arg15: memref<10x512xf32, #tpu.memory_space<vmem>>) attributes {dimension_semantics = [], scalar_prefetch = 0 : i64, scratch_operands = 1 : i64, tpu.core_type = #tpu.core_type<tc>} {
    %c0 = arith.constant 0 : index
    %c0_0 = arith.constant 0 : index
    %0 = vector.load %arg8[%c0, %c0_0] : memref<1x256xf32, #tpu.memory_space<vmem>>, vector<1x256xf32>
    %cst = arith.constant 0.000000e+00 : f32
    %1 = vector.broadcast %cst : f32 to vector<10x512xf32>
    %c0_1 = arith.constant 0 : index
    %c0_2 = arith.constant 0 : index
    %2 = vector.load %arg15[%c0_1, %c0_2] : memref<10x512xf32, #tpu.memory_space<vmem>>, vector<10x512xf32>
    tpu.vector_store %arg15[%c0_1, %c0_2], %1 {strides = array<i32>} : memref<10x512xf32, #tpu.memory_space<vmem>>, vector<10x512xf32>,
    %c0_3 = arith.constant 0 : index
    %c0_4 = arith.constant 0 : index
    %3 = vector.load %arg0[%c0_3, %c0_4] : memref<10x256xf32, #tpu.memory_space<vmem>>, vector<10x256xf32>
    %c0_5 = arith.constant 0 : index
    %c0_6 = arith.constant 0 : index
    %c0_7 = arith.constant 0 : index
    %4 = vector.load %arg2[%c0_5, %c0_6, %c0_7] : memref<7x10x1xf32, #tpu.memory_space<vmem>>, vector<1x10x1xf32>
    %5 = vector.shape_cast %4 : vector<1x10x1xf32> to vector<10x1xf32>
    %c0_8 = arith.constant 0 : index
    %c128 = arith.constant 128 : index
    %6 = vector.load %arg15[%c0_8, %c128] : memref<10x512xf32, #tpu.memory_space<vmem>>, vector<10x256xf32>
    tpu.vector_store %arg15[%c0_8, %c128], %3 {strides = array<i32>} : memref<10x512xf32, #tpu.memory_space<vmem>>, vector<10x256xf32>,
    %c0_9 = arith.constant 0 : index
    %c117 = arith.constant 117 : index
    %7 = vector.load %arg15[%c0_9, %c117] : memref<10x512xf32, #tpu.memory_space<vmem>>, vector<10x256xf32>
    %c0_10 = arith.constant 0 : index
    %c0_11 = arith.constant 0 : index
    %c0_12 = arith.constant 0 : index
    %c0_13 = arith.constant 0 : index
    %8 = vector.load %arg1[%c0_10, %c0_11, %c0_12, %c0_13] : memref<7x9x10x10xf32, #tpu.memory_space<vmem>>, vector<1x1x10x10xf32>
    %9 = vector.shape_cast %8 : vector<1x1x10x10xf32> to vector<10x10xf32>
    %cst_14 = arith.constant dense<0.000000e+00> : vector<10x256xf32>
    %10 = tpu.matmul %9, %7, %cst_14 {dimension_numbers = #tpu.dot_dimension_numbers<[1], [0], [0], [1], [0, 0, 1, 1], [], []>} : vector<10x10xf32>, vector<10x256xf32>, vector<10x256xf32> -> vector<10x256xf32>
    %c0_15 = arith.constant 0 : index
    %c118 = arith.constant 118 : index
    %11 = vector.load %arg15[%c0_15, %c118] : memref<10x512xf32, #tpu.memory_space<vmem>>, vector<10x256xf32>
    %c0_16 = arith.constant 0 : index
    %c1 = arith.constant 1 : index
    %c0_17 = arith.constant 0 : index
    %c0_18 = arith.constant 0 : index
    %12 = vector.load %arg1[%c0_16, %c1, %c0_17, %c0_18] : memref<7x9x10x10xf32, #tpu.memory_space<vmem>>, vector<1x1x10x10xf32>
    %13 = vector.shape_cast %12 : vector<1x1x10x10xf32> to vector<10x10xf32>
    %cst_19 = arith.constant dense<0.000000e+00> : vector<10x256xf32>
    %14 = tpu.matmul %13, %11, %cst_19 {dimension_numbers = #tpu.dot_dimension_numbers<[1], [0], [0], [1], [0, 0, 1, 1], [], []>} : vector<10x10xf32>, vector<10x256xf32>, vector<10x256xf32> -> vector<10x256xf32>
    %15 = arith.addf %10, %14 : vector<10x256xf32>
    %c0_20 = arith.constant 0 : index
    %c119 = arith.constant 119 : index
    %16 = vector.load %arg15[%c0_20, %c119] : memref<10x512xf32, #tpu.memory_space<vmem>>, vector<10x256xf32>
    %c0_21 = arith.constant 0 : index
    %c2 = arith.constant 2 : index
    %c0_22 = arith.constant 0 : index
    %c0_23 = arith.constant 0 : index
    %17 = vector.load %arg1[%c0_21, %c2, %c0_22, %c0_23] : memref<7x9x10x10xf32, #tpu.memory_space<vmem>>, vector<1x1x10x10xf32>
    %18 = vector.shape_cast %17 : vector<1x1x10x10xf32> to vector<10x10xf32>
    %cst_24 = arith.constant dense<0.000000e+00> : vector<10x256xf32>
    %19 = tpu.matmul %18, %16, %cst_24 {dimension_numbers = #tpu.dot_dimension_numbers<[1], [0], [0], [1], [0, 0, 1, 1], [], []>} : vector<10x10xf32>, vector<10x256xf32>, vector<10x256xf32> -> vector<10x256xf32>
    %20 = arith.addf %15, %19 : vector<10x256xf32>
    %c0_25 = arith.constant 0 : index
    %c127 = arith.constant 127 : index
    %21 = vector.load %arg15[%c0_25, %c127] : memref<10x512xf32, #tpu.memory_space<vmem>>, vector<10x256xf32>
    %c0_26 = arith.constant 0 : index
    %c3 = arith.constant 3 : index
    %c0_27 = arith.constant 0 : index
    %c0_28 = arith.constant 0 : index
    %22 = vector.load %arg1[%c0_26, %c3, %c0_27, %c0_28] : memref<7x9x10x10xf32, #tpu.memory_space<vmem>>, vector<1x1x10x10xf32>
    %23 = vector.shape_cast %22 : vector<1x1x10x10xf32> to vector<10x10xf32>
    %cst_29 = arith.constant dense<0.000000e+00> : vector<10x256xf32>
    %24 = tpu.matmul %23, %21, %cst_29 {dimension_numbers = #tpu.dot_dimension_numbers<[1], [0], [0], [1], [0, 0, 1, 1], [], []>} : vector<10x10xf32>, vector<10x256xf32>, vector<10x256xf32> -> vector<10x256xf32>
    %25 = arith.addf %20, %24 : vector<10x256xf32>
    %c0_30 = arith.constant 0 : index
    %c128_31 = arith.constant 128 : index
    %26 = vector.load %arg15[%c0_30, %c128_31] : memref<10x512xf32, #tpu.memory_space<vmem>>, vector<10x256xf32>
    %c0_32 = arith.constant 0 : index
    %c4 = arith.constant 4 : index
    %c0_33 = arith.constant 0 : index
    %c0_34 = arith.constant 0 : index
    %27 = vector.load %arg1[%c0_32, %c4, %c0_33, %c0_34] : memref<7x9x10x10xf32, #tpu.memory_space<vmem>>, vector<1x1x10x10xf32>
    %28 = vector.shape_cast %27 : vector<1x1x10x10xf32> to vector<10x10xf32>
    %cst_35 = arith.constant dense<0.000000e+00> : vector<10x256xf32>
    %29 = tpu.matmul %28, %26, %cst_35 {dimension_numbers = #tpu.dot_dimension_numbers<[1], [0], [0], [1], [0, 0, 1, 1], [], []>} : vector<10x10xf32>, vector<10x256xf32>, vector<10x256xf32> -> vector<10x256xf32>
    %30 = arith.addf %25, %29 : vector<10x256xf32>
    %c0_36 = arith.constant 0 : index
    %c129 = arith.constant 129 : index
    %31 = vector.load %arg15[%c0_36, %c129] : memref<10x512xf32, #tpu.memory_space<vmem>>, vector<10x256xf32>
    %c0_37 = arith.constant 0 : index
    %c5 = arith.constant 5 : index
    %c0_38 = arith.constant 0 : index
    %c0_39 = arith.constant 0 : index
    %32 = vector.load %arg1[%c0_37, %c5, %c0_38, %c0_39] : memref<7x9x10x10xf32, #tpu.memory_space<vmem>>, vector<1x1x10x10xf32>
    %33 = vector.shape_cast %32 : vector<1x1x10x10xf32> to vector<10x10xf32>
    %cst_40 = arith.constant dense<0.000000e+00> : vector<10x256xf32>
    %34 = tpu.matmul %33, %31, %cst_40 {dimension_numbers = #tpu.dot_dimension_numbers<[1], [0], [0], [1], [0, 0, 1, 1], [], []>} : vector<10x10xf32>, vector<10x256xf32>, vector<10x256xf32> -> vector<10x256xf32>
    %35 = arith.addf %30, %34 : vector<10x256xf32>
    %c0_41 = arith.constant 0 : index
    %c137 = arith.constant 137 : index
    %36 = vector.load %arg15[%c0_41, %c137] : memref<10x512xf32, #tpu.memory_space<vmem>>, vector<10x256xf32>
    %c0_42 = arith.constant 0 : index
    %c6 = arith.constant 6 : index
    %c0_43 = arith.constant 0 : index
    %c0_44 = arith.constant 0 : index
    %37 = vector.load %arg1[%c0_42, %c6, %c0_43, %c0_44] : memref<7x9x10x10xf32, #tpu.memory_space<vmem>>, vector<1x1x10x10xf32>
    %38 = vector.shape_cast %37 : vector<1x1x10x10xf32> to vector<10x10xf32>
    %cst_45 = arith.constant dense<0.000000e+00> : vector<10x256xf32>
    %39 = tpu.matmul %38, %36, %cst_45 {dimension_numbers = #tpu.dot_dimension_numbers<[1], [0], [0], [1], [0, 0, 1, 1], [], []>} : vector<10x10xf32>, vector<10x256xf32>, vector<10x256xf32> -> vector<10x256xf32>
    %40 = arith.addf %35, %39 : vector<10x256xf32>
    %c0_46 = arith.constant 0 : index
    %c138 = arith.constant 138 : index
    %41 = vector.load %arg15[%c0_46, %c138] : memref<10x512xf32, #tpu.memory_space<vmem>>, vector<10x256xf32>
    %c0_47 = arith.constant 0 : index
    %c7 = arith.constant 7 : index
    %c0_48 = arith.constant 0 : index
    %c0_49 = arith.constant 0 : index
    %42 = vector.load %arg1[%c0_47, %c7, %c0_48, %c0_49] : memref<7x9x10x10xf32, #tpu.memory_space<vmem>>, vector<1x1x10x10xf32>
    %43 = vector.shape_cast %42 : vector<1x1x10x10xf32> to vector<10x10xf32>
    %cst_50 = arith.constant dense<0.000000e+00> : vector<10x256xf32>
    %44 = tpu.matmul %43, %41, %cst_50 {dimension_numbers = #tpu.dot_dimension_numbers<[1], [0], [0], [1], [0, 0, 1, 1], [], []>} : vector<10x10xf32>, vector<10x256xf32>, vector<10x256xf32> -> vector<10x256xf32>
    %45 = arith.addf %40, %44 : vector<10x256xf32>
    %c0_51 = arith.constant 0 : index
    %c139 = arith.constant 139 : index
    %46 = vector.load %arg15[%c0_51, %c139] : memref<10x512xf32, #tpu.memory_space<vmem>>, vector<10x256xf32>
    %c0_52 = arith.constant 0 : index
    %c8 = arith.constant 8 : index
    %c0_53 = arith.constant 0 : index
    %c0_54 = arith.constant 0 : index
    %47 = vector.load %arg1[%c0_52, %c8, %c0_53, %c0_54] : memref<7x9x10x10xf32, #tpu.memory_space<vmem>>, vector<1x1x10x10xf32>
    %48 = vector.shape_cast %47 : vector<1x1x10x10xf32> to vector<10x10xf32>
    %cst_55 = arith.constant dense<0.000000e+00> : vector<10x256xf32>
    %49 = tpu.matmul %48, %46, %cst_55 {dimension_numbers = #tpu.dot_dimension_numbers<[1], [0], [0], [1], [0, 0, 1, 1], [], []>} : vector<10x10xf32>, vector<10x256xf32>, vector<10x256xf32> -> vector<10x256xf32>
    %50 = arith.addf %45, %49 : vector<10x256xf32>
    %51 = vector.broadcast %5 : vector<10x1xf32> to vector<10x256xf32>
    %52 = arith.addf %50, %51 : vector<10x256xf32>
    %c0_56 = arith.constant 0 : index
    %c0_57 = arith.constant 0 : index
    %c0_58 = arith.constant 0 : index
    %53 = vector.load %arg3[%c0_56, %c0_57, %c0_58] : memref<7x10x1xf32, #tpu.memory_space<vmem>>, vector<1x10x1xf32>
    %54 = vector.shape_cast %53 : vector<1x10x1xf32> to vector<10x1xf32>
    %c0_59 = arith.constant 0 : index
    %c0_60 = arith.constant 0 : index
    %c0_61 = arith.constant 0 : index
    %55 = vector.load %arg4[%c0_59, %c0_60, %c0_61] : memref<7x10x1xf32, #tpu.memory_space<vmem>>, vector<1x10x1xf32>
    %56 = vector.shape_cast %55 : vector<1x10x1xf32> to vector<10x1xf32>
    %57 = vector.broadcast %0 : vector<1x256xf32> to vector<10x256xf32>
    %58 = arith.mulf %52, %57 : vector<10x256xf32>
    %cst_62 = arith.constant dense<0.000000e+00> : vector<10xf32>
    %59 = vector.multi_reduction <add>, %58, %cst_62 [1] : vector<10x256xf32> to vector<10xf32>
    %60 = vector.shape_cast %59 : vector<10xf32> to vector<10x1xf32>
    %61 = arith.mulf %58, %58 : vector<10x256xf32>
    %cst_63 = arith.constant dense<0.000000e+00> : vector<10xf32>
    %62 = vector.multi_reduction <add>, %61, %cst_63 [1] : vector<10x256xf32> to vector<10xf32>
    %63 = vector.shape_cast %62 : vector<10xf32> to vector<10x1xf32>
    %cst_64 = arith.constant 7.812500e-03 : f32
    %64 = vector.broadcast %cst_64 : f32 to vector<10x1xf32>
    %65 = arith.mulf %60, %64 : vector<10x1xf32>
    %cst_65 = arith.constant 7.812500e-03 : f32
    %66 = vector.broadcast %cst_65 : f32 to vector<10x1xf32>
    %67 = arith.mulf %63, %66 : vector<10x1xf32>
    %68 = arith.mulf %65, %65 : vector<10x1xf32>
    %69 = arith.subf %67, %68 : vector<10x1xf32>
    %cst_66 = arith.constant 9.99999974E-6 : f32
    %70 = vector.broadcast %cst_66 : f32 to vector<10x1xf32>
    %71 = arith.addf %69, %70 : vector<10x1xf32>
    %72 = math.rsqrt %71 : vector<10x1xf32>
    %73 = arith.mulf %54, %72 : vector<10x1xf32>
    %74 = arith.mulf %73, %65 : vector<10x1xf32>
    %75 = arith.subf %56, %74 : vector<10x1xf32>
    %76 = vector.broadcast %73 : vector<10x1xf32> to vector<10x256xf32>
    %77 = arith.mulf %76, %52 : vector<10x256xf32>
    %78 = vector.broadcast %75 : vector<10x1xf32> to vector<10x256xf32>
    %79 = arith.addf %77, %78 : vector<10x256xf32>
    %cst_67 = arith.constant 0.000000e+00 : f32
    %80 = vector.broadcast %cst_67 : f32 to vector<10x256xf32>
    %81 = arith.maximumf %79, %80 : vector<10x256xf32>
    %82 = vector.broadcast %0 : vector<1x256xf32> to vector<10x256xf32>
    %83 = arith.mulf %81, %82 : vector<10x256xf32>
    %c1_68 = arith.constant 1 : index
    %c0_69 = arith.constant 0 : index
    %c0_70 = arith.constant 0 : index
    %84 = vector.load %arg2[%c1_68, %c0_69, %c0_70] : memref<7x10x1xf32, #tpu.memory_space<vmem>>, vector<1x10x1xf32>
    %85 = vector.shape_cast %84 : vector<1x10x1xf32> to vector<10x1xf32>
    %c0_71 = arith.constant 0 : index
    %c128_72 = arith.constant 128 : index
    %86 = vector.load %arg15[%c0_71, %c128_72] : memref<10x512xf32, #tpu.memory_space<vmem>>, vector<10x256xf32>
    tpu.vector_store %arg15[%c0_71, %c128_72], %83 {strides = array<i32>} : memref<10x512xf32, #tpu.memory_space<vmem>>, vector<10x256xf32>,
    %c0_73 = arith.constant 0 : index
    %c117_74 = arith.constant 117 : index
    %87 = vector.load %arg15[%c0_73, %c117_74] : memref<10x512xf32, #tpu.memory_space<vmem>>, vector<10x256xf32>
    %c1_75 = arith.constant 1 : index
    %c0_76 = arith.constant 0 : index
    %c0_77 = arith.constant 0 : index
    %c0_78 = arith.constant 0 : index
    %88 = vector.load %arg1[%c1_75, %c0_76, %c0_77, %c0_78] : memref<7x9x10x10xf32, #tpu.memory_space<vmem>>, vector<1x1x10x10xf32>
    %89 = vector.shape_cast %88 : vector<1x1x10x10xf32> to vector<10x10xf32>
    %cst_79 = arith.constant dense<0.000000e+00> : vector<10x256xf32>
    %90 = tpu.matmul %89, %87, %cst_79 {dimension_numbers = #tpu.dot_dimension_numbers<[1], [0], [0], [1], [0, 0, 1, 1], [], []>} : vector<10x10xf32>, vector<10x256xf32>, vector<10x256xf32> -> vector<10x256xf32>
    %c0_80 = arith.constant 0 : index
    %c118_81 = arith.constant 118 : index
    %91 = vector.load %arg15[%c0_80, %c118_81] : memref<10x512xf32, #tpu.memory_space<vmem>>, vector<10x256xf32>
    %c1_82 = arith.constant 1 : index
    %c1_83 = arith.constant 1 : index
    %c0_84 = arith.constant 0 : index
    %c0_85 = arith.constant 0 : index
    %92 = vector.load %arg1[%c1_82, %c1_83, %c0_84, %c0_85] : memref<7x9x10x10xf32, #tpu.memory_space<vmem>>, vector<1x1x10x10xf32>
    %93 = vector.shape_cast %92 : vector<1x1x10x10xf32> to vector<10x10xf32>
    %cst_86 = arith.constant dense<0.000000e+00> : vector<10x256xf32>
    %94 = tpu.matmul %93, %91, %cst_86 {dimension_numbers = #tpu.dot_dimension_numbers<[1], [0], [0], [1], [0, 0, 1, 1], [], []>} : vector<10x10xf32>, vector<10x256xf32>, vector<10x256xf32> -> vector<10x256xf32>
    %95 = arith.addf %90, %94 : vector<10x256xf32>
    %c0_87 = arith.constant 0 : index
    %c119_88 = arith.constant 119 : index
    %96 = vector.load %arg15[%c0_87, %c119_88] : memref<10x512xf32, #tpu.memory_space<vmem>>, vector<10x256xf32>
    %c1_89 = arith.constant 1 : index
    %c2_90 = arith.constant 2 : index
    %c0_91 = arith.constant 0 : index
    %c0_92 = arith.constant 0 : index
    %97 = vector.load %arg1[%c1_89, %c2_90, %c0_91, %c0_92] : memref<7x9x10x10xf32, #tpu.memory_space<vmem>>, vector<1x1x10x10xf32>
    %98 = vector.shape_cast %97 : vector<1x1x10x10xf32> to vector<10x10xf32>
    %cst_93 = arith.constant dense<0.000000e+00> : vector<10x256xf32>
    %99 = tpu.matmul %98, %96, %cst_93 {dimension_numbers = #tpu.dot_dimension_numbers<[1], [0], [0], [1], [0, 0, 1, 1], [], []>} : vector<10x10xf32>, vector<10x256xf32>, vector<10x256xf32> -> vector<10x256xf32>
    %100 = arith.addf %95, %99 : vector<10x256xf32>
    %c0_94 = arith.constant 0 : index
    %c127_95 = arith.constant 127 : index
    %101 = vector.load %arg15[%c0_94, %c127_95] : memref<10x512xf32, #tpu.memory_space<vmem>>, vector<10x256xf32>
    %c1_96 = arith.constant 1 : index
    %c3_97 = arith.constant 3 : index
    %c0_98 = arith.constant 0 : index
    %c0_99 = arith.constant 0 : index
    %102 = vector.load %arg1[%c1_96, %c3_97, %c0_98, %c0_99] : memref<7x9x10x10xf32, #tpu.memory_space<vmem>>, vector<1x1x10x10xf32>
    %103 = vector.shape_cast %102 : vector<1x1x10x10xf32> to vector<10x10xf32>
    %cst_100 = arith.constant dense<0.000000e+00> : vector<10x256xf32>
    %104 = tpu.matmul %103, %101, %cst_100 {dimension_numbers = #tpu.dot_dimension_numbers<[1], [0], [0], [1], [0, 0, 1, 1], [], []>} : vector<10x10xf32>, vector<10x256xf32>, vector<10x256xf32> -> vector<10x256xf32>
    %105 = arith.addf %100, %104 : vector<10x256xf32>
    %c0_101 = arith.constant 0 : index
    %c128_102 = arith.constant 128 : index
    %106 = vector.load %arg15[%c0_101, %c128_102] : memref<10x512xf32, #tpu.memory_space<vmem>>, vector<10x256xf32>
    %c1_103 = arith.constant 1 : index
    %c4_104 = arith.constant 4 : index
    %c0_105 = arith.constant 0 : index
    %c0_106 = arith.constant 0 : index
    %107 = vector.load %arg1[%c1_103, %c4_104, %c0_105, %c0_106] : memref<7x9x10x10xf32, #tpu.memory_space<vmem>>, vector<1x1x10x10xf32>
    %108 = vector.shape_cast %107 : vector<1x1x10x10xf32> to vector<10x10xf32>
    %cst_107 = arith.constant dense<0.000000e+00> : vector<10x256xf32>
    %109 = tpu.matmul %108, %106, %cst_107 {dimension_numbers = #tpu.dot_dimension_numbers<[1], [0], [0], [1], [0, 0, 1, 1], [], []>} : vector<10x10xf32>, vector<10x256xf32>, vector<10x256xf32> -> vector<10x256xf32>
    %110 = arith.addf %105, %109 : vector<10x256xf32>
    %c0_108 = arith.constant 0 : index
    %c129_109 = arith.constant 129 : index
    %111 = vector.load %arg15[%c0_108, %c129_109] : memref<10x512xf32, #tpu.memory_space<vmem>>, vector<10x256xf32>
    %c1_110 = arith.constant 1 : index
    %c5_111 = arith.constant 5 : index
    %c0_112 = arith.constant 0 : index
    %c0_113 = arith.constant 0 : index
    %112 = vector.load %arg1[%c1_110, %c5_111, %c0_112, %c0_113] : memref<7x9x10x10xf32, #tpu.memory_space<vmem>>, vector<1x1x10x10xf32>
    %113 = vector.shape_cast %112 : vector<1x1x10x10xf32> to vector<10x10xf32>
    %cst_114 = arith.constant dense<0.000000e+00> : vector<10x256xf32>
    %114 = tpu.matmul %113, %111, %cst_114 {dimension_numbers = #tpu.dot_dimension_numbers<[1], [0], [0], [1], [0, 0, 1, 1], [], []>} : vector<10x10xf32>, vector<10x256xf32>, vector<10x256xf32> -> vector<10x256xf32>
    %115 = arith.addf %110, %114 : vector<10x256xf32>
    %c0_115 = arith.constant 0 : index
    %c137_116 = arith.constant 137 : index
    %116 = vector.load %arg15[%c0_115, %c137_116] : memref<10x512xf32, #tpu.memory_space<vmem>>, vector<10x256xf32>
    %c1_117 = arith.constant 1 : index
    %c6_118 = arith.constant 6 : index
    %c0_119 = arith.constant 0 : index
    %c0_120 = arith.constant 0 : index
    %117 = vector.load %arg1[%c1_117, %c6_118, %c0_119, %c0_120] : memref<7x9x10x10xf32, #tpu.memory_space<vmem>>, vector<1x1x10x10xf32>
    %118 = vector.shape_cast %117 : vector<1x1x10x10xf32> to vector<10x10xf32>
    %cst_121 = arith.constant dense<0.000000e+00> : vector<10x256xf32>
    %119 = tpu.matmul %118, %116, %cst_121 {dimension_numbers = #tpu.dot_dimension_numbers<[1], [0], [0], [1], [0, 0, 1, 1], [], []>} : vector<10x10xf32>, vector<10x256xf32>, vector<10x256xf32> -> vector<10x256xf32>
    %120 = arith.addf %115, %119 : vector<10x256xf32>
    %c0_122 = arith.constant 0 : index
    %c138_123 = arith.constant 138 : index
    %121 = vector.load %arg15[%c0_122, %c138_123] : memref<10x512xf32, #tpu.memory_space<vmem>>, vector<10x256xf32>
    %c1_124 = arith.constant 1 : index
    %c7_125 = arith.constant 7 : index
    %c0_126 = arith.constant 0 : index
    %c0_127 = arith.constant 0 : index
    %122 = vector.load %arg1[%c1_124, %c7_125, %c0_126, %c0_127] : memref<7x9x10x10xf32, #tpu.memory_space<vmem>>, vector<1x1x10x10xf32>
    %123 = vector.shape_cast %122 : vector<1x1x10x10xf32> to vector<10x10xf32>
    %cst_128 = arith.constant dense<0.000000e+00> : vector<10x256xf32>
    %124 = tpu.matmul %123, %121, %cst_128 {dimension_numbers = #tpu.dot_dimension_numbers<[1], [0], [0], [1], [0, 0, 1, 1], [], []>} : vector<10x10xf32>, vector<10x256xf32>, vector<10x256xf32> -> vector<10x256xf32>
    %125 = arith.addf %120, %124 : vector<10x256xf32>
    %c0_129 = arith.constant 0 : index
    %c139_130 = arith.constant 139 : index
    %126 = vector.load %arg15[%c0_129, %c139_130] : memref<10x512xf32, #tpu.memory_space<vmem>>, vector<10x256xf32>
    %c1_131 = arith.constant 1 : index
    %c8_132 = arith.constant 8 : index
    %c0_133 = arith.constant 0 : index
    %c0_134 = arith.constant 0 : index
    %127 = vector.load %arg1[%c1_131, %c8_132, %c0_133, %c0_134] : memref<7x9x10x10xf32, #tpu.memory_space<vmem>>, vector<1x1x10x10xf32>
    %128 = vector.shape_cast %127 : vector<1x1x10x10xf32> to vector<10x10xf32>
    %cst_135 = arith.constant dense<0.000000e+00> : vector<10x256xf32>
    %129 = tpu.matmul %128, %126, %cst_135 {dimension_numbers = #tpu.dot_dimension_numbers<[1], [0], [0], [1], [0, 0, 1, 1], [], []>} : vector<10x10xf32>, vector<10x256xf32>, vector<10x256xf32> -> vector<10x256xf32>
    %130 = arith.addf %125, %129 : vector<10x256xf32>
    %131 = vector.broadcast %85 : vector<10x1xf32> to vector<10x256xf32>
    %132 = arith.addf %130, %131 : vector<10x256xf32>
    %c1_136 = arith.constant 1 : index
    %c0_137 = arith.constant 0 : index
    %c0_138 = arith.constant 0 : index
    %133 = vector.load %arg3[%c1_136, %c0_137, %c0_138] : memref<7x10x1xf32, #tpu.memory_space<vmem>>, vector<1x10x1xf32>
    %134 = vector.shape_cast %133 : vector<1x10x1xf32> to vector<10x1xf32>
    %c1_139 = arith.constant 1 : index
    %c0_140 = arith.constant 0 : index
    %c0_141 = arith.constant 0 : index
    %135 = vector.load %arg4[%c1_139, %c0_140, %c0_141] : memref<7x10x1xf32, #tpu.memory_space<vmem>>, vector<1x10x1xf32>
    %136 = vector.shape_cast %135 : vector<1x10x1xf32> to vector<10x1xf32>
    %137 = vector.broadcast %0 : vector<1x256xf32> to vector<10x256xf32>
    %138 = arith.mulf %132, %137 : vector<10x256xf32>
    %cst_142 = arith.constant dense<0.000000e+00> : vector<10xf32>
    %139 = vector.multi_reduction <add>, %138, %cst_142 [1] : vector<10x256xf32> to vector<10xf32>
    %140 = vector.shape_cast %139 : vector<10xf32> to vector<10x1xf32>
    %141 = arith.mulf %138, %138 : vector<10x256xf32>
    %cst_143 = arith.constant dense<0.000000e+00> : vector<10xf32>
    %142 = vector.multi_reduction <add>, %141, %cst_143 [1] : vector<10x256xf32> to vector<10xf32>
    %143 = vector.shape_cast %142 : vector<10xf32> to vector<10x1xf32>
    %cst_144 = arith.constant 7.812500e-03 : f32
    %144 = vector.broadcast %cst_144 : f32 to vector<10x1xf32>
    %145 = arith.mulf %140, %144 : vector<10x1xf32>
    %cst_145 = arith.constant 7.812500e-03 : f32
    %146 = vector.broadcast %cst_145 : f32 to vector<10x1xf32>
    %147 = arith.mulf %143, %146 : vector<10x1xf32>
    %148 = arith.mulf %145, %145 : vector<10x1xf32>
    %149 = arith.subf %147, %148 : vector<10x1xf32>
    %cst_146 = arith.constant 9.99999974E-6 : f32
    %150 = vector.broadcast %cst_146 : f32 to vector<10x1xf32>
    %151 = arith.addf %149, %150 : vector<10x1xf32>
    %152 = math.rsqrt %151 : vector<10x1xf32>
    %153 = arith.mulf %134, %152 : vector<10x1xf32>
    %154 = arith.mulf %153, %145 : vector<10x1xf32>
    %155 = arith.subf %136, %154 : vector<10x1xf32>
    %156 = vector.broadcast %153 : vector<10x1xf32> to vector<10x256xf32>
    %157 = arith.mulf %156, %132 : vector<10x256xf32>
    %158 = vector.broadcast %155 : vector<10x1xf32> to vector<10x256xf32>
    %159 = arith.addf %157, %158 : vector<10x256xf32>
    %cst_147 = arith.constant 0.000000e+00 : f32
    %160 = vector.broadcast %cst_147 : f32 to vector<10x256xf32>
    %161 = arith.maximumf %159, %160 : vector<10x256xf32>
    %162 = vector.broadcast %0 : vector<1x256xf32> to vector<10x256xf32>
    %163 = arith.mulf %161, %162 : vector<10x256xf32>
    %c2_148 = arith.constant 2 : index
    %c0_149 = arith.constant 0 : index
    %c0_150 = arith.constant 0 : index
    %164 = vector.load %arg2[%c2_148, %c0_149, %c0_150] : memref<7x10x1xf32, #tpu.memory_space<vmem>>, vector<1x10x1xf32>
    %165 = vector.shape_cast %164 : vector<1x10x1xf32> to vector<10x1xf32>
    %c0_151 = arith.constant 0 : index
    %c128_152 = arith.constant 128 : index
    %166 = vector.load %arg15[%c0_151, %c128_152] : memref<10x512xf32, #tpu.memory_space<vmem>>, vector<10x256xf32>
    tpu.vector_store %arg15[%c0_151, %c128_152], %163 {strides = array<i32>} : memref<10x512xf32, #tpu.memory_space<vmem>>, vector<10x256xf32>,
    %c0_153 = arith.constant 0 : index
    %c117_154 = arith.constant 117 : index
    %167 = vector.load %arg15[%c0_153, %c117_154] : memref<10x512xf32, #tpu.memory_space<vmem>>, vector<10x256xf32>
    %c2_155 = arith.constant 2 : index
    %c0_156 = arith.constant 0 : index
    %c0_157 = arith.constant 0 : index
    %c0_158 = arith.constant 0 : index
    %168 = vector.load %arg1[%c2_155, %c0_156, %c0_157, %c0_158] : memref<7x9x10x10xf32, #tpu.memory_space<vmem>>, vector<1x1x10x10xf32>
    %169 = vector.shape_cast %168 : vector<1x1x10x10xf32> to vector<10x10xf32>
    %cst_159 = arith.constant dense<0.000000e+00> : vector<10x256xf32>
    %170 = tpu.matmul %169, %167, %cst_159 {dimension_numbers = #tpu.dot_dimension_numbers<[1], [0], [0], [1], [0, 0, 1, 1], [], []>} : vector<10x10xf32>, vector<10x256xf32>, vector<10x256xf32> -> vector<10x256xf32>
    %c0_160 = arith.constant 0 : index
    %c118_161 = arith.constant 118 : index
    %171 = vector.load %arg15[%c0_160, %c118_161] : memref<10x512xf32, #tpu.memory_space<vmem>>, vector<10x256xf32>
    %c2_162 = arith.constant 2 : index
    %c1_163 = arith.constant 1 : index
    %c0_164 = arith.constant 0 : index
    %c0_165 = arith.constant 0 : index
    %172 = vector.load %arg1[%c2_162, %c1_163, %c0_164, %c0_165] : memref<7x9x10x10xf32, #tpu.memory_space<vmem>>, vector<1x1x10x10xf32>
    %173 = vector.shape_cast %172 : vector<1x1x10x10xf32> to vector<10x10xf32>
    %cst_166 = arith.constant dense<0.000000e+00> : vector<10x256xf32>
    %174 = tpu.matmul %173, %171, %cst_166 {dimension_numbers = #tpu.dot_dimension_numbers<[1], [0], [0], [1], [0, 0, 1, 1], [], []>} : vector<10x10xf32>, vector<10x256xf32>, vector<10x256xf32> -> vector<10x256xf32>
    %175 = arith.addf %170, %174 : vector<10x256xf32>
    %c0_167 = arith.constant 0 : index
    %c119_168 = arith.constant 119 : index
    %176 = vector.load %arg15[%c0_167, %c119_168] : memref<10x512xf32, #tpu.memory_space<vmem>>, vector<10x256xf32>
    %c2_169 = arith.constant 2 : index
    %c2_170 = arith.constant 2 : index
    %c0_171 = arith.constant 0 : index
    %c0_172 = arith.constant 0 : index
    %177 = vector.load %arg1[%c2_169, %c2_170, %c0_171, %c0_172] : memref<7x9x10x10xf32, #tpu.memory_space<vmem>>, vector<1x1x10x10xf32>
    %178 = vector.shape_cast %177 : vector<1x1x10x10xf32> to vector<10x10xf32>
    %cst_173 = arith.constant dense<0.000000e+00> : vector<10x256xf32>
    %179 = tpu.matmul %178, %176, %cst_173 {dimension_numbers = #tpu.dot_dimension_numbers<[1], [0], [0], [1], [0, 0, 1, 1], [], []>} : vector<10x10xf32>, vector<10x256xf32>, vector<10x256xf32> -> vector<10x256xf32>
    %180 = arith.addf %175, %179 : vector<10x256xf32>
    %c0_174 = arith.constant 0 : index
    %c127_175 = arith.constant 127 : index
    %181 = vector.load %arg15[%c0_174, %c127_175] : memref<10x512xf32, #tpu.memory_space<vmem>>, vector<10x256xf32>
    %c2_176 = arith.constant 2 : index
    %c3_177 = arith.constant 3 : index
    %c0_178 = arith.constant 0 : index
    %c0_179 = arith.constant 0 : index
    %182 = vector.load %arg1[%c2_176, %c3_177, %c0_178, %c0_179] : memref<7x9x10x10xf32, #tpu.memory_space<vmem>>, vector<1x1x10x10xf32>
    %183 = vector.shape_cast %182 : vector<1x1x10x10xf32> to vector<10x10xf32>
    %cst_180 = arith.constant dense<0.000000e+00> : vector<10x256xf32>
    %184 = tpu.matmul %183, %181, %cst_180 {dimension_numbers = #tpu.dot_dimension_numbers<[1], [0], [0], [1], [0, 0, 1, 1], [], []>} : vector<10x10xf32>, vector<10x256xf32>, vector<10x256xf32> -> vector<10x256xf32>
    %185 = arith.addf %180, %184 : vector<10x256xf32>
    %c0_181 = arith.constant 0 : index
    %c128_182 = arith.constant 128 : index
    %186 = vector.load %arg15[%c0_181, %c128_182] : memref<10x512xf32, #tpu.memory_space<vmem>>, vector<10x256xf32>
    %c2_183 = arith.constant 2 : index
    %c4_184 = arith.constant 4 : index
    %c0_185 = arith.constant 0 : index
    %c0_186 = arith.constant 0 : index
    %187 = vector.load %arg1[%c2_183, %c4_184, %c0_185, %c0_186] : memref<7x9x10x10xf32, #tpu.memory_space<vmem>>, vector<1x1x10x10xf32>
    %188 = vector.shape_cast %187 : vector<1x1x10x10xf32> to vector<10x10xf32>
    %cst_187 = arith.constant dense<0.000000e+00> : vector<10x256xf32>
    %189 = tpu.matmul %188, %186, %cst_187 {dimension_numbers = #tpu.dot_dimension_numbers<[1], [0], [0], [1], [0, 0, 1, 1], [], []>} : vector<10x10xf32>, vector<10x256xf32>, vector<10x256xf32> -> vector<10x256xf32>
    %190 = arith.addf %185, %189 : vector<10x256xf32>
    %c0_188 = arith.constant 0 : index
    %c129_189 = arith.constant 129 : index
    %191 = vector.load %arg15[%c0_188, %c129_189] : memref<10x512xf32, #tpu.memory_space<vmem>>, vector<10x256xf32>
    %c2_190 = arith.constant 2 : index
    %c5_191 = arith.constant 5 : index
    %c0_192 = arith.constant 0 : index
    %c0_193 = arith.constant 0 : index
    %192 = vector.load %arg1[%c2_190, %c5_191, %c0_192, %c0_193] : memref<7x9x10x10xf32, #tpu.memory_space<vmem>>, vector<1x1x10x10xf32>
    %193 = vector.shape_cast %192 : vector<1x1x10x10xf32> to vector<10x10xf32>
    %cst_194 = arith.constant dense<0.000000e+00> : vector<10x256xf32>
    %194 = tpu.matmul %193, %191, %cst_194 {dimension_numbers = #tpu.dot_dimension_numbers<[1], [0], [0], [1], [0, 0, 1, 1], [], []>} : vector<10x10xf32>, vector<10x256xf32>, vector<10x256xf32> -> vector<10x256xf32>
    %195 = arith.addf %190, %194 : vector<10x256xf32>
    %c0_195 = arith.constant 0 : index
    %c137_196 = arith.constant 137 : index
    %196 = vector.load %arg15[%c0_195, %c137_196] : memref<10x512xf32, #tpu.memory_space<vmem>>, vector<10x256xf32>
    %c2_197 = arith.constant 2 : index
    %c6_198 = arith.constant 6 : index
    %c0_199 = arith.constant 0 : index
    %c0_200 = arith.constant 0 : index
    %197 = vector.load %arg1[%c2_197, %c6_198, %c0_199, %c0_200] : memref<7x9x10x10xf32, #tpu.memory_space<vmem>>, vector<1x1x10x10xf32>
    %198 = vector.shape_cast %197 : vector<1x1x10x10xf32> to vector<10x10xf32>
    %cst_201 = arith.constant dense<0.000000e+00> : vector<10x256xf32>
    %199 = tpu.matmul %198, %196, %cst_201 {dimension_numbers = #tpu.dot_dimension_numbers<[1], [0], [0], [1], [0, 0, 1, 1], [], []>} : vector<10x10xf32>, vector<10x256xf32>, vector<10x256xf32> -> vector<10x256xf32>
    %200 = arith.addf %195, %199 : vector<10x256xf32>
    %c0_202 = arith.constant 0 : index
    %c138_203 = arith.constant 138 : index
    %201 = vector.load %arg15[%c0_202, %c138_203] : memref<10x512xf32, #tpu.memory_space<vmem>>, vector<10x256xf32>
    %c2_204 = arith.constant 2 : index
    %c7_205 = arith.constant 7 : index
    %c0_206 = arith.constant 0 : index
    %c0_207 = arith.constant 0 : index
    %202 = vector.load %arg1[%c2_204, %c7_205, %c0_206, %c0_207] : memref<7x9x10x10xf32, #tpu.memory_space<vmem>>, vector<1x1x10x10xf32>
    %203 = vector.shape_cast %202 : vector<1x1x10x10xf32> to vector<10x10xf32>
    %cst_208 = arith.constant dense<0.000000e+00> : vector<10x256xf32>
    %204 = tpu.matmul %203, %201, %cst_208 {dimension_numbers = #tpu.dot_dimension_numbers<[1], [0], [0], [1], [0, 0, 1, 1], [], []>} : vector<10x10xf32>, vector<10x256xf32>, vector<10x256xf32> -> vector<10x256xf32>
    %205 = arith.addf %200, %204 : vector<10x256xf32>
    %c0_209 = arith.constant 0 : index
    %c139_210 = arith.constant 139 : index
    %206 = vector.load %arg15[%c0_209, %c139_210] : memref<10x512xf32, #tpu.memory_space<vmem>>, vector<10x256xf32>
    %c2_211 = arith.constant 2 : index
    %c8_212 = arith.constant 8 : index
    %c0_213 = arith.constant 0 : index
    %c0_214 = arith.constant 0 : index
    %207 = vector.load %arg1[%c2_211, %c8_212, %c0_213, %c0_214] : memref<7x9x10x10xf32, #tpu.memory_space<vmem>>, vector<1x1x10x10xf32>
    %208 = vector.shape_cast %207 : vector<1x1x10x10xf32> to vector<10x10xf32>
    %cst_215 = arith.constant dense<0.000000e+00> : vector<10x256xf32>
    %209 = tpu.matmul %208, %206, %cst_215 {dimension_numbers = #tpu.dot_dimension_numbers<[1], [0], [0], [1], [0, 0, 1, 1], [], []>} : vector<10x10xf32>, vector<10x256xf32>, vector<10x256xf32> -> vector<10x256xf32>
    %210 = arith.addf %205, %209 : vector<10x256xf32>
    %211 = vector.broadcast %165 : vector<10x1xf32> to vector<10x256xf32>
    %212 = arith.addf %210, %211 : vector<10x256xf32>
    %c2_216 = arith.constant 2 : index
    %c0_217 = arith.constant 0 : index
    %c0_218 = arith.constant 0 : index
    %213 = vector.load %arg3[%c2_216, %c0_217, %c0_218] : memref<7x10x1xf32, #tpu.memory_space<vmem>>, vector<1x10x1xf32>
    %214 = vector.shape_cast %213 : vector<1x10x1xf32> to vector<10x1xf32>
    %c2_219 = arith.constant 2 : index
    %c0_220 = arith.constant 0 : index
    %c0_221 = arith.constant 0 : index
    %215 = vector.load %arg4[%c2_219, %c0_220, %c0_221] : memref<7x10x1xf32, #tpu.memory_space<vmem>>, vector<1x10x1xf32>
    %216 = vector.shape_cast %215 : vector<1x10x1xf32> to vector<10x1xf32>
    %217 = vector.broadcast %0 : vector<1x256xf32> to vector<10x256xf32>
    %218 = arith.mulf %212, %217 : vector<10x256xf32>
    %cst_222 = arith.constant dense<0.000000e+00> : vector<10xf32>
    %219 = vector.multi_reduction <add>, %218, %cst_222 [1] : vector<10x256xf32> to vector<10xf32>
    %220 = vector.shape_cast %219 : vector<10xf32> to vector<10x1xf32>
    %221 = arith.mulf %218, %218 : vector<10x256xf32>
    %cst_223 = arith.constant dense<0.000000e+00> : vector<10xf32>
    %222 = vector.multi_reduction <add>, %221, %cst_223 [1] : vector<10x256xf32> to vector<10xf32>
    %223 = vector.shape_cast %222 : vector<10xf32> to vector<10x1xf32>
    %cst_224 = arith.constant 7.812500e-03 : f32
    %224 = vector.broadcast %cst_224 : f32 to vector<10x1xf32>
    %225 = arith.mulf %220, %224 : vector<10x1xf32>
    %cst_225 = arith.constant 7.812500e-03 : f32
    %226 = vector.broadcast %cst_225 : f32 to vector<10x1xf32>
    %227 = arith.mulf %223, %226 : vector<10x1xf32>
    %228 = arith.mulf %225, %225 : vector<10x1xf32>
    %229 = arith.subf %227, %228 : vector<10x1xf32>
    %cst_226 = arith.constant 9.99999974E-6 : f32
    %230 = vector.broadcast %cst_226 : f32 to vector<10x1xf32>
    %231 = arith.addf %229, %230 : vector<10x1xf32>
    %232 = math.rsqrt %231 : vector<10x1xf32>
    %233 = arith.mulf %214, %232 : vector<10x1xf32>
    %234 = arith.mulf %233, %225 : vector<10x1xf32>
    %235 = arith.subf %216, %234 : vector<10x1xf32>
    %236 = vector.broadcast %233 : vector<10x1xf32> to vector<10x256xf32>
    %237 = arith.mulf %236, %212 : vector<10x256xf32>
    %238 = vector.broadcast %235 : vector<10x1xf32> to vector<10x256xf32>
    %239 = arith.addf %237, %238 : vector<10x256xf32>
    %240 = arith.addf %239, %83 : vector<10x256xf32>
    %cst_227 = arith.constant 0.000000e+00 : f32
    %241 = vector.broadcast %cst_227 : f32 to vector<10x256xf32>
    %242 = arith.maximumf %240, %241 : vector<10x256xf32>
    %243 = vector.broadcast %0 : vector<1x256xf32> to vector<10x256xf32>
    %244 = arith.mulf %242, %243 : vector<10x256xf32>
    %c3_228 = arith.constant 3 : index
    %c0_229 = arith.constant 0 : index
    %c0_230 = arith.constant 0 : index
    %245 = vector.load %arg2[%c3_228, %c0_229, %c0_230] : memref<7x10x1xf32, #tpu.memory_space<vmem>>, vector<1x10x1xf32>
    %246 = vector.shape_cast %245 : vector<1x10x1xf32> to vector<10x1xf32>
    %c0_231 = arith.constant 0 : index
    %c128_232 = arith.constant 128 : index
    %247 = vector.load %arg15[%c0_231, %c128_232] : memref<10x512xf32, #tpu.memory_space<vmem>>, vector<10x256xf32>
    tpu.vector_store %arg15[%c0_231, %c128_232], %244 {strides = array<i32>} : memref<10x512xf32, #tpu.memory_space<vmem>>, vector<10x256xf32>,
    %c0_233 = arith.constant 0 : index
    %c117_234 = arith.constant 117 : index
    %248 = vector.load %arg15[%c0_233, %c117_234] : memref<10x512xf32, #tpu.memory_space<vmem>>, vector<10x256xf32>
    %c3_235 = arith.constant 3 : index
    %c0_236 = arith.constant 0 : index
    %c0_237 = arith.constant 0 : index
    %c0_238 = arith.constant 0 : index
    %249 = vector.load %arg1[%c3_235, %c0_236, %c0_237, %c0_238] : memref<7x9x10x10xf32, #tpu.memory_space<vmem>>, vector<1x1x10x10xf32>
    %250 = vector.shape_cast %249 : vector<1x1x10x10xf32> to vector<10x10xf32>
    %cst_239 = arith.constant dense<0.000000e+00> : vector<10x256xf32>
    %251 = tpu.matmul %250, %248, %cst_239 {dimension_numbers = #tpu.dot_dimension_numbers<[1], [0], [0], [1], [0, 0, 1, 1], [], []>} : vector<10x10xf32>, vector<10x256xf32>, vector<10x256xf32> -> vector<10x256xf32>
    %c0_240 = arith.constant 0 : index
    %c118_241 = arith.constant 118 : index
    %252 = vector.load %arg15[%c0_240, %c118_241] : memref<10x512xf32, #tpu.memory_space<vmem>>, vector<10x256xf32>
    %c3_242 = arith.constant 3 : index
    %c1_243 = arith.constant 1 : index
    %c0_244 = arith.constant 0 : index
    %c0_245 = arith.constant 0 : index
    %253 = vector.load %arg1[%c3_242, %c1_243, %c0_244, %c0_245] : memref<7x9x10x10xf32, #tpu.memory_space<vmem>>, vector<1x1x10x10xf32>
    %254 = vector.shape_cast %253 : vector<1x1x10x10xf32> to vector<10x10xf32>
    %cst_246 = arith.constant dense<0.000000e+00> : vector<10x256xf32>
    %255 = tpu.matmul %254, %252, %cst_246 {dimension_numbers = #tpu.dot_dimension_numbers<[1], [0], [0], [1], [0, 0, 1, 1], [], []>} : vector<10x10xf32>, vector<10x256xf32>, vector<10x256xf32> -> vector<10x256xf32>
    %256 = arith.addf %251, %255 : vector<10x256xf32>
    %c0_247 = arith.constant 0 : index
    %c119_248 = arith.constant 119 : index
    %257 = vector.load %arg15[%c0_247, %c119_248] : memref<10x512xf32, #tpu.memory_space<vmem>>, vector<10x256xf32>
    %c3_249 = arith.constant 3 : index
    %c2_250 = arith.constant 2 : index
    %c0_251 = arith.constant 0 : index
    %c0_252 = arith.constant 0 : index
    %258 = vector.load %arg1[%c3_249, %c2_250, %c0_251, %c0_252] : memref<7x9x10x10xf32, #tpu.memory_space<vmem>>, vector<1x1x10x10xf32>
    %259 = vector.shape_cast %258 : vector<1x1x10x10xf32> to vector<10x10xf32>
    %cst_253 = arith.constant dense<0.000000e+00> : vector<10x256xf32>
    %260 = tpu.matmul %259, %257, %cst_253 {dimension_numbers = #tpu.dot_dimension_numbers<[1], [0], [0], [1], [0, 0, 1, 1], [], []>} : vector<10x10xf32>, vector<10x256xf32>, vector<10x256xf32> -> vector<10x256xf32>
    %261 = arith.addf %256, %260 : vector<10x256xf32>
    %c0_254 = arith.constant 0 : index
    %c127_255 = arith.constant 127 : index
    %262 = vector.load %arg15[%c0_254, %c127_255] : memref<10x512xf32, #tpu.memory_space<vmem>>, vector<10x256xf32>
    %c3_256 = arith.constant 3 : index
    %c3_257 = arith.constant 3 : index
    %c0_258 = arith.constant 0 : index
    %c0_259 = arith.constant 0 : index
    %263 = vector.load %arg1[%c3_256, %c3_257, %c0_258, %c0_259] : memref<7x9x10x10xf32, #tpu.memory_space<vmem>>, vector<1x1x10x10xf32>
    %264 = vector.shape_cast %263 : vector<1x1x10x10xf32> to vector<10x10xf32>
    %cst_260 = arith.constant dense<0.000000e+00> : vector<10x256xf32>
    %265 = tpu.matmul %264, %262, %cst_260 {dimension_numbers = #tpu.dot_dimension_numbers<[1], [0], [0], [1], [0, 0, 1, 1], [], []>} : vector<10x10xf32>, vector<10x256xf32>, vector<10x256xf32> -> vector<10x256xf32>
    %266 = arith.addf %261, %265 : vector<10x256xf32>
    %c0_261 = arith.constant 0 : index
    %c128_262 = arith.constant 128 : index
    %267 = vector.load %arg15[%c0_261, %c128_262] : memref<10x512xf32, #tpu.memory_space<vmem>>, vector<10x256xf32>
    %c3_263 = arith.constant 3 : index
    %c4_264 = arith.constant 4 : index
    %c0_265 = arith.constant 0 : index
    %c0_266 = arith.constant 0 : index
    %268 = vector.load %arg1[%c3_263, %c4_264, %c0_265, %c0_266] : memref<7x9x10x10xf32, #tpu.memory_space<vmem>>, vector<1x1x10x10xf32>
    %269 = vector.shape_cast %268 : vector<1x1x10x10xf32> to vector<10x10xf32>
    %cst_267 = arith.constant dense<0.000000e+00> : vector<10x256xf32>
    %270 = tpu.matmul %269, %267, %cst_267 {dimension_numbers = #tpu.dot_dimension_numbers<[1], [0], [0], [1], [0, 0, 1, 1], [], []>} : vector<10x10xf32>, vector<10x256xf32>, vector<10x256xf32> -> vector<10x256xf32>
    %271 = arith.addf %266, %270 : vector<10x256xf32>
    %c0_268 = arith.constant 0 : index
    %c129_269 = arith.constant 129 : index
    %272 = vector.load %arg15[%c0_268, %c129_269] : memref<10x512xf32, #tpu.memory_space<vmem>>, vector<10x256xf32>
    %c3_270 = arith.constant 3 : index
    %c5_271 = arith.constant 5 : index
    %c0_272 = arith.constant 0 : index
    %c0_273 = arith.constant 0 : index
    %273 = vector.load %arg1[%c3_270, %c5_271, %c0_272, %c0_273] : memref<7x9x10x10xf32, #tpu.memory_space<vmem>>, vector<1x1x10x10xf32>
    %274 = vector.shape_cast %273 : vector<1x1x10x10xf32> to vector<10x10xf32>
    %cst_274 = arith.constant dense<0.000000e+00> : vector<10x256xf32>
    %275 = tpu.matmul %274, %272, %cst_274 {dimension_numbers = #tpu.dot_dimension_numbers<[1], [0], [0], [1], [0, 0, 1, 1], [], []>} : vector<10x10xf32>, vector<10x256xf32>, vector<10x256xf32> -> vector<10x256xf32>
    %276 = arith.addf %271, %275 : vector<10x256xf32>
    %c0_275 = arith.constant 0 : index
    %c137_276 = arith.constant 137 : index
    %277 = vector.load %arg15[%c0_275, %c137_276] : memref<10x512xf32, #tpu.memory_space<vmem>>, vector<10x256xf32>
    %c3_277 = arith.constant 3 : index
    %c6_278 = arith.constant 6 : index
    %c0_279 = arith.constant 0 : index
    %c0_280 = arith.constant 0 : index
    %278 = vector.load %arg1[%c3_277, %c6_278, %c0_279, %c0_280] : memref<7x9x10x10xf32, #tpu.memory_space<vmem>>, vector<1x1x10x10xf32>
    %279 = vector.shape_cast %278 : vector<1x1x10x10xf32> to vector<10x10xf32>
    %cst_281 = arith.constant dense<0.000000e+00> : vector<10x256xf32>
    %280 = tpu.matmul %279, %277, %cst_281 {dimension_numbers = #tpu.dot_dimension_numbers<[1], [0], [0], [1], [0, 0, 1, 1], [], []>} : vector<10x10xf32>, vector<10x256xf32>, vector<10x256xf32> -> vector<10x256xf32>
    %281 = arith.addf %276, %280 : vector<10x256xf32>
    %c0_282 = arith.constant 0 : index
    %c138_283 = arith.constant 138 : index
    %282 = vector.load %arg15[%c0_282, %c138_283] : memref<10x512xf32, #tpu.memory_space<vmem>>, vector<10x256xf32>
    %c3_284 = arith.constant 3 : index
    %c7_285 = arith.constant 7 : index
    %c0_286 = arith.constant 0 : index
    %c0_287 = arith.constant 0 : index
    %283 = vector.load %arg1[%c3_284, %c7_285, %c0_286, %c0_287] : memref<7x9x10x10xf32, #tpu.memory_space<vmem>>, vector<1x1x10x10xf32>
    %284 = vector.shape_cast %283 : vector<1x1x10x10xf32> to vector<10x10xf32>
    %cst_288 = arith.constant dense<0.000000e+00> : vector<10x256xf32>
    %285 = tpu.matmul %284, %282, %cst_288 {dimension_numbers = #tpu.dot_dimension_numbers<[1], [0], [0], [1], [0, 0, 1, 1], [], []>} : vector<10x10xf32>, vector<10x256xf32>, vector<10x256xf32> -> vector<10x256xf32>
    %286 = arith.addf %281, %285 : vector<10x256xf32>
    %c0_289 = arith.constant 0 : index
    %c139_290 = arith.constant 139 : index
    %287 = vector.load %arg15[%c0_289, %c139_290] : memref<10x512xf32, #tpu.memory_space<vmem>>, vector<10x256xf32>
    %c3_291 = arith.constant 3 : index
    %c8_292 = arith.constant 8 : index
    %c0_293 = arith.constant 0 : index
    %c0_294 = arith.constant 0 : index
    %288 = vector.load %arg1[%c3_291, %c8_292, %c0_293, %c0_294] : memref<7x9x10x10xf32, #tpu.memory_space<vmem>>, vector<1x1x10x10xf32>
    %289 = vector.shape_cast %288 : vector<1x1x10x10xf32> to vector<10x10xf32>
    %cst_295 = arith.constant dense<0.000000e+00> : vector<10x256xf32>
    %290 = tpu.matmul %289, %287, %cst_295 {dimension_numbers = #tpu.dot_dimension_numbers<[1], [0], [0], [1], [0, 0, 1, 1], [], []>} : vector<10x10xf32>, vector<10x256xf32>, vector<10x256xf32> -> vector<10x256xf32>
    %291 = arith.addf %286, %290 : vector<10x256xf32>
    %292 = vector.broadcast %246 : vector<10x1xf32> to vector<10x256xf32>
    %293 = arith.addf %291, %292 : vector<10x256xf32>
    %c3_296 = arith.constant 3 : index
    %c0_297 = arith.constant 0 : index
    %c0_298 = arith.constant 0 : index
    %294 = vector.load %arg3[%c3_296, %c0_297, %c0_298] : memref<7x10x1xf32, #tpu.memory_space<vmem>>, vector<1x10x1xf32>
    %295 = vector.shape_cast %294 : vector<1x10x1xf32> to vector<10x1xf32>
    %c3_299 = arith.constant 3 : index
    %c0_300 = arith.constant 0 : index
    %c0_301 = arith.constant 0 : index
    %296 = vector.load %arg4[%c3_299, %c0_300, %c0_301] : memref<7x10x1xf32, #tpu.memory_space<vmem>>, vector<1x10x1xf32>
    %297 = vector.shape_cast %296 : vector<1x10x1xf32> to vector<10x1xf32>
    %298 = vector.broadcast %0 : vector<1x256xf32> to vector<10x256xf32>
    %299 = arith.mulf %293, %298 : vector<10x256xf32>
    %cst_302 = arith.constant dense<0.000000e+00> : vector<10xf32>
    %300 = vector.multi_reduction <add>, %299, %cst_302 [1] : vector<10x256xf32> to vector<10xf32>
    %301 = vector.shape_cast %300 : vector<10xf32> to vector<10x1xf32>
    %302 = arith.mulf %299, %299 : vector<10x256xf32>
    %cst_303 = arith.constant dense<0.000000e+00> : vector<10xf32>
    %303 = vector.multi_reduction <add>, %302, %cst_303 [1] : vector<10x256xf32> to vector<10xf32>
    %304 = vector.shape_cast %303 : vector<10xf32> to vector<10x1xf32>
    %cst_304 = arith.constant 7.812500e-03 : f32
    %305 = vector.broadcast %cst_304 : f32 to vector<10x1xf32>
    %306 = arith.mulf %301, %305 : vector<10x1xf32>
    %cst_305 = arith.constant 7.812500e-03 : f32
    %307 = vector.broadcast %cst_305 : f32 to vector<10x1xf32>
    %308 = arith.mulf %304, %307 : vector<10x1xf32>
    %309 = arith.mulf %306, %306 : vector<10x1xf32>
    %310 = arith.subf %308, %309 : vector<10x1xf32>
    %cst_306 = arith.constant 9.99999974E-6 : f32
    %311 = vector.broadcast %cst_306 : f32 to vector<10x1xf32>
    %312 = arith.addf %310, %311 : vector<10x1xf32>
    %313 = math.rsqrt %312 : vector<10x1xf32>
    %314 = arith.mulf %295, %313 : vector<10x1xf32>
    %315 = arith.mulf %314, %306 : vector<10x1xf32>
    %316 = arith.subf %297, %315 : vector<10x1xf32>
    %317 = vector.broadcast %314 : vector<10x1xf32> to vector<10x256xf32>
    %318 = arith.mulf %317, %293 : vector<10x256xf32>
    %319 = vector.broadcast %316 : vector<10x1xf32> to vector<10x256xf32>
    %320 = arith.addf %318, %319 : vector<10x256xf32>
    %cst_307 = arith.constant 0.000000e+00 : f32
    %321 = vector.broadcast %cst_307 : f32 to vector<10x256xf32>
    %322 = arith.maximumf %320, %321 : vector<10x256xf32>
    %323 = vector.broadcast %0 : vector<1x256xf32> to vector<10x256xf32>
    %324 = arith.mulf %322, %323 : vector<10x256xf32>
    %c4_308 = arith.constant 4 : index
    %c0_309 = arith.constant 0 : index
    %c0_310 = arith.constant 0 : index
    %325 = vector.load %arg2[%c4_308, %c0_309, %c0_310] : memref<7x10x1xf32, #tpu.memory_space<vmem>>, vector<1x10x1xf32>
    %326 = vector.shape_cast %325 : vector<1x10x1xf32> to vector<10x1xf32>
    %c0_311 = arith.constant 0 : index
    %c128_312 = arith.constant 128 : index
    %327 = vector.load %arg15[%c0_311, %c128_312] : memref<10x512xf32, #tpu.memory_space<vmem>>, vector<10x256xf32>
    tpu.vector_store %arg15[%c0_311, %c128_312], %324 {strides = array<i32>} : memref<10x512xf32, #tpu.memory_space<vmem>>, vector<10x256xf32>,
    %c0_313 = arith.constant 0 : index
    %c117_314 = arith.constant 117 : index
    %328 = vector.load %arg15[%c0_313, %c117_314] : memref<10x512xf32, #tpu.memory_space<vmem>>, vector<10x256xf32>
    %c4_315 = arith.constant 4 : index
    %c0_316 = arith.constant 0 : index
    %c0_317 = arith.constant 0 : index
    %c0_318 = arith.constant 0 : index
    %329 = vector.load %arg1[%c4_315, %c0_316, %c0_317, %c0_318] : memref<7x9x10x10xf32, #tpu.memory_space<vmem>>, vector<1x1x10x10xf32>
    %330 = vector.shape_cast %329 : vector<1x1x10x10xf32> to vector<10x10xf32>
    %cst_319 = arith.constant dense<0.000000e+00> : vector<10x256xf32>
    %331 = tpu.matmul %330, %328, %cst_319 {dimension_numbers = #tpu.dot_dimension_numbers<[1], [0], [0], [1], [0, 0, 1, 1], [], []>} : vector<10x10xf32>, vector<10x256xf32>, vector<10x256xf32> -> vector<10x256xf32>
    %c0_320 = arith.constant 0 : index
    %c118_321 = arith.constant 118 : index
    %332 = vector.load %arg15[%c0_320, %c118_321] : memref<10x512xf32, #tpu.memory_space<vmem>>, vector<10x256xf32>
    %c4_322 = arith.constant 4 : index
    %c1_323 = arith.constant 1 : index
    %c0_324 = arith.constant 0 : index
    %c0_325 = arith.constant 0 : index
    %333 = vector.load %arg1[%c4_322, %c1_323, %c0_324, %c0_325] : memref<7x9x10x10xf32, #tpu.memory_space<vmem>>, vector<1x1x10x10xf32>
    %334 = vector.shape_cast %333 : vector<1x1x10x10xf32> to vector<10x10xf32>
    %cst_326 = arith.constant dense<0.000000e+00> : vector<10x256xf32>
    %335 = tpu.matmul %334, %332, %cst_326 {dimension_numbers = #tpu.dot_dimension_numbers<[1], [0], [0], [1], [0, 0, 1, 1], [], []>} : vector<10x10xf32>, vector<10x256xf32>, vector<10x256xf32> -> vector<10x256xf32>
    %336 = arith.addf %331, %335 : vector<10x256xf32>
    %c0_327 = arith.constant 0 : index
    %c119_328 = arith.constant 119 : index
    %337 = vector.load %arg15[%c0_327, %c119_328] : memref<10x512xf32, #tpu.memory_space<vmem>>, vector<10x256xf32>
    %c4_329 = arith.constant 4 : index
    %c2_330 = arith.constant 2 : index
    %c0_331 = arith.constant 0 : index
    %c0_332 = arith.constant 0 : index
    %338 = vector.load %arg1[%c4_329, %c2_330, %c0_331, %c0_332] : memref<7x9x10x10xf32, #tpu.memory_space<vmem>>, vector<1x1x10x10xf32>
    %339 = vector.shape_cast %338 : vector<1x1x10x10xf32> to vector<10x10xf32>
    %cst_333 = arith.constant dense<0.000000e+00> : vector<10x256xf32>
    %340 = tpu.matmul %339, %337, %cst_333 {dimension_numbers = #tpu.dot_dimension_numbers<[1], [0], [0], [1], [0, 0, 1, 1], [], []>} : vector<10x10xf32>, vector<10x256xf32>, vector<10x256xf32> -> vector<10x256xf32>
    %341 = arith.addf %336, %340 : vector<10x256xf32>
    %c0_334 = arith.constant 0 : index
    %c127_335 = arith.constant 127 : index
    %342 = vector.load %arg15[%c0_334, %c127_335] : memref<10x512xf32, #tpu.memory_space<vmem>>, vector<10x256xf32>
    %c4_336 = arith.constant 4 : index
    %c3_337 = arith.constant 3 : index
    %c0_338 = arith.constant 0 : index
    %c0_339 = arith.constant 0 : index
    %343 = vector.load %arg1[%c4_336, %c3_337, %c0_338, %c0_339] : memref<7x9x10x10xf32, #tpu.memory_space<vmem>>, vector<1x1x10x10xf32>
    %344 = vector.shape_cast %343 : vector<1x1x10x10xf32> to vector<10x10xf32>
    %cst_340 = arith.constant dense<0.000000e+00> : vector<10x256xf32>
    %345 = tpu.matmul %344, %342, %cst_340 {dimension_numbers = #tpu.dot_dimension_numbers<[1], [0], [0], [1], [0, 0, 1, 1], [], []>} : vector<10x10xf32>, vector<10x256xf32>, vector<10x256xf32> -> vector<10x256xf32>
    %346 = arith.addf %341, %345 : vector<10x256xf32>
    %c0_341 = arith.constant 0 : index
    %c128_342 = arith.constant 128 : index
    %347 = vector.load %arg15[%c0_341, %c128_342] : memref<10x512xf32, #tpu.memory_space<vmem>>, vector<10x256xf32>
    %c4_343 = arith.constant 4 : index
    %c4_344 = arith.constant 4 : index
    %c0_345 = arith.constant 0 : index
    %c0_346 = arith.constant 0 : index
    %348 = vector.load %arg1[%c4_343, %c4_344, %c0_345, %c0_346] : memref<7x9x10x10xf32, #tpu.memory_space<vmem>>, vector<1x1x10x10xf32>
    %349 = vector.shape_cast %348 : vector<1x1x10x10xf32> to vector<10x10xf32>
    %cst_347 = arith.constant dense<0.000000e+00> : vector<10x256xf32>
    %350 = tpu.matmul %349, %347, %cst_347 {dimension_numbers = #tpu.dot_dimension_numbers<[1], [0], [0], [1], [0, 0, 1, 1], [], []>} : vector<10x10xf32>, vector<10x256xf32>, vector<10x256xf32> -> vector<10x256xf32>
    %351 = arith.addf %346, %350 : vector<10x256xf32>
    %c0_348 = arith.constant 0 : index
    %c129_349 = arith.constant 129 : index
    %352 = vector.load %arg15[%c0_348, %c129_349] : memref<10x512xf32, #tpu.memory_space<vmem>>, vector<10x256xf32>
    %c4_350 = arith.constant 4 : index
    %c5_351 = arith.constant 5 : index
    %c0_352 = arith.constant 0 : index
    %c0_353 = arith.constant 0 : index
    %353 = vector.load %arg1[%c4_350, %c5_351, %c0_352, %c0_353] : memref<7x9x10x10xf32, #tpu.memory_space<vmem>>, vector<1x1x10x10xf32>
    %354 = vector.shape_cast %353 : vector<1x1x10x10xf32> to vector<10x10xf32>
    %cst_354 = arith.constant dense<0.000000e+00> : vector<10x256xf32>
    %355 = tpu.matmul %354, %352, %cst_354 {dimension_numbers = #tpu.dot_dimension_numbers<[1], [0], [0], [1], [0, 0, 1, 1], [], []>} : vector<10x10xf32>, vector<10x256xf32>, vector<10x256xf32> -> vector<10x256xf32>
    %356 = arith.addf %351, %355 : vector<10x256xf32>
    %c0_355 = arith.constant 0 : index
    %c137_356 = arith.constant 137 : index
    %357 = vector.load %arg15[%c0_355, %c137_356] : memref<10x512xf32, #tpu.memory_space<vmem>>, vector<10x256xf32>
    %c4_357 = arith.constant 4 : index
    %c6_358 = arith.constant 6 : index
    %c0_359 = arith.constant 0 : index
    %c0_360 = arith.constant 0 : index
    %358 = vector.load %arg1[%c4_357, %c6_358, %c0_359, %c0_360] : memref<7x9x10x10xf32, #tpu.memory_space<vmem>>, vector<1x1x10x10xf32>
    %359 = vector.shape_cast %358 : vector<1x1x10x10xf32> to vector<10x10xf32>
    %cst_361 = arith.constant dense<0.000000e+00> : vector<10x256xf32>
    %360 = tpu.matmul %359, %357, %cst_361 {dimension_numbers = #tpu.dot_dimension_numbers<[1], [0], [0], [1], [0, 0, 1, 1], [], []>} : vector<10x10xf32>, vector<10x256xf32>, vector<10x256xf32> -> vector<10x256xf32>
    %361 = arith.addf %356, %360 : vector<10x256xf32>
    %c0_362 = arith.constant 0 : index
    %c138_363 = arith.constant 138 : index
    %362 = vector.load %arg15[%c0_362, %c138_363] : memref<10x512xf32, #tpu.memory_space<vmem>>, vector<10x256xf32>
    %c4_364 = arith.constant 4 : index
    %c7_365 = arith.constant 7 : index
    %c0_366 = arith.constant 0 : index
    %c0_367 = arith.constant 0 : index
    %363 = vector.load %arg1[%c4_364, %c7_365, %c0_366, %c0_367] : memref<7x9x10x10xf32, #tpu.memory_space<vmem>>, vector<1x1x10x10xf32>
    %364 = vector.shape_cast %363 : vector<1x1x10x10xf32> to vector<10x10xf32>
    %cst_368 = arith.constant dense<0.000000e+00> : vector<10x256xf32>
    %365 = tpu.matmul %364, %362, %cst_368 {dimension_numbers = #tpu.dot_dimension_numbers<[1], [0], [0], [1], [0, 0, 1, 1], [], []>} : vector<10x10xf32>, vector<10x256xf32>, vector<10x256xf32> -> vector<10x256xf32>
    %366 = arith.addf %361, %365 : vector<10x256xf32>
    %c0_369 = arith.constant 0 : index
    %c139_370 = arith.constant 139 : index
    %367 = vector.load %arg15[%c0_369, %c139_370] : memref<10x512xf32, #tpu.memory_space<vmem>>, vector<10x256xf32>
    %c4_371 = arith.constant 4 : index
    %c8_372 = arith.constant 8 : index
    %c0_373 = arith.constant 0 : index
    %c0_374 = arith.constant 0 : index
    %368 = vector.load %arg1[%c4_371, %c8_372, %c0_373, %c0_374] : memref<7x9x10x10xf32, #tpu.memory_space<vmem>>, vector<1x1x10x10xf32>
    %369 = vector.shape_cast %368 : vector<1x1x10x10xf32> to vector<10x10xf32>
    %cst_375 = arith.constant dense<0.000000e+00> : vector<10x256xf32>
    %370 = tpu.matmul %369, %367, %cst_375 {dimension_numbers = #tpu.dot_dimension_numbers<[1], [0], [0], [1], [0, 0, 1, 1], [], []>} : vector<10x10xf32>, vector<10x256xf32>, vector<10x256xf32> -> vector<10x256xf32>
    %371 = arith.addf %366, %370 : vector<10x256xf32>
    %372 = vector.broadcast %326 : vector<10x1xf32> to vector<10x256xf32>
    %373 = arith.addf %371, %372 : vector<10x256xf32>
    %c4_376 = arith.constant 4 : index
    %c0_377 = arith.constant 0 : index
    %c0_378 = arith.constant 0 : index
    %374 = vector.load %arg3[%c4_376, %c0_377, %c0_378] : memref<7x10x1xf32, #tpu.memory_space<vmem>>, vector<1x10x1xf32>
    %375 = vector.shape_cast %374 : vector<1x10x1xf32> to vector<10x1xf32>
    %c4_379 = arith.constant 4 : index
    %c0_380 = arith.constant 0 : index
    %c0_381 = arith.constant 0 : index
    %376 = vector.load %arg4[%c4_379, %c0_380, %c0_381] : memref<7x10x1xf32, #tpu.memory_space<vmem>>, vector<1x10x1xf32>
    %377 = vector.shape_cast %376 : vector<1x10x1xf32> to vector<10x1xf32>
    %378 = vector.broadcast %0 : vector<1x256xf32> to vector<10x256xf32>
    %379 = arith.mulf %373, %378 : vector<10x256xf32>
    %cst_382 = arith.constant dense<0.000000e+00> : vector<10xf32>
    %380 = vector.multi_reduction <add>, %379, %cst_382 [1] : vector<10x256xf32> to vector<10xf32>
    %381 = vector.shape_cast %380 : vector<10xf32> to vector<10x1xf32>
    %382 = arith.mulf %379, %379 : vector<10x256xf32>
    %cst_383 = arith.constant dense<0.000000e+00> : vector<10xf32>
    %383 = vector.multi_reduction <add>, %382, %cst_383 [1] : vector<10x256xf32> to vector<10xf32>
    %384 = vector.shape_cast %383 : vector<10xf32> to vector<10x1xf32>
    %cst_384 = arith.constant 7.812500e-03 : f32
    %385 = vector.broadcast %cst_384 : f32 to vector<10x1xf32>
    %386 = arith.mulf %381, %385 : vector<10x1xf32>
    %cst_385 = arith.constant 7.812500e-03 : f32
    %387 = vector.broadcast %cst_385 : f32 to vector<10x1xf32>
    %388 = arith.mulf %384, %387 : vector<10x1xf32>
    %389 = arith.mulf %386, %386 : vector<10x1xf32>
    %390 = arith.subf %388, %389 : vector<10x1xf32>
    %cst_386 = arith.constant 9.99999974E-6 : f32
    %391 = vector.broadcast %cst_386 : f32 to vector<10x1xf32>
    %392 = arith.addf %390, %391 : vector<10x1xf32>
    %393 = math.rsqrt %392 : vector<10x1xf32>
    %394 = arith.mulf %375, %393 : vector<10x1xf32>
    %395 = arith.mulf %394, %386 : vector<10x1xf32>
    %396 = arith.subf %377, %395 : vector<10x1xf32>
    %397 = vector.broadcast %394 : vector<10x1xf32> to vector<10x256xf32>
    %398 = arith.mulf %397, %373 : vector<10x256xf32>
    %399 = vector.broadcast %396 : vector<10x1xf32> to vector<10x256xf32>
    %400 = arith.addf %398, %399 : vector<10x256xf32>
    %401 = arith.addf %400, %244 : vector<10x256xf32>
    %cst_387 = arith.constant 0.000000e+00 : f32
    %402 = vector.broadcast %cst_387 : f32 to vector<10x256xf32>
    %403 = arith.maximumf %401, %402 : vector<10x256xf32>
    %404 = vector.broadcast %0 : vector<1x256xf32> to vector<10x256xf32>
    %405 = arith.mulf %403, %404 : vector<10x256xf32>
    %c5_388 = arith.constant 5 : index
    %c0_389 = arith.constant 0 : index
    %c0_390 = arith.constant 0 : index
    %406 = vector.load %arg2[%c5_388, %c0_389, %c0_390] : memref<7x10x1xf32, #tpu.memory_space<vmem>>, vector<1x10x1xf32>
    %407 = vector.shape_cast %406 : vector<1x10x1xf32> to vector<10x1xf32>
    %c0_391 = arith.constant 0 : index
    %c128_392 = arith.constant 128 : index
    %408 = vector.load %arg15[%c0_391, %c128_392] : memref<10x512xf32, #tpu.memory_space<vmem>>, vector<10x256xf32>
    tpu.vector_store %arg15[%c0_391, %c128_392], %405 {strides = array<i32>} : memref<10x512xf32, #tpu.memory_space<vmem>>, vector<10x256xf32>,
    %c0_393 = arith.constant 0 : index
    %c117_394 = arith.constant 117 : index
    %409 = vector.load %arg15[%c0_393, %c117_394] : memref<10x512xf32, #tpu.memory_space<vmem>>, vector<10x256xf32>
    %c5_395 = arith.constant 5 : index
    %c0_396 = arith.constant 0 : index
    %c0_397 = arith.constant 0 : index
    %c0_398 = arith.constant 0 : index
    %410 = vector.load %arg1[%c5_395, %c0_396, %c0_397, %c0_398] : memref<7x9x10x10xf32, #tpu.memory_space<vmem>>, vector<1x1x10x10xf32>
    %411 = vector.shape_cast %410 : vector<1x1x10x10xf32> to vector<10x10xf32>
    %cst_399 = arith.constant dense<0.000000e+00> : vector<10x256xf32>
    %412 = tpu.matmul %411, %409, %cst_399 {dimension_numbers = #tpu.dot_dimension_numbers<[1], [0], [0], [1], [0, 0, 1, 1], [], []>} : vector<10x10xf32>, vector<10x256xf32>, vector<10x256xf32> -> vector<10x256xf32>
    %c0_400 = arith.constant 0 : index
    %c118_401 = arith.constant 118 : index
    %413 = vector.load %arg15[%c0_400, %c118_401] : memref<10x512xf32, #tpu.memory_space<vmem>>, vector<10x256xf32>
    %c5_402 = arith.constant 5 : index
    %c1_403 = arith.constant 1 : index
    %c0_404 = arith.constant 0 : index
    %c0_405 = arith.constant 0 : index
    %414 = vector.load %arg1[%c5_402, %c1_403, %c0_404, %c0_405] : memref<7x9x10x10xf32, #tpu.memory_space<vmem>>, vector<1x1x10x10xf32>
    %415 = vector.shape_cast %414 : vector<1x1x10x10xf32> to vector<10x10xf32>
    %cst_406 = arith.constant dense<0.000000e+00> : vector<10x256xf32>
    %416 = tpu.matmul %415, %413, %cst_406 {dimension_numbers = #tpu.dot_dimension_numbers<[1], [0], [0], [1], [0, 0, 1, 1], [], []>} : vector<10x10xf32>, vector<10x256xf32>, vector<10x256xf32> -> vector<10x256xf32>
    %417 = arith.addf %412, %416 : vector<10x256xf32>
    %c0_407 = arith.constant 0 : index
    %c119_408 = arith.constant 119 : index
    %418 = vector.load %arg15[%c0_407, %c119_408] : memref<10x512xf32, #tpu.memory_space<vmem>>, vector<10x256xf32>
    %c5_409 = arith.constant 5 : index
    %c2_410 = arith.constant 2 : index
    %c0_411 = arith.constant 0 : index
    %c0_412 = arith.constant 0 : index
    %419 = vector.load %arg1[%c5_409, %c2_410, %c0_411, %c0_412] : memref<7x9x10x10xf32, #tpu.memory_space<vmem>>, vector<1x1x10x10xf32>
    %420 = vector.shape_cast %419 : vector<1x1x10x10xf32> to vector<10x10xf32>
    %cst_413 = arith.constant dense<0.000000e+00> : vector<10x256xf32>
    %421 = tpu.matmul %420, %418, %cst_413 {dimension_numbers = #tpu.dot_dimension_numbers<[1], [0], [0], [1], [0, 0, 1, 1], [], []>} : vector<10x10xf32>, vector<10x256xf32>, vector<10x256xf32> -> vector<10x256xf32>
    %422 = arith.addf %417, %421 : vector<10x256xf32>
    %c0_414 = arith.constant 0 : index
    %c127_415 = arith.constant 127 : index
    %423 = vector.load %arg15[%c0_414, %c127_415] : memref<10x512xf32, #tpu.memory_space<vmem>>, vector<10x256xf32>
    %c5_416 = arith.constant 5 : index
    %c3_417 = arith.constant 3 : index
    %c0_418 = arith.constant 0 : index
    %c0_419 = arith.constant 0 : index
    %424 = vector.load %arg1[%c5_416, %c3_417, %c0_418, %c0_419] : memref<7x9x10x10xf32, #tpu.memory_space<vmem>>, vector<1x1x10x10xf32>
    %425 = vector.shape_cast %424 : vector<1x1x10x10xf32> to vector<10x10xf32>
    %cst_420 = arith.constant dense<0.000000e+00> : vector<10x256xf32>
    %426 = tpu.matmul %425, %423, %cst_420 {dimension_numbers = #tpu.dot_dimension_numbers<[1], [0], [0], [1], [0, 0, 1, 1], [], []>} : vector<10x10xf32>, vector<10x256xf32>, vector<10x256xf32> -> vector<10x256xf32>
    %427 = arith.addf %422, %426 : vector<10x256xf32>
    %c0_421 = arith.constant 0 : index
    %c128_422 = arith.constant 128 : index
    %428 = vector.load %arg15[%c0_421, %c128_422] : memref<10x512xf32, #tpu.memory_space<vmem>>, vector<10x256xf32>
    %c5_423 = arith.constant 5 : index
    %c4_424 = arith.constant 4 : index
    %c0_425 = arith.constant 0 : index
    %c0_426 = arith.constant 0 : index
    %429 = vector.load %arg1[%c5_423, %c4_424, %c0_425, %c0_426] : memref<7x9x10x10xf32, #tpu.memory_space<vmem>>, vector<1x1x10x10xf32>
    %430 = vector.shape_cast %429 : vector<1x1x10x10xf32> to vector<10x10xf32>
    %cst_427 = arith.constant dense<0.000000e+00> : vector<10x256xf32>
    %431 = tpu.matmul %430, %428, %cst_427 {dimension_numbers = #tpu.dot_dimension_numbers<[1], [0], [0], [1], [0, 0, 1, 1], [], []>} : vector<10x10xf32>, vector<10x256xf32>, vector<10x256xf32> -> vector<10x256xf32>
    %432 = arith.addf %427, %431 : vector<10x256xf32>
    %c0_428 = arith.constant 0 : index
    %c129_429 = arith.constant 129 : index
    %433 = vector.load %arg15[%c0_428, %c129_429] : memref<10x512xf32, #tpu.memory_space<vmem>>, vector<10x256xf32>
    %c5_430 = arith.constant 5 : index
    %c5_431 = arith.constant 5 : index
    %c0_432 = arith.constant 0 : index
    %c0_433 = arith.constant 0 : index
    %434 = vector.load %arg1[%c5_430, %c5_431, %c0_432, %c0_433] : memref<7x9x10x10xf32, #tpu.memory_space<vmem>>, vector<1x1x10x10xf32>
    %435 = vector.shape_cast %434 : vector<1x1x10x10xf32> to vector<10x10xf32>
    %cst_434 = arith.constant dense<0.000000e+00> : vector<10x256xf32>
    %436 = tpu.matmul %435, %433, %cst_434 {dimension_numbers = #tpu.dot_dimension_numbers<[1], [0], [0], [1], [0, 0, 1, 1], [], []>} : vector<10x10xf32>, vector<10x256xf32>, vector<10x256xf32> -> vector<10x256xf32>
    %437 = arith.addf %432, %436 : vector<10x256xf32>
    %c0_435 = arith.constant 0 : index
    %c137_436 = arith.constant 137 : index
    %438 = vector.load %arg15[%c0_435, %c137_436] : memref<10x512xf32, #tpu.memory_space<vmem>>, vector<10x256xf32>
    %c5_437 = arith.constant 5 : index
    %c6_438 = arith.constant 6 : index
    %c0_439 = arith.constant 0 : index
    %c0_440 = arith.constant 0 : index
    %439 = vector.load %arg1[%c5_437, %c6_438, %c0_439, %c0_440] : memref<7x9x10x10xf32, #tpu.memory_space<vmem>>, vector<1x1x10x10xf32>
    %440 = vector.shape_cast %439 : vector<1x1x10x10xf32> to vector<10x10xf32>
    %cst_441 = arith.constant dense<0.000000e+00> : vector<10x256xf32>
    %441 = tpu.matmul %440, %438, %cst_441 {dimension_numbers = #tpu.dot_dimension_numbers<[1], [0], [0], [1], [0, 0, 1, 1], [], []>} : vector<10x10xf32>, vector<10x256xf32>, vector<10x256xf32> -> vector<10x256xf32>
    %442 = arith.addf %437, %441 : vector<10x256xf32>
    %c0_442 = arith.constant 0 : index
    %c138_443 = arith.constant 138 : index
    %443 = vector.load %arg15[%c0_442, %c138_443] : memref<10x512xf32, #tpu.memory_space<vmem>>, vector<10x256xf32>
    %c5_444 = arith.constant 5 : index
    %c7_445 = arith.constant 7 : index
    %c0_446 = arith.constant 0 : index
    %c0_447 = arith.constant 0 : index
    %444 = vector.load %arg1[%c5_444, %c7_445, %c0_446, %c0_447] : memref<7x9x10x10xf32, #tpu.memory_space<vmem>>, vector<1x1x10x10xf32>
    %445 = vector.shape_cast %444 : vector<1x1x10x10xf32> to vector<10x10xf32>
    %cst_448 = arith.constant dense<0.000000e+00> : vector<10x256xf32>
    %446 = tpu.matmul %445, %443, %cst_448 {dimension_numbers = #tpu.dot_dimension_numbers<[1], [0], [0], [1], [0, 0, 1, 1], [], []>} : vector<10x10xf32>, vector<10x256xf32>, vector<10x256xf32> -> vector<10x256xf32>
    %447 = arith.addf %442, %446 : vector<10x256xf32>
    %c0_449 = arith.constant 0 : index
    %c139_450 = arith.constant 139 : index
    %448 = vector.load %arg15[%c0_449, %c139_450] : memref<10x512xf32, #tpu.memory_space<vmem>>, vector<10x256xf32>
    %c5_451 = arith.constant 5 : index
    %c8_452 = arith.constant 8 : index
    %c0_453 = arith.constant 0 : index
    %c0_454 = arith.constant 0 : index
    %449 = vector.load %arg1[%c5_451, %c8_452, %c0_453, %c0_454] : memref<7x9x10x10xf32, #tpu.memory_space<vmem>>, vector<1x1x10x10xf32>
    %450 = vector.shape_cast %449 : vector<1x1x10x10xf32> to vector<10x10xf32>
    %cst_455 = arith.constant dense<0.000000e+00> : vector<10x256xf32>
    %451 = tpu.matmul %450, %448, %cst_455 {dimension_numbers = #tpu.dot_dimension_numbers<[1], [0], [0], [1], [0, 0, 1, 1], [], []>} : vector<10x10xf32>, vector<10x256xf32>, vector<10x256xf32> -> vector<10x256xf32>
    %452 = arith.addf %447, %451 : vector<10x256xf32>
    %453 = vector.broadcast %407 : vector<10x1xf32> to vector<10x256xf32>
    %454 = arith.addf %452, %453 : vector<10x256xf32>
    %c5_456 = arith.constant 5 : index
    %c0_457 = arith.constant 0 : index
    %c0_458 = arith.constant 0 : index
    %455 = vector.load %arg3[%c5_456, %c0_457, %c0_458] : memref<7x10x1xf32, #tpu.memory_space<vmem>>, vector<1x10x1xf32>
    %456 = vector.shape_cast %455 : vector<1x10x1xf32> to vector<10x1xf32>
    %c5_459 = arith.constant 5 : index
    %c0_460 = arith.constant 0 : index
    %c0_461 = arith.constant 0 : index
    %457 = vector.load %arg4[%c5_459, %c0_460, %c0_461] : memref<7x10x1xf32, #tpu.memory_space<vmem>>, vector<1x10x1xf32>
    %458 = vector.shape_cast %457 : vector<1x10x1xf32> to vector<10x1xf32>
    %459 = vector.broadcast %0 : vector<1x256xf32> to vector<10x256xf32>
    %460 = arith.mulf %454, %459 : vector<10x256xf32>
    %cst_462 = arith.constant dense<0.000000e+00> : vector<10xf32>
    %461 = vector.multi_reduction <add>, %460, %cst_462 [1] : vector<10x256xf32> to vector<10xf32>
    %462 = vector.shape_cast %461 : vector<10xf32> to vector<10x1xf32>
    %463 = arith.mulf %460, %460 : vector<10x256xf32>
    %cst_463 = arith.constant dense<0.000000e+00> : vector<10xf32>
    %464 = vector.multi_reduction <add>, %463, %cst_463 [1] : vector<10x256xf32> to vector<10xf32>
    %465 = vector.shape_cast %464 : vector<10xf32> to vector<10x1xf32>
    %cst_464 = arith.constant 7.812500e-03 : f32
    %466 = vector.broadcast %cst_464 : f32 to vector<10x1xf32>
    %467 = arith.mulf %462, %466 : vector<10x1xf32>
    %cst_465 = arith.constant 7.812500e-03 : f32
    %468 = vector.broadcast %cst_465 : f32 to vector<10x1xf32>
    %469 = arith.mulf %465, %468 : vector<10x1xf32>
    %470 = arith.mulf %467, %467 : vector<10x1xf32>
    %471 = arith.subf %469, %470 : vector<10x1xf32>
    %cst_466 = arith.constant 9.99999974E-6 : f32
    %472 = vector.broadcast %cst_466 : f32 to vector<10x1xf32>
    %473 = arith.addf %471, %472 : vector<10x1xf32>
    %474 = math.rsqrt %473 : vector<10x1xf32>
    %475 = arith.mulf %456, %474 : vector<10x1xf32>
    %476 = arith.mulf %475, %467 : vector<10x1xf32>
    %477 = arith.subf %458, %476 : vector<10x1xf32>
    %478 = vector.broadcast %475 : vector<10x1xf32> to vector<10x256xf32>
    %479 = arith.mulf %478, %454 : vector<10x256xf32>
    %480 = vector.broadcast %477 : vector<10x1xf32> to vector<10x256xf32>
    %481 = arith.addf %479, %480 : vector<10x256xf32>
    %cst_467 = arith.constant 0.000000e+00 : f32
    %482 = vector.broadcast %cst_467 : f32 to vector<10x256xf32>
    %483 = arith.maximumf %481, %482 : vector<10x256xf32>
    %484 = vector.broadcast %0 : vector<1x256xf32> to vector<10x256xf32>
    %485 = arith.mulf %483, %484 : vector<10x256xf32>
    %c6_468 = arith.constant 6 : index
    %c0_469 = arith.constant 0 : index
    %c0_470 = arith.constant 0 : index
    %486 = vector.load %arg2[%c6_468, %c0_469, %c0_470] : memref<7x10x1xf32, #tpu.memory_space<vmem>>, vector<1x10x1xf32>
    %487 = vector.shape_cast %486 : vector<1x10x1xf32> to vector<10x1xf32>
    %c0_471 = arith.constant 0 : index
    %c128_472 = arith.constant 128 : index
    %488 = vector.load %arg15[%c0_471, %c128_472] : memref<10x512xf32, #tpu.memory_space<vmem>>, vector<10x256xf32>
    tpu.vector_store %arg15[%c0_471, %c128_472], %485 {strides = array<i32>} : memref<10x512xf32, #tpu.memory_space<vmem>>, vector<10x256xf32>,
    %c0_473 = arith.constant 0 : index
    %c117_474 = arith.constant 117 : index
    %489 = vector.load %arg15[%c0_473, %c117_474] : memref<10x512xf32, #tpu.memory_space<vmem>>, vector<10x256xf32>
    %c6_475 = arith.constant 6 : index
    %c0_476 = arith.constant 0 : index
    %c0_477 = arith.constant 0 : index
    %c0_478 = arith.constant 0 : index
    %490 = vector.load %arg1[%c6_475, %c0_476, %c0_477, %c0_478] : memref<7x9x10x10xf32, #tpu.memory_space<vmem>>, vector<1x1x10x10xf32>
    %491 = vector.shape_cast %490 : vector<1x1x10x10xf32> to vector<10x10xf32>
    %cst_479 = arith.constant dense<0.000000e+00> : vector<10x256xf32>
    %492 = tpu.matmul %491, %489, %cst_479 {dimension_numbers = #tpu.dot_dimension_numbers<[1], [0], [0], [1], [0, 0, 1, 1], [], []>} : vector<10x10xf32>, vector<10x256xf32>, vector<10x256xf32> -> vector<10x256xf32>
    %c0_480 = arith.constant 0 : index
    %c118_481 = arith.constant 118 : index
    %493 = vector.load %arg15[%c0_480, %c118_481] : memref<10x512xf32, #tpu.memory_space<vmem>>, vector<10x256xf32>
    %c6_482 = arith.constant 6 : index
    %c1_483 = arith.constant 1 : index
    %c0_484 = arith.constant 0 : index
    %c0_485 = arith.constant 0 : index
    %494 = vector.load %arg1[%c6_482, %c1_483, %c0_484, %c0_485] : memref<7x9x10x10xf32, #tpu.memory_space<vmem>>, vector<1x1x10x10xf32>
    %495 = vector.shape_cast %494 : vector<1x1x10x10xf32> to vector<10x10xf32>
    %cst_486 = arith.constant dense<0.000000e+00> : vector<10x256xf32>
    %496 = tpu.matmul %495, %493, %cst_486 {dimension_numbers = #tpu.dot_dimension_numbers<[1], [0], [0], [1], [0, 0, 1, 1], [], []>} : vector<10x10xf32>, vector<10x256xf32>, vector<10x256xf32> -> vector<10x256xf32>
    %497 = arith.addf %492, %496 : vector<10x256xf32>
    %c0_487 = arith.constant 0 : index
    %c119_488 = arith.constant 119 : index
    %498 = vector.load %arg15[%c0_487, %c119_488] : memref<10x512xf32, #tpu.memory_space<vmem>>, vector<10x256xf32>
    %c6_489 = arith.constant 6 : index
    %c2_490 = arith.constant 2 : index
    %c0_491 = arith.constant 0 : index
    %c0_492 = arith.constant 0 : index
    %499 = vector.load %arg1[%c6_489, %c2_490, %c0_491, %c0_492] : memref<7x9x10x10xf32, #tpu.memory_space<vmem>>, vector<1x1x10x10xf32>
    %500 = vector.shape_cast %499 : vector<1x1x10x10xf32> to vector<10x10xf32>
    %cst_493 = arith.constant dense<0.000000e+00> : vector<10x256xf32>
    %501 = tpu.matmul %500, %498, %cst_493 {dimension_numbers = #tpu.dot_dimension_numbers<[1], [0], [0], [1], [0, 0, 1, 1], [], []>} : vector<10x10xf32>, vector<10x256xf32>, vector<10x256xf32> -> vector<10x256xf32>
    %502 = arith.addf %497, %501 : vector<10x256xf32>
    %c0_494 = arith.constant 0 : index
    %c127_495 = arith.constant 127 : index
    %503 = vector.load %arg15[%c0_494, %c127_495] : memref<10x512xf32, #tpu.memory_space<vmem>>, vector<10x256xf32>
    %c6_496 = arith.constant 6 : index
    %c3_497 = arith.constant 3 : index
    %c0_498 = arith.constant 0 : index
    %c0_499 = arith.constant 0 : index
    %504 = vector.load %arg1[%c6_496, %c3_497, %c0_498, %c0_499] : memref<7x9x10x10xf32, #tpu.memory_space<vmem>>, vector<1x1x10x10xf32>
    %505 = vector.shape_cast %504 : vector<1x1x10x10xf32> to vector<10x10xf32>
    %cst_500 = arith.constant dense<0.000000e+00> : vector<10x256xf32>
    %506 = tpu.matmul %505, %503, %cst_500 {dimension_numbers = #tpu.dot_dimension_numbers<[1], [0], [0], [1], [0, 0, 1, 1], [], []>} : vector<10x10xf32>, vector<10x256xf32>, vector<10x256xf32> -> vector<10x256xf32>
    %507 = arith.addf %502, %506 : vector<10x256xf32>
    %c0_501 = arith.constant 0 : index
    %c128_502 = arith.constant 128 : index
    %508 = vector.load %arg15[%c0_501, %c128_502] : memref<10x512xf32, #tpu.memory_space<vmem>>, vector<10x256xf32>
    %c6_503 = arith.constant 6 : index
    %c4_504 = arith.constant 4 : index
    %c0_505 = arith.constant 0 : index
    %c0_506 = arith.constant 0 : index
    %509 = vector.load %arg1[%c6_503, %c4_504, %c0_505, %c0_506] : memref<7x9x10x10xf32, #tpu.memory_space<vmem>>, vector<1x1x10x10xf32>
    %510 = vector.shape_cast %509 : vector<1x1x10x10xf32> to vector<10x10xf32>
    %cst_507 = arith.constant dense<0.000000e+00> : vector<10x256xf32>
    %511 = tpu.matmul %510, %508, %cst_507 {dimension_numbers = #tpu.dot_dimension_numbers<[1], [0], [0], [1], [0, 0, 1, 1], [], []>} : vector<10x10xf32>, vector<10x256xf32>, vector<10x256xf32> -> vector<10x256xf32>
    %512 = arith.addf %507, %511 : vector<10x256xf32>
    %c0_508 = arith.constant 0 : index
    %c129_509 = arith.constant 129 : index
    %513 = vector.load %arg15[%c0_508, %c129_509] : memref<10x512xf32, #tpu.memory_space<vmem>>, vector<10x256xf32>
    %c6_510 = arith.constant 6 : index
    %c5_511 = arith.constant 5 : index
    %c0_512 = arith.constant 0 : index
    %c0_513 = arith.constant 0 : index
    %514 = vector.load %arg1[%c6_510, %c5_511, %c0_512, %c0_513] : memref<7x9x10x10xf32, #tpu.memory_space<vmem>>, vector<1x1x10x10xf32>
    %515 = vector.shape_cast %514 : vector<1x1x10x10xf32> to vector<10x10xf32>
    %cst_514 = arith.constant dense<0.000000e+00> : vector<10x256xf32>
    %516 = tpu.matmul %515, %513, %cst_514 {dimension_numbers = #tpu.dot_dimension_numbers<[1], [0], [0], [1], [0, 0, 1, 1], [], []>} : vector<10x10xf32>, vector<10x256xf32>, vector<10x256xf32> -> vector<10x256xf32>
    %517 = arith.addf %512, %516 : vector<10x256xf32>
    %c0_515 = arith.constant 0 : index
    %c137_516 = arith.constant 137 : index
    %518 = vector.load %arg15[%c0_515, %c137_516] : memref<10x512xf32, #tpu.memory_space<vmem>>, vector<10x256xf32>
    %c6_517 = arith.constant 6 : index
    %c6_518 = arith.constant 6 : index
    %c0_519 = arith.constant 0 : index
    %c0_520 = arith.constant 0 : index
    %519 = vector.load %arg1[%c6_517, %c6_518, %c0_519, %c0_520] : memref<7x9x10x10xf32, #tpu.memory_space<vmem>>, vector<1x1x10x10xf32>
    %520 = vector.shape_cast %519 : vector<1x1x10x10xf32> to vector<10x10xf32>
    %cst_521 = arith.constant dense<0.000000e+00> : vector<10x256xf32>
    %521 = tpu.matmul %520, %518, %cst_521 {dimension_numbers = #tpu.dot_dimension_numbers<[1], [0], [0], [1], [0, 0, 1, 1], [], []>} : vector<10x10xf32>, vector<10x256xf32>, vector<10x256xf32> -> vector<10x256xf32>
    %522 = arith.addf %517, %521 : vector<10x256xf32>
    %c0_522 = arith.constant 0 : index
    %c138_523 = arith.constant 138 : index
    %523 = vector.load %arg15[%c0_522, %c138_523] : memref<10x512xf32, #tpu.memory_space<vmem>>, vector<10x256xf32>
    %c6_524 = arith.constant 6 : index
    %c7_525 = arith.constant 7 : index
    %c0_526 = arith.constant 0 : index
    %c0_527 = arith.constant 0 : index
    %524 = vector.load %arg1[%c6_524, %c7_525, %c0_526, %c0_527] : memref<7x9x10x10xf32, #tpu.memory_space<vmem>>, vector<1x1x10x10xf32>
    %525 = vector.shape_cast %524 : vector<1x1x10x10xf32> to vector<10x10xf32>
    %cst_528 = arith.constant dense<0.000000e+00> : vector<10x256xf32>
    %526 = tpu.matmul %525, %523, %cst_528 {dimension_numbers = #tpu.dot_dimension_numbers<[1], [0], [0], [1], [0, 0, 1, 1], [], []>} : vector<10x10xf32>, vector<10x256xf32>, vector<10x256xf32> -> vector<10x256xf32>
    %527 = arith.addf %522, %526 : vector<10x256xf32>
    %c0_529 = arith.constant 0 : index
    %c139_530 = arith.constant 139 : index
    %528 = vector.load %arg15[%c0_529, %c139_530] : memref<10x512xf32, #tpu.memory_space<vmem>>, vector<10x256xf32>
    %c6_531 = arith.constant 6 : index
    %c8_532 = arith.constant 8 : index
    %c0_533 = arith.constant 0 : index
    %c0_534 = arith.constant 0 : index
    %529 = vector.load %arg1[%c6_531, %c8_532, %c0_533, %c0_534] : memref<7x9x10x10xf32, #tpu.memory_space<vmem>>, vector<1x1x10x10xf32>
    %530 = vector.shape_cast %529 : vector<1x1x10x10xf32> to vector<10x10xf32>
    %cst_535 = arith.constant dense<0.000000e+00> : vector<10x256xf32>
    %531 = tpu.matmul %530, %528, %cst_535 {dimension_numbers = #tpu.dot_dimension_numbers<[1], [0], [0], [1], [0, 0, 1, 1], [], []>} : vector<10x10xf32>, vector<10x256xf32>, vector<10x256xf32> -> vector<10x256xf32>
    %532 = arith.addf %527, %531 : vector<10x256xf32>
    %533 = vector.broadcast %487 : vector<10x1xf32> to vector<10x256xf32>
    %534 = arith.addf %532, %533 : vector<10x256xf32>
    %c6_536 = arith.constant 6 : index
    %c0_537 = arith.constant 0 : index
    %c0_538 = arith.constant 0 : index
    %535 = vector.load %arg3[%c6_536, %c0_537, %c0_538] : memref<7x10x1xf32, #tpu.memory_space<vmem>>, vector<1x10x1xf32>
    %536 = vector.shape_cast %535 : vector<1x10x1xf32> to vector<10x1xf32>
    %c6_539 = arith.constant 6 : index
    %c0_540 = arith.constant 0 : index
    %c0_541 = arith.constant 0 : index
    %537 = vector.load %arg4[%c6_539, %c0_540, %c0_541] : memref<7x10x1xf32, #tpu.memory_space<vmem>>, vector<1x10x1xf32>
    %538 = vector.shape_cast %537 : vector<1x10x1xf32> to vector<10x1xf32>
    %539 = vector.broadcast %0 : vector<1x256xf32> to vector<10x256xf32>
    %540 = arith.mulf %534, %539 : vector<10x256xf32>
    %cst_542 = arith.constant dense<0.000000e+00> : vector<10xf32>
    %541 = vector.multi_reduction <add>, %540, %cst_542 [1] : vector<10x256xf32> to vector<10xf32>
    %542 = vector.shape_cast %541 : vector<10xf32> to vector<10x1xf32>
    %543 = arith.mulf %540, %540 : vector<10x256xf32>
    %cst_543 = arith.constant dense<0.000000e+00> : vector<10xf32>
    %544 = vector.multi_reduction <add>, %543, %cst_543 [1] : vector<10x256xf32> to vector<10xf32>
    %545 = vector.shape_cast %544 : vector<10xf32> to vector<10x1xf32>
    %cst_544 = arith.constant 7.812500e-03 : f32
    %546 = vector.broadcast %cst_544 : f32 to vector<10x1xf32>
    %547 = arith.mulf %542, %546 : vector<10x1xf32>
    %cst_545 = arith.constant 7.812500e-03 : f32
    %548 = vector.broadcast %cst_545 : f32 to vector<10x1xf32>
    %549 = arith.mulf %545, %548 : vector<10x1xf32>
    %550 = arith.mulf %547, %547 : vector<10x1xf32>
    %551 = arith.subf %549, %550 : vector<10x1xf32>
    %cst_546 = arith.constant 9.99999974E-6 : f32
    %552 = vector.broadcast %cst_546 : f32 to vector<10x1xf32>
    %553 = arith.addf %551, %552 : vector<10x1xf32>
    %554 = math.rsqrt %553 : vector<10x1xf32>
    %555 = arith.mulf %536, %554 : vector<10x1xf32>
    %556 = arith.mulf %555, %547 : vector<10x1xf32>
    %557 = arith.subf %538, %556 : vector<10x1xf32>
    %558 = vector.broadcast %555 : vector<10x1xf32> to vector<10x256xf32>
    %559 = arith.mulf %558, %534 : vector<10x256xf32>
    %560 = vector.broadcast %557 : vector<10x1xf32> to vector<10x256xf32>
    %561 = arith.addf %559, %560 : vector<10x256xf32>
    %562 = arith.addf %561, %405 : vector<10x256xf32>
    %cst_547 = arith.constant 0.000000e+00 : f32
    %563 = vector.broadcast %cst_547 : f32 to vector<10x256xf32>
    %564 = arith.maximumf %562, %563 : vector<10x256xf32>
    %565 = vector.broadcast %0 : vector<1x256xf32> to vector<10x256xf32>
    %566 = arith.mulf %564, %565 : vector<10x256xf32>
    %c0_548 = arith.constant 0 : index
    %c0_549 = arith.constant 0 : index
    %567 = vector.load %arg6[%c0_548, %c0_549] : memref<2x3xf32, #tpu.memory_space<vmem>>, vector<2x1xf32>
    %c0_550 = arith.constant 0 : index
    %c128_551 = arith.constant 128 : index
    %568 = vector.load %arg15[%c0_550, %c128_551] : memref<10x512xf32, #tpu.memory_space<vmem>>, vector<10x256xf32>
    tpu.vector_store %arg15[%c0_550, %c128_551], %566 {strides = array<i32>} : memref<10x512xf32, #tpu.memory_space<vmem>>, vector<10x256xf32>,
    %c0_552 = arith.constant 0 : index
    %c117_553 = arith.constant 117 : index
    %569 = vector.load %arg15[%c0_552, %c117_553] : memref<10x512xf32, #tpu.memory_space<vmem>>, vector<10x256xf32>
    %c0_554 = arith.constant 0 : index
    %c0_555 = arith.constant 0 : index
    %c0_556 = arith.constant 0 : index
    %570 = vector.load %arg5[%c0_554, %c0_555, %c0_556] : memref<9x2x10xf32, #tpu.memory_space<vmem>>, vector<1x2x10xf32>
    %571 = vector.shape_cast %570 : vector<1x2x10xf32> to vector<2x10xf32>
    %cst_557 = arith.constant dense<0.000000e+00> : vector<2x256xf32>
    %572 = tpu.matmul %571, %569, %cst_557 {dimension_numbers = #tpu.dot_dimension_numbers<[1], [0], [0], [1], [0, 0, 1, 1], [], []>} : vector<2x10xf32>, vector<10x256xf32>, vector<2x256xf32> -> vector<2x256xf32>
    %c0_558 = arith.constant 0 : index
    %c118_559 = arith.constant 118 : index
    %573 = vector.load %arg15[%c0_558, %c118_559] : memref<10x512xf32, #tpu.memory_space<vmem>>, vector<10x256xf32>
    %c1_560 = arith.constant 1 : index
    %c0_561 = arith.constant 0 : index
    %c0_562 = arith.constant 0 : index
    %574 = vector.load %arg5[%c1_560, %c0_561, %c0_562] : memref<9x2x10xf32, #tpu.memory_space<vmem>>, vector<1x2x10xf32>
    %575 = vector.shape_cast %574 : vector<1x2x10xf32> to vector<2x10xf32>
    %cst_563 = arith.constant dense<0.000000e+00> : vector<2x256xf32>
    %576 = tpu.matmul %575, %573, %cst_563 {dimension_numbers = #tpu.dot_dimension_numbers<[1], [0], [0], [1], [0, 0, 1, 1], [], []>} : vector<2x10xf32>, vector<10x256xf32>, vector<2x256xf32> -> vector<2x256xf32>
    %577 = arith.addf %572, %576 : vector<2x256xf32>
    %c0_564 = arith.constant 0 : index
    %c119_565 = arith.constant 119 : index
    %578 = vector.load %arg15[%c0_564, %c119_565] : memref<10x512xf32, #tpu.memory_space<vmem>>, vector<10x256xf32>
    %c2_566 = arith.constant 2 : index
    %c0_567 = arith.constant 0 : index
    %c0_568 = arith.constant 0 : index
    %579 = vector.load %arg5[%c2_566, %c0_567, %c0_568] : memref<9x2x10xf32, #tpu.memory_space<vmem>>, vector<1x2x10xf32>
    %580 = vector.shape_cast %579 : vector<1x2x10xf32> to vector<2x10xf32>
    %cst_569 = arith.constant dense<0.000000e+00> : vector<2x256xf32>
    %581 = tpu.matmul %580, %578, %cst_569 {dimension_numbers = #tpu.dot_dimension_numbers<[1], [0], [0], [1], [0, 0, 1, 1], [], []>} : vector<2x10xf32>, vector<10x256xf32>, vector<2x256xf32> -> vector<2x256xf32>
    %582 = arith.addf %577, %581 : vector<2x256xf32>
    %c0_570 = arith.constant 0 : index
    %c127_571 = arith.constant 127 : index
    %583 = vector.load %arg15[%c0_570, %c127_571] : memref<10x512xf32, #tpu.memory_space<vmem>>, vector<10x256xf32>
    %c3_572 = arith.constant 3 : index
    %c0_573 = arith.constant 0 : index
    %c0_574 = arith.constant 0 : index
    %584 = vector.load %arg5[%c3_572, %c0_573, %c0_574] : memref<9x2x10xf32, #tpu.memory_space<vmem>>, vector<1x2x10xf32>
    %585 = vector.shape_cast %584 : vector<1x2x10xf32> to vector<2x10xf32>
    %cst_575 = arith.constant dense<0.000000e+00> : vector<2x256xf32>
    %586 = tpu.matmul %585, %583, %cst_575 {dimension_numbers = #tpu.dot_dimension_numbers<[1], [0], [0], [1], [0, 0, 1, 1], [], []>} : vector<2x10xf32>, vector<10x256xf32>, vector<2x256xf32> -> vector<2x256xf32>
    %587 = arith.addf %582, %586 : vector<2x256xf32>
    %c0_576 = arith.constant 0 : index
    %c128_577 = arith.constant 128 : index
    %588 = vector.load %arg15[%c0_576, %c128_577] : memref<10x512xf32, #tpu.memory_space<vmem>>, vector<10x256xf32>
    %c4_578 = arith.constant 4 : index
    %c0_579 = arith.constant 0 : index
    %c0_580 = arith.constant 0 : index
    %589 = vector.load %arg5[%c4_578, %c0_579, %c0_580] : memref<9x2x10xf32, #tpu.memory_space<vmem>>, vector<1x2x10xf32>
    %590 = vector.shape_cast %589 : vector<1x2x10xf32> to vector<2x10xf32>
    %cst_581 = arith.constant dense<0.000000e+00> : vector<2x256xf32>
    %591 = tpu.matmul %590, %588, %cst_581 {dimension_numbers = #tpu.dot_dimension_numbers<[1], [0], [0], [1], [0, 0, 1, 1], [], []>} : vector<2x10xf32>, vector<10x256xf32>, vector<2x256xf32> -> vector<2x256xf32>
    %592 = arith.addf %587, %591 : vector<2x256xf32>
    %c0_582 = arith.constant 0 : index
    %c129_583 = arith.constant 129 : index
    %593 = vector.load %arg15[%c0_582, %c129_583] : memref<10x512xf32, #tpu.memory_space<vmem>>, vector<10x256xf32>
    %c5_584 = arith.constant 5 : index
    %c0_585 = arith.constant 0 : index
    %c0_586 = arith.constant 0 : index
    %594 = vector.load %arg5[%c5_584, %c0_585, %c0_586] : memref<9x2x10xf32, #tpu.memory_space<vmem>>, vector<1x2x10xf32>
    %595 = vector.shape_cast %594 : vector<1x2x10xf32> to vector<2x10xf32>
    %cst_587 = arith.constant dense<0.000000e+00> : vector<2x256xf32>
    %596 = tpu.matmul %595, %593, %cst_587 {dimension_numbers = #tpu.dot_dimension_numbers<[1], [0], [0], [1], [0, 0, 1, 1], [], []>} : vector<2x10xf32>, vector<10x256xf32>, vector<2x256xf32> -> vector<2x256xf32>
    %597 = arith.addf %592, %596 : vector<2x256xf32>
    %c0_588 = arith.constant 0 : index
    %c137_589 = arith.constant 137 : index
    %598 = vector.load %arg15[%c0_588, %c137_589] : memref<10x512xf32, #tpu.memory_space<vmem>>, vector<10x256xf32>
    %c6_590 = arith.constant 6 : index
    %c0_591 = arith.constant 0 : index
    %c0_592 = arith.constant 0 : index
    %599 = vector.load %arg5[%c6_590, %c0_591, %c0_592] : memref<9x2x10xf32, #tpu.memory_space<vmem>>, vector<1x2x10xf32>
    %600 = vector.shape_cast %599 : vector<1x2x10xf32> to vector<2x10xf32>
    %cst_593 = arith.constant dense<0.000000e+00> : vector<2x256xf32>
    %601 = tpu.matmul %600, %598, %cst_593 {dimension_numbers = #tpu.dot_dimension_numbers<[1], [0], [0], [1], [0, 0, 1, 1], [], []>} : vector<2x10xf32>, vector<10x256xf32>, vector<2x256xf32> -> vector<2x256xf32>
    %602 = arith.addf %597, %601 : vector<2x256xf32>
    %c0_594 = arith.constant 0 : index
    %c138_595 = arith.constant 138 : index
    %603 = vector.load %arg15[%c0_594, %c138_595] : memref<10x512xf32, #tpu.memory_space<vmem>>, vector<10x256xf32>
    %c7_596 = arith.constant 7 : index
    %c0_597 = arith.constant 0 : index
    %c0_598 = arith.constant 0 : index
    %604 = vector.load %arg5[%c7_596, %c0_597, %c0_598] : memref<9x2x10xf32, #tpu.memory_space<vmem>>, vector<1x2x10xf32>
    %605 = vector.shape_cast %604 : vector<1x2x10xf32> to vector<2x10xf32>
    %cst_599 = arith.constant dense<0.000000e+00> : vector<2x256xf32>
    %606 = tpu.matmul %605, %603, %cst_599 {dimension_numbers = #tpu.dot_dimension_numbers<[1], [0], [0], [1], [0, 0, 1, 1], [], []>} : vector<2x10xf32>, vector<10x256xf32>, vector<2x256xf32> -> vector<2x256xf32>
    %607 = arith.addf %602, %606 : vector<2x256xf32>
    %c0_600 = arith.constant 0 : index
    %c139_601 = arith.constant 139 : index
    %608 = vector.load %arg15[%c0_600, %c139_601] : memref<10x512xf32, #tpu.memory_space<vmem>>, vector<10x256xf32>
    %c8_602 = arith.constant 8 : index
    %c0_603 = arith.constant 0 : index
    %c0_604 = arith.constant 0 : index
    %609 = vector.load %arg5[%c8_602, %c0_603, %c0_604] : memref<9x2x10xf32, #tpu.memory_space<vmem>>, vector<1x2x10xf32>
    %610 = vector.shape_cast %609 : vector<1x2x10xf32> to vector<2x10xf32>
    %cst_605 = arith.constant dense<0.000000e+00> : vector<2x256xf32>
    %611 = tpu.matmul %610, %608, %cst_605 {dimension_numbers = #tpu.dot_dimension_numbers<[1], [0], [0], [1], [0, 0, 1, 1], [], []>} : vector<2x10xf32>, vector<10x256xf32>, vector<2x256xf32> -> vector<2x256xf32>
    %612 = arith.addf %607, %611 : vector<2x256xf32>
    %613 = vector.broadcast %567 : vector<2x1xf32> to vector<2x256xf32>
    %614 = arith.addf %612, %613 : vector<2x256xf32>
    %c0_606 = arith.constant 0 : index
    %c1_607 = arith.constant 1 : index
    %615 = vector.load %arg6[%c0_606, %c1_607] : memref<2x3xf32, #tpu.memory_space<vmem>>, vector<2x1xf32>
    %c0_608 = arith.constant 0 : index
    %c2_609 = arith.constant 2 : index
    %616 = vector.load %arg6[%c0_608, %c2_609] : memref<2x3xf32, #tpu.memory_space<vmem>>, vector<2x1xf32>
    %617 = vector.broadcast %0 : vector<1x256xf32> to vector<2x256xf32>
    %618 = arith.mulf %614, %617 : vector<2x256xf32>
    %cst_610 = arith.constant dense<0.000000e+00> : vector<2xf32>
    %619 = vector.multi_reduction <add>, %618, %cst_610 [1] : vector<2x256xf32> to vector<2xf32>
    %620 = vector.shape_cast %619 : vector<2xf32> to vector<2x1xf32>
    %621 = arith.mulf %618, %618 : vector<2x256xf32>
    %cst_611 = arith.constant dense<0.000000e+00> : vector<2xf32>
    %622 = vector.multi_reduction <add>, %621, %cst_611 [1] : vector<2x256xf32> to vector<2xf32>
    %623 = vector.shape_cast %622 : vector<2xf32> to vector<2x1xf32>
    %cst_612 = arith.constant 7.812500e-03 : f32
    %624 = vector.broadcast %cst_612 : f32 to vector<2x1xf32>
    %625 = arith.mulf %620, %624 : vector<2x1xf32>
    %cst_613 = arith.constant 7.812500e-03 : f32
    %626 = vector.broadcast %cst_613 : f32 to vector<2x1xf32>
    %627 = arith.mulf %623, %626 : vector<2x1xf32>
    %628 = arith.mulf %625, %625 : vector<2x1xf32>
    %629 = arith.subf %627, %628 : vector<2x1xf32>
    %cst_614 = arith.constant 9.99999974E-6 : f32
    %630 = vector.broadcast %cst_614 : f32 to vector<2x1xf32>
    %631 = arith.addf %629, %630 : vector<2x1xf32>
    %632 = math.rsqrt %631 : vector<2x1xf32>
    %633 = arith.mulf %615, %632 : vector<2x1xf32>
    %634 = arith.mulf %633, %625 : vector<2x1xf32>
    %635 = arith.subf %616, %634 : vector<2x1xf32>
    %636 = vector.broadcast %633 : vector<2x1xf32> to vector<2x256xf32>
    %637 = arith.mulf %636, %614 : vector<2x256xf32>
    %638 = vector.broadcast %635 : vector<2x1xf32> to vector<2x256xf32>
    %639 = arith.addf %637, %638 : vector<2x256xf32>
    %640 = vector.extract_strided_slice %639 {offsets = [0, 0], sizes = [1, 128], strides = [1, 1]} : vector<2x256xf32> to vector<1x128xf32>
    %641 = vector.extract_strided_slice %639 {offsets = [0, 128], sizes = [1, 128], strides = [1, 1]} : vector<2x256xf32> to vector<1x128xf32>
    %642 = tpu.concatenate %640, %641 in 0 : vector<1x128xf32>, vector<1x128xf32> -> vector<2x128xf32>
    %643 = vector.extract_strided_slice %639 {offsets = [1, 0], sizes = [1, 128], strides = [1, 1]} : vector<2x256xf32> to vector<1x128xf32>
    %644 = vector.extract_strided_slice %639 {offsets = [1, 128], sizes = [1, 128], strides = [1, 1]} : vector<2x256xf32> to vector<1x128xf32>
    %645 = tpu.concatenate %643, %644 in 0 : vector<1x128xf32>, vector<1x128xf32> -> vector<2x128xf32>
    %c0_615 = arith.constant 0 : index
    %c0_616 = arith.constant 0 : index
    %646 = vector.load %arg7[%c0_615, %c0_616] : memref<128x64xf32, #tpu.memory_space<vmem>>, vector<128x64xf32>
    %cst_617 = arith.constant dense<0.000000e+00> : vector<2x64xf32>
    %647 = tpu.matmul %642, %646, %cst_617 {dimension_numbers = #tpu.dot_dimension_numbers<[1], [0], [0], [1], [0, 0, 1, 1], [], []>} : vector<2x128xf32>, vector<128x64xf32>, vector<2x64xf32> -> vector<2x64xf32>
    %648 = math.tanh %647 : vector<2x64xf32>
    %c0_618 = arith.constant 0 : index
    %c0_619 = arith.constant 0 : index
    %649 = vector.load %arg13[%c0_618, %c0_619] : memref<2x64xf32, #tpu.memory_space<vmem>>, vector<2x64xf32>
    tpu.vector_store %arg13[%c0_618, %c0_619], %648 {strides = array<i32>} : memref<2x64xf32, #tpu.memory_space<vmem>>, vector<2x64xf32>,
    %cst_620 = arith.constant 0.000000e+00 : f32
    %650 = vector.broadcast %cst_620 : f32 to vector<2x128xf32>
    %651 = arith.maximumf %645, %650 : vector<2x128xf32>
    %cst_621 = arith.constant dense<0.000000e+00> : vector<2x64xf32>
    %652 = tpu.matmul %651, %646, %cst_621 {dimension_numbers = #tpu.dot_dimension_numbers<[1], [0], [0], [1], [0, 0, 1, 1], [], []>} : vector<2x128xf32>, vector<128x64xf32>, vector<2x64xf32> -> vector<2x64xf32>
    %c0_622 = arith.constant 0 : index
    %c0_623 = arith.constant 0 : index
    %653 = vector.load %arg9[%c0_622, %c0_623] : memref<64x64xf32, #tpu.memory_space<vmem>>, vector<64x64xf32>
    %cst_624 = arith.constant dense<0.000000e+00> : vector<2x64xf32>
    %654 = tpu.matmul %652, %653, %cst_624 {dimension_numbers = #tpu.dot_dimension_numbers<[1], [0], [0], [1], [0, 0, 1, 1], [], []>} : vector<2x64xf32>, vector<64x64xf32>, vector<2x64xf32> -> vector<2x64xf32>
    %c0_625 = arith.constant 0 : index
    %c0_626 = arith.constant 0 : index
    %655 = vector.load %arg10[%c0_625, %c0_626] : memref<1x64xf32, #tpu.memory_space<vmem>>, vector<1x64xf32>
    %656 = vector.broadcast %655 : vector<1x64xf32> to vector<2x64xf32>
    %657 = arith.addf %654, %656 : vector<2x64xf32>
    %cst_627 = arith.constant 0.000000e+00 : f32
    %658 = vector.broadcast %cst_627 : f32 to vector<2x64xf32>
    %659 = arith.maximumf %657, %658 : vector<2x64xf32>
    %c0_628 = arith.constant 0 : index
    %c0_629 = arith.constant 0 : index
    %660 = vector.load %arg11[%c0_628, %c0_629] : memref<64x1xf32, #tpu.memory_space<vmem>>, vector<64x1xf32>
    %cst_630 = arith.constant dense<0.000000e+00> : vector<2x1xf32>
    %661 = tpu.matmul %659, %660, %cst_630 {dimension_numbers = #tpu.dot_dimension_numbers<[1], [0], [0], [1], [0, 0, 1, 1], [], []>} : vector<2x64xf32>, vector<64x1xf32>, vector<2x1xf32> -> vector<2x1xf32>
    %c0_631 = arith.constant 0 : index
    %c0_632 = arith.constant 0 : index
    %662 = vector.load %arg12[%c0_631, %c0_632] : memref<1x1xf32, #tpu.memory_space<vmem>>, vector<1x1xf32>
    %663 = vector.broadcast %662 : vector<1x1xf32> to vector<2x1xf32>
    %664 = arith.addf %661, %663 : vector<2x1xf32>
    %665 = math.tanh %664 : vector<2x1xf32>
    %c0_633 = arith.constant 0 : index
    %c0_634 = arith.constant 0 : index
    %666 = vector.load %arg14[%c0_633, %c0_634] : memref<2x1xf32, #tpu.memory_space<vmem>>, vector<2x1xf32>
    tpu.vector_store %arg14[%c0_633, %c0_634], %665 {strides = array<i32>} : memref<2x1xf32, #tpu.memory_space<vmem>>, vector<2x1xf32>,
    return
  }
}

</mosaic_0001>

<llo_original>
// kernel: tile.8
$region0: #{tile.8}
  #allocation0 [shape = 's32[1]{0}', space=sflag, size = 0x4, scoped, tag = 'scoped memory for tile.8']
  %s0 = inlined_call_operand.vmem [shape: f32[128], index: 0, kind: input, shape index: {}]
  %s1 = inlined_call_operand.vmem [shape: f32[2,128], index: 1, kind: output, shape index: {}]
  // Predicated region
  $region2: #{tile.8} parent=0 // pred_check
    _
  $region3: #{tile.8} parent=0 // pred_check_branch
    %3 = sbr.rel (0) target = $region5
  $region4: #{tile.8} parent=0 // pred_region
    _
  $region5: #{tile.8} parent=0 // pred_fallthru
    _
  %v4 = vld [vmem:[%s0] ss:$0 sm:$0xff]
  %5 = vst [vmem:[%s1] sm:$0x3] %v4

// kernel: neuralnet_cnn_forward.1
$region0: #{neuralnet_cnn_forward.1}
  #allocation0 [shape = 'u32[]', space=smem, size = 0x4, offset = 0x4, fixed_abs, tag = 'smem constant byte address 0x4 - core index']
  #allocation1 [shape = 'u32[72,128]{1,0:T(1,128)}', space=vmem, size = 0x9000, scoped, tag = 'internal scratch']
  #allocation2 [shape = 'f32[10,512]{1,0:T(8,128)}', space=vmem, size = 0x8000, scoped, tag = 'scratch operand']
  #allocation3 [shape = 'f32[1,1]{1,0:T(1,128)S(1)}', space=vmem, size = 0x200, scoped, tag = 'scoped memory for neuralnet_cnn_forward.1']
  %s0 = inlined_call_operand.vmem [shape: f32[10,256], index: 0, kind: input, shape index: {}]
  %s1 = inlined_call_operand.vmem [shape: f32[7,9,10,10], index: 1, kind: input, shape index: {}]
  %s2 = inlined_call_operand.vmem [shape: f32[7,10,1], index: 2, kind: input, shape index: {}]
  %s3 = inlined_call_operand.vmem [shape: f32[7,10,1], index: 3, kind: input, shape index: {}]
  %s4 = inlined_call_operand.vmem [shape: f32[7,10,1], index: 4, kind: input, shape index: {}]
  %s5 = inlined_call_operand.vmem [shape: f32[9,2,10], index: 5, kind: input, shape index: {}]
  %s6 = inlined_call_operand.vmem [shape: f32[2,3], index: 6, kind: input, shape index: {}]
  %s7 = inlined_call_operand.vmem [shape: f32[128,64], index: 7, kind: input, shape index: {}]
  %s8 = inlined_call_operand.vmem [shape: f32[1,256], index: 8, kind: input, shape index: {}]
  %s9 = inlined_call_operand.vmem [shape: f32[64,64], index: 9, kind: input, shape index: {}]
  %s10 = inlined_call_operand.vmem [shape: f32[1,64], index: 10, kind: input, shape index: {}]
  %s11 = inlined_call_operand.vmem [shape: f32[64,1], index: 11, kind: input, shape index: {}]
  %s12 = inlined_call_operand.<no memory space> [shape: f32[1,1], index: 12, kind: input, shape index: {}]
  %s13 = inlined_call_operand.hbm [shape: f32[2,64], index: 13, kind: output, shape index: {0}]
  %s14 = inlined_call_operand.vmem [shape: f32[2,1], index: 14, kind: output, shape index: {1}]
  %15 = xla_tuple %s13, %s14
  %s16 = sld [smem:[#allocation0]]
  $region70: #{neuralnet_cnn_forward.1} parent=0
    _
  %s18 = ssub.s32 1, %s16
  %s19 = scalar_select 0, %s18, %s16
  %v20 = vstv %s12
  %21 = vst [vmem:[#allocation3] sm:$0x1] %v20
  $region1: #{neuralnet_cnn_forward.1} parent=0
    #allocation4 [shape = 'u8[1024]{0}', space=vmem, size = 0x400, scoped, tag = 'output window, operand 0, single buffered']
    #allocation5 [shape = 's32[1]{0}', space=sflag, size = 0x4, scoped, tag = 'scoped memory for neuralnet_cnn_forward.1']
    %22 = vsyncpa [#allocation5], 0
    // Predicated region
    $region2: #{neuralnet_cnn_forward.1} parent=1 // pred_check
      _
    $region3: #{neuralnet_cnn_forward.1} parent=1 // pred_check_branch
      %24 = sbr.rel (0) target = $region5
    $region4: #{neuralnet_cnn_forward.1} parent=1 // pred_region
      _
    $region5: #{neuralnet_cnn_forward.1} parent=1 // pred_fallthru
      _
    // Predicated region
    $region6: #{neuralnet_cnn_forward.1} parent=1 // pred_check
      _
    $region7: #{neuralnet_cnn_forward.1} parent=1 // pred_check_branch
      %26 = sbr.rel (0) target = $region9
    $region8: #{neuralnet_cnn_forward.1} parent=1 // pred_region
      _
    $region9: #{neuralnet_cnn_forward.1} parent=1 // pred_fallthru
      _
    // Predicated region
    $region10: #{neuralnet_cnn_forward.1} parent=1 // pred_check
      _
    $region11: #{neuralnet_cnn_forward.1} parent=1 // pred_check_branch
      %28 = sbr.rel (0) target = $region13
    $region12: #{neuralnet_cnn_forward.1} parent=1 // pred_region
      _
    $region13: #{neuralnet_cnn_forward.1} parent=1 // pred_fallthru
      _
    // Predicated region
    $region14: #{neuralnet_cnn_forward.1} parent=1 // pred_check
      _
    $region15: #{neuralnet_cnn_forward.1} parent=1 // pred_check_branch
      %30 = sbr.rel (0) target = $region17
    $region16: #{neuralnet_cnn_forward.1} parent=1 // pred_region
      _
    $region17: #{neuralnet_cnn_forward.1} parent=1 // pred_fallthru
      _
    // Predicated region
    $region18: #{neuralnet_cnn_forward.1} parent=1 // pred_check
      _
    $region19: #{neuralnet_cnn_forward.1} parent=1 // pred_check_branch
      %32 = sbr.rel (0) target = $region21
    $region20: #{neuralnet_cnn_forward.1} parent=1 // pred_region
      _
    $region21: #{neuralnet_cnn_forward.1} parent=1 // pred_fallthru
      _
    // Predicated region
    $region22: #{neuralnet_cnn_forward.1} parent=1 // pred_check
      _
    $region23: #{neuralnet_cnn_forward.1} parent=1 // pred_check_branch
      %34 = sbr.rel (0) target = $region25
    $region24: #{neuralnet_cnn_forward.1} parent=1 // pred_region
      _
    $region25: #{neuralnet_cnn_forward.1} parent=1 // pred_fallthru
      _
    // Predicated region
    $region26: #{neuralnet_cnn_forward.1} parent=1 // pred_check
      _
    $region27: #{neuralnet_cnn_forward.1} parent=1 // pred_check_branch
      %36 = sbr.rel (0) target = $region29
    $region28: #{neuralnet_cnn_forward.1} parent=1 // pred_region
      _
    $region29: #{neuralnet_cnn_forward.1} parent=1 // pred_fallthru
      _
    // Predicated region
    $region30: #{neuralnet_cnn_forward.1} parent=1 // pred_check
      _
    $region31: #{neuralnet_cnn_forward.1} parent=1 // pred_check_branch
      %38 = sbr.rel (0) target = $region33
    $region32: #{neuralnet_cnn_forward.1} parent=1 // pred_region
      _
    $region33: #{neuralnet_cnn_forward.1} parent=1 // pred_fallthru
      _
    // Predicated region
    $region34: #{neuralnet_cnn_forward.1} parent=1 // pred_check
      _
    $region35: #{neuralnet_cnn_forward.1} parent=1 // pred_check_branch
      %40 = sbr.rel (0) target = $region37
    $region36: #{neuralnet_cnn_forward.1} parent=1 // pred_region
      _
    $region37: #{neuralnet_cnn_forward.1} parent=1 // pred_fallthru
      _
    // Predicated region
    $region38: #{neuralnet_cnn_forward.1} parent=1 // pred_check
      _
    $region39: #{neuralnet_cnn_forward.1} parent=1 // pred_check_branch
      %42 = sbr.rel (0) target = $region41
    $region40: #{neuralnet_cnn_forward.1} parent=1 // pred_region
      _
    $region41: #{neuralnet_cnn_forward.1} parent=1 // pred_fallthru
      _
    // Predicated region
    $region42: #{neuralnet_cnn_forward.1} parent=1 // pred_check
      _
    $region43: #{neuralnet_cnn_forward.1} parent=1 // pred_check_branch
      %44 = sbr.rel (0) target = $region45
    $region44: #{neuralnet_cnn_forward.1} parent=1 // pred_region
      _
    $region45: #{neuralnet_cnn_forward.1} parent=1 // pred_fallthru
      _
    // Predicated region
    $region46: #{neuralnet_cnn_forward.1} parent=1 // pred_check
      _
    $region47: #{neuralnet_cnn_forward.1} parent=1 // pred_check_branch
      %46 = sbr.rel (0) target = $region49
    $region48: #{neuralnet_cnn_forward.1} parent=1 // pred_region
      _
    $region49: #{neuralnet_cnn_forward.1} parent=1 // pred_fallthru
      _
    // Predicated region
    $region50: #{neuralnet_cnn_forward.1} parent=1 // pred_check
      _
    $region51: #{neuralnet_cnn_forward.1} parent=1 // pred_check_branch
      %48 = sbr.rel (0) target = $region53
    $region52: #{neuralnet_cnn_forward.1} parent=1 // pred_region
      _
    $region53: #{neuralnet_cnn_forward.1} parent=1 // pred_fallthru
      _
    %v49 = vld [vmem:[%s8] sm:$0x3]
    %50 = vst [vmem:[#allocation2] sm:$0xff] 0.0
    %51 = vst [vmem:[#allocation2 + $0x8] sm:$0xff] 0.0
    %52 = vst [vmem:[#allocation2 + $0x10] sm:$0xff] 0.0
    %53 = vst [vmem:[#allocation2 + $0x18] sm:$0xff] 0.0
    %54 = vst [vmem:[#allocation2 + $0x20] sm:$0x3] 0.0
    %55 = vst [vmem:[#allocation2 + $0x28] sm:$0x3] 0.0
    %56 = vst [vmem:[#allocation2 + $0x30] sm:$0x3] 0.0
    %57 = vst [vmem:[#allocation2 + $0x38] sm:$0x3] 0.0
    %v58 = vld [vmem:[%s0] sm:$0xff]
    %v59 = vld [vmem:[%s0 + $0x8] sm:$0xff]
    %v60 = vld [vmem:[%s0 + $0x10] sm:$0x3]
    %v61 = vld [vmem:[%s0 + $0x18] sm:$0x3]
    %v62 = vld [vmem:[%s2] sm:$0xff]
    %v63 = vld [vmem:[%s2 + $0x8] sm:$0x3]
    %64 = vst [vmem:[#allocation2 + $0x8] sm:$0xff] %v58
    %65 = vst [vmem:[#allocation2 + $0x10] sm:$0xff] %v59
    %66 = vst [vmem:[#allocation2 + $0x28] sm:$0x3] %v60
    %67 = vst [vmem:[#allocation2 + $0x30] sm:$0x3] %v61
    %v68 = vld [vmem:[#allocation2] sm:$0xff]
    %v69 = vld [vmem:[#allocation2 + $0x8] sm:$0xff]
    %v70 = vld [vmem:[#allocation2 + $0x10] sm:$0xff]
    %v71 = vld [vmem:[#allocation2 + $0x20] sm:$0x3]
    %v72 = vld [vmem:[#allocation2 + $0x28] sm:$0x3]
    %v73 = vld [vmem:[#allocation2 + $0x30] sm:$0x3]
    %v74 = vld [vmem:[%s1] sm:$0xff]
    %v75 = vld [vmem:[%s1 + $0x8] sm:$0x3]
    %s76 = scalar_lea.vmem %s1, 16
    %v77 = vld [vmem:[%s76] sm:$0xff]
    %v78 = vld [vmem:[%s76 + $0x8] sm:$0x3]
    %85 = vrot.lane.b32.xlu0 %v68, 10
    %v86 = vpop.permute.xlu0 %85
    %87 = vrot.lane.b32.xlu0 %v69, 10
    %v88 = vpop.permute.xlu0 %87
    %89 = vrot.lane.b32.xlu0 %v70, 10
    %v90 = vpop.permute.xlu0 %89
    %91 = vrot.lane.b32.xlu0 %v71, 10
    %v92 = vpop.permute.xlu0 %91
    %93 = vrot.lane.b32.xlu0 %v72, 10
    %v94 = vpop.permute.xlu0 %93
    %95 = vrot.lane.b32.xlu0 %v73, 10
    %v96 = vpop.permute.xlu0 %95
    %vm97 = vcmask 80896
    %v98 = vsel %vm97, %v86, %v88
    %v99 = vsel %vm97, %v88, %v90
    %v100 = vsel %vm97, %v92, %v94
    %v101 = vsel %vm97, %v94, %v96
    %v105 = vsel %vm97, %v77, 0
    %v108 = vsel %vm97, %v78, 0
    %vm110 = vcmask 1041408
    %v111 = vsel %vm110, %v100, 0
    %v113 = vsel %vm110, %v101, 0
    %115 = vmatpush.msra.mxu0 0.0
    %116 = vmatpush.msra.mxu0 0.0
    %117 = vmatpush.msra.mxu0 0.0
    %118 = vmatpush.msra.mxu0 0.0
    %119 = vmatpush.msra.mxu0 0.0
    %120 = vmatpush.msra.mxu0 0.0
    %121 = vmatpush.msra.mxu0 0.0
    %122 = vmatpush.msra.mxu0 0.0
    %123 = vmatpush.msra.mxu0 0.0
    %124 = vmatpush.msra.mxu0 0.0
    %125 = vmatpush.msra.mxu0 0.0
    %126 = vmatpush.msra.mxu0 0.0
    %127 = vmatpush.msra.mxu0 0.0
    %128 = vmatpush.msra.mxu0 0.0
    %129 = vmatpush.msra.mxu0 %v111
    %130 = vmatpush.msra.mxu0 %v98
    %131 = vmatmul.f32.gmra.mxu0 %v105
    %v132 = vpop.f32.mrf.mxu0
    %v133 = vadd.f32 0.0, %v132
    %134 = vmatmul.f32.gmra.mxu0 %v108
    %v135 = vpop.f32.mrf.mxu0
    %v136 = vadd.f32 0.0, %v135
    %137 = vdwg.mxu0
    %138 = vmatpush.msra.mxu0 0.0
    %139 = vmatpush.msra.mxu0 0.0
    %140 = vmatpush.msra.mxu0 0.0
    %141 = vmatpush.msra.mxu0 0.0
    %142 = vmatpush.msra.mxu0 0.0
    %143 = vmatpush.msra.mxu0 0.0
    %144 = vmatpush.msra.mxu0 0.0
    %145 = vmatpush.msra.mxu0 0.0
    %146 = vmatpush.msra.mxu0 0.0
    %147 = vmatpush.msra.mxu0 0.0
    %148 = vmatpush.msra.mxu0 0.0
    %149 = vmatpush.msra.mxu0 0.0
    %150 = vmatpush.msra.mxu0 0.0
    %151 = vmatpush.msra.mxu0 0.0
    %152 = vmatpush.msra.mxu0 %v113
    %153 = vmatpush.msra.mxu0 %v99
    %154 = vmatmul.f32.gmra.mxu0 %v105
    %v155 = vpop.f32.mrf.mxu0
    %v156 = vadd.f32 0.0, %v155
    %157 = vmatmul.f32.gmra.mxu0 %v108
    %v158 = vpop.f32.mrf.mxu0
    %v159 = vadd.f32 0.0, %v158
    %160 = vdwg.mxu0
    %161 = vrot.lane.b32.xlu0 %v68, 11
    %v162 = vpop.permute.xlu0 %161
    %163 = vrot.lane.b32.xlu0 %v69, 11
    %v164 = vpop.permute.xlu0 %163
    %165 = vrot.lane.b32.xlu0 %v70, 11
    %v166 = vpop.permute.xlu0 %165
    %167 = vrot.lane.b32.xlu0 %v71, 11
    %v168 = vpop.permute.xlu0 %167
    %169 = vrot.lane.b32.xlu0 %v72, 11
    %v170 = vpop.permute.xlu0 %169
    %171 = vrot.lane.b32.xlu0 %v73, 11
    %v172 = vpop.permute.xlu0 %171
    %vm173 = vcmask 89088
    %v174 = vsel %vm173, %v162, %v164
    %v175 = vsel %vm173, %v164, %v166
    %v176 = vsel %vm173, %v168, %v170
    %v177 = vsel %vm173, %v170, %v172
    %v181 = vsel %vm97, %v74, 0
    %v184 = vsel %vm97, %v75, 0
    %v186 = vsel %vm110, %v176, 0
    %v188 = vsel %vm110, %v177, 0
    %190 = vmatpush.msra.mxu0 0.0
    %191 = vmatpush.msra.mxu0 0.0
    %192 = vmatpush.msra.mxu0 0.0
    %193 = vmatpush.msra.mxu0 0.0
    %194 = vmatpush.msra.mxu0 0.0
    %195 = vmatpush.msra.mxu0 0.0
    %196 = vmatpush.msra.mxu0 0.0
    %197 = vmatpush.msra.mxu0 0.0
    %198 = vmatpush.msra.mxu0 0.0
    %199 = vmatpush.msra.mxu0 0.0
    %200 = vmatpush.msra.mxu0 0.0
    %201 = vmatpush.msra.mxu0 0.0
    %202 = vmatpush.msra.mxu0 0.0
    %203 = vmatpush.msra.mxu0 0.0
    %204 = vmatpush.msra.mxu0 %v186
    %205 = vmatpush.msra.mxu0 %v174
    %206 = vmatmul.f32.gmra.mxu0 %v181
    %v207 = vpop.f32.mrf.mxu0
    %v208 = vadd.f32 %v133, %v207
    %209 = vmatmul.f32.gmra.mxu0 %v184
    %v210 = vpop.f32.mrf.mxu0
    %v211 = vadd.f32 %v136, %v210
    %212 = vdwg.mxu0
    %213 = vmatpush.msra.mxu0 0.0
    %214 = vmatpush.msra.mxu0 0.0
    %215 = vmatpush.msra.mxu0 0.0
    %216 = vmatpush.msra.mxu0 0.0
    %217 = vmatpush.msra.mxu0 0.0
    %218 = vmatpush.msra.mxu0 0.0
    %219 = vmatpush.msra.mxu0 0.0
    %220 = vmatpush.msra.mxu0 0.0
    %221 = vmatpush.msra.mxu0 0.0
    %222 = vmatpush.msra.mxu0 0.0
    %223 = vmatpush.msra.mxu0 0.0
    %224 = vmatpush.msra.mxu0 0.0
    %225 = vmatpush.msra.mxu0 0.0
    %226 = vmatpush.msra.mxu0 0.0
    %227 = vmatpush.msra.mxu0 %v188
    %228 = vmatpush.msra.mxu0 %v175
    %229 = vmatmul.f32.gmra.mxu0 %v181
    %v230 = vpop.f32.mrf.mxu0
    %v231 = vadd.f32 %v156, %v230
    %232 = vmatmul.f32.gmra.mxu0 %v184
    %v233 = vpop.f32.mrf.mxu0
    %v234 = vadd.f32 %v159, %v233
    %235 = vdwg.mxu0
    %s236 = scalar_lea.vmem %s1, 32
    %v237 = vld [vmem:[%s236] sm:$0xff]
    %v238 = vld [vmem:[%s236 + $0x8] sm:$0x3]
    %239 = vrot.lane.b32.xlu0 %v68, 9
    %v240 = vpop.permute.xlu0 %239
    %241 = vrot.lane.b32.xlu0 %v69, 9
    %v242 = vpop.permute.xlu0 %241
    %243 = vrot.lane.b32.xlu0 %v70, 9
    %v244 = vpop.permute.xlu0 %243
    %245 = vrot.lane.b32.xlu0 %v71, 9
    %v246 = vpop.permute.xlu0 %245
    %247 = vrot.lane.b32.xlu0 %v72, 9
    %v248 = vpop.permute.xlu0 %247
    %249 = vrot.lane.b32.xlu0 %v73, 9
    %v250 = vpop.permute.xlu0 %249
    %vm251 = vcmask 72704
    %v252 = vsel %vm251, %v240, %v242
    %v253 = vsel %vm251, %v242, %v244
    %v254 = vsel %vm251, %v246, %v248
    %v255 = vsel %vm251, %v248, %v250
    %v259 = vsel %vm97, %v237, 0
    %v262 = vsel %vm97, %v238, 0
    %v264 = vsel %vm110, %v254, 0
    %v266 = vsel %vm110, %v255, 0
    %268 = vmatpush.msra.mxu0 0.0
    %269 = vmatpush.msra.mxu0 0.0
    %270 = vmatpush.msra.mxu0 0.0
    %271 = vmatpush.msra.mxu0 0.0
    %272 = vmatpush.msra.mxu0 0.0
    %273 = vmatpush.msra.mxu0 0.0
    %274 = vmatpush.msra.mxu0 0.0
    %275 = vmatpush.msra.mxu0 0.0
    %276 = vmatpush.msra.mxu0 0.0
    %277 = vmatpush.msra.mxu0 0.0
    %278 = vmatpush.msra.mxu0 0.0
    %279 = vmatpush.msra.mxu0 0.0
    %280 = vmatpush.msra.mxu0 0.0
    %281 = vmatpush.msra.mxu0 0.0
    %282 = vmatpush.msra.mxu0 %v264
    %283 = vmatpush.msra.mxu0 %v252
    %284 = vmatmul.f32.gmra.mxu0 %v259
    %v285 = vpop.f32.mrf.mxu0
    %v286 = vadd.f32 0.0, %v285
    %287 = vmatmul.f32.gmra.mxu0 %v262
    %v288 = vpop.f32.mrf.mxu0
    %v289 = vadd.f32 0.0, %v288
    %290 = vdwg.mxu0
    %291 = vmatpush.msra.mxu0 0.0
    %292 = vmatpush.msra.mxu0 0.0
    %293 = vmatpush.msra.mxu0 0.0
    %294 = vmatpush.msra.mxu0 0.0
    %295 = vmatpush.msra.mxu0 0.0
    %296 = vmatpush.msra.mxu0 0.0
    %297 = vmatpush.msra.mxu0 0.0
    %298 = vmatpush.msra.mxu0 0.0
    %299 = vmatpush.msra.mxu0 0.0
    %300 = vmatpush.msra.mxu0 0.0
    %301 = vmatpush.msra.mxu0 0.0
    %302 = vmatpush.msra.mxu0 0.0
    %303 = vmatpush.msra.mxu0 0.0
    %304 = vmatpush.msra.mxu0 0.0
    %305 = vmatpush.msra.mxu0 %v266
    %306 = vmatpush.msra.mxu0 %v253
    %307 = vmatmul.f32.gmra.mxu0 %v259
    %v308 = vpop.f32.mrf.mxu0
    %v309 = vadd.f32 0.0, %v308
    %310 = vmatmul.f32.gmra.mxu0 %v262
    %v311 = vpop.f32.mrf.mxu0
    %v312 = vadd.f32 0.0, %v311
    %313 = vdwg.mxu0
    %v314 = vadd.f32 %v208, %v286
    %v315 = vadd.f32 %v231, %v309
    %v316 = vadd.f32 %v211, %v289
    %v317 = vadd.f32 %v234, %v312
    %s318 = scalar_lea.vmem %s1, 48
    %v319 = vld [vmem:[%s318] sm:$0xff]
    %v320 = vld [vmem:[%s318 + $0x8] sm:$0x3]
    %321 = vrot.lane.b32.xlu0 %v68, 1
    %v322 = vpop.permute.xlu0 %321
    %323 = vrot.lane.b32.xlu0 %v69, 1
    %v324 = vpop.permute.xlu0 %323
    %325 = vrot.lane.b32.xlu0 %v70, 1
    %v326 = vpop.permute.xlu0 %325
    %327 = vrot.lane.b32.xlu0 %v71, 1
    %v328 = vpop.permute.xlu0 %327
    %329 = vrot.lane.b32.xlu0 %v72, 1
    %v330 = vpop.permute.xlu0 %329
    %331 = vrot.lane.b32.xlu0 %v73, 1
    %v332 = vpop.permute.xlu0 %331
    %vm333 = vcmask 7168
    %v334 = vsel %vm333, %v322, %v324
    %v335 = vsel %vm333, %v324, %v326
    %v336 = vsel %vm333, %v328, %v330
    %v337 = vsel %vm333, %v330, %v332
    %v341 = vsel %vm97, %v319, 0
    %v344 = vsel %vm97, %v320, 0
    %v346 = vsel %vm110, %v336, 0
    %v348 = vsel %vm110, %v337, 0
    %350 = vmatpush.msra.mxu0 0.0
    %351 = vmatpush.msra.mxu0 0.0
    %352 = vmatpush.msra.mxu0 0.0
    %353 = vmatpush.msra.mxu0 0.0
    %354 = vmatpush.msra.mxu0 0.0
    %355 = vmatpush.msra.mxu0 0.0
    %356 = vmatpush.msra.mxu0 0.0
    %357 = vmatpush.msra.mxu0 0.0
    %358 = vmatpush.msra.mxu0 0.0
    %359 = vmatpush.msra.mxu0 0.0
    %360 = vmatpush.msra.mxu0 0.0
    %361 = vmatpush.msra.mxu0 0.0
    %362 = vmatpush.msra.mxu0 0.0
    %363 = vmatpush.msra.mxu0 0.0
    %364 = vmatpush.msra.mxu0 %v346
    %365 = vmatpush.msra.mxu0 %v334
    %366 = vmatmul.f32.gmra.mxu0 %v341
    %v367 = vpop.f32.mrf.mxu0
    %v368 = vadd.f32 0.0, %v367
    %369 = vmatmul.f32.gmra.mxu0 %v344
    %v370 = vpop.f32.mrf.mxu0
    %v371 = vadd.f32 0.0, %v370
    %372 = vdwg.mxu0
    %373 = vmatpush.msra.mxu0 0.0
    %374 = vmatpush.msra.mxu0 0.0
    %375 = vmatpush.msra.mxu0 0.0
    %376 = vmatpush.msra.mxu0 0.0
    %377 = vmatpush.msra.mxu0 0.0
    %378 = vmatpush.msra.mxu0 0.0
    %379 = vmatpush.msra.mxu0 0.0
    %380 = vmatpush.msra.mxu0 0.0
    %381 = vmatpush.msra.mxu0 0.0
    %382 = vmatpush.msra.mxu0 0.0
    %383 = vmatpush.msra.mxu0 0.0
    %384 = vmatpush.msra.mxu0 0.0
    %385 = vmatpush.msra.mxu0 0.0
    %386 = vmatpush.msra.mxu0 0.0
    %387 = vmatpush.msra.mxu0 %v348
    %388 = vmatpush.msra.mxu0 %v335
    %389 = vmatmul.f32.gmra.mxu0 %v341
    %v390 = vpop.f32.mrf.mxu0
    %v391 = vadd.f32 0.0, %v390
    %392 = vmatmul.f32.gmra.mxu0 %v344
    %v393 = vpop.f32.mrf.mxu0
    %v394 = vadd.f32 0.0, %v393
    %395 = vdwg.mxu0
    %v396 = vadd.f32 %v314, %v368
    %v397 = vadd.f32 %v315, %v391
    %v398 = vadd.f32 %v316, %v371
    %v399 = vadd.f32 %v317, %v394
    %s400 = scalar_lea.vmem %s1, 64
    %v401 = vld [vmem:[%s400] sm:$0xff]
    %v402 = vld [vmem:[%s400 + $0x8] sm:$0x3]
    %v404 = vsel %vm97, %v401, 0
    %v407 = vsel %vm97, %v402, 0
    %v409 = vsel %vm110, %v72, 0
    %v411 = vsel %vm110, %v73, 0
    %413 = vmatpush.msra.mxu0 0.0
    %414 = vmatpush.msra.mxu0 0.0
    %415 = vmatpush.msra.mxu0 0.0
    %416 = vmatpush.msra.mxu0 0.0
    %417 = vmatpush.msra.mxu0 0.0
    %418 = vmatpush.msra.mxu0 0.0
    %419 = vmatpush.msra.mxu0 0.0
    %420 = vmatpush.msra.mxu0 0.0
    %421 = vmatpush.msra.mxu0 0.0
    %422 = vmatpush.msra.mxu0 0.0
    %423 = vmatpush.msra.mxu0 0.0
    %424 = vmatpush.msra.mxu0 0.0
    %425 = vmatpush.msra.mxu0 0.0
    %426 = vmatpush.msra.mxu0 0.0
    %427 = vmatpush.msra.mxu0 %v409
    %428 = vmatpush.msra.mxu0 %v69
    %429 = vmatmul.f32.gmra.mxu0 %v404
    %v430 = vpop.f32.mrf.mxu0
    %v431 = vadd.f32 0.0, %v430
    %432 = vmatmul.f32.gmra.mxu0 %v407
    %v433 = vpop.f32.mrf.mxu0
    %v434 = vadd.f32 0.0, %v433
    %435 = vdwg.mxu0
    %436 = vmatpush.msra.mxu0 0.0
    %437 = vmatpush.msra.mxu0 0.0
    %438 = vmatpush.msra.mxu0 0.0
    %439 = vmatpush.msra.mxu0 0.0
    %440 = vmatpush.msra.mxu0 0.0
    %441 = vmatpush.msra.mxu0 0.0
    %442 = vmatpush.msra.mxu0 0.0
    %443 = vmatpush.msra.mxu0 0.0
    %444 = vmatpush.msra.mxu0 0.0
    %445 = vmatpush.msra.mxu0 0.0
    %446 = vmatpush.msra.mxu0 0.0
    %447 = vmatpush.msra.mxu0 0.0
    %448 = vmatpush.msra.mxu0 0.0
    %449 = vmatpush.msra.mxu0 0.0
    %450 = vmatpush.msra.mxu0 %v411
    %451 = vmatpush.msra.mxu0 %v70
    %452 = vmatmul.f32.gmra.mxu0 %v404
    %v453 = vpop.f32.mrf.mxu0
    %v454 = vadd.f32 0.0, %v453
    %455 = vmatmul.f32.gmra.mxu0 %v407
    %v456 = vpop.f32.mrf.mxu0
    %v457 = vadd.f32 0.0, %v456
    %458 = vdwg.mxu0
    %v459 = vadd.f32 %v396, %v431
    %v460 = vadd.f32 %v397, %v454
    %v461 = vadd.f32 %v398, %v434
    %v462 = vadd.f32 %v399, %v457
    %v463 = vld [vmem:[#allocation2 + $0x8] sm:$0xff]
    %v464 = vld [vmem:[#allocation2 + $0x10] sm:$0xff]
    %v465 = vld [vmem:[#allocation2 + $0x18] sm:$0xff]
    %v466 = vld [vmem:[#allocation2 + $0x28] sm:$0x3]
    %v467 = vld [vmem:[#allocation2 + $0x30] sm:$0x3]
    %v468 = vld [vmem:[#allocation2 + $0x38] sm:$0x3]
    %s469 = scalar_lea.vmem %s1, 80
    %v470 = vld [vmem:[%s469] sm:$0xff]
    %v471 = vld [vmem:[%s469 + $0x8] sm:$0x3]
    %478 = vrot.lane.b32.xlu0 %v463, 127
    %v479 = vpop.permute.xlu0 %478
    %480 = vrot.lane.b32.xlu0 %v464, 127
    %v481 = vpop.permute.xlu0 %480
    %482 = vrot.lane.b32.xlu0 %v465, 127
    %v483 = vpop.permute.xlu0 %482
    %484 = vrot.lane.b32.xlu0 %v466, 127
    %v485 = vpop.permute.xlu0 %484
    %486 = vrot.lane.b32.xlu0 %v467, 127
    %v487 = vpop.permute.xlu0 %486
    %488 = vrot.lane.b32.xlu0 %v468, 127
    %v489 = vpop.permute.xlu0 %488
    %vm490 = vcmask 1039360
    %v491 = vsel %vm490, %v479, %v481
    %v492 = vsel %vm490, %v481, %v483
    %v493 = vsel %vm490, %v485, %v487
    %v494 = vsel %vm490, %v487, %v489
    %v498 = vsel %vm97, %v470, 0
    %v501 = vsel %vm97, %v471, 0
    %v503 = vsel %vm110, %v493, 0
    %v505 = vsel %vm110, %v494, 0
    %507 = vmatpush.msra.mxu0 0.0
    %508 = vmatpush.msra.mxu0 0.0
    %509 = vmatpush.msra.mxu0 0.0
    %510 = vmatpush.msra.mxu0 0.0
    %511 = vmatpush.msra.mxu0 0.0
    %512 = vmatpush.msra.mxu0 0.0
    %513 = vmatpush.msra.mxu0 0.0
    %514 = vmatpush.msra.mxu0 0.0
    %515 = vmatpush.msra.mxu0 0.0
    %516 = vmatpush.msra.mxu0 0.0
    %517 = vmatpush.msra.mxu0 0.0
    %518 = vmatpush.msra.mxu0 0.0
    %519 = vmatpush.msra.mxu0 0.0
    %520 = vmatpush.msra.mxu0 0.0
    %521 = vmatpush.msra.mxu0 %v503
    %522 = vmatpush.msra.mxu0 %v491
    %523 = vmatmul.f32.gmra.mxu0 %v498
    %v524 = vpop.f32.mrf.mxu0
    %v525 = vadd.f32 0.0, %v524
    %526 = vmatmul.f32.gmra.mxu0 %v501
    %v527 = vpop.f32.mrf.mxu0
    %v528 = vadd.f32 0.0, %v527
    %529 = vdwg.mxu0
    %530 = vmatpush.msra.mxu0 0.0
    %531 = vmatpush.msra.mxu0 0.0
    %532 = vmatpush.msra.mxu0 0.0
    %533 = vmatpush.msra.mxu0 0.0
    %534 = vmatpush.msra.mxu0 0.0
    %535 = vmatpush.msra.mxu0 0.0
    %536 = vmatpush.msra.mxu0 0.0
    %537 = vmatpush.msra.mxu0 0.0
    %538 = vmatpush.msra.mxu0 0.0
    %539 = vmatpush.msra.mxu0 0.0
    %540 = vmatpush.msra.mxu0 0.0
    %541 = vmatpush.msra.mxu0 0.0
    %542 = vmatpush.msra.mxu0 0.0
    %543 = vmatpush.msra.mxu0 0.0
    %544 = vmatpush.msra.mxu0 %v505
    %545 = vmatpush.msra.mxu0 %v492
    %546 = vmatmul.f32.gmra.mxu0 %v498
    %v547 = vpop.f32.mrf.mxu0
    %v548 = vadd.f32 0.0, %v547
    %549 = vmatmul.f32.gmra.mxu0 %v501
    %v550 = vpop.f32.mrf.mxu0
    %v551 = vadd.f32 0.0, %v550
    %552 = vdwg.mxu0
    %v553 = vadd.f32 %v459, %v525
    %v554 = vadd.f32 %v460, %v548
    %v555 = vadd.f32 %v461, %v528
    %v556 = vadd.f32 %v462, %v551
    %s557 = scalar_lea.vmem %s1, 96
    %v558 = vld [vmem:[%s557] sm:$0xff]
    %v559 = vld [vmem:[%s557 + $0x8] sm:$0x3]
    %560 = vrot.lane.b32.xlu0 %v463, 119
    %v561 = vpop.permute.xlu0 %560
    %562 = vrot.lane.b32.xlu0 %v464, 119
    %v563 = vpop.permute.xlu0 %562
    %564 = vrot.lane.b32.xlu0 %v465, 119
    %v565 = vpop.permute.xlu0 %564
    %566 = vrot.lane.b32.xlu0 %v466, 119
    %v567 = vpop.permute.xlu0 %566
    %568 = vrot.lane.b32.xlu0 %v467, 119
    %v569 = vpop.permute.xlu0 %568
    %570 = vrot.lane.b32.xlu0 %v468, 119
    %v571 = vpop.permute.xlu0 %570
    %vm572 = vcmask 973824
    %v573 = vsel %vm572, %v561, %v563
    %v574 = vsel %vm572, %v563, %v565
    %v575 = vsel %vm572, %v567, %v569
    %v576 = vsel %vm572, %v569, %v571
    %v580 = vsel %vm97, %v558, 0
    %v583 = vsel %vm97, %v559, 0
    %v585 = vsel %vm110, %v575, 0
    %v587 = vsel %vm110, %v576, 0
    %589 = vmatpush.msra.mxu0 0.0
    %590 = vmatpush.msra.mxu0 0.0
    %591 = vmatpush.msra.mxu0 0.0
    %592 = vmatpush.msra.mxu0 0.0
    %593 = vmatpush.msra.mxu0 0.0
    %594 = vmatpush.msra.mxu0 0.0
    %595 = vmatpush.msra.mxu0 0.0
    %596 = vmatpush.msra.mxu0 0.0
    %597 = vmatpush.msra.mxu0 0.0
    %598 = vmatpush.msra.mxu0 0.0
    %599 = vmatpush.msra.mxu0 0.0
    %600 = vmatpush.msra.mxu0 0.0
    %601 = vmatpush.msra.mxu0 0.0
    %602 = vmatpush.msra.mxu0 0.0
    %603 = vmatpush.msra.mxu0 %v585
    %604 = vmatpush.msra.mxu0 %v573
    %605 = vmatmul.f32.gmra.mxu0 %v580
    %v606 = vpop.f32.mrf.mxu0
    %v607 = vadd.f32 0.0, %v606
    %608 = vmatmul.f32.gmra.mxu0 %v583
    %v609 = vpop.f32.mrf.mxu0
    %v610 = vadd.f32 0.0, %v609
    %611 = vdwg.mxu0
    %612 = vmatpush.msra.mxu0 0.0
    %613 = vmatpush.msra.mxu0 0.0
    %614 = vmatpush.msra.mxu0 0.0
    %615 = vmatpush.msra.mxu0 0.0
    %616 = vmatpush.msra.mxu0 0.0
    %617 = vmatpush.msra.mxu0 0.0
    %618 = vmatpush.msra.mxu0 0.0
    %619 = vmatpush.msra.mxu0 0.0
    %620 = vmatpush.msra.mxu0 0.0
    %621 = vmatpush.msra.mxu0 0.0
    %622 = vmatpush.msra.mxu0 0.0
    %623 = vmatpush.msra.mxu0 0.0
    %624 = vmatpush.msra.mxu0 0.0
    %625 = vmatpush.msra.mxu0 0.0
    %626 = vmatpush.msra.mxu0 %v587
    %627 = vmatpush.msra.mxu0 %v574
    %628 = vmatmul.f32.gmra.mxu0 %v580
    %v629 = vpop.f32.mrf.mxu0
    %v630 = vadd.f32 0.0, %v629
    %631 = vmatmul.f32.gmra.mxu0 %v583
    %v632 = vpop.f32.mrf.mxu0
    %v633 = vadd.f32 0.0, %v632
    %634 = vdwg.mxu0
    %v635 = vadd.f32 %v553, %v607
    %v636 = vadd.f32 %v554, %v630
    %v637 = vadd.f32 %v555, %v610
    %v638 = vadd.f32 %v556, %v633
    %s639 = scalar_lea.vmem %s1, 112
    %v640 = vld [vmem:[%s639] sm:$0xff]
    %v641 = vld [vmem:[%s639 + $0x8] sm:$0x3]
    %642 = vrot.lane.b32.xlu0 %v463, 118
    %v643 = vpop.permute.xlu0 %642
    %644 = vrot.lane.b32.xlu0 %v464, 118
    %v645 = vpop.permute.xlu0 %644
    %646 = vrot.lane.b32.xlu0 %v465, 118
    %v647 = vpop.permute.xlu0 %646
    %648 = vrot.lane.b32.xlu0 %v466, 118
    %v649 = vpop.permute.xlu0 %648
    %650 = vrot.lane.b32.xlu0 %v467, 118
    %v651 = vpop.permute.xlu0 %650
    %652 = vrot.lane.b32.xlu0 %v468, 118
    %v653 = vpop.permute.xlu0 %652
    %vm654 = vcmask 965632
    %v655 = vsel %vm654, %v643, %v645
    %v656 = vsel %vm654, %v645, %v647
    %v657 = vsel %vm654, %v649, %v651
    %v658 = vsel %vm654, %v651, %v653
    %v662 = vsel %vm97, %v640, 0
    %v665 = vsel %vm97, %v641, 0
    %v667 = vsel %vm110, %v657, 0
    %v669 = vsel %vm110, %v658, 0
    %671 = vmatpush.msra.mxu0 0.0
    %672 = vmatpush.msra.mxu0 0.0
    %673 = vmatpush.msra.mxu0 0.0
    %674 = vmatpush.msra.mxu0 0.0
    %675 = vmatpush.msra.mxu0 0.0
    %676 = vmatpush.msra.mxu0 0.0
    %677 = vmatpush.msra.mxu0 0.0
    %678 = vmatpush.msra.mxu0 0.0
    %679 = vmatpush.msra.mxu0 0.0
    %680 = vmatpush.msra.mxu0 0.0
    %681 = vmatpush.msra.mxu0 0.0
    %682 = vmatpush.msra.mxu0 0.0
    %683 = vmatpush.msra.mxu0 0.0
    %684 = vmatpush.msra.mxu0 0.0
    %685 = vmatpush.msra.mxu0 %v667
    %686 = vmatpush.msra.mxu0 %v655
    %687 = vmatmul.f32.gmra.mxu0 %v662
    %v688 = vpop.f32.mrf.mxu0
    %v689 = vadd.f32 0.0, %v688
    %690 = vmatmul.f32.gmra.mxu0 %v665
    %v691 = vpop.f32.mrf.mxu0
    %v692 = vadd.f32 0.0, %v691
    %693 = vdwg.mxu0
    %694 = vmatpush.msra.mxu0 0.0
    %695 = vmatpush.msra.mxu0 0.0
    %696 = vmatpush.msra.mxu0 0.0
    %697 = vmatpush.msra.mxu0 0.0
    %698 = vmatpush.msra.mxu0 0.0
    %699 = vmatpush.msra.mxu0 0.0
    %700 = vmatpush.msra.mxu0 0.0
    %701 = vmatpush.msra.mxu0 0.0
    %702 = vmatpush.msra.mxu0 0.0
    %703 = vmatpush.msra.mxu0 0.0
    %704 = vmatpush.msra.mxu0 0.0
    %705 = vmatpush.msra.mxu0 0.0
    %706 = vmatpush.msra.mxu0 0.0
    %707 = vmatpush.msra.mxu0 0.0
    %708 = vmatpush.msra.mxu0 %v669
    %709 = vmatpush.msra.mxu0 %v656
    %710 = vmatmul.f32.gmra.mxu0 %v662
    %v711 = vpop.f32.mrf.mxu0
    %v712 = vadd.f32 0.0, %v711
    %713 = vmatmul.f32.gmra.mxu0 %v665
    %v714 = vpop.f32.mrf.mxu0
    %v715 = vadd.f32 0.0, %v714
    %716 = vdwg.mxu0
    %v717 = vadd.f32 %v635, %v689
    %v718 = vadd.f32 %v636, %v712
    %v719 = vadd.f32 %v637, %v692
    %v720 = vadd.f32 %v638, %v715
    %s721 = scalar_lea.vmem %s1, 128
    %v722 = vld [vmem:[%s721] sm:$0xff]
    %v723 = vld [vmem:[%s721 + $0x8] sm:$0x3]
    %724 = vrot.lane.b32.xlu0 %v463, 117
    %v725 = vpop.permute.xlu0 %724
    %726 = vrot.lane.b32.xlu0 %v464, 117
    %v727 = vpop.permute.xlu0 %726
    %728 = vrot.lane.b32.xlu0 %v465, 117
    %v729 = vpop.permute.xlu0 %728
    %730 = vrot.lane.b32.xlu0 %v466, 117
    %v731 = vpop.permute.xlu0 %730
    %732 = vrot.lane.b32.xlu0 %v467, 117
    %v733 = vpop.permute.xlu0 %732
    %734 = vrot.lane.b32.xlu0 %v468, 117
    %v735 = vpop.permute.xlu0 %734
    %vm736 = vcmask 957440
    %v737 = vsel %vm736, %v725, %v727
    %v738 = vsel %vm736, %v727, %v729
    %v739 = vsel %vm736, %v731, %v733
    %v740 = vsel %vm736, %v733, %v735
    %v744 = vsel %vm97, %v722, 0
    %v747 = vsel %vm97, %v723, 0
    %v749 = vsel %vm110, %v739, 0
    %v751 = vsel %vm110, %v740, 0
    %753 = vmatpush.msra.mxu0 0.0
    %754 = vmatpush.msra.mxu0 0.0
    %755 = vmatpush.msra.mxu0 0.0
    %756 = vmatpush.msra.mxu0 0.0
    %757 = vmatpush.msra.mxu0 0.0
    %758 = vmatpush.msra.mxu0 0.0
    %759 = vmatpush.msra.mxu0 0.0
    %760 = vmatpush.msra.mxu0 0.0
    %761 = vmatpush.msra.mxu0 0.0
    %762 = vmatpush.msra.mxu0 0.0
    %763 = vmatpush.msra.mxu0 0.0
    %764 = vmatpush.msra.mxu0 0.0
    %765 = vmatpush.msra.mxu0 0.0
    %766 = vmatpush.msra.mxu0 0.0
    %767 = vmatpush.msra.mxu0 %v749
    %768 = vmatpush.msra.mxu0 %v737
    %769 = vmatmul.f32.gmra.mxu0 %v744
    %v770 = vpop.f32.mrf.mxu0
    %v771 = vadd.f32 0.0, %v770
    %772 = vmatmul.f32.gmra.mxu0 %v747
    %v773 = vpop.f32.mrf.mxu0
    %v774 = vadd.f32 0.0, %v773
    %775 = vdwg.mxu0
    %776 = vmatpush.msra.mxu0 0.0
    %777 = vmatpush.msra.mxu0 0.0
    %778 = vmatpush.msra.mxu0 0.0
    %779 = vmatpush.msra.mxu0 0.0
    %780 = vmatpush.msra.mxu0 0.0
    %781 = vmatpush.msra.mxu0 0.0
    %782 = vmatpush.msra.mxu0 0.0
    %783 = vmatpush.msra.mxu0 0.0
    %784 = vmatpush.msra.mxu0 0.0
    %785 = vmatpush.msra.mxu0 0.0
    %786 = vmatpush.msra.mxu0 0.0
    %787 = vmatpush.msra.mxu0 0.0
    %788 = vmatpush.msra.mxu0 0.0
    %789 = vmatpush.msra.mxu0 0.0
    %790 = vmatpush.msra.mxu0 %v751
    %791 = vmatpush.msra.mxu0 %v738
    %792 = vmatmul.f32.gmra.mxu0 %v744
    %v793 = vpop.f32.mrf.mxu0
    %v794 = vadd.f32 0.0, %v793
    %795 = vmatmul.f32.gmra.mxu0 %v747
    %v796 = vpop.f32.mrf.mxu0
    %v797 = vadd.f32 0.0, %v796
    %798 = vdwg.mxu0
    %v799 = vadd.f32 %v717, %v771
    %v800 = vadd.f32 %v718, %v794
    %v801 = vadd.f32 %v719, %v774
    %v802 = vadd.f32 %v720, %v797
    %804 = vset.pattern.permute.xlu0 0
    %805 = vperm.xlu0 %804, %v62
    %v806 = vpop.permute.xlu0 %805
    %809 = vset.pattern.permute.xlu0 0
    %810 = vperm.xlu0 %809, %v63
    %v811 = vpop.permute.xlu0 %810
    %v813 = vadd.f32 %v799, %v806
    %v814 = vadd.f32 %v800, %v806
    %v815 = vadd.f32 %v801, %v811
    %v816 = vadd.f32 %v802, %v811
    %v817 = vld [vmem:[%s3] sm:$0xff]
    %v818 = vld [vmem:[%s3 + $0x8] sm:$0x3]
    %v819 = vld [vmem:[%s4] sm:$0xff]
    %v820 = vld [vmem:[%s4 + $0x8] sm:$0x3]
    %v822 = vperm.slane %v49, 0
    %v823 = vperm.slane %v49, 1
    %v826 = vmul.f32 %v813, %v822
    %v827 = vmul.f32 %v814, %v823
    %v828 = vmul.f32 %v815, %v822
    %v829 = vmul.f32 %v816, %v823
    %v830 = vadd.f32 %v826, %v827
    %831 = vadd.xlane.f32.xlu0 %v830
    %v832 = vpop.xlane.xlu0 %831
    %v833 = vsel %vm110, %v828, 0.0
    %v834 = vsel %vm110, %v829, 0.0
    %v835 = vadd.f32 %v833, %v834
    %836 = vadd.xlane.f32.xlu0 %v835
    %v837 = vpop.xlane.xlu0 %836
    %v838 = vmul.f32 %v826, %v826
    %v839 = vmul.f32 %v827, %v827
    %v840 = vmul.f32 %v828, %v828
    %v841 = vmul.f32 %v829, %v829
    %v842 = vadd.f32 %v838, %v839
    %843 = vadd.xlane.f32.xlu0 %v842
    %v844 = vpop.xlane.xlu0 %843
    %v845 = vsel %vm110, %v840, 0.0
    %v846 = vsel %vm110, %v841, 0.0
    %v847 = vadd.f32 %v845, %v846
    %848 = vadd.xlane.f32.xlu0 %v847
    %v849 = vpop.xlane.xlu0 %848
    %v850 = vmul.f32 %v832, 0.0078125
    %v851 = vmul.f32 %v837, 0.0078125
    %v852 = vmul.f32 %v844, 0.0078125
    %v853 = vmul.f32 %v849, 0.0078125
    %v854 = vmul.f32 %v850, %v850
    %v855 = vmul.f32 %v851, %v851
    %v856 = vsub.f32 %v852, %v854
    %v857 = vsub.f32 %v853, %v855
    %v858 = vadd.f32 %v856, 1e-05
    %v859 = vadd.f32 %v857, 1e-05
    %v860 = vrsqrt.pop %v858
    %v861 = vmul.f32 %v860, %v858
    %v862 = vmul.f32 %v861, %v860
    %v863 = vmul.f32 0.5, %v862
    %v864 = vsub.f32 1.5, %v863
    %v865 = vmul.f32 %v860, %v864
    %vm866 = vweird.f32 %v858
    %vm867 = vweird.f32 %v860
    %vm868 = vmor %vm866, %vm867
    %v869 = vsel %vm868, %v860, %v865
    %v870 = vrsqrt.pop %v859
    %v871 = vmul.f32 %v870, %v859
    %v872 = vmul.f32 %v871, %v870
    %v873 = vmul.f32 0.5, %v872
    %v874 = vsub.f32 1.5, %v873
    %v875 = vmul.f32 %v870, %v874
    %vm876 = vweird.f32 %v859
    %vm877 = vweird.f32 %v870
    %vm878 = vmor %vm876, %vm877
    %v879 = vsel %vm878, %v870, %v875
    %v880 = vmul.f32 %v817, %v869
    %v881 = vmul.f32 %v818, %v879
    %v882 = vmul.f32 %v880, %v850
    %v883 = vmul.f32 %v881, %v851
    %v884 = vsub.f32 %v819, %v882
    %v885 = vsub.f32 %v820, %v883
    %887 = vset.pattern.permute.xlu0 0
    %888 = vperm.xlu0 %887, %v880
    %v889 = vpop.permute.xlu0 %888
    %892 = vset.pattern.permute.xlu0 0
    %893 = vperm.xlu0 %892, %v881
    %v894 = vpop.permute.xlu0 %893
    %v896 = vmul.f32 %v889, %v813
    %v897 = vmul.f32 %v889, %v814
    %v898 = vmul.f32 %v894, %v815
    %v899 = vmul.f32 %v894, %v816
    %901 = vset.pattern.permute.xlu0 0
    %902 = vperm.xlu0 %901, %v884
    %v903 = vpop.permute.xlu0 %902
    %906 = vset.pattern.permute.xlu0 0
    %907 = vperm.xlu0 %906, %v885
    %v908 = vpop.permute.xlu0 %907
    %v910 = vadd.f32 %v896, %v903
    %v911 = vadd.f32 %v897, %v903
    %v912 = vadd.f32 %v898, %v908
    %v913 = vadd.f32 %v899, %v908
    %v914 = vmax.f32 %v910, 0.0
    %v915 = vmax.f32 %v911, 0.0
    %v916 = vmax.f32 %v912, 0.0
    %v917 = vmax.f32 %v913, 0.0
    %v918 = vmul.f32 %v914, %v822
    %v919 = vmul.f32 %v915, %v823
    %v920 = vmul.f32 %v916, %v822
    %v921 = vmul.f32 %v917, %v823
    %s922 = scalar_lea.vmem %s2, 16
    %v923 = vld [vmem:[%s922] sm:$0xff]
    %v924 = vld [vmem:[%s922 + $0x8] sm:$0x3]
    %925 = vst [vmem:[#allocation2 + $0x8] sm:$0xff] %v918
    %926 = vst [vmem:[#allocation2 + $0x10] sm:$0xff] %v919
    %927 = vst [vmem:[#allocation2 + $0x28] sm:$0x3] %v920
    %928 = vst [vmem:[#allocation2 + $0x30] sm:$0x3] %v921
    %v929 = vld [vmem:[#allocation2] sm:$0xff]
    %v930 = vld [vmem:[#allocation2 + $0x8] sm:$0xff]
    %v931 = vld [vmem:[#allocation2 + $0x10] sm:$0xff]
    %v932 = vld [vmem:[#allocation2 + $0x20] sm:$0x3]
    %v933 = vld [vmem:[#allocation2 + $0x28] sm:$0x3]
    %v934 = vld [vmem:[#allocation2 + $0x30] sm:$0x3]
    %s935 = scalar_lea.vmem %s1, 144
    %v936 = vld [vmem:[%s935] sm:$0xff]
    %v937 = vld [vmem:[%s935 + $0x8] sm:$0x3]
    %s938 = scalar_lea.vmem %s1, 160
    %v939 = vld [vmem:[%s938] sm:$0xff]
    %v940 = vld [vmem:[%s938 + $0x8] sm:$0x3]
    %947 = vrot.lane.b32.xlu0 %v929, 10
    %v948 = vpop.permute.xlu0 %947
    %949 = vrot.lane.b32.xlu0 %v930, 10
    %v950 = vpop.permute.xlu0 %949
    %951 = vrot.lane.b32.xlu0 %v931, 10
    %v952 = vpop.permute.xlu0 %951
    %953 = vrot.lane.b32.xlu0 %v932, 10
    %v954 = vpop.permute.xlu0 %953
    %955 = vrot.lane.b32.xlu0 %v933, 10
    %v956 = vpop.permute.xlu0 %955
    %957 = vrot.lane.b32.xlu0 %v934, 10
    %v958 = vpop.permute.xlu0 %957
    %v959 = vsel %vm97, %v948, %v950
    %v960 = vsel %vm97, %v950, %v952
    %v961 = vsel %vm97, %v954, %v956
    %v962 = vsel %vm97, %v956, %v958
    %v966 = vsel %vm97, %v939, 0
    %v969 = vsel %vm97, %v940, 0
    %v971 = vsel %vm110, %v961, 0
    %v973 = vsel %vm110, %v962, 0
    %975 = vmatpush.msra.mxu0 0.0
    %976 = vmatpush.msra.mxu0 0.0
    %977 = vmatpush.msra.mxu0 0.0
    %978 = vmatpush.msra.mxu0 0.0
    %979 = vmatpush.msra.mxu0 0.0
    %980 = vmatpush.msra.mxu0 0.0
    %981 = vmatpush.msra.mxu0 0.0
    %982 = vmatpush.msra.mxu0 0.0
    %983 = vmatpush.msra.mxu0 0.0
    %984 = vmatpush.msra.mxu0 0.0
    %985 = vmatpush.msra.mxu0 0.0
    %986 = vmatpush.msra.mxu0 0.0
    %987 = vmatpush.msra.mxu0 0.0
    %988 = vmatpush.msra.mxu0 0.0
    %989 = vmatpush.msra.mxu0 %v971
    %990 = vmatpush.msra.mxu0 %v959
    %991 = vmatmul.f32.gmra.mxu0 %v966
    %v992 = vpop.f32.mrf.mxu0
    %v993 = vadd.f32 0.0, %v992
    %994 = vmatmul.f32.gmra.mxu0 %v969
    %v995 = vpop.f32.mrf.mxu0
    %v996 = vadd.f32 0.0, %v995
    %997 = vdwg.mxu0
    %998 = vmatpush.msra.mxu0 0.0
    %999 = vmatpush.msra.mxu0 0.0
    %1000 = vmatpush.msra.mxu0 0.0
    %1001 = vmatpush.msra.mxu0 0.0
    %1002 = vmatpush.msra.mxu0 0.0
    %1003 = vmatpush.msra.mxu0 0.0
    %1004 = vmatpush.msra.mxu0 0.0
    %1005 = vmatpush.msra.mxu0 0.0
    %1006 = vmatpush.msra.mxu0 0.0
    %1007 = vmatpush.msra.mxu0 0.0
    %1008 = vmatpush.msra.mxu0 0.0
    %1009 = vmatpush.msra.mxu0 0.0
    %1010 = vmatpush.msra.mxu0 0.0
    %1011 = vmatpush.msra.mxu0 0.0
    %1012 = vmatpush.msra.mxu0 %v973
    %1013 = vmatpush.msra.mxu0 %v960
    %1014 = vmatmul.f32.gmra.mxu0 %v966
    %v1015 = vpop.f32.mrf.mxu0
    %v1016 = vadd.f32 0.0, %v1015
    %1017 = vmatmul.f32.gmra.mxu0 %v969
    %v1018 = vpop.f32.mrf.mxu0
    %v1019 = vadd.f32 0.0, %v1018
    %1020 = vdwg.mxu0
    %1021 = vrot.lane.b32.xlu0 %v929, 11
    %v1022 = vpop.permute.xlu0 %1021
    %1023 = vrot.lane.b32.xlu0 %v930, 11
    %v1024 = vpop.permute.xlu0 %1023
    %1025 = vrot.lane.b32.xlu0 %v931, 11
    %v1026 = vpop.permute.xlu0 %1025
    %1027 = vrot.lane.b32.xlu0 %v932, 11
    %v1028 = vpop.permute.xlu0 %1027
    %1029 = vrot.lane.b32.xlu0 %v933, 11
    %v1030 = vpop.permute.xlu0 %1029
    %1031 = vrot.lane.b32.xlu0 %v934, 11
    %v1032 = vpop.permute.xlu0 %1031
    %v1033 = vsel %vm173, %v1022, %v1024
    %v1034 = vsel %vm173, %v1024, %v1026
    %v1035 = vsel %vm173, %v1028, %v1030
    %v1036 = vsel %vm173, %v1030, %v1032
    %v1040 = vsel %vm97, %v936, 0
    %v1043 = vsel %vm97, %v937, 0
    %v1045 = vsel %vm110, %v1035, 0
    %v1047 = vsel %vm110, %v1036, 0
    %1049 = vmatpush.msra.mxu0 0.0
    %1050 = vmatpush.msra.mxu0 0.0
    %1051 = vmatpush.msra.mxu0 0.0
    %1052 = vmatpush.msra.mxu0 0.0
    %1053 = vmatpush.msra.mxu0 0.0
    %1054 = vmatpush.msra.mxu0 0.0
    %1055 = vmatpush.msra.mxu0 0.0
    %1056 = vmatpush.msra.mxu0 0.0
    %1057 = vmatpush.msra.mxu0 0.0
    %1058 = vmatpush.msra.mxu0 0.0
    %1059 = vmatpush.msra.mxu0 0.0
    %1060 = vmatpush.msra.mxu0 0.0
    %1061 = vmatpush.msra.mxu0 0.0
    %1062 = vmatpush.msra.mxu0 0.0
    %1063 = vmatpush.msra.mxu0 %v1045
    %1064 = vmatpush.msra.mxu0 %v1033
    %1065 = vmatmul.f32.gmra.mxu0 %v1040
    %v1066 = vpop.f32.mrf.mxu0
    %v1067 = vadd.f32 %v993, %v1066
    %1068 = vmatmul.f32.gmra.mxu0 %v1043
    %v1069 = vpop.f32.mrf.mxu0
    %v1070 = vadd.f32 %v996, %v1069
    %1071 = vdwg.mxu0
    %1072 = vmatpush.msra.mxu0 0.0
    %1073 = vmatpush.msra.mxu0 0.0
    %1074 = vmatpush.msra.mxu0 0.0
    %1075 = vmatpush.msra.mxu0 0.0
    %1076 = vmatpush.msra.mxu0 0.0
    %1077 = vmatpush.msra.mxu0 0.0
    %1078 = vmatpush.msra.mxu0 0.0
    %1079 = vmatpush.msra.mxu0 0.0
    %1080 = vmatpush.msra.mxu0 0.0
    %1081 = vmatpush.msra.mxu0 0.0
    %1082 = vmatpush.msra.mxu0 0.0
    %1083 = vmatpush.msra.mxu0 0.0
    %1084 = vmatpush.msra.mxu0 0.0
    %1085 = vmatpush.msra.mxu0 0.0
    %1086 = vmatpush.msra.mxu0 %v1047
    %1087 = vmatpush.msra.mxu0 %v1034
    %1088 = vmatmul.f32.gmra.mxu0 %v1040
    %v1089 = vpop.f32.mrf.mxu0
    %v1090 = vadd.f32 %v1016, %v1089
    %1091 = vmatmul.f32.gmra.mxu0 %v1043
    %v1092 = vpop.f32.mrf.mxu0
    %v1093 = vadd.f32 %v1019, %v1092
    %1094 = vdwg.mxu0
    %s1095 = scalar_lea.vmem %s1, 176
    %v1096 = vld [vmem:[%s1095] sm:$0xff]
    %v1097 = vld [vmem:[%s1095 + $0x8] sm:$0x3]
    %1098 = vrot.lane.b32.xlu0 %v929, 9
    %v1099 = vpop.permute.xlu0 %1098
    %1100 = vrot.lane.b32.xlu0 %v930, 9
    %v1101 = vpop.permute.xlu0 %1100
    %1102 = vrot.lane.b32.xlu0 %v931, 9
    %v1103 = vpop.permute.xlu0 %1102
    %1104 = vrot.lane.b32.xlu0 %v932, 9
    %v1105 = vpop.permute.xlu0 %1104
    %1106 = vrot.lane.b32.xlu0 %v933, 9
    %v1107 = vpop.permute.xlu0 %1106
    %1108 = vrot.lane.b32.xlu0 %v934, 9
    %v1109 = vpop.permute.xlu0 %1108
    %v1110 = vsel %vm251, %v1099, %v1101
    %v1111 = vsel %vm251, %v1101, %v1103
    %v1112 = vsel %vm251, %v1105, %v1107
    %v1113 = vsel %vm251, %v1107, %v1109
    %v1117 = vsel %vm97, %v1096, 0
    %v1120 = vsel %vm97, %v1097, 0
    %v1122 = vsel %vm110, %v1112, 0
    %v1124 = vsel %vm110, %v1113, 0
    %1126 = vmatpush.msra.mxu0 0.0
    %1127 = vmatpush.msra.mxu0 0.0
    %1128 = vmatpush.msra.mxu0 0.0
    %1129 = vmatpush.msra.mxu0 0.0
    %1130 = vmatpush.msra.mxu0 0.0
    %1131 = vmatpush.msra.mxu0 0.0
    %1132 = vmatpush.msra.mxu0 0.0
    %1133 = vmatpush.msra.mxu0 0.0
    %1134 = vmatpush.msra.mxu0 0.0
    %1135 = vmatpush.msra.mxu0 0.0
    %1136 = vmatpush.msra.mxu0 0.0
    %1137 = vmatpush.msra.mxu0 0.0
    %1138 = vmatpush.msra.mxu0 0.0
    %1139 = vmatpush.msra.mxu0 0.0
    %1140 = vmatpush.msra.mxu0 %v1122
    %1141 = vmatpush.msra.mxu0 %v1110
    %1142 = vmatmul.f32.gmra.mxu0 %v1117
    %v1143 = vpop.f32.mrf.mxu0
    %v1144 = vadd.f32 0.0, %v1143
    %1145 = vmatmul.f32.gmra.mxu0 %v1120
    %v1146 = vpop.f32.mrf.mxu0
    %v1147 = vadd.f32 0.0, %v1146
    %1148 = vdwg.mxu0
    %1149 = vmatpush.msra.mxu0 0.0
    %1150 = vmatpush.msra.mxu0 0.0
    %1151 = vmatpush.msra.mxu0 0.0
    %1152 = vmatpush.msra.mxu0 0.0
    %1153 = vmatpush.msra.mxu0 0.0
    %1154 = vmatpush.msra.mxu0 0.0
    %1155 = vmatpush.msra.mxu0 0.0
    %1156 = vmatpush.msra.mxu0 0.0
    %1157 = vmatpush.msra.mxu0 0.0
    %1158 = vmatpush.msra.mxu0 0.0
    %1159 = vmatpush.msra.mxu0 0.0
    %1160 = vmatpush.msra.mxu0 0.0
    %1161 = vmatpush.msra.mxu0 0.0
    %1162 = vmatpush.msra.mxu0 0.0
    %1163 = vmatpush.msra.mxu0 %v1124
    %1164 = vmatpush.msra.mxu0 %v1111
    %1165 = vmatmul.f32.gmra.mxu0 %v1117
    %v1166 = vpop.f32.mrf.mxu0
    %v1167 = vadd.f32 0.0, %v1166
    %1168 = vmatmul.f32.gmra.mxu0 %v1120
    %v1169 = vpop.f32.mrf.mxu0
    %v1170 = vadd.f32 0.0, %v1169
    %1171 = vdwg.mxu0
    %v1172 = vadd.f32 %v1067, %v1144
    %v1173 = vadd.f32 %v1090, %v1167
    %v1174 = vadd.f32 %v1070, %v1147
    %v1175 = vadd.f32 %v1093, %v1170
    %s1176 = scalar_lea.vmem %s1, 192
    %v1177 = vld [vmem:[%s1176] sm:$0xff]
    %v1178 = vld [vmem:[%s1176 + $0x8] sm:$0x3]
    %1179 = vrot.lane.b32.xlu0 %v929, 1
    %v1180 = vpop.permute.xlu0 %1179
    %1181 = vrot.lane.b32.xlu0 %v930, 1
    %v1182 = vpop.permute.xlu0 %1181
    %1183 = vrot.lane.b32.xlu0 %v931, 1
    %v1184 = vpop.permute.xlu0 %1183
    %1185 = vrot.lane.b32.xlu0 %v932, 1
    %v1186 = vpop.permute.xlu0 %1185
    %1187 = vrot.lane.b32.xlu0 %v933, 1
    %v1188 = vpop.permute.xlu0 %1187
    %1189 = vrot.lane.b32.xlu0 %v934, 1
    %v1190 = vpop.permute.xlu0 %1189
    %v1191 = vsel %vm333, %v1180, %v1182
    %v1192 = vsel %vm333, %v1182, %v1184
    %v1193 = vsel %vm333, %v1186, %v1188
    %v1194 = vsel %vm333, %v1188, %v1190
    %v1198 = vsel %vm97, %v1177, 0
    %v1201 = vsel %vm97, %v1178, 0
    %v1203 = vsel %vm110, %v1193, 0
    %v1205 = vsel %vm110, %v1194, 0
    %1207 = vmatpush.msra.mxu0 0.0
    %1208 = vmatpush.msra.mxu0 0.0
    %1209 = vmatpush.msra.mxu0 0.0
    %1210 = vmatpush.msra.mxu0 0.0
    %1211 = vmatpush.msra.mxu0 0.0
    %1212 = vmatpush.msra.mxu0 0.0
    %1213 = vmatpush.msra.mxu0 0.0
    %1214 = vmatpush.msra.mxu0 0.0
    %1215 = vmatpush.msra.mxu0 0.0
    %1216 = vmatpush.msra.mxu0 0.0
    %1217 = vmatpush.msra.mxu0 0.0
    %1218 = vmatpush.msra.mxu0 0.0
    %1219 = vmatpush.msra.mxu0 0.0
    %1220 = vmatpush.msra.mxu0 0.0
    %1221 = vmatpush.msra.mxu0 %v1203
    %1222 = vmatpush.msra.mxu0 %v1191
    %1223 = vmatmul.f32.gmra.mxu0 %v1198
    %v1224 = vpop.f32.mrf.mxu0
    %v1225 = vadd.f32 0.0, %v1224
    %1226 = vmatmul.f32.gmra.mxu0 %v1201
    %v1227 = vpop.f32.mrf.mxu0
    %v1228 = vadd.f32 0.0, %v1227
    %1229 = vdwg.mxu0
    %1230 = vmatpush.msra.mxu0 0.0
    %1231 = vmatpush.msra.mxu0 0.0
    %1232 = vmatpush.msra.mxu0 0.0
    %1233 = vmatpush.msra.mxu0 0.0
    %1234 = vmatpush.msra.mxu0 0.0
    %1235 = vmatpush.msra.mxu0 0.0
    %1236 = vmatpush.msra.mxu0 0.0
    %1237 = vmatpush.msra.mxu0 0.0
    %1238 = vmatpush.msra.mxu0 0.0
    %1239 = vmatpush.msra.mxu0 0.0
    %1240 = vmatpush.msra.mxu0 0.0
    %1241 = vmatpush.msra.mxu0 0.0
    %1242 = vmatpush.msra.mxu0 0.0
    %1243 = vmatpush.msra.mxu0 0.0
    %1244 = vmatpush.msra.mxu0 %v1205
    %1245 = vmatpush.msra.mxu0 %v1192
    %1246 = vmatmul.f32.gmra.mxu0 %v1198
    %v1247 = vpop.f32.mrf.mxu0
    %v1248 = vadd.f32 0.0, %v1247
    %1249 = vmatmul.f32.gmra.mxu0 %v1201
    %v1250 = vpop.f32.mrf.mxu0
    %v1251 = vadd.f32 0.0, %v1250
    %1252 = vdwg.mxu0
    %v1253 = vadd.f32 %v1172, %v1225
    %v1254 = vadd.f32 %v1173, %v1248
    %v1255 = vadd.f32 %v1174, %v1228
    %v1256 = vadd.f32 %v1175, %v1251
    %s1257 = scalar_lea.vmem %s1, 208
    %v1258 = vld [vmem:[%s1257] sm:$0xff]
    %v1259 = vld [vmem:[%s1257 + $0x8] sm:$0x3]
    %v1261 = vsel %vm97, %v1258, 0
    %v1264 = vsel %vm97, %v1259, 0
    %v1266 = vsel %vm110, %v933, 0
    %v1268 = vsel %vm110, %v934, 0
    %1270 = vmatpush.msra.mxu0 0.0
    %1271 = vmatpush.msra.mxu0 0.0
    %1272 = vmatpush.msra.mxu0 0.0
    %1273 = vmatpush.msra.mxu0 0.0
    %1274 = vmatpush.msra.mxu0 0.0
    %1275 = vmatpush.msra.mxu0 0.0
    %1276 = vmatpush.msra.mxu0 0.0
    %1277 = vmatpush.msra.mxu0 0.0
    %1278 = vmatpush.msra.mxu0 0.0
    %1279 = vmatpush.msra.mxu0 0.0
    %1280 = vmatpush.msra.mxu0 0.0
    %1281 = vmatpush.msra.mxu0 0.0
    %1282 = vmatpush.msra.mxu0 0.0
    %1283 = vmatpush.msra.mxu0 0.0
    %1284 = vmatpush.msra.mxu0 %v1266
    %1285 = vmatpush.msra.mxu0 %v930
    %1286 = vmatmul.f32.gmra.mxu0 %v1261
    %v1287 = vpop.f32.mrf.mxu0
    %v1288 = vadd.f32 0.0, %v1287
    %1289 = vmatmul.f32.gmra.mxu0 %v1264
    %v1290 = vpop.f32.mrf.mxu0
    %v1291 = vadd.f32 0.0, %v1290
    %1292 = vdwg.mxu0
    %1293 = vmatpush.msra.mxu0 0.0
    %1294 = vmatpush.msra.mxu0 0.0
    %1295 = vmatpush.msra.mxu0 0.0
    %1296 = vmatpush.msra.mxu0 0.0
    %1297 = vmatpush.msra.mxu0 0.0
    %1298 = vmatpush.msra.mxu0 0.0
    %1299 = vmatpush.msra.mxu0 0.0
    %1300 = vmatpush.msra.mxu0 0.0
    %1301 = vmatpush.msra.mxu0 0.0
    %1302 = vmatpush.msra.mxu0 0.0
    %1303 = vmatpush.msra.mxu0 0.0
    %1304 = vmatpush.msra.mxu0 0.0
    %1305 = vmatpush.msra.mxu0 0.0
    %1306 = vmatpush.msra.mxu0 0.0
    %1307 = vmatpush.msra.mxu0 %v1268
    %1308 = vmatpush.msra.mxu0 %v931
    %1309 = vmatmul.f32.gmra.mxu0 %v1261
    %v1310 = vpop.f32.mrf.mxu0
    %v1311 = vadd.f32 0.0, %v1310
    %1312 = vmatmul.f32.gmra.mxu0 %v1264
    %v1313 = vpop.f32.mrf.mxu0
    %v1314 = vadd.f32 0.0, %v1313
    %1315 = vdwg.mxu0
    %v1316 = vadd.f32 %v1253, %v1288
    %v1317 = vadd.f32 %v1254, %v1311
    %v1318 = vadd.f32 %v1255, %v1291
    %v1319 = vadd.f32 %v1256, %v1314
    %v1320 = vld [vmem:[#allocation2 + $0x8] sm:$0xff]
    %v1321 = vld [vmem:[#allocation2 + $0x10] sm:$0xff]
    %v1322 = vld [vmem:[#allocation2 + $0x18] sm:$0xff]
    %v1323 = vld [vmem:[#allocation2 + $0x28] sm:$0x3]
    %v1324 = vld [vmem:[#allocation2 + $0x30] sm:$0x3]
    %v1325 = vld [vmem:[#allocation2 + $0x38] sm:$0x3]
    %s1326 = scalar_lea.vmem %s1, 224
    %v1327 = vld [vmem:[%s1326] sm:$0xff]
    %v1328 = vld [vmem:[%s1326 + $0x8] sm:$0x3]
    %1335 = vrot.lane.b32.xlu0 %v1320, 127
    %v1336 = vpop.permute.xlu0 %1335
    %1337 = vrot.lane.b32.xlu0 %v1321, 127
    %v1338 = vpop.permute.xlu0 %1337
    %1339 = vrot.lane.b32.xlu0 %v1322, 127
    %v1340 = vpop.permute.xlu0 %1339
    %1341 = vrot.lane.b32.xlu0 %v1323, 127
    %v1342 = vpop.permute.xlu0 %1341
    %1343 = vrot.lane.b32.xlu0 %v1324, 127
    %v1344 = vpop.permute.xlu0 %1343
    %1345 = vrot.lane.b32.xlu0 %v1325, 127
    %v1346 = vpop.permute.xlu0 %1345
    %v1347 = vsel %vm490, %v1336, %v1338
    %v1348 = vsel %vm490, %v1338, %v1340
    %v1349 = vsel %vm490, %v1342, %v1344
    %v1350 = vsel %vm490, %v1344, %v1346
    %v1354 = vsel %vm97, %v1327, 0
    %v1357 = vsel %vm97, %v1328, 0
    %v1359 = vsel %vm110, %v1349, 0
    %v1361 = vsel %vm110, %v1350, 0
    %1363 = vmatpush.msra.mxu0 0.0
    %1364 = vmatpush.msra.mxu0 0.0
    %1365 = vmatpush.msra.mxu0 0.0
    %1366 = vmatpush.msra.mxu0 0.0
    %1367 = vmatpush.msra.mxu0 0.0
    %1368 = vmatpush.msra.mxu0 0.0
    %1369 = vmatpush.msra.mxu0 0.0
    %1370 = vmatpush.msra.mxu0 0.0
    %1371 = vmatpush.msra.mxu0 0.0
    %1372 = vmatpush.msra.mxu0 0.0
    %1373 = vmatpush.msra.mxu0 0.0
    %1374 = vmatpush.msra.mxu0 0.0
    %1375 = vmatpush.msra.mxu0 0.0
    %1376 = vmatpush.msra.mxu0 0.0
    %1377 = vmatpush.msra.mxu0 %v1359
    %1378 = vmatpush.msra.mxu0 %v1347
    %1379 = vmatmul.f32.gmra.mxu0 %v1354
    %v1380 = vpop.f32.mrf.mxu0
    %v1381 = vadd.f32 0.0, %v1380
    %1382 = vmatmul.f32.gmra.mxu0 %v1357
    %v1383 = vpop.f32.mrf.mxu0
    %v1384 = vadd.f32 0.0, %v1383
    %1385 = vdwg.mxu0
    %1386 = vmatpush.msra.mxu0 0.0
    %1387 = vmatpush.msra.mxu0 0.0
    %1388 = vmatpush.msra.mxu0 0.0
    %1389 = vmatpush.msra.mxu0 0.0
    %1390 = vmatpush.msra.mxu0 0.0
    %1391 = vmatpush.msra.mxu0 0.0
    %1392 = vmatpush.msra.mxu0 0.0
    %1393 = vmatpush.msra.mxu0 0.0
    %1394 = vmatpush.msra.mxu0 0.0
    %1395 = vmatpush.msra.mxu0 0.0
    %1396 = vmatpush.msra.mxu0 0.0
    %1397 = vmatpush.msra.mxu0 0.0
    %1398 = vmatpush.msra.mxu0 0.0
    %1399 = vmatpush.msra.mxu0 0.0
    %1400 = vmatpush.msra.mxu0 %v1361
    %1401 = vmatpush.msra.mxu0 %v1348
    %1402 = vmatmul.f32.gmra.mxu0 %v1354
    %v1403 = vpop.f32.mrf.mxu0
    %v1404 = vadd.f32 0.0, %v1403
    %1405 = vmatmul.f32.gmra.mxu0 %v1357
    %v1406 = vpop.f32.mrf.mxu0
    %v1407 = vadd.f32 0.0, %v1406
    %1408 = vdwg.mxu0
    %v1409 = vadd.f32 %v1316, %v1381
    %v1410 = vadd.f32 %v1317, %v1404
    %v1411 = vadd.f32 %v1318, %v1384
    %v1412 = vadd.f32 %v1319, %v1407
    %s1413 = scalar_lea.vmem %s1, 240
    %v1414 = vld [vmem:[%s1413] sm:$0xff]
    %v1415 = vld [vmem:[%s1413 + $0x8] sm:$0x3]
    %1416 = vrot.lane.b32.xlu0 %v1320, 119
    %v1417 = vpop.permute.xlu0 %1416
    %1418 = vrot.lane.b32.xlu0 %v1321, 119
    %v1419 = vpop.permute.xlu0 %1418
    %1420 = vrot.lane.b32.xlu0 %v1322, 119
    %v1421 = vpop.permute.xlu0 %1420
    %1422 = vrot.lane.b32.xlu0 %v1323, 119
    %v1423 = vpop.permute.xlu0 %1422
    %1424 = vrot.lane.b32.xlu0 %v1324, 119
    %v1425 = vpop.permute.xlu0 %1424
    %1426 = vrot.lane.b32.xlu0 %v1325, 119
    %v1427 = vpop.permute.xlu0 %1426
    %v1428 = vsel %vm572, %v1417, %v1419
    %v1429 = vsel %vm572, %v1419, %v1421
    %v1430 = vsel %vm572, %v1423, %v1425
    %v1431 = vsel %vm572, %v1425, %v1427
    %v1435 = vsel %vm97, %v1414, 0
    %v1438 = vsel %vm97, %v1415, 0
    %v1440 = vsel %vm110, %v1430, 0
    %v1442 = vsel %vm110, %v1431, 0
    %1444 = vmatpush.msra.mxu0 0.0
    %1445 = vmatpush.msra.mxu0 0.0
    %1446 = vmatpush.msra.mxu0 0.0
    %1447 = vmatpush.msra.mxu0 0.0
    %1448 = vmatpush.msra.mxu0 0.0
    %1449 = vmatpush.msra.mxu0 0.0
    %1450 = vmatpush.msra.mxu0 0.0
    %1451 = vmatpush.msra.mxu0 0.0
    %1452 = vmatpush.msra.mxu0 0.0
    %1453 = vmatpush.msra.mxu0 0.0
    %1454 = vmatpush.msra.mxu0 0.0
    %1455 = vmatpush.msra.mxu0 0.0
    %1456 = vmatpush.msra.mxu0 0.0
    %1457 = vmatpush.msra.mxu0 0.0
    %1458 = vmatpush.msra.mxu0 %v1440
    %1459 = vmatpush.msra.mxu0 %v1428
    %1460 = vmatmul.f32.gmra.mxu0 %v1435
    %v1461 = vpop.f32.mrf.mxu0
    %v1462 = vadd.f32 0.0, %v1461
    %1463 = vmatmul.f32.gmra.mxu0 %v1438
    %v1464 = vpop.f32.mrf.mxu0
    %v1465 = vadd.f32 0.0, %v1464
    %1466 = vdwg.mxu0
    %1467 = vmatpush.msra.mxu0 0.0
    %1468 = vmatpush.msra.mxu0 0.0
    %1469 = vmatpush.msra.mxu0 0.0
    %1470 = vmatpush.msra.mxu0 0.0
    %1471 = vmatpush.msra.mxu0 0.0
    %1472 = vmatpush.msra.mxu0 0.0
    %1473 = vmatpush.msra.mxu0 0.0
    %1474 = vmatpush.msra.mxu0 0.0
    %1475 = vmatpush.msra.mxu0 0.0
    %1476 = vmatpush.msra.mxu0 0.0
    %1477 = vmatpush.msra.mxu0 0.0
    %1478 = vmatpush.msra.mxu0 0.0
    %1479 = vmatpush.msra.mxu0 0.0
    %1480 = vmatpush.msra.mxu0 0.0
    %1481 = vmatpush.msra.mxu0 %v1442
    %1482 = vmatpush.msra.mxu0 %v1429
    %1483 = vmatmul.f32.gmra.mxu0 %v1435
    %v1484 = vpop.f32.mrf.mxu0
    %v1485 = vadd.f32 0.0, %v1484
    %1486 = vmatmul.f32.gmra.mxu0 %v1438
    %v1487 = vpop.f32.mrf.mxu0
    %v1488 = vadd.f32 0.0, %v1487
    %1489 = vdwg.mxu0
    %v1490 = vadd.f32 %v1409, %v1462
    %v1491 = vadd.f32 %v1410, %v1485
    %v1492 = vadd.f32 %v1411, %v1465
    %v1493 = vadd.f32 %v1412, %v1488
    %s1494 = scalar_lea.vmem %s1, 256
    %v1495 = vld [vmem:[%s1494] sm:$0xff]
    %v1496 = vld [vmem:[%s1494 + $0x8] sm:$0x3]
    %1497 = vrot.lane.b32.xlu0 %v1320, 118
    %v1498 = vpop.permute.xlu0 %1497
    %1499 = vrot.lane.b32.xlu0 %v1321, 118
    %v1500 = vpop.permute.xlu0 %1499
    %1501 = vrot.lane.b32.xlu0 %v1322, 118
    %v1502 = vpop.permute.xlu0 %1501
    %1503 = vrot.lane.b32.xlu0 %v1323, 118
    %v1504 = vpop.permute.xlu0 %1503
    %1505 = vrot.lane.b32.xlu0 %v1324, 118
    %v1506 = vpop.permute.xlu0 %1505
    %1507 = vrot.lane.b32.xlu0 %v1325, 118
    %v1508 = vpop.permute.xlu0 %1507
    %v1509 = vsel %vm654, %v1498, %v1500
    %v1510 = vsel %vm654, %v1500, %v1502
    %v1511 = vsel %vm654, %v1504, %v1506
    %v1512 = vsel %vm654, %v1506, %v1508
    %v1516 = vsel %vm97, %v1495, 0
    %v1519 = vsel %vm97, %v1496, 0
    %v1521 = vsel %vm110, %v1511, 0
    %v1523 = vsel %vm110, %v1512, 0
    %1525 = vmatpush.msra.mxu0 0.0
    %1526 = vmatpush.msra.mxu0 0.0
    %1527 = vmatpush.msra.mxu0 0.0
    %1528 = vmatpush.msra.mxu0 0.0
    %1529 = vmatpush.msra.mxu0 0.0
    %1530 = vmatpush.msra.mxu0 0.0
    %1531 = vmatpush.msra.mxu0 0.0
    %1532 = vmatpush.msra.mxu0 0.0
    %1533 = vmatpush.msra.mxu0 0.0
    %1534 = vmatpush.msra.mxu0 0.0
    %1535 = vmatpush.msra.mxu0 0.0
    %1536 = vmatpush.msra.mxu0 0.0
    %1537 = vmatpush.msra.mxu0 0.0
    %1538 = vmatpush.msra.mxu0 0.0
    %1539 = vmatpush.msra.mxu0 %v1521
    %1540 = vmatpush.msra.mxu0 %v1509
    %1541 = vmatmul.f32.gmra.mxu0 %v1516
    %v1542 = vpop.f32.mrf.mxu0
    %v1543 = vadd.f32 0.0, %v1542
    %1544 = vmatmul.f32.gmra.mxu0 %v1519
    %v1545 = vpop.f32.mrf.mxu0
    %v1546 = vadd.f32 0.0, %v1545
    %1547 = vdwg.mxu0
    %1548 = vmatpush.msra.mxu0 0.0
    %1549 = vmatpush.msra.mxu0 0.0
    %1550 = vmatpush.msra.mxu0 0.0
    %1551 = vmatpush.msra.mxu0 0.0
    %1552 = vmatpush.msra.mxu0 0.0
    %1553 = vmatpush.msra.mxu0 0.0
    %1554 = vmatpush.msra.mxu0 0.0
    %1555 = vmatpush.msra.mxu0 0.0
    %1556 = vmatpush.msra.mxu0 0.0
    %1557 = vmatpush.msra.mxu0 0.0
    %1558 = vmatpush.msra.mxu0 0.0
    %1559 = vmatpush.msra.mxu0 0.0
    %1560 = vmatpush.msra.mxu0 0.0
    %1561 = vmatpush.msra.mxu0 0.0
    %1562 = vmatpush.msra.mxu0 %v1523
    %1563 = vmatpush.msra.mxu0 %v1510
    %1564 = vmatmul.f32.gmra.mxu0 %v1516
    %v1565 = vpop.f32.mrf.mxu0
    %v1566 = vadd.f32 0.0, %v1565
    %1567 = vmatmul.f32.gmra.mxu0 %v1519
    %v1568 = vpop.f32.mrf.mxu0
    %v1569 = vadd.f32 0.0, %v1568
    %1570 = vdwg.mxu0
    %v1571 = vadd.f32 %v1490, %v1543
    %v1572 = vadd.f32 %v1491, %v1566
    %v1573 = vadd.f32 %v1492, %v1546
    %v1574 = vadd.f32 %v1493, %v1569
    %s1575 = scalar_lea.vmem %s1, 272
    %v1576 = vld [vmem:[%s1575] sm:$0xff]
    %v1577 = vld [vmem:[%s1575 + $0x8] sm:$0x3]
    %1578 = vrot.lane.b32.xlu0 %v1320, 117
    %v1579 = vpop.permute.xlu0 %1578
    %1580 = vrot.lane.b32.xlu0 %v1321, 117
    %v1581 = vpop.permute.xlu0 %1580
    %1582 = vrot.lane.b32.xlu0 %v1322, 117
    %v1583 = vpop.permute.xlu0 %1582
    %1584 = vrot.lane.b32.xlu0 %v1323, 117
    %v1585 = vpop.permute.xlu0 %1584
    %1586 = vrot.lane.b32.xlu0 %v1324, 117
    %v1587 = vpop.permute.xlu0 %1586
    %1588 = vrot.lane.b32.xlu0 %v1325, 117
    %v1589 = vpop.permute.xlu0 %1588
    %v1590 = vsel %vm736, %v1579, %v1581
    %v1591 = vsel %vm736, %v1581, %v1583
    %v1592 = vsel %vm736, %v1585, %v1587
    %v1593 = vsel %vm736, %v1587, %v1589
    %v1597 = vsel %vm97, %v1576, 0
    %v1600 = vsel %vm97, %v1577, 0
    %v1602 = vsel %vm110, %v1592, 0
    %v1604 = vsel %vm110, %v1593, 0
    %1606 = vmatpush.msra.mxu0 0.0
    %1607 = vmatpush.msra.mxu0 0.0
    %1608 = vmatpush.msra.mxu0 0.0
    %1609 = vmatpush.msra.mxu0 0.0
    %1610 = vmatpush.msra.mxu0 0.0
    %1611 = vmatpush.msra.mxu0 0.0
    %1612 = vmatpush.msra.mxu0 0.0
    %1613 = vmatpush.msra.mxu0 0.0
    %1614 = vmatpush.msra.mxu0 0.0
    %1615 = vmatpush.msra.mxu0 0.0
    %1616 = vmatpush.msra.mxu0 0.0
    %1617 = vmatpush.msra.mxu0 0.0
    %1618 = vmatpush.msra.mxu0 0.0
    %1619 = vmatpush.msra.mxu0 0.0
    %1620 = vmatpush.msra.mxu0 %v1602
    %1621 = vmatpush.msra.mxu0 %v1590
    %1622 = vmatmul.f32.gmra.mxu0 %v1597
    %v1623 = vpop.f32.mrf.mxu0
    %v1624 = vadd.f32 0.0, %v1623
    %1625 = vmatmul.f32.gmra.mxu0 %v1600
    %v1626 = vpop.f32.mrf.mxu0
    %v1627 = vadd.f32 0.0, %v1626
    %1628 = vdwg.mxu0
    %1629 = vmatpush.msra.mxu0 0.0
    %1630 = vmatpush.msra.mxu0 0.0
    %1631 = vmatpush.msra.mxu0 0.0
    %1632 = vmatpush.msra.mxu0 0.0
    %1633 = vmatpush.msra.mxu0 0.0
    %1634 = vmatpush.msra.mxu0 0.0
    %1635 = vmatpush.msra.mxu0 0.0
    %1636 = vmatpush.msra.mxu0 0.0
    %1637 = vmatpush.msra.mxu0 0.0
    %1638 = vmatpush.msra.mxu0 0.0
    %1639 = vmatpush.msra.mxu0 0.0
    %1640 = vmatpush.msra.mxu0 0.0
    %1641 = vmatpush.msra.mxu0 0.0
    %1642 = vmatpush.msra.mxu0 0.0
    %1643 = vmatpush.msra.mxu0 %v1604
    %1644 = vmatpush.msra.mxu0 %v1591
    %1645 = vmatmul.f32.gmra.mxu0 %v1597
    %v1646 = vpop.f32.mrf.mxu0
    %v1647 = vadd.f32 0.0, %v1646
    %1648 = vmatmul.f32.gmra.mxu0 %v1600
    %v1649 = vpop.f32.mrf.mxu0
    %v1650 = vadd.f32 0.0, %v1649
    %1651 = vdwg.mxu0
    %v1652 = vadd.f32 %v1571, %v1624
    %v1653 = vadd.f32 %v1572, %v1647
    %v1654 = vadd.f32 %v1573, %v1627
    %v1655 = vadd.f32 %v1574, %v1650
    %1657 = vset.pattern.permute.xlu0 0
    %1658 = vperm.xlu0 %1657, %v923
    %v1659 = vpop.permute.xlu0 %1658
    %1662 = vset.pattern.permute.xlu0 0
    %1663 = vperm.xlu0 %1662, %v924
    %v1664 = vpop.permute.xlu0 %1663
    %v1666 = vadd.f32 %v1652, %v1659
    %v1667 = vadd.f32 %v1653, %v1659
    %v1668 = vadd.f32 %v1654, %v1664
    %v1669 = vadd.f32 %v1655, %v1664
    %s1670 = scalar_lea.vmem %s3, 16
    %v1671 = vld [vmem:[%s1670] sm:$0xff]
    %v1672 = vld [vmem:[%s1670 + $0x8] sm:$0x3]
    %s1673 = scalar_lea.vmem %s4, 16
    %v1674 = vld [vmem:[%s1673] sm:$0xff]
    %v1675 = vld [vmem:[%s1673 + $0x8] sm:$0x3]
    %v1676 = vmul.f32 %v1666, %v822
    %v1677 = vmul.f32 %v1667, %v823
    %v1678 = vmul.f32 %v1668, %v822
    %v1679 = vmul.f32 %v1669, %v823
    %v1680 = vadd.f32 %v1676, %v1677
    %1681 = vadd.xlane.f32.xlu0 %v1680
    %v1682 = vpop.xlane.xlu0 %1681
    %v1683 = vsel %vm110, %v1678, 0.0
    %v1684 = vsel %vm110, %v1679, 0.0
    %v1685 = vadd.f32 %v1683, %v1684
    %1686 = vadd.xlane.f32.xlu0 %v1685
    %v1687 = vpop.xlane.xlu0 %1686
    %v1688 = vmul.f32 %v1676, %v1676
    %v1689 = vmul.f32 %v1677, %v1677
    %v1690 = vmul.f32 %v1678, %v1678
    %v1691 = vmul.f32 %v1679, %v1679
    %v1692 = vadd.f32 %v1688, %v1689
    %1693 = vadd.xlane.f32.xlu0 %v1692
    %v1694 = vpop.xlane.xlu0 %1693
    %v1695 = vsel %vm110, %v1690, 0.0
    %v1696 = vsel %vm110, %v1691, 0.0
    %v1697 = vadd.f32 %v1695, %v1696
    %1698 = vadd.xlane.f32.xlu0 %v1697
    %v1699 = vpop.xlane.xlu0 %1698
    %v1700 = vmul.f32 %v1682, 0.0078125
    %v1701 = vmul.f32 %v1687, 0.0078125
    %v1702 = vmul.f32 %v1694, 0.0078125
    %v1703 = vmul.f32 %v1699, 0.0078125
    %v1704 = vmul.f32 %v1700, %v1700
    %v1705 = vmul.f32 %v1701, %v1701
    %v1706 = vsub.f32 %v1702, %v1704
    %v1707 = vsub.f32 %v1703, %v1705
    %v1708 = vadd.f32 %v1706, 1e-05
    %v1709 = vadd.f32 %v1707, 1e-05
    %v1710 = vrsqrt.pop %v1708
    %v1711 = vmul.f32 %v1710, %v1708
    %v1712 = vmul.f32 %v1711, %v1710
    %v1713 = vmul.f32 0.5, %v1712
    %v1714 = vsub.f32 1.5, %v1713
    %v1715 = vmul.f32 %v1710, %v1714
    %vm1716 = vweird.f32 %v1708
    %vm1717 = vweird.f32 %v1710
    %vm1718 = vmor %vm1716, %vm1717
    %v1719 = vsel %vm1718, %v1710, %v1715
    %v1720 = vrsqrt.pop %v1709
    %v1721 = vmul.f32 %v1720, %v1709
    %v1722 = vmul.f32 %v1721, %v1720
    %v1723 = vmul.f32 0.5, %v1722
    %v1724 = vsub.f32 1.5, %v1723
    %v1725 = vmul.f32 %v1720, %v1724
    %vm1726 = vweird.f32 %v1709
    %vm1727 = vweird.f32 %v1720
    %vm1728 = vmor %vm1726, %vm1727
    %v1729 = vsel %vm1728, %v1720, %v1725
    %v1730 = vmul.f32 %v1671, %v1719
    %v1731 = vmul.f32 %v1672, %v1729
    %v1732 = vmul.f32 %v1730, %v1700
    %v1733 = vmul.f32 %v1731, %v1701
    %v1734 = vsub.f32 %v1674, %v1732
    %v1735 = vsub.f32 %v1675, %v1733
    %1737 = vset.pattern.permute.xlu0 0
    %1738 = vperm.xlu0 %1737, %v1730
    %v1739 = vpop.permute.xlu0 %1738
    %1742 = vset.pattern.permute.xlu0 0
    %1743 = vperm.xlu0 %1742, %v1731
    %v1744 = vpop.permute.xlu0 %1743
    %v1746 = vmul.f32 %v1739, %v1666
    %v1747 = vmul.f32 %v1739, %v1667
    %v1748 = vmul.f32 %v1744, %v1668
    %v1749 = vmul.f32 %v1744, %v1669
    %1751 = vset.pattern.permute.xlu0 0
    %1752 = vperm.xlu0 %1751, %v1734
    %v1753 = vpop.permute.xlu0 %1752
    %1756 = vset.pattern.permute.xlu0 0
    %1757 = vperm.xlu0 %1756, %v1735
    %v1758 = vpop.permute.xlu0 %1757
    %v1760 = vadd.f32 %v1746, %v1753
    %v1761 = vadd.f32 %v1747, %v1753
    %v1762 = vadd.f32 %v1748, %v1758
    %v1763 = vadd.f32 %v1749, %v1758
    %v1764 = vmax.f32 %v1760, 0.0
    %v1765 = vmax.f32 %v1761, 0.0
    %v1766 = vmax.f32 %v1762, 0.0
    %v1767 = vmax.f32 %v1763, 0.0
    %v1768 = vmul.f32 %v1764, %v822
    %v1769 = vmul.f32 %v1765, %v823
    %v1770 = vmul.f32 %v1766, %v822
    %v1771 = vmul.f32 %v1767, %v823
    %s1772 = scalar_lea.vmem %s2, 32
    %v1773 = vld [vmem:[%s1772] sm:$0xff]
    %v1774 = vld [vmem:[%s1772 + $0x8] sm:$0x3]
    %1775 = vst [vmem:[#allocation2 + $0x8] sm:$0xff] %v1768
    %1776 = vst [vmem:[#allocation2 + $0x10] sm:$0xff] %v1769
    %1777 = vst [vmem:[#allocation2 + $0x28] sm:$0x3] %v1770
    %1778 = vst [vmem:[#allocation2 + $0x30] sm:$0x3] %v1771
    %v1779 = vld [vmem:[#allocation2] sm:$0xff]
    %v1780 = vld [vmem:[#allocation2 + $0x8] sm:$0xff]
    %v1781 = vld [vmem:[#allocation2 + $0x10] sm:$0xff]
    %v1782 = vld [vmem:[#allocation2 + $0x20] sm:$0x3]
    %v1783 = vld [vmem:[#allocation2 + $0x28] sm:$0x3]
    %v1784 = vld [vmem:[#allocation2 + $0x30] sm:$0x3]
    %s1785 = scalar_lea.vmem %s1, 288
    %v1786 = vld [vmem:[%s1785] sm:$0xff]
    %v1787 = vld [vmem:[%s1785 + $0x8] sm:$0x3]
    %s1788 = scalar_lea.vmem %s1, 304
    %v1789 = vld [vmem:[%s1788] sm:$0xff]
    %v1790 = vld [vmem:[%s1788 + $0x8] sm:$0x3]
    %1797 = vrot.lane.b32.xlu0 %v1779, 10
    %v1798 = vpop.permute.xlu0 %1797
    %1799 = vrot.lane.b32.xlu0 %v1780, 10
    %v1800 = vpop.permute.xlu0 %1799
    %1801 = vrot.lane.b32.xlu0 %v1781, 10
    %v1802 = vpop.permute.xlu0 %1801
    %1803 = vrot.lane.b32.xlu0 %v1782, 10
    %v1804 = vpop.permute.xlu0 %1803
    %1805 = vrot.lane.b32.xlu0 %v1783, 10
    %v1806 = vpop.permute.xlu0 %1805
    %1807 = vrot.lane.b32.xlu0 %v1784, 10
    %v1808 = vpop.permute.xlu0 %1807
    %v1809 = vsel %vm97, %v1798, %v1800
    %v1810 = vsel %vm97, %v1800, %v1802
    %v1811 = vsel %vm97, %v1804, %v1806
    %v1812 = vsel %vm97, %v1806, %v1808
    %v1816 = vsel %vm97, %v1789, 0
    %v1819 = vsel %vm97, %v1790, 0
    %v1821 = vsel %vm110, %v1811, 0
    %v1823 = vsel %vm110, %v1812, 0
    %1825 = vmatpush.msra.mxu0 0.0
    %1826 = vmatpush.msra.mxu0 0.0
    %1827 = vmatpush.msra.mxu0 0.0
    %1828 = vmatpush.msra.mxu0 0.0
    %1829 = vmatpush.msra.mxu0 0.0
    %1830 = vmatpush.msra.mxu0 0.0
    %1831 = vmatpush.msra.mxu0 0.0
    %1832 = vmatpush.msra.mxu0 0.0
    %1833 = vmatpush.msra.mxu0 0.0
    %1834 = vmatpush.msra.mxu0 0.0
    %1835 = vmatpush.msra.mxu0 0.0
    %1836 = vmatpush.msra.mxu0 0.0
    %1837 = vmatpush.msra.mxu0 0.0
    %1838 = vmatpush.msra.mxu0 0.0
    %1839 = vmatpush.msra.mxu0 %v1821
    %1840 = vmatpush.msra.mxu0 %v1809
    %1841 = vmatmul.f32.gmra.mxu0 %v1816
    %v1842 = vpop.f32.mrf.mxu0
    %v1843 = vadd.f32 0.0, %v1842
    %1844 = vmatmul.f32.gmra.mxu0 %v1819
    %v1845 = vpop.f32.mrf.mxu0
    %v1846 = vadd.f32 0.0, %v1845
    %1847 = vdwg.mxu0
    %1848 = vmatpush.msra.mxu0 0.0
    %1849 = vmatpush.msra.mxu0 0.0
    %1850 = vmatpush.msra.mxu0 0.0
    %1851 = vmatpush.msra.mxu0 0.0
    %1852 = vmatpush.msra.mxu0 0.0
    %1853 = vmatpush.msra.mxu0 0.0
    %1854 = vmatpush.msra.mxu0 0.0
    %1855 = vmatpush.msra.mxu0 0.0
    %1856 = vmatpush.msra.mxu0 0.0
    %1857 = vmatpush.msra.mxu0 0.0
    %1858 = vmatpush.msra.mxu0 0.0
    %1859 = vmatpush.msra.mxu0 0.0
    %1860 = vmatpush.msra.mxu0 0.0
    %1861 = vmatpush.msra.mxu0 0.0
    %1862 = vmatpush.msra.mxu0 %v1823
    %1863 = vmatpush.msra.mxu0 %v1810
    %1864 = vmatmul.f32.gmra.mxu0 %v1816
    %v1865 = vpop.f32.mrf.mxu0
    %v1866 = vadd.f32 0.0, %v1865
    %1867 = vmatmul.f32.gmra.mxu0 %v1819
    %v1868 = vpop.f32.mrf.mxu0
    %v1869 = vadd.f32 0.0, %v1868
    %1870 = vdwg.mxu0
    %1871 = vrot.lane.b32.xlu0 %v1779, 11
    %v1872 = vpop.permute.xlu0 %1871
    %1873 = vrot.lane.b32.xlu0 %v1780, 11
    %v1874 = vpop.permute.xlu0 %1873
    %1875 = vrot.lane.b32.xlu0 %v1781, 11
    %v1876 = vpop.permute.xlu0 %1875
    %1877 = vrot.lane.b32.xlu0 %v1782, 11
    %v1878 = vpop.permute.xlu0 %1877
    %1879 = vrot.lane.b32.xlu0 %v1783, 11
    %v1880 = vpop.permute.xlu0 %1879
    %1881 = vrot.lane.b32.xlu0 %v1784, 11
    %v1882 = vpop.permute.xlu0 %1881
    %v1883 = vsel %vm173, %v1872, %v1874
    %v1884 = vsel %vm173, %v1874, %v1876
    %v1885 = vsel %vm173, %v1878, %v1880
    %v1886 = vsel %vm173, %v1880, %v1882
    %v1890 = vsel %vm97, %v1786, 0
    %v1893 = vsel %vm97, %v1787, 0
    %v1895 = vsel %vm110, %v1885, 0
    %v1897 = vsel %vm110, %v1886, 0
    %1899 = vmatpush.msra.mxu0 0.0
    %1900 = vmatpush.msra.mxu0 0.0
    %1901 = vmatpush.msra.mxu0 0.0
    %1902 = vmatpush.msra.mxu0 0.0
    %1903 = vmatpush.msra.mxu0 0.0
    %1904 = vmatpush.msra.mxu0 0.0
    %1905 = vmatpush.msra.mxu0 0.0
    %1906 = vmatpush.msra.mxu0 0.0
    %1907 = vmatpush.msra.mxu0 0.0
    %1908 = vmatpush.msra.mxu0 0.0
    %1909 = vmatpush.msra.mxu0 0.0
    %1910 = vmatpush.msra.mxu0 0.0
    %1911 = vmatpush.msra.mxu0 0.0
    %1912 = vmatpush.msra.mxu0 0.0
    %1913 = vmatpush.msra.mxu0 %v1895
    %1914 = vmatpush.msra.mxu0 %v1883
    %1915 = vmatmul.f32.gmra.mxu0 %v1890
    %v1916 = vpop.f32.mrf.mxu0
    %v1917 = vadd.f32 %v1843, %v1916
    %1918 = vmatmul.f32.gmra.mxu0 %v1893
    %v1919 = vpop.f32.mrf.mxu0
    %v1920 = vadd.f32 %v1846, %v1919
    %1921 = vdwg.mxu0
    %1922 = vmatpush.msra.mxu0 0.0
    %1923 = vmatpush.msra.mxu0 0.0
    %1924 = vmatpush.msra.mxu0 0.0
    %1925 = vmatpush.msra.mxu0 0.0
    %1926 = vmatpush.msra.mxu0 0.0
    %1927 = vmatpush.msra.mxu0 0.0
    %1928 = vmatpush.msra.mxu0 0.0
    %1929 = vmatpush.msra.mxu0 0.0
    %1930 = vmatpush.msra.mxu0 0.0
    %1931 = vmatpush.msra.mxu0 0.0
    %1932 = vmatpush.msra.mxu0 0.0
    %1933 = vmatpush.msra.mxu0 0.0
    %1934 = vmatpush.msra.mxu0 0.0
    %1935 = vmatpush.msra.mxu0 0.0
    %1936 = vmatpush.msra.mxu0 %v1897
    %1937 = vmatpush.msra.mxu0 %v1884
    %1938 = vmatmul.f32.gmra.mxu0 %v1890
    %v1939 = vpop.f32.mrf.mxu0
    %v1940 = vadd.f32 %v1866, %v1939
    %1941 = vmatmul.f32.gmra.mxu0 %v1893
    %v1942 = vpop.f32.mrf.mxu0
    %v1943 = vadd.f32 %v1869, %v1942
    %1944 = vdwg.mxu0
    %s1945 = scalar_lea.vmem %s1, 320
    %v1946 = vld [vmem:[%s1945] sm:$0xff]
    %v1947 = vld [vmem:[%s1945 + $0x8] sm:$0x3]
    %1948 = vrot.lane.b32.xlu0 %v1779, 9
    %v1949 = vpop.permute.xlu0 %1948
    %1950 = vrot.lane.b32.xlu0 %v1780, 9
    %v1951 = vpop.permute.xlu0 %1950
    %1952 = vrot.lane.b32.xlu0 %v1781, 9
    %v1953 = vpop.permute.xlu0 %1952
    %1954 = vrot.lane.b32.xlu0 %v1782, 9
    %v1955 = vpop.permute.xlu0 %1954
    %1956 = vrot.lane.b32.xlu0 %v1783, 9
    %v1957 = vpop.permute.xlu0 %1956
    %1958 = vrot.lane.b32.xlu0 %v1784, 9
    %v1959 = vpop.permute.xlu0 %1958
    %v1960 = vsel %vm251, %v1949, %v1951
    %v1961 = vsel %vm251, %v1951, %v1953
    %v1962 = vsel %vm251, %v1955, %v1957
    %v1963 = vsel %vm251, %v1957, %v1959
    %v1967 = vsel %vm97, %v1946, 0
    %v1970 = vsel %vm97, %v1947, 0
    %v1972 = vsel %vm110, %v1962, 0
    %v1974 = vsel %vm110, %v1963, 0
    %1976 = vmatpush.msra.mxu0 0.0
    %1977 = vmatpush.msra.mxu0 0.0
    %1978 = vmatpush.msra.mxu0 0.0
    %1979 = vmatpush.msra.mxu0 0.0
    %1980 = vmatpush.msra.mxu0 0.0
    %1981 = vmatpush.msra.mxu0 0.0
    %1982 = vmatpush.msra.mxu0 0.0
    %1983 = vmatpush.msra.mxu0 0.0
    %1984 = vmatpush.msra.mxu0 0.0
    %1985 = vmatpush.msra.mxu0 0.0
    %1986 = vmatpush.msra.mxu0 0.0
    %1987 = vmatpush.msra.mxu0 0.0
    %1988 = vmatpush.msra.mxu0 0.0
    %1989 = vmatpush.msra.mxu0 0.0
    %1990 = vmatpush.msra.mxu0 %v1972
    %1991 = vmatpush.msra.mxu0 %v1960
    %1992 = vmatmul.f32.gmra.mxu0 %v1967
    %v1993 = vpop.f32.mrf.mxu0
    %v1994 = vadd.f32 0.0, %v1993
    %1995 = vmatmul.f32.gmra.mxu0 %v1970
    %v1996 = vpop.f32.mrf.mxu0
    %v1997 = vadd.f32 0.0, %v1996
    %1998 = vdwg.mxu0
    %1999 = vmatpush.msra.mxu0 0.0
    %2000 = vmatpush.msra.mxu0 0.0
    %2001 = vmatpush.msra.mxu0 0.0
    %2002 = vmatpush.msra.mxu0 0.0
    %2003 = vmatpush.msra.mxu0 0.0
    %2004 = vmatpush.msra.mxu0 0.0
    %2005 = vmatpush.msra.mxu0 0.0
    %2006 = vmatpush.msra.mxu0 0.0
    %2007 = vmatpush.msra.mxu0 0.0
    %2008 = vmatpush.msra.mxu0 0.0
    %2009 = vmatpush.msra.mxu0 0.0
    %2010 = vmatpush.msra.mxu0 0.0
    %2011 = vmatpush.msra.mxu0 0.0
    %2012 = vmatpush.msra.mxu0 0.0
    %2013 = vmatpush.msra.mxu0 %v1974
    %2014 = vmatpush.msra.mxu0 %v1961
    %2015 = vmatmul.f32.gmra.mxu0 %v1967
    %v2016 = vpop.f32.mrf.mxu0
    %v2017 = vadd.f32 0.0, %v2016
    %2018 = vmatmul.f32.gmra.mxu0 %v1970
    %v2019 = vpop.f32.mrf.mxu0
    %v2020 = vadd.f32 0.0, %v2019
    %2021 = vdwg.mxu0
    %v2022 = vadd.f32 %v1917, %v1994
    %v2023 = vadd.f32 %v1940, %v2017
    %v2024 = vadd.f32 %v1920, %v1997
    %v2025 = vadd.f32 %v1943, %v2020
    %s2026 = scalar_lea.vmem %s1, 336
    %v2027 = vld [vmem:[%s2026] sm:$0xff]
    %v2028 = vld [vmem:[%s2026 + $0x8] sm:$0x3]
    %2029 = vrot.lane.b32.xlu0 %v1779, 1
    %v2030 = vpop.permute.xlu0 %2029
    %2031 = vrot.lane.b32.xlu0 %v1780, 1
    %v2032 = vpop.permute.xlu0 %2031
    %2033 = vrot.lane.b32.xlu0 %v1781, 1
    %v2034 = vpop.permute.xlu0 %2033
    %2035 = vrot.lane.b32.xlu0 %v1782, 1
    %v2036 = vpop.permute.xlu0 %2035
    %2037 = vrot.lane.b32.xlu0 %v1783, 1
    %v2038 = vpop.permute.xlu0 %2037
    %2039 = vrot.lane.b32.xlu0 %v1784, 1
    %v2040 = vpop.permute.xlu0 %2039
    %v2041 = vsel %vm333, %v2030, %v2032
    %v2042 = vsel %vm333, %v2032, %v2034
    %v2043 = vsel %vm333, %v2036, %v2038
    %v2044 = vsel %vm333, %v2038, %v2040
    %v2048 = vsel %vm97, %v2027, 0
    %v2051 = vsel %vm97, %v2028, 0
    %v2053 = vsel %vm110, %v2043, 0
    %v2055 = vsel %vm110, %v2044, 0
    %2057 = vmatpush.msra.mxu0 0.0
    %2058 = vmatpush.msra.mxu0 0.0
    %2059 = vmatpush.msra.mxu0 0.0
    %2060 = vmatpush.msra.mxu0 0.0
    %2061 = vmatpush.msra.mxu0 0.0
    %2062 = vmatpush.msra.mxu0 0.0
    %2063 = vmatpush.msra.mxu0 0.0
    %2064 = vmatpush.msra.mxu0 0.0
    %2065 = vmatpush.msra.mxu0 0.0
    %2066 = vmatpush.msra.mxu0 0.0
    %2067 = vmatpush.msra.mxu0 0.0
    %2068 = vmatpush.msra.mxu0 0.0
    %2069 = vmatpush.msra.mxu0 0.0
    %2070 = vmatpush.msra.mxu0 0.0
    %2071 = vmatpush.msra.mxu0 %v2053
    %2072 = vmatpush.msra.mxu0 %v2041
    %2073 = vmatmul.f32.gmra.mxu0 %v2048
    %v2074 = vpop.f32.mrf.mxu0
    %v2075 = vadd.f32 0.0, %v2074
    %2076 = vmatmul.f32.gmra.mxu0 %v2051
    %v2077 = vpop.f32.mrf.mxu0
    %v2078 = vadd.f32 0.0, %v2077
    %2079 = vdwg.mxu0
    %2080 = vmatpush.msra.mxu0 0.0
    %2081 = vmatpush.msra.mxu0 0.0
    %2082 = vmatpush.msra.mxu0 0.0
    %2083 = vmatpush.msra.mxu0 0.0
    %2084 = vmatpush.msra.mxu0 0.0
    %2085 = vmatpush.msra.mxu0 0.0
    %2086 = vmatpush.msra.mxu0 0.0
    %2087 = vmatpush.msra.mxu0 0.0
    %2088 = vmatpush.msra.mxu0 0.0
    %2089 = vmatpush.msra.mxu0 0.0
    %2090 = vmatpush.msra.mxu0 0.0
    %2091 = vmatpush.msra.mxu0 0.0
    %2092 = vmatpush.msra.mxu0 0.0
    %2093 = vmatpush.msra.mxu0 0.0
    %2094 = vmatpush.msra.mxu0 %v2055
    %2095 = vmatpush.msra.mxu0 %v2042
    %2096 = vmatmul.f32.gmra.mxu0 %v2048
    %v2097 = vpop.f32.mrf.mxu0
    %v2098 = vadd.f32 0.0, %v2097
    %2099 = vmatmul.f32.gmra.mxu0 %v2051
    %v2100 = vpop.f32.mrf.mxu0
    %v2101 = vadd.f32 0.0, %v2100
    %2102 = vdwg.mxu0
    %v2103 = vadd.f32 %v2022, %v2075
    %v2104 = vadd.f32 %v2023, %v2098
    %v2105 = vadd.f32 %v2024, %v2078
    %v2106 = vadd.f32 %v2025, %v2101
    %s2107 = scalar_lea.vmem %s1, 352
    %v2108 = vld [vmem:[%s2107] sm:$0xff]
    %v2109 = vld [vmem:[%s2107 + $0x8] sm:$0x3]
    %v2111 = vsel %vm97, %v2108, 0
    %v2114 = vsel %vm97, %v2109, 0
    %v2116 = vsel %vm110, %v1783, 0
    %v2118 = vsel %vm110, %v1784, 0
    %2120 = vmatpush.msra.mxu0 0.0
    %2121 = vmatpush.msra.mxu0 0.0
    %2122 = vmatpush.msra.mxu0 0.0
    %2123 = vmatpush.msra.mxu0 0.0
    %2124 = vmatpush.msra.mxu0 0.0
    %2125 = vmatpush.msra.mxu0 0.0
    %2126 = vmatpush.msra.mxu0 0.0
    %2127 = vmatpush.msra.mxu0 0.0
    %2128 = vmatpush.msra.mxu0 0.0
    %2129 = vmatpush.msra.mxu0 0.0
    %2130 = vmatpush.msra.mxu0 0.0
    %2131 = vmatpush.msra.mxu0 0.0
    %2132 = vmatpush.msra.mxu0 0.0
    %2133 = vmatpush.msra.mxu0 0.0
    %2134 = vmatpush.msra.mxu0 %v2116
    %2135 = vmatpush.msra.mxu0 %v1780
    %2136 = vmatmul.f32.gmra.mxu0 %v2111
    %v2137 = vpop.f32.mrf.mxu0
    %v2138 = vadd.f32 0.0, %v2137
    %2139 = vmatmul.f32.gmra.mxu0 %v2114
    %v2140 = vpop.f32.mrf.mxu0
    %v2141 = vadd.f32 0.0, %v2140
    %2142 = vdwg.mxu0
    %2143 = vmatpush.msra.mxu0 0.0
    %2144 = vmatpush.msra.mxu0 0.0
    %2145 = vmatpush.msra.mxu0 0.0
    %2146 = vmatpush.msra.mxu0 0.0
    %2147 = vmatpush.msra.mxu0 0.0
    %2148 = vmatpush.msra.mxu0 0.0
    %2149 = vmatpush.msra.mxu0 0.0
    %2150 = vmatpush.msra.mxu0 0.0
    %2151 = vmatpush.msra.mxu0 0.0
    %2152 = vmatpush.msra.mxu0 0.0
    %2153 = vmatpush.msra.mxu0 0.0
    %2154 = vmatpush.msra.mxu0 0.0
    %2155 = vmatpush.msra.mxu0 0.0
    %2156 = vmatpush.msra.mxu0 0.0
    %2157 = vmatpush.msra.mxu0 %v2118
    %2158 = vmatpush.msra.mxu0 %v1781
    %2159 = vmatmul.f32.gmra.mxu0 %v2111
    %v2160 = vpop.f32.mrf.mxu0
    %v2161 = vadd.f32 0.0, %v2160
    %2162 = vmatmul.f32.gmra.mxu0 %v2114
    %v2163 = vpop.f32.mrf.mxu0
    %v2164 = vadd.f32 0.0, %v2163
    %2165 = vdwg.mxu0
    %v2166 = vadd.f32 %v2103, %v2138
    %v2167 = vadd.f32 %v2104, %v2161
    %v2168 = vadd.f32 %v2105, %v2141
    %v2169 = vadd.f32 %v2106, %v2164
    %v2170 = vld [vmem:[#allocation2 + $0x8] sm:$0xff]
    %v2171 = vld [vmem:[#allocation2 + $0x10] sm:$0xff]
    %v2172 = vld [vmem:[#allocation2 + $0x18] sm:$0xff]
    %v2173 = vld [vmem:[#allocation2 + $0x28] sm:$0x3]
    %v2174 = vld [vmem:[#allocation2 + $0x30] sm:$0x3]
    %v2175 = vld [vmem:[#allocation2 + $0x38] sm:$0x3]
    %s2176 = scalar_lea.vmem %s1, 368
    %v2177 = vld [vmem:[%s2176] sm:$0xff]
    %v2178 = vld [vmem:[%s2176 + $0x8] sm:$0x3]
    %2185 = vrot.lane.b32.xlu0 %v2170, 127
    %v2186 = vpop.permute.xlu0 %2185
    %2187 = vrot.lane.b32.xlu0 %v2171, 127
    %v2188 = vpop.permute.xlu0 %2187
    %2189 = vrot.lane.b32.xlu0 %v2172, 127
    %v2190 = vpop.permute.xlu0 %2189
    %2191 = vrot.lane.b32.xlu0 %v2173, 127
    %v2192 = vpop.permute.xlu0 %2191
    %2193 = vrot.lane.b32.xlu0 %v2174, 127
    %v2194 = vpop.permute.xlu0 %2193
    %2195 = vrot.lane.b32.xlu0 %v2175, 127
    %v2196 = vpop.permute.xlu0 %2195
    %v2197 = vsel %vm490, %v2186, %v2188
    %v2198 = vsel %vm490, %v2188, %v2190
    %v2199 = vsel %vm490, %v2192, %v2194
    %v2200 = vsel %vm490, %v2194, %v2196
    %v2204 = vsel %vm97, %v2177, 0
    %v2207 = vsel %vm97, %v2178, 0
    %v2209 = vsel %vm110, %v2199, 0
    %v2211 = vsel %vm110, %v2200, 0
    %2213 = vmatpush.msra.mxu0 0.0
    %2214 = vmatpush.msra.mxu0 0.0
    %2215 = vmatpush.msra.mxu0 0.0
    %2216 = vmatpush.msra.mxu0 0.0
    %2217 = vmatpush.msra.mxu0 0.0
    %2218 = vmatpush.msra.mxu0 0.0
    %2219 = vmatpush.msra.mxu0 0.0
    %2220 = vmatpush.msra.mxu0 0.0
    %2221 = vmatpush.msra.mxu0 0.0
    %2222 = vmatpush.msra.mxu0 0.0
    %2223 = vmatpush.msra.mxu0 0.0
    %2224 = vmatpush.msra.mxu0 0.0
    %2225 = vmatpush.msra.mxu0 0.0
    %2226 = vmatpush.msra.mxu0 0.0
    %2227 = vmatpush.msra.mxu0 %v2209
    %2228 = vmatpush.msra.mxu0 %v2197
    %2229 = vmatmul.f32.gmra.mxu0 %v2204
    %v2230 = vpop.f32.mrf.mxu0
    %v2231 = vadd.f32 0.0, %v2230
    %2232 = vmatmul.f32.gmra.mxu0 %v2207
    %v2233 = vpop.f32.mrf.mxu0
    %v2234 = vadd.f32 0.0, %v2233
    %2235 = vdwg.mxu0
    %2236 = vmatpush.msra.mxu0 0.0
    %2237 = vmatpush.msra.mxu0 0.0
    %2238 = vmatpush.msra.mxu0 0.0
    %2239 = vmatpush.msra.mxu0 0.0
    %2240 = vmatpush.msra.mxu0 0.0
    %2241 = vmatpush.msra.mxu0 0.0
    %2242 = vmatpush.msra.mxu0 0.0
    %2243 = vmatpush.msra.mxu0 0.0
    %2244 = vmatpush.msra.mxu0 0.0
    %2245 = vmatpush.msra.mxu0 0.0
    %2246 = vmatpush.msra.mxu0 0.0
    %2247 = vmatpush.msra.mxu0 0.0
    %2248 = vmatpush.msra.mxu0 0.0
    %2249 = vmatpush.msra.mxu0 0.0
    %2250 = vmatpush.msra.mxu0 %v2211
    %2251 = vmatpush.msra.mxu0 %v2198
    %2252 = vmatmul.f32.gmra.mxu0 %v2204
    %v2253 = vpop.f32.mrf.mxu0
    %v2254 = vadd.f32 0.0, %v2253
    %2255 = vmatmul.f32.gmra.mxu0 %v2207
    %v2256 = vpop.f32.mrf.mxu0
    %v2257 = vadd.f32 0.0, %v2256
    %2258 = vdwg.mxu0
    %v2259 = vadd.f32 %v2166, %v2231
    %v2260 = vadd.f32 %v2167, %v2254
    %v2261 = vadd.f32 %v2168, %v2234
    %v2262 = vadd.f32 %v2169, %v2257
    %s2263 = scalar_lea.vmem %s1, 384
    %v2264 = vld [vmem:[%s2263] sm:$0xff]
    %v2265 = vld [vmem:[%s2263 + $0x8] sm:$0x3]
    %2266 = vrot.lane.b32.xlu0 %v2170, 119
    %v2267 = vpop.permute.xlu0 %2266
    %2268 = vrot.lane.b32.xlu0 %v2171, 119
    %v2269 = vpop.permute.xlu0 %2268
    %2270 = vrot.lane.b32.xlu0 %v2172, 119
    %v2271 = vpop.permute.xlu0 %2270
    %2272 = vrot.lane.b32.xlu0 %v2173, 119
    %v2273 = vpop.permute.xlu0 %2272
    %2274 = vrot.lane.b32.xlu0 %v2174, 119
    %v2275 = vpop.permute.xlu0 %2274
    %2276 = vrot.lane.b32.xlu0 %v2175, 119
    %v2277 = vpop.permute.xlu0 %2276
    %v2278 = vsel %vm572, %v2267, %v2269
    %v2279 = vsel %vm572, %v2269, %v2271
    %v2280 = vsel %vm572, %v2273, %v2275
    %v2281 = vsel %vm572, %v2275, %v2277
    %v2285 = vsel %vm97, %v2264, 0
    %v2288 = vsel %vm97, %v2265, 0
    %v2290 = vsel %vm110, %v2280, 0
    %v2292 = vsel %vm110, %v2281, 0
    %2294 = vmatpush.msra.mxu0 0.0
    %2295 = vmatpush.msra.mxu0 0.0
    %2296 = vmatpush.msra.mxu0 0.0
    %2297 = vmatpush.msra.mxu0 0.0
    %2298 = vmatpush.msra.mxu0 0.0
    %2299 = vmatpush.msra.mxu0 0.0
    %2300 = vmatpush.msra.mxu0 0.0
    %2301 = vmatpush.msra.mxu0 0.0
    %2302 = vmatpush.msra.mxu0 0.0
    %2303 = vmatpush.msra.mxu0 0.0
    %2304 = vmatpush.msra.mxu0 0.0
    %2305 = vmatpush.msra.mxu0 0.0
    %2306 = vmatpush.msra.mxu0 0.0
    %2307 = vmatpush.msra.mxu0 0.0
    %2308 = vmatpush.msra.mxu0 %v2290
    %2309 = vmatpush.msra.mxu0 %v2278
    %2310 = vmatmul.f32.gmra.mxu0 %v2285
    %v2311 = vpop.f32.mrf.mxu0
    %v2312 = vadd.f32 0.0, %v2311
    %2313 = vmatmul.f32.gmra.mxu0 %v2288
    %v2314 = vpop.f32.mrf.mxu0
    %v2315 = vadd.f32 0.0, %v2314
    %2316 = vdwg.mxu0
    %2317 = vmatpush.msra.mxu0 0.0
    %2318 = vmatpush.msra.mxu0 0.0
    %2319 = vmatpush.msra.mxu0 0.0
    %2320 = vmatpush.msra.mxu0 0.0
    %2321 = vmatpush.msra.mxu0 0.0
    %2322 = vmatpush.msra.mxu0 0.0
    %2323 = vmatpush.msra.mxu0 0.0
    %2324 = vmatpush.msra.mxu0 0.0
    %2325 = vmatpush.msra.mxu0 0.0
    %2326 = vmatpush.msra.mxu0 0.0
    %2327 = vmatpush.msra.mxu0 0.0
    %2328 = vmatpush.msra.mxu0 0.0
    %2329 = vmatpush.msra.mxu0 0.0
    %2330 = vmatpush.msra.mxu0 0.0
    %2331 = vmatpush.msra.mxu0 %v2292
    %2332 = vmatpush.msra.mxu0 %v2279
    %2333 = vmatmul.f32.gmra.mxu0 %v2285
    %v2334 = vpop.f32.mrf.mxu0
    %v2335 = vadd.f32 0.0, %v2334
    %2336 = vmatmul.f32.gmra.mxu0 %v2288
    %v2337 = vpop.f32.mrf.mxu0
    %v2338 = vadd.f32 0.0, %v2337
    %2339 = vdwg.mxu0
    %v2340 = vadd.f32 %v2259, %v2312
    %v2341 = vadd.f32 %v2260, %v2335
    %v2342 = vadd.f32 %v2261, %v2315
    %v2343 = vadd.f32 %v2262, %v2338
    %s2344 = scalar_lea.vmem %s1, 400
    %v2345 = vld [vmem:[%s2344] sm:$0xff]
    %v2346 = vld [vmem:[%s2344 + $0x8] sm:$0x3]
    %2347 = vrot.lane.b32.xlu0 %v2170, 118
    %v2348 = vpop.permute.xlu0 %2347
    %2349 = vrot.lane.b32.xlu0 %v2171, 118
    %v2350 = vpop.permute.xlu0 %2349
    %2351 = vrot.lane.b32.xlu0 %v2172, 118
    %v2352 = vpop.permute.xlu0 %2351
    %2353 = vrot.lane.b32.xlu0 %v2173, 118
    %v2354 = vpop.permute.xlu0 %2353
    %2355 = vrot.lane.b32.xlu0 %v2174, 118
    %v2356 = vpop.permute.xlu0 %2355
    %2357 = vrot.lane.b32.xlu0 %v2175, 118
    %v2358 = vpop.permute.xlu0 %2357
    %v2359 = vsel %vm654, %v2348, %v2350
    %v2360 = vsel %vm654, %v2350, %v2352
    %v2361 = vsel %vm654, %v2354, %v2356
    %v2362 = vsel %vm654, %v2356, %v2358
    %v2366 = vsel %vm97, %v2345, 0
    %v2369 = vsel %vm97, %v2346, 0
    %v2371 = vsel %vm110, %v2361, 0
    %v2373 = vsel %vm110, %v2362, 0
    %2375 = vmatpush.msra.mxu0 0.0
    %2376 = vmatpush.msra.mxu0 0.0
    %2377 = vmatpush.msra.mxu0 0.0
    %2378 = vmatpush.msra.mxu0 0.0
    %2379 = vmatpush.msra.mxu0 0.0
    %2380 = vmatpush.msra.mxu0 0.0
    %2381 = vmatpush.msra.mxu0 0.0
    %2382 = vmatpush.msra.mxu0 0.0
    %2383 = vmatpush.msra.mxu0 0.0
    %2384 = vmatpush.msra.mxu0 0.0
    %2385 = vmatpush.msra.mxu0 0.0
    %2386 = vmatpush.msra.mxu0 0.0
    %2387 = vmatpush.msra.mxu0 0.0
    %2388 = vmatpush.msra.mxu0 0.0
    %2389 = vmatpush.msra.mxu0 %v2371
    %2390 = vmatpush.msra.mxu0 %v2359
    %2391 = vmatmul.f32.gmra.mxu0 %v2366
    %v2392 = vpop.f32.mrf.mxu0
    %v2393 = vadd.f32 0.0, %v2392
    %2394 = vmatmul.f32.gmra.mxu0 %v2369
    %v2395 = vpop.f32.mrf.mxu0
    %v2396 = vadd.f32 0.0, %v2395
    %2397 = vdwg.mxu0
    %2398 = vmatpush.msra.mxu0 0.0
    %2399 = vmatpush.msra.mxu0 0.0
    %2400 = vmatpush.msra.mxu0 0.0
    %2401 = vmatpush.msra.mxu0 0.0
    %2402 = vmatpush.msra.mxu0 0.0
    %2403 = vmatpush.msra.mxu0 0.0
    %2404 = vmatpush.msra.mxu0 0.0
    %2405 = vmatpush.msra.mxu0 0.0
    %2406 = vmatpush.msra.mxu0 0.0
    %2407 = vmatpush.msra.mxu0 0.0
    %2408 = vmatpush.msra.mxu0 0.0
    %2409 = vmatpush.msra.mxu0 0.0
    %2410 = vmatpush.msra.mxu0 0.0
    %2411 = vmatpush.msra.mxu0 0.0
    %2412 = vmatpush.msra.mxu0 %v2373
    %2413 = vmatpush.msra.mxu0 %v2360
    %2414 = vmatmul.f32.gmra.mxu0 %v2366
    %v2415 = vpop.f32.mrf.mxu0
    %v2416 = vadd.f32 0.0, %v2415
    %2417 = vmatmul.f32.gmra.mxu0 %v2369
    %v2418 = vpop.f32.mrf.mxu0
    %v2419 = vadd.f32 0.0, %v2418
    %2420 = vdwg.mxu0
    %v2421 = vadd.f32 %v2340, %v2393
    %v2422 = vadd.f32 %v2341, %v2416
    %v2423 = vadd.f32 %v2342, %v2396
    %v2424 = vadd.f32 %v2343, %v2419
    %s2425 = scalar_lea.vmem %s1, 416
    %v2426 = vld [vmem:[%s2425] sm:$0xff]
    %v2427 = vld [vmem:[%s2425 + $0x8] sm:$0x3]
    %2428 = vrot.lane.b32.xlu0 %v2170, 117
    %v2429 = vpop.permute.xlu0 %2428
    %2430 = vrot.lane.b32.xlu0 %v2171, 117
    %v2431 = vpop.permute.xlu0 %2430
    %2432 = vrot.lane.b32.xlu0 %v2172, 117
    %v2433 = vpop.permute.xlu0 %2432
    %2434 = vrot.lane.b32.xlu0 %v2173, 117
    %v2435 = vpop.permute.xlu0 %2434
    %2436 = vrot.lane.b32.xlu0 %v2174, 117
    %v2437 = vpop.permute.xlu0 %2436
    %2438 = vrot.lane.b32.xlu0 %v2175, 117
    %v2439 = vpop.permute.xlu0 %2438
    %v2440 = vsel %vm736, %v2429, %v2431
    %v2441 = vsel %vm736, %v2431, %v2433
    %v2442 = vsel %vm736, %v2435, %v2437
    %v2443 = vsel %vm736, %v2437, %v2439
    %v2447 = vsel %vm97, %v2426, 0
    %v2450 = vsel %vm97, %v2427, 0
    %v2452 = vsel %vm110, %v2442, 0
    %v2454 = vsel %vm110, %v2443, 0
    %2456 = vmatpush.msra.mxu0 0.0
    %2457 = vmatpush.msra.mxu0 0.0
    %2458 = vmatpush.msra.mxu0 0.0
    %2459 = vmatpush.msra.mxu0 0.0
    %2460 = vmatpush.msra.mxu0 0.0
    %2461 = vmatpush.msra.mxu0 0.0
    %2462 = vmatpush.msra.mxu0 0.0
    %2463 = vmatpush.msra.mxu0 0.0
    %2464 = vmatpush.msra.mxu0 0.0
    %2465 = vmatpush.msra.mxu0 0.0
    %2466 = vmatpush.msra.mxu0 0.0
    %2467 = vmatpush.msra.mxu0 0.0
    %2468 = vmatpush.msra.mxu0 0.0
    %2469 = vmatpush.msra.mxu0 0.0
    %2470 = vmatpush.msra.mxu0 %v2452
    %2471 = vmatpush.msra.mxu0 %v2440
    %2472 = vmatmul.f32.gmra.mxu0 %v2447
    %v2473 = vpop.f32.mrf.mxu0
    %v2474 = vadd.f32 0.0, %v2473
    %2475 = vmatmul.f32.gmra.mxu0 %v2450
    %v2476 = vpop.f32.mrf.mxu0
    %v2477 = vadd.f32 0.0, %v2476
    %2478 = vdwg.mxu0
    %2479 = vmatpush.msra.mxu0 0.0
    %2480 = vmatpush.msra.mxu0 0.0
    %2481 = vmatpush.msra.mxu0 0.0
    %2482 = vmatpush.msra.mxu0 0.0
    %2483 = vmatpush.msra.mxu0 0.0
    %2484 = vmatpush.msra.mxu0 0.0
    %2485 = vmatpush.msra.mxu0 0.0
    %2486 = vmatpush.msra.mxu0 0.0
    %2487 = vmatpush.msra.mxu0 0.0
    %2488 = vmatpush.msra.mxu0 0.0
    %2489 = vmatpush.msra.mxu0 0.0
    %2490 = vmatpush.msra.mxu0 0.0
    %2491 = vmatpush.msra.mxu0 0.0
    %2492 = vmatpush.msra.mxu0 0.0
    %2493 = vmatpush.msra.mxu0 %v2454
    %2494 = vmatpush.msra.mxu0 %v2441
    %2495 = vmatmul.f32.gmra.mxu0 %v2447
    %v2496 = vpop.f32.mrf.mxu0
    %v2497 = vadd.f32 0.0, %v2496
    %2498 = vmatmul.f32.gmra.mxu0 %v2450
    %v2499 = vpop.f32.mrf.mxu0
    %v2500 = vadd.f32 0.0, %v2499
    %2501 = vdwg.mxu0
    %v2502 = vadd.f32 %v2421, %v2474
    %v2503 = vadd.f32 %v2422, %v2497
    %v2504 = vadd.f32 %v2423, %v2477
    %v2505 = vadd.f32 %v2424, %v2500
    %2507 = vset.pattern.permute.xlu0 0
    %2508 = vperm.xlu0 %2507, %v1773
    %v2509 = vpop.permute.xlu0 %2508
    %2512 = vset.pattern.permute.xlu0 0
    %2513 = vperm.xlu0 %2512, %v1774
    %v2514 = vpop.permute.xlu0 %2513
    %v2516 = vadd.f32 %v2502, %v2509
    %v2517 = vadd.f32 %v2503, %v2509
    %v2518 = vadd.f32 %v2504, %v2514
    %v2519 = vadd.f32 %v2505, %v2514
    %s2520 = scalar_lea.vmem %s3, 32
    %v2521 = vld [vmem:[%s2520] sm:$0xff]
    %v2522 = vld [vmem:[%s2520 + $0x8] sm:$0x3]
    %s2523 = scalar_lea.vmem %s4, 32
    %v2524 = vld [vmem:[%s2523] sm:$0xff]
    %v2525 = vld [vmem:[%s2523 + $0x8] sm:$0x3]
    %v2526 = vmul.f32 %v2516, %v822
    %v2527 = vmul.f32 %v2517, %v823
    %v2528 = vmul.f32 %v2518, %v822
    %v2529 = vmul.f32 %v2519, %v823
    %v2530 = vadd.f32 %v2526, %v2527
    %2531 = vadd.xlane.f32.xlu0 %v2530
    %v2532 = vpop.xlane.xlu0 %2531
    %v2533 = vsel %vm110, %v2528, 0.0
    %v2534 = vsel %vm110, %v2529, 0.0
    %v2535 = vadd.f32 %v2533, %v2534
    %2536 = vadd.xlane.f32.xlu0 %v2535
    %v2537 = vpop.xlane.xlu0 %2536
    %v2538 = vmul.f32 %v2526, %v2526
    %v2539 = vmul.f32 %v2527, %v2527
    %v2540 = vmul.f32 %v2528, %v2528
    %v2541 = vmul.f32 %v2529, %v2529
    %v2542 = vadd.f32 %v2538, %v2539
    %2543 = vadd.xlane.f32.xlu0 %v2542
    %v2544 = vpop.xlane.xlu0 %2543
    %v2545 = vsel %vm110, %v2540, 0.0
    %v2546 = vsel %vm110, %v2541, 0.0
    %v2547 = vadd.f32 %v2545, %v2546
    %2548 = vadd.xlane.f32.xlu0 %v2547
    %v2549 = vpop.xlane.xlu0 %2548
    %v2550 = vmul.f32 %v2532, 0.0078125
    %v2551 = vmul.f32 %v2537, 0.0078125
    %v2552 = vmul.f32 %v2544, 0.0078125
    %v2553 = vmul.f32 %v2549, 0.0078125
    %v2554 = vmul.f32 %v2550, %v2550
    %v2555 = vmul.f32 %v2551, %v2551
    %v2556 = vsub.f32 %v2552, %v2554
    %v2557 = vsub.f32 %v2553, %v2555
    %v2558 = vadd.f32 %v2556, 1e-05
    %v2559 = vadd.f32 %v2557, 1e-05
    %v2560 = vrsqrt.pop %v2558
    %v2561 = vmul.f32 %v2560, %v2558
    %v2562 = vmul.f32 %v2561, %v2560
    %v2563 = vmul.f32 0.5, %v2562
    %v2564 = vsub.f32 1.5, %v2563
    %v2565 = vmul.f32 %v2560, %v2564
    %vm2566 = vweird.f32 %v2558
    %vm2567 = vweird.f32 %v2560
    %vm2568 = vmor %vm2566, %vm2567
    %v2569 = vsel %vm2568, %v2560, %v2565
    %v2570 = vrsqrt.pop %v2559
    %v2571 = vmul.f32 %v2570, %v2559
    %v2572 = vmul.f32 %v2571, %v2570
    %v2573 = vmul.f32 0.5, %v2572
    %v2574 = vsub.f32 1.5, %v2573
    %v2575 = vmul.f32 %v2570, %v2574
    %vm2576 = vweird.f32 %v2559
    %vm2577 = vweird.f32 %v2570
    %vm2578 = vmor %vm2576, %vm2577
    %v2579 = vsel %vm2578, %v2570, %v2575
    %v2580 = vmul.f32 %v2521, %v2569
    %v2581 = vmul.f32 %v2522, %v2579
    %v2582 = vmul.f32 %v2580, %v2550
    %v2583 = vmul.f32 %v2581, %v2551
    %v2584 = vsub.f32 %v2524, %v2582
    %v2585 = vsub.f32 %v2525, %v2583
    %2587 = vset.pattern.permute.xlu0 0
    %2588 = vperm.xlu0 %2587, %v2580
    %v2589 = vpop.permute.xlu0 %2588
    %2592 = vset.pattern.permute.xlu0 0
    %2593 = vperm.xlu0 %2592, %v2581
    %v2594 = vpop.permute.xlu0 %2593
    %v2596 = vmul.f32 %v2589, %v2516
    %v2597 = vmul.f32 %v2589, %v2517
    %v2598 = vmul.f32 %v2594, %v2518
    %v2599 = vmul.f32 %v2594, %v2519
    %2601 = vset.pattern.permute.xlu0 0
    %2602 = vperm.xlu0 %2601, %v2584
    %v2603 = vpop.permute.xlu0 %2602
    %2606 = vset.pattern.permute.xlu0 0
    %2607 = vperm.xlu0 %2606, %v2585
    %v2608 = vpop.permute.xlu0 %2607
    %v2610 = vadd.f32 %v2596, %v2603
    %v2611 = vadd.f32 %v2597, %v2603
    %v2612 = vadd.f32 %v2598, %v2608
    %v2613 = vadd.f32 %v2599, %v2608
    %v2614 = vadd.f32 %v2610, %v918
    %v2615 = vadd.f32 %v2611, %v919
    %v2616 = vadd.f32 %v2612, %v920
    %v2617 = vadd.f32 %v2613, %v921
    %v2618 = vmax.f32 %v2614, 0.0
    %v2619 = vmax.f32 %v2615, 0.0
    %v2620 = vmax.f32 %v2616, 0.0
    %v2621 = vmax.f32 %v2617, 0.0
    %v2622 = vmul.f32 %v2618, %v822
    %v2623 = vmul.f32 %v2619, %v823
    %v2624 = vmul.f32 %v2620, %v822
    %v2625 = vmul.f32 %v2621, %v823
    %s2626 = scalar_lea.vmem %s2, 48
    %v2627 = vld [vmem:[%s2626] sm:$0xff]
    %v2628 = vld [vmem:[%s2626 + $0x8] sm:$0x3]
    %2629 = vst [vmem:[#allocation2 + $0x8] sm:$0xff] %v2622
    %2630 = vst [vmem:[#allocation2 + $0x10] sm:$0xff] %v2623
    %2631 = vst [vmem:[#allocation2 + $0x28] sm:$0x3] %v2624
    %2632 = vst [vmem:[#allocation2 + $0x30] sm:$0x3] %v2625
    %v2633 = vld [vmem:[#allocation2] sm:$0xff]
    %v2634 = vld [vmem:[#allocation2 + $0x8] sm:$0xff]
    %v2635 = vld [vmem:[#allocation2 + $0x10] sm:$0xff]
    %v2636 = vld [vmem:[#allocation2 + $0x20] sm:$0x3]
    %v2637 = vld [vmem:[#allocation2 + $0x28] sm:$0x3]
    %v2638 = vld [vmem:[#allocation2 + $0x30] sm:$0x3]
    %s2639 = scalar_lea.vmem %s1, 432
    %v2640 = vld [vmem:[%s2639] sm:$0xff]
    %v2641 = vld [vmem:[%s2639 + $0x8] sm:$0x3]
    %s2642 = scalar_lea.vmem %s1, 448
    %v2643 = vld [vmem:[%s2642] sm:$0xff]
    %v2644 = vld [vmem:[%s2642 + $0x8] sm:$0x3]
    %2651 = vrot.lane.b32.xlu0 %v2633, 10
    %v2652 = vpop.permute.xlu0 %2651
    %2653 = vrot.lane.b32.xlu0 %v2634, 10
    %v2654 = vpop.permute.xlu0 %2653
    %2655 = vrot.lane.b32.xlu0 %v2635, 10
    %v2656 = vpop.permute.xlu0 %2655
    %2657 = vrot.lane.b32.xlu0 %v2636, 10
    %v2658 = vpop.permute.xlu0 %2657
    %2659 = vrot.lane.b32.xlu0 %v2637, 10
    %v2660 = vpop.permute.xlu0 %2659
    %2661 = vrot.lane.b32.xlu0 %v2638, 10
    %v2662 = vpop.permute.xlu0 %2661
    %v2663 = vsel %vm97, %v2652, %v2654
    %v2664 = vsel %vm97, %v2654, %v2656
    %v2665 = vsel %vm97, %v2658, %v2660
    %v2666 = vsel %vm97, %v2660, %v2662
    %v2670 = vsel %vm97, %v2643, 0
    %v2673 = vsel %vm97, %v2644, 0
    %v2675 = vsel %vm110, %v2665, 0
    %v2677 = vsel %vm110, %v2666, 0
    %2679 = vmatpush.msra.mxu0 0.0
    %2680 = vmatpush.msra.mxu0 0.0
    %2681 = vmatpush.msra.mxu0 0.0
    %2682 = vmatpush.msra.mxu0 0.0
    %2683 = vmatpush.msra.mxu0 0.0
    %2684 = vmatpush.msra.mxu0 0.0
    %2685 = vmatpush.msra.mxu0 0.0
    %2686 = vmatpush.msra.mxu0 0.0
    %2687 = vmatpush.msra.mxu0 0.0
    %2688 = vmatpush.msra.mxu0 0.0
    %2689 = vmatpush.msra.mxu0 0.0
    %2690 = vmatpush.msra.mxu0 0.0
    %2691 = vmatpush.msra.mxu0 0.0
    %2692 = vmatpush.msra.mxu0 0.0
    %2693 = vmatpush.msra.mxu0 %v2675
    %2694 = vmatpush.msra.mxu0 %v2663
    %2695 = vmatmul.f32.gmra.mxu0 %v2670
    %v2696 = vpop.f32.mrf.mxu0
    %v2697 = vadd.f32 0.0, %v2696
    %2698 = vmatmul.f32.gmra.mxu0 %v2673
    %v2699 = vpop.f32.mrf.mxu0
    %v2700 = vadd.f32 0.0, %v2699
    %2701 = vdwg.mxu0
    %2702 = vmatpush.msra.mxu0 0.0
    %2703 = vmatpush.msra.mxu0 0.0
    %2704 = vmatpush.msra.mxu0 0.0
    %2705 = vmatpush.msra.mxu0 0.0
    %2706 = vmatpush.msra.mxu0 0.0
    %2707 = vmatpush.msra.mxu0 0.0
    %2708 = vmatpush.msra.mxu0 0.0
    %2709 = vmatpush.msra.mxu0 0.0
    %2710 = vmatpush.msra.mxu0 0.0
    %2711 = vmatpush.msra.mxu0 0.0
    %2712 = vmatpush.msra.mxu0 0.0
    %2713 = vmatpush.msra.mxu0 0.0
    %2714 = vmatpush.msra.mxu0 0.0
    %2715 = vmatpush.msra.mxu0 0.0
    %2716 = vmatpush.msra.mxu0 %v2677
    %2717 = vmatpush.msra.mxu0 %v2664
    %2718 = vmatmul.f32.gmra.mxu0 %v2670
    %v2719 = vpop.f32.mrf.mxu0
    %v2720 = vadd.f32 0.0, %v2719
    %2721 = vmatmul.f32.gmra.mxu0 %v2673
    %v2722 = vpop.f32.mrf.mxu0
    %v2723 = vadd.f32 0.0, %v2722
    %2724 = vdwg.mxu0
    %2725 = vrot.lane.b32.xlu0 %v2633, 11
    %v2726 = vpop.permute.xlu0 %2725
    %2727 = vrot.lane.b32.xlu0 %v2634, 11
    %v2728 = vpop.permute.xlu0 %2727
    %2729 = vrot.lane.b32.xlu0 %v2635, 11
    %v2730 = vpop.permute.xlu0 %2729
    %2731 = vrot.lane.b32.xlu0 %v2636, 11
    %v2732 = vpop.permute.xlu0 %2731
    %2733 = vrot.lane.b32.xlu0 %v2637, 11
    %v2734 = vpop.permute.xlu0 %2733
    %2735 = vrot.lane.b32.xlu0 %v2638, 11
    %v2736 = vpop.permute.xlu0 %2735
    %v2737 = vsel %vm173, %v2726, %v2728
    %v2738 = vsel %vm173, %v2728, %v2730
    %v2739 = vsel %vm173, %v2732, %v2734
    %v2740 = vsel %vm173, %v2734, %v2736
    %v2744 = vsel %vm97, %v2640, 0
    %v2747 = vsel %vm97, %v2641, 0
    %v2749 = vsel %vm110, %v2739, 0
    %v2751 = vsel %vm110, %v2740, 0
    %2753 = vmatpush.msra.mxu0 0.0
    %2754 = vmatpush.msra.mxu0 0.0
    %2755 = vmatpush.msra.mxu0 0.0
    %2756 = vmatpush.msra.mxu0 0.0
    %2757 = vmatpush.msra.mxu0 0.0
    %2758 = vmatpush.msra.mxu0 0.0
    %2759 = vmatpush.msra.mxu0 0.0
    %2760 = vmatpush.msra.mxu0 0.0
    %2761 = vmatpush.msra.mxu0 0.0
    %2762 = vmatpush.msra.mxu0 0.0
    %2763 = vmatpush.msra.mxu0 0.0
    %2764 = vmatpush.msra.mxu0 0.0
    %2765 = vmatpush.msra.mxu0 0.0
    %2766 = vmatpush.msra.mxu0 0.0
    %2767 = vmatpush.msra.mxu0 %v2749
    %2768 = vmatpush.msra.mxu0 %v2737
    %2769 = vmatmul.f32.gmra.mxu0 %v2744
    %v2770 = vpop.f32.mrf.mxu0
    %v2771 = vadd.f32 %v2697, %v2770
    %2772 = vmatmul.f32.gmra.mxu0 %v2747
    %v2773 = vpop.f32.mrf.mxu0
    %v2774 = vadd.f32 %v2700, %v2773
    %2775 = vdwg.mxu0
    %2776 = vmatpush.msra.mxu0 0.0
    %2777 = vmatpush.msra.mxu0 0.0
    %2778 = vmatpush.msra.mxu0 0.0
    %2779 = vmatpush.msra.mxu0 0.0
    %2780 = vmatpush.msra.mxu0 0.0
    %2781 = vmatpush.msra.mxu0 0.0
    %2782 = vmatpush.msra.mxu0 0.0
    %2783 = vmatpush.msra.mxu0 0.0
    %2784 = vmatpush.msra.mxu0 0.0
    %2785 = vmatpush.msra.mxu0 0.0
    %2786 = vmatpush.msra.mxu0 0.0
    %2787 = vmatpush.msra.mxu0 0.0
    %2788 = vmatpush.msra.mxu0 0.0
    %2789 = vmatpush.msra.mxu0 0.0
    %2790 = vmatpush.msra.mxu0 %v2751
    %2791 = vmatpush.msra.mxu0 %v2738
    %2792 = vmatmul.f32.gmra.mxu0 %v2744
    %v2793 = vpop.f32.mrf.mxu0
    %v2794 = vadd.f32 %v2720, %v2793
    %2795 = vmatmul.f32.gmra.mxu0 %v2747
    %v2796 = vpop.f32.mrf.mxu0
    %v2797 = vadd.f32 %v2723, %v2796
    %2798 = vdwg.mxu0
    %s2799 = scalar_lea.vmem %s1, 464
    %v2800 = vld [vmem:[%s2799] sm:$0xff]
    %v2801 = vld [vmem:[%s2799 + $0x8] sm:$0x3]
    %2802 = vrot.lane.b32.xlu0 %v2633, 9
    %v2803 = vpop.permute.xlu0 %2802
    %2804 = vrot.lane.b32.xlu0 %v2634, 9
    %v2805 = vpop.permute.xlu0 %2804
    %2806 = vrot.lane.b32.xlu0 %v2635, 9
    %v2807 = vpop.permute.xlu0 %2806
    %2808 = vrot.lane.b32.xlu0 %v2636, 9
    %v2809 = vpop.permute.xlu0 %2808
    %2810 = vrot.lane.b32.xlu0 %v2637, 9
    %v2811 = vpop.permute.xlu0 %2810
    %2812 = vrot.lane.b32.xlu0 %v2638, 9
    %v2813 = vpop.permute.xlu0 %2812
    %v2814 = vsel %vm251, %v2803, %v2805
    %v2815 = vsel %vm251, %v2805, %v2807
    %v2816 = vsel %vm251, %v2809, %v2811
    %v2817 = vsel %vm251, %v2811, %v2813
    %v2821 = vsel %vm97, %v2800, 0
    %v2824 = vsel %vm97, %v2801, 0
    %v2826 = vsel %vm110, %v2816, 0
    %v2828 = vsel %vm110, %v2817, 0
    %2830 = vmatpush.msra.mxu0 0.0
    %2831 = vmatpush.msra.mxu0 0.0
    %2832 = vmatpush.msra.mxu0 0.0
    %2833 = vmatpush.msra.mxu0 0.0
    %2834 = vmatpush.msra.mxu0 0.0
    %2835 = vmatpush.msra.mxu0 0.0
    %2836 = vmatpush.msra.mxu0 0.0
    %2837 = vmatpush.msra.mxu0 0.0
    %2838 = vmatpush.msra.mxu0 0.0
    %2839 = vmatpush.msra.mxu0 0.0
    %2840 = vmatpush.msra.mxu0 0.0
    %2841 = vmatpush.msra.mxu0 0.0
    %2842 = vmatpush.msra.mxu0 0.0
    %2843 = vmatpush.msra.mxu0 0.0
    %2844 = vmatpush.msra.mxu0 %v2826
    %2845 = vmatpush.msra.mxu0 %v2814
    %2846 = vmatmul.f32.gmra.mxu0 %v2821
    %v2847 = vpop.f32.mrf.mxu0
    %v2848 = vadd.f32 0.0, %v2847
    %2849 = vmatmul.f32.gmra.mxu0 %v2824
    %v2850 = vpop.f32.mrf.mxu0
    %v2851 = vadd.f32 0.0, %v2850
    %2852 = vdwg.mxu0
    %2853 = vmatpush.msra.mxu0 0.0
    %2854 = vmatpush.msra.mxu0 0.0
    %2855 = vmatpush.msra.mxu0 0.0
    %2856 = vmatpush.msra.mxu0 0.0
    %2857 = vmatpush.msra.mxu0 0.0
    %2858 = vmatpush.msra.mxu0 0.0
    %2859 = vmatpush.msra.mxu0 0.0
    %2860 = vmatpush.msra.mxu0 0.0
    %2861 = vmatpush.msra.mxu0 0.0
    %2862 = vmatpush.msra.mxu0 0.0
    %2863 = vmatpush.msra.mxu0 0.0
    %2864 = vmatpush.msra.mxu0 0.0
    %2865 = vmatpush.msra.mxu0 0.0
    %2866 = vmatpush.msra.mxu0 0.0
    %2867 = vmatpush.msra.mxu0 %v2828
    %2868 = vmatpush.msra.mxu0 %v2815
    %2869 = vmatmul.f32.gmra.mxu0 %v2821
    %v2870 = vpop.f32.mrf.mxu0
    %v2871 = vadd.f32 0.0, %v2870
    %2872 = vmatmul.f32.gmra.mxu0 %v2824
    %v2873 = vpop.f32.mrf.mxu0
    %v2874 = vadd.f32 0.0, %v2873
    %2875 = vdwg.mxu0
    %v2876 = vadd.f32 %v2771, %v2848
    %v2877 = vadd.f32 %v2794, %v2871
    %v2878 = vadd.f32 %v2774, %v2851
    %v2879 = vadd.f32 %v2797, %v2874
    %s2880 = scalar_lea.vmem %s1, 480
    %v2881 = vld [vmem:[%s2880] sm:$0xff]
    %v2882 = vld [vmem:[%s2880 + $0x8] sm:$0x3]
    %2883 = vrot.lane.b32.xlu0 %v2633, 1
    %v2884 = vpop.permute.xlu0 %2883
    %2885 = vrot.lane.b32.xlu0 %v2634, 1
    %v2886 = vpop.permute.xlu0 %2885
    %2887 = vrot.lane.b32.xlu0 %v2635, 1
    %v2888 = vpop.permute.xlu0 %2887
    %2889 = vrot.lane.b32.xlu0 %v2636, 1
    %v2890 = vpop.permute.xlu0 %2889
    %2891 = vrot.lane.b32.xlu0 %v2637, 1
    %v2892 = vpop.permute.xlu0 %2891
    %2893 = vrot.lane.b32.xlu0 %v2638, 1
    %v2894 = vpop.permute.xlu0 %2893
    %v2895 = vsel %vm333, %v2884, %v2886
    %v2896 = vsel %vm333, %v2886, %v2888
    %v2897 = vsel %vm333, %v2890, %v2892
    %v2898 = vsel %vm333, %v2892, %v2894
    %v2902 = vsel %vm97, %v2881, 0
    %v2905 = vsel %vm97, %v2882, 0
    %v2907 = vsel %vm110, %v2897, 0
    %v2909 = vsel %vm110, %v2898, 0
    %2911 = vmatpush.msra.mxu0 0.0
    %2912 = vmatpush.msra.mxu0 0.0
    %2913 = vmatpush.msra.mxu0 0.0
    %2914 = vmatpush.msra.mxu0 0.0
    %2915 = vmatpush.msra.mxu0 0.0
    %2916 = vmatpush.msra.mxu0 0.0
    %2917 = vmatpush.msra.mxu0 0.0
    %2918 = vmatpush.msra.mxu0 0.0
    %2919 = vmatpush.msra.mxu0 0.0
    %2920 = vmatpush.msra.mxu0 0.0
    %2921 = vmatpush.msra.mxu0 0.0
    %2922 = vmatpush.msra.mxu0 0.0
    %2923 = vmatpush.msra.mxu0 0.0
    %2924 = vmatpush.msra.mxu0 0.0
    %2925 = vmatpush.msra.mxu0 %v2907
    %2926 = vmatpush.msra.mxu0 %v2895
    %2927 = vmatmul.f32.gmra.mxu0 %v2902
    %v2928 = vpop.f32.mrf.mxu0
    %v2929 = vadd.f32 0.0, %v2928
    %2930 = vmatmul.f32.gmra.mxu0 %v2905
    %v2931 = vpop.f32.mrf.mxu0
    %v2932 = vadd.f32 0.0, %v2931
    %2933 = vdwg.mxu0
    %2934 = vmatpush.msra.mxu0 0.0
    %2935 = vmatpush.msra.mxu0 0.0
    %2936 = vmatpush.msra.mxu0 0.0
    %2937 = vmatpush.msra.mxu0 0.0
    %2938 = vmatpush.msra.mxu0 0.0
    %2939 = vmatpush.msra.mxu0 0.0
    %2940 = vmatpush.msra.mxu0 0.0
    %2941 = vmatpush.msra.mxu0 0.0
    %2942 = vmatpush.msra.mxu0 0.0
    %2943 = vmatpush.msra.mxu0 0.0
    %2944 = vmatpush.msra.mxu0 0.0
    %2945 = vmatpush.msra.mxu0 0.0
    %2946 = vmatpush.msra.mxu0 0.0
    %2947 = vmatpush.msra.mxu0 0.0
    %2948 = vmatpush.msra.mxu0 %v2909
    %2949 = vmatpush.msra.mxu0 %v2896
    %2950 = vmatmul.f32.gmra.mxu0 %v2902
    %v2951 = vpop.f32.mrf.mxu0
    %v2952 = vadd.f32 0.0, %v2951
    %2953 = vmatmul.f32.gmra.mxu0 %v2905
    %v2954 = vpop.f32.mrf.mxu0
    %v2955 = vadd.f32 0.0, %v2954
    %2956 = vdwg.mxu0
    %v2957 = vadd.f32 %v2876, %v2929
    %v2958 = vadd.f32 %v2877, %v2952
    %v2959 = vadd.f32 %v2878, %v2932
    %v2960 = vadd.f32 %v2879, %v2955
    %s2961 = scalar_lea.vmem %s1, 496
    %v2962 = vld [vmem:[%s2961] sm:$0xff]
    %v2963 = vld [vmem:[%s2961 + $0x8] sm:$0x3]
    %v2965 = vsel %vm97, %v2962, 0
    %v2968 = vsel %vm97, %v2963, 0
    %v2970 = vsel %vm110, %v2637, 0
    %v2972 = vsel %vm110, %v2638, 0
    %2974 = vmatpush.msra.mxu0 0.0
    %2975 = vmatpush.msra.mxu0 0.0
    %2976 = vmatpush.msra.mxu0 0.0
    %2977 = vmatpush.msra.mxu0 0.0
    %2978 = vmatpush.msra.mxu0 0.0
    %2979 = vmatpush.msra.mxu0 0.0
    %2980 = vmatpush.msra.mxu0 0.0
    %2981 = vmatpush.msra.mxu0 0.0
    %2982 = vmatpush.msra.mxu0 0.0
    %2983 = vmatpush.msra.mxu0 0.0
    %2984 = vmatpush.msra.mxu0 0.0
    %2985 = vmatpush.msra.mxu0 0.0
    %2986 = vmatpush.msra.mxu0 0.0
    %2987 = vmatpush.msra.mxu0 0.0
    %2988 = vmatpush.msra.mxu0 %v2970
    %2989 = vmatpush.msra.mxu0 %v2634
    %2990 = vmatmul.f32.gmra.mxu0 %v2965
    %v2991 = vpop.f32.mrf.mxu0
    %v2992 = vadd.f32 0.0, %v2991
    %2993 = vmatmul.f32.gmra.mxu0 %v2968
    %v2994 = vpop.f32.mrf.mxu0
    %v2995 = vadd.f32 0.0, %v2994
    %2996 = vdwg.mxu0
    %2997 = vmatpush.msra.mxu0 0.0
    %2998 = vmatpush.msra.mxu0 0.0
    %2999 = vmatpush.msra.mxu0 0.0
    %3000 = vmatpush.msra.mxu0 0.0
    %3001 = vmatpush.msra.mxu0 0.0
    %3002 = vmatpush.msra.mxu0 0.0
    %3003 = vmatpush.msra.mxu0 0.0
    %3004 = vmatpush.msra.mxu0 0.0
    %3005 = vmatpush.msra.mxu0 0.0
    %3006 = vmatpush.msra.mxu0 0.0
    %3007 = vmatpush.msra.mxu0 0.0
    %3008 = vmatpush.msra.mxu0 0.0
    %3009 = vmatpush.msra.mxu0 0.0
    %3010 = vmatpush.msra.mxu0 0.0
    %3011 = vmatpush.msra.mxu0 %v2972
    %3012 = vmatpush.msra.mxu0 %v2635
    %3013 = vmatmul.f32.gmra.mxu0 %v2965
    %v3014 = vpop.f32.mrf.mxu0
    %v3015 = vadd.f32 0.0, %v3014
    %3016 = vmatmul.f32.gmra.mxu0 %v2968
    %v3017 = vpop.f32.mrf.mxu0
    %v3018 = vadd.f32 0.0, %v3017
    %3019 = vdwg.mxu0
    %v3020 = vadd.f32 %v2957, %v2992
    %v3021 = vadd.f32 %v2958, %v3015
    %v3022 = vadd.f32 %v2959, %v2995
    %v3023 = vadd.f32 %v2960, %v3018
    %v3024 = vld [vmem:[#allocation2 + $0x8] sm:$0xff]
    %v3025 = vld [vmem:[#allocation2 + $0x10] sm:$0xff]
    %v3026 = vld [vmem:[#allocation2 + $0x18] sm:$0xff]
    %v3027 = vld [vmem:[#allocation2 + $0x28] sm:$0x3]
    %v3028 = vld [vmem:[#allocation2 + $0x30] sm:$0x3]
    %v3029 = vld [vmem:[#allocation2 + $0x38] sm:$0x3]
    %s3030 = scalar_lea.vmem %s1, 512
    %v3031 = vld [vmem:[%s3030] sm:$0xff]
    %v3032 = vld [vmem:[%s3030 + $0x8] sm:$0x3]
    %3039 = vrot.lane.b32.xlu0 %v3024, 127
    %v3040 = vpop.permute.xlu0 %3039
    %3041 = vrot.lane.b32.xlu0 %v3025, 127
    %v3042 = vpop.permute.xlu0 %3041
    %3043 = vrot.lane.b32.xlu0 %v3026, 127
    %v3044 = vpop.permute.xlu0 %3043
    %3045 = vrot.lane.b32.xlu0 %v3027, 127
    %v3046 = vpop.permute.xlu0 %3045
    %3047 = vrot.lane.b32.xlu0 %v3028, 127
    %v3048 = vpop.permute.xlu0 %3047
    %3049 = vrot.lane.b32.xlu0 %v3029, 127
    %v3050 = vpop.permute.xlu0 %3049
    %v3051 = vsel %vm490, %v3040, %v3042
    %v3052 = vsel %vm490, %v3042, %v3044
    %v3053 = vsel %vm490, %v3046, %v3048
    %v3054 = vsel %vm490, %v3048, %v3050
    %v3058 = vsel %vm97, %v3031, 0
    %v3061 = vsel %vm97, %v3032, 0
    %v3063 = vsel %vm110, %v3053, 0
    %v3065 = vsel %vm110, %v3054, 0
    %3067 = vmatpush.msra.mxu0 0.0
    %3068 = vmatpush.msra.mxu0 0.0
    %3069 = vmatpush.msra.mxu0 0.0
    %3070 = vmatpush.msra.mxu0 0.0
    %3071 = vmatpush.msra.mxu0 0.0
    %3072 = vmatpush.msra.mxu0 0.0
    %3073 = vmatpush.msra.mxu0 0.0
    %3074 = vmatpush.msra.mxu0 0.0
    %3075 = vmatpush.msra.mxu0 0.0
    %3076 = vmatpush.msra.mxu0 0.0
    %3077 = vmatpush.msra.mxu0 0.0
    %3078 = vmatpush.msra.mxu0 0.0
    %3079 = vmatpush.msra.mxu0 0.0
    %3080 = vmatpush.msra.mxu0 0.0
    %3081 = vmatpush.msra.mxu0 %v3063
    %3082 = vmatpush.msra.mxu0 %v3051
    %3083 = vmatmul.f32.gmra.mxu0 %v3058
    %v3084 = vpop.f32.mrf.mxu0
    %v3085 = vadd.f32 0.0, %v3084
    %3086 = vmatmul.f32.gmra.mxu0 %v3061
    %v3087 = vpop.f32.mrf.mxu0
    %v3088 = vadd.f32 0.0, %v3087
    %3089 = vdwg.mxu0
    %3090 = vmatpush.msra.mxu0 0.0
    %3091 = vmatpush.msra.mxu0 0.0
    %3092 = vmatpush.msra.mxu0 0.0
    %3093 = vmatpush.msra.mxu0 0.0
    %3094 = vmatpush.msra.mxu0 0.0
    %3095 = vmatpush.msra.mxu0 0.0
    %3096 = vmatpush.msra.mxu0 0.0
    %3097 = vmatpush.msra.mxu0 0.0
    %3098 = vmatpush.msra.mxu0 0.0
    %3099 = vmatpush.msra.mxu0 0.0
    %3100 = vmatpush.msra.mxu0 0.0
    %3101 = vmatpush.msra.mxu0 0.0
    %3102 = vmatpush.msra.mxu0 0.0
    %3103 = vmatpush.msra.mxu0 0.0
    %3104 = vmatpush.msra.mxu0 %v3065
    %3105 = vmatpush.msra.mxu0 %v3052
    %3106 = vmatmul.f32.gmra.mxu0 %v3058
    %v3107 = vpop.f32.mrf.mxu0
    %v3108 = vadd.f32 0.0, %v3107
    %3109 = vmatmul.f32.gmra.mxu0 %v3061
    %v3110 = vpop.f32.mrf.mxu0
    %v3111 = vadd.f32 0.0, %v3110
    %3112 = vdwg.mxu0
    %v3113 = vadd.f32 %v3020, %v3085
    %v3114 = vadd.f32 %v3021, %v3108
    %v3115 = vadd.f32 %v3022, %v3088
    %v3116 = vadd.f32 %v3023, %v3111
    %s3117 = scalar_lea.vmem %s1, 528
    %v3118 = vld [vmem:[%s3117] sm:$0xff]
    %v3119 = vld [vmem:[%s3117 + $0x8] sm:$0x3]
    %3120 = vrot.lane.b32.xlu0 %v3024, 119
    %v3121 = vpop.permute.xlu0 %3120
    %3122 = vrot.lane.b32.xlu0 %v3025, 119
    %v3123 = vpop.permute.xlu0 %3122
    %3124 = vrot.lane.b32.xlu0 %v3026, 119
    %v3125 = vpop.permute.xlu0 %3124
    %3126 = vrot.lane.b32.xlu0 %v3027, 119
    %v3127 = vpop.permute.xlu0 %3126
    %3128 = vrot.lane.b32.xlu0 %v3028, 119
    %v3129 = vpop.permute.xlu0 %3128
    %3130 = vrot.lane.b32.xlu0 %v3029, 119
    %v3131 = vpop.permute.xlu0 %3130
    %v3132 = vsel %vm572, %v3121, %v3123
    %v3133 = vsel %vm572, %v3123, %v3125
    %v3134 = vsel %vm572, %v3127, %v3129
    %v3135 = vsel %vm572, %v3129, %v3131
    %v3139 = vsel %vm97, %v3118, 0
    %v3142 = vsel %vm97, %v3119, 0
    %v3144 = vsel %vm110, %v3134, 0
    %v3146 = vsel %vm110, %v3135, 0
    %3148 = vmatpush.msra.mxu0 0.0
    %3149 = vmatpush.msra.mxu0 0.0
    %3150 = vmatpush.msra.mxu0 0.0
    %3151 = vmatpush.msra.mxu0 0.0
    %3152 = vmatpush.msra.mxu0 0.0
    %3153 = vmatpush.msra.mxu0 0.0
    %3154 = vmatpush.msra.mxu0 0.0
    %3155 = vmatpush.msra.mxu0 0.0
    %3156 = vmatpush.msra.mxu0 0.0
    %3157 = vmatpush.msra.mxu0 0.0
    %3158 = vmatpush.msra.mxu0 0.0
    %3159 = vmatpush.msra.mxu0 0.0
    %3160 = vmatpush.msra.mxu0 0.0
    %3161 = vmatpush.msra.mxu0 0.0
    %3162 = vmatpush.msra.mxu0 %v3144
    %3163 = vmatpush.msra.mxu0 %v3132
    %3164 = vmatmul.f32.gmra.mxu0 %v3139
    %v3165 = vpop.f32.mrf.mxu0
    %v3166 = vadd.f32 0.0, %v3165
    %3167 = vmatmul.f32.gmra.mxu0 %v3142
    %v3168 = vpop.f32.mrf.mxu0
    %v3169 = vadd.f32 0.0, %v3168
    %3170 = vdwg.mxu0
    %3171 = vmatpush.msra.mxu0 0.0
    %3172 = vmatpush.msra.mxu0 0.0
    %3173 = vmatpush.msra.mxu0 0.0
    %3174 = vmatpush.msra.mxu0 0.0
    %3175 = vmatpush.msra.mxu0 0.0
    %3176 = vmatpush.msra.mxu0 0.0
    %3177 = vmatpush.msra.mxu0 0.0
    %3178 = vmatpush.msra.mxu0 0.0
    %3179 = vmatpush.msra.mxu0 0.0
    %3180 = vmatpush.msra.mxu0 0.0
    %3181 = vmatpush.msra.mxu0 0.0
    %3182 = vmatpush.msra.mxu0 0.0
    %3183 = vmatpush.msra.mxu0 0.0
    %3184 = vmatpush.msra.mxu0 0.0
    %3185 = vmatpush.msra.mxu0 %v3146
    %3186 = vmatpush.msra.mxu0 %v3133
    %3187 = vmatmul.f32.gmra.mxu0 %v3139
    %v3188 = vpop.f32.mrf.mxu0
    %v3189 = vadd.f32 0.0, %v3188
    %3190 = vmatmul.f32.gmra.mxu0 %v3142
    %v3191 = vpop.f32.mrf.mxu0
    %v3192 = vadd.f32 0.0, %v3191
    %3193 = vdwg.mxu0
    %v3194 = vadd.f32 %v3113, %v3166
    %v3195 = vadd.f32 %v3114, %v3189
    %v3196 = vadd.f32 %v3115, %v3169
    %v3197 = vadd.f32 %v3116, %v3192
    %s3198 = scalar_lea.vmem %s1, 544
    %v3199 = vld [vmem:[%s3198] sm:$0xff]
    %v3200 = vld [vmem:[%s3198 + $0x8] sm:$0x3]
    %3201 = vrot.lane.b32.xlu0 %v3024, 118
    %v3202 = vpop.permute.xlu0 %3201
    %3203 = vrot.lane.b32.xlu0 %v3025, 118
    %v3204 = vpop.permute.xlu0 %3203
    %3205 = vrot.lane.b32.xlu0 %v3026, 118
    %v3206 = vpop.permute.xlu0 %3205
    %3207 = vrot.lane.b32.xlu0 %v3027, 118
    %v3208 = vpop.permute.xlu0 %3207
    %3209 = vrot.lane.b32.xlu0 %v3028, 118
    %v3210 = vpop.permute.xlu0 %3209
    %3211 = vrot.lane.b32.xlu0 %v3029, 118
    %v3212 = vpop.permute.xlu0 %3211
    %v3213 = vsel %vm654, %v3202, %v3204
    %v3214 = vsel %vm654, %v3204, %v3206
    %v3215 = vsel %vm654, %v3208, %v3210
    %v3216 = vsel %vm654, %v3210, %v3212
    %v3220 = vsel %vm97, %v3199, 0
    %v3223 = vsel %vm97, %v3200, 0
    %v3225 = vsel %vm110, %v3215, 0
    %v3227 = vsel %vm110, %v3216, 0
    %3229 = vmatpush.msra.mxu0 0.0
    %3230 = vmatpush.msra.mxu0 0.0
    %3231 = vmatpush.msra.mxu0 0.0
    %3232 = vmatpush.msra.mxu0 0.0
    %3233 = vmatpush.msra.mxu0 0.0
    %3234 = vmatpush.msra.mxu0 0.0
    %3235 = vmatpush.msra.mxu0 0.0
    %3236 = vmatpush.msra.mxu0 0.0
    %3237 = vmatpush.msra.mxu0 0.0
    %3238 = vmatpush.msra.mxu0 0.0
    %3239 = vmatpush.msra.mxu0 0.0
    %3240 = vmatpush.msra.mxu0 0.0
    %3241 = vmatpush.msra.mxu0 0.0
    %3242 = vmatpush.msra.mxu0 0.0
    %3243 = vmatpush.msra.mxu0 %v3225
    %3244 = vmatpush.msra.mxu0 %v3213
    %3245 = vmatmul.f32.gmra.mxu0 %v3220
    %v3246 = vpop.f32.mrf.mxu0
    %v3247 = vadd.f32 0.0, %v3246
    %3248 = vmatmul.f32.gmra.mxu0 %v3223
    %v3249 = vpop.f32.mrf.mxu0
    %v3250 = vadd.f32 0.0, %v3249
    %3251 = vdwg.mxu0
    %3252 = vmatpush.msra.mxu0 0.0
    %3253 = vmatpush.msra.mxu0 0.0
    %3254 = vmatpush.msra.mxu0 0.0
    %3255 = vmatpush.msra.mxu0 0.0
    %3256 = vmatpush.msra.mxu0 0.0
    %3257 = vmatpush.msra.mxu0 0.0
    %3258 = vmatpush.msra.mxu0 0.0
    %3259 = vmatpush.msra.mxu0 0.0
    %3260 = vmatpush.msra.mxu0 0.0
    %3261 = vmatpush.msra.mxu0 0.0
    %3262 = vmatpush.msra.mxu0 0.0
    %3263 = vmatpush.msra.mxu0 0.0
    %3264 = vmatpush.msra.mxu0 0.0
    %3265 = vmatpush.msra.mxu0 0.0
    %3266 = vmatpush.msra.mxu0 %v3227
    %3267 = vmatpush.msra.mxu0 %v3214
    %3268 = vmatmul.f32.gmra.mxu0 %v3220
    %v3269 = vpop.f32.mrf.mxu0
    %v3270 = vadd.f32 0.0, %v3269
    %3271 = vmatmul.f32.gmra.mxu0 %v3223
    %v3272 = vpop.f32.mrf.mxu0
    %v3273 = vadd.f32 0.0, %v3272
    %3274 = vdwg.mxu0
    %v3275 = vadd.f32 %v3194, %v3247
    %v3276 = vadd.f32 %v3195, %v3270
    %v3277 = vadd.f32 %v3196, %v3250
    %v3278 = vadd.f32 %v3197, %v3273
    %s3279 = scalar_lea.vmem %s1, 560
    %v3280 = vld [vmem:[%s3279] sm:$0xff]
    %v3281 = vld [vmem:[%s3279 + $0x8] sm:$0x3]
    %3282 = vrot.lane.b32.xlu0 %v3024, 117
    %v3283 = vpop.permute.xlu0 %3282
    %3284 = vrot.lane.b32.xlu0 %v3025, 117
    %v3285 = vpop.permute.xlu0 %3284
    %3286 = vrot.lane.b32.xlu0 %v3026, 117
    %v3287 = vpop.permute.xlu0 %3286
    %3288 = vrot.lane.b32.xlu0 %v3027, 117
    %v3289 = vpop.permute.xlu0 %3288
    %3290 = vrot.lane.b32.xlu0 %v3028, 117
    %v3291 = vpop.permute.xlu0 %3290
    %3292 = vrot.lane.b32.xlu0 %v3029, 117
    %v3293 = vpop.permute.xlu0 %3292
    %v3294 = vsel %vm736, %v3283, %v3285
    %v3295 = vsel %vm736, %v3285, %v3287
    %v3296 = vsel %vm736, %v3289, %v3291
    %v3297 = vsel %vm736, %v3291, %v3293
    %v3301 = vsel %vm97, %v3280, 0
    %v3304 = vsel %vm97, %v3281, 0
    %v3306 = vsel %vm110, %v3296, 0
    %v3308 = vsel %vm110, %v3297, 0
    %3310 = vmatpush.msra.mxu0 0.0
    %3311 = vmatpush.msra.mxu0 0.0
    %3312 = vmatpush.msra.mxu0 0.0
    %3313 = vmatpush.msra.mxu0 0.0
    %3314 = vmatpush.msra.mxu0 0.0
    %3315 = vmatpush.msra.mxu0 0.0
    %3316 = vmatpush.msra.mxu0 0.0
    %3317 = vmatpush.msra.mxu0 0.0
    %3318 = vmatpush.msra.mxu0 0.0
    %3319 = vmatpush.msra.mxu0 0.0
    %3320 = vmatpush.msra.mxu0 0.0
    %3321 = vmatpush.msra.mxu0 0.0
    %3322 = vmatpush.msra.mxu0 0.0
    %3323 = vmatpush.msra.mxu0 0.0
    %3324 = vmatpush.msra.mxu0 %v3306
    %3325 = vmatpush.msra.mxu0 %v3294
    %3326 = vmatmul.f32.gmra.mxu0 %v3301
    %v3327 = vpop.f32.mrf.mxu0
    %v3328 = vadd.f32 0.0, %v3327
    %3329 = vmatmul.f32.gmra.mxu0 %v3304
    %v3330 = vpop.f32.mrf.mxu0
    %v3331 = vadd.f32 0.0, %v3330
    %3332 = vdwg.mxu0
    %3333 = vmatpush.msra.mxu0 0.0
    %3334 = vmatpush.msra.mxu0 0.0
    %3335 = vmatpush.msra.mxu0 0.0
    %3336 = vmatpush.msra.mxu0 0.0
    %3337 = vmatpush.msra.mxu0 0.0
    %3338 = vmatpush.msra.mxu0 0.0
    %3339 = vmatpush.msra.mxu0 0.0
    %3340 = vmatpush.msra.mxu0 0.0
    %3341 = vmatpush.msra.mxu0 0.0
    %3342 = vmatpush.msra.mxu0 0.0
    %3343 = vmatpush.msra.mxu0 0.0
    %3344 = vmatpush.msra.mxu0 0.0
    %3345 = vmatpush.msra.mxu0 0.0
    %3346 = vmatpush.msra.mxu0 0.0
    %3347 = vmatpush.msra.mxu0 %v3308
    %3348 = vmatpush.msra.mxu0 %v3295
    %3349 = vmatmul.f32.gmra.mxu0 %v3301
    %v3350 = vpop.f32.mrf.mxu0
    %v3351 = vadd.f32 0.0, %v3350
    %3352 = vmatmul.f32.gmra.mxu0 %v3304
    %v3353 = vpop.f32.mrf.mxu0
    %v3354 = vadd.f32 0.0, %v3353
    %3355 = vdwg.mxu0
    %v3356 = vadd.f32 %v3275, %v3328
    %v3357 = vadd.f32 %v3276, %v3351
    %v3358 = vadd.f32 %v3277, %v3331
    %v3359 = vadd.f32 %v3278, %v3354
    %3361 = vset.pattern.permute.xlu0 0
    %3362 = vperm.xlu0 %3361, %v2627
    %v3363 = vpop.permute.xlu0 %3362
    %3366 = vset.pattern.permute.xlu0 0
    %3367 = vperm.xlu0 %3366, %v2628
    %v3368 = vpop.permute.xlu0 %3367
    %v3370 = vadd.f32 %v3356, %v3363
    %v3371 = vadd.f32 %v3357, %v3363
    %v3372 = vadd.f32 %v3358, %v3368
    %v3373 = vadd.f32 %v3359, %v3368
    %s3374 = scalar_lea.vmem %s3, 48
    %v3375 = vld [vmem:[%s3374] sm:$0xff]
    %v3376 = vld [vmem:[%s3374 + $0x8] sm:$0x3]
    %s3377 = scalar_lea.vmem %s4, 48
    %v3378 = vld [vmem:[%s3377] sm:$0xff]
    %v3379 = vld [vmem:[%s3377 + $0x8] sm:$0x3]
    %v3380 = vmul.f32 %v3370, %v822
    %v3381 = vmul.f32 %v3371, %v823
    %v3382 = vmul.f32 %v3372, %v822
    %v3383 = vmul.f32 %v3373, %v823
    %v3384 = vadd.f32 %v3380, %v3381
    %3385 = vadd.xlane.f32.xlu0 %v3384
    %v3386 = vpop.xlane.xlu0 %3385
    %v3387 = vsel %vm110, %v3382, 0.0
    %v3388 = vsel %vm110, %v3383, 0.0
    %v3389 = vadd.f32 %v3387, %v3388
    %3390 = vadd.xlane.f32.xlu0 %v3389
    %v3391 = vpop.xlane.xlu0 %3390
    %v3392 = vmul.f32 %v3380, %v3380
    %v3393 = vmul.f32 %v3381, %v3381
    %v3394 = vmul.f32 %v3382, %v3382
    %v3395 = vmul.f32 %v3383, %v3383
    %v3396 = vadd.f32 %v3392, %v3393
    %3397 = vadd.xlane.f32.xlu0 %v3396
    %v3398 = vpop.xlane.xlu0 %3397
    %v3399 = vsel %vm110, %v3394, 0.0
    %v3400 = vsel %vm110, %v3395, 0.0
    %v3401 = vadd.f32 %v3399, %v3400
    %3402 = vadd.xlane.f32.xlu0 %v3401
    %v3403 = vpop.xlane.xlu0 %3402
    %v3404 = vmul.f32 %v3386, 0.0078125
    %v3405 = vmul.f32 %v3391, 0.0078125
    %v3406 = vmul.f32 %v3398, 0.0078125
    %v3407 = vmul.f32 %v3403, 0.0078125
    %v3408 = vmul.f32 %v3404, %v3404
    %v3409 = vmul.f32 %v3405, %v3405
    %v3410 = vsub.f32 %v3406, %v3408
    %v3411 = vsub.f32 %v3407, %v3409
    %v3412 = vadd.f32 %v3410, 1e-05
    %v3413 = vadd.f32 %v3411, 1e-05
    %v3414 = vrsqrt.pop %v3412
    %v3415 = vmul.f32 %v3414, %v3412
    %v3416 = vmul.f32 %v3415, %v3414
    %v3417 = vmul.f32 0.5, %v3416
    %v3418 = vsub.f32 1.5, %v3417
    %v3419 = vmul.f32 %v3414, %v3418
    %vm3420 = vweird.f32 %v3412
    %vm3421 = vweird.f32 %v3414
    %vm3422 = vmor %vm3420, %vm3421
    %v3423 = vsel %vm3422, %v3414, %v3419
    %v3424 = vrsqrt.pop %v3413
    %v3425 = vmul.f32 %v3424, %v3413
    %v3426 = vmul.f32 %v3425, %v3424
    %v3427 = vmul.f32 0.5, %v3426
    %v3428 = vsub.f32 1.5, %v3427
    %v3429 = vmul.f32 %v3424, %v3428
    %vm3430 = vweird.f32 %v3413
    %vm3431 = vweird.f32 %v3424
    %vm3432 = vmor %vm3430, %vm3431
    %v3433 = vsel %vm3432, %v3424, %v3429
    %v3434 = vmul.f32 %v3375, %v3423
    %v3435 = vmul.f32 %v3376, %v3433
    %v3436 = vmul.f32 %v3434, %v3404
    %v3437 = vmul.f32 %v3435, %v3405
    %v3438 = vsub.f32 %v3378, %v3436
    %v3439 = vsub.f32 %v3379, %v3437
    %3441 = vset.pattern.permute.xlu0 0
    %3442 = vperm.xlu0 %3441, %v3434
    %v3443 = vpop.permute.xlu0 %3442
    %3446 = vset.pattern.permute.xlu0 0
    %3447 = vperm.xlu0 %3446, %v3435
    %v3448 = vpop.permute.xlu0 %3447
    %v3450 = vmul.f32 %v3443, %v3370
    %v3451 = vmul.f32 %v3443, %v3371
    %v3452 = vmul.f32 %v3448, %v3372
    %v3453 = vmul.f32 %v3448, %v3373
    %3455 = vset.pattern.permute.xlu0 0
    %3456 = vperm.xlu0 %3455, %v3438
    %v3457 = vpop.permute.xlu0 %3456
    %3460 = vset.pattern.permute.xlu0 0
    %3461 = vperm.xlu0 %3460, %v3439
    %v3462 = vpop.permute.xlu0 %3461
    %v3464 = vadd.f32 %v3450, %v3457
    %v3465 = vadd.f32 %v3451, %v3457
    %v3466 = vadd.f32 %v3452, %v3462
    %v3467 = vadd.f32 %v3453, %v3462
    %v3468 = vmax.f32 %v3464, 0.0
    %v3469 = vmax.f32 %v3465, 0.0
    %v3470 = vmax.f32 %v3466, 0.0
    %v3471 = vmax.f32 %v3467, 0.0
    %v3472 = vmul.f32 %v3468, %v822
    %v3473 = vmul.f32 %v3469, %v823
    %v3474 = vmul.f32 %v3470, %v822
    %v3475 = vmul.f32 %v3471, %v823
    %s3476 = scalar_lea.vmem %s2, 64
    %v3477 = vld [vmem:[%s3476] sm:$0xff]
    %v3478 = vld [vmem:[%s3476 + $0x8] sm:$0x3]
    %3479 = vst [vmem:[#allocation2 + $0x8] sm:$0xff] %v3472
    %3480 = vst [vmem:[#allocation2 + $0x10] sm:$0xff] %v3473
    %3481 = vst [vmem:[#allocation2 + $0x28] sm:$0x3] %v3474
    %3482 = vst [vmem:[#allocation2 + $0x30] sm:$0x3] %v3475
    %v3483 = vld [vmem:[#allocation2] sm:$0xff]
    %v3484 = vld [vmem:[#allocation2 + $0x8] sm:$0xff]
    %v3485 = vld [vmem:[#allocation2 + $0x10] sm:$0xff]
    %v3486 = vld [vmem:[#allocation2 + $0x20] sm:$0x3]
    %v3487 = vld [vmem:[#allocation2 + $0x28] sm:$0x3]
    %v3488 = vld [vmem:[#allocation2 + $0x30] sm:$0x3]
    %s3489 = scalar_lea.vmem %s1, 576
    %v3490 = vld [vmem:[%s3489] sm:$0xff]
    %v3491 = vld [vmem:[%s3489 + $0x8] sm:$0x3]
    %s3492 = scalar_lea.vmem %s1, 592
    %v3493 = vld [vmem:[%s3492] sm:$0xff]
    %v3494 = vld [vmem:[%s3492 + $0x8] sm:$0x3]
    %3501 = vrot.lane.b32.xlu0 %v3483, 10
    %v3502 = vpop.permute.xlu0 %3501
    %3503 = vrot.lane.b32.xlu0 %v3484, 10
    %v3504 = vpop.permute.xlu0 %3503
    %3505 = vrot.lane.b32.xlu0 %v3485, 10
    %v3506 = vpop.permute.xlu0 %3505
    %3507 = vrot.lane.b32.xlu0 %v3486, 10
    %v3508 = vpop.permute.xlu0 %3507
    %3509 = vrot.lane.b32.xlu0 %v3487, 10
    %v3510 = vpop.permute.xlu0 %3509
    %3511 = vrot.lane.b32.xlu0 %v3488, 10
    %v3512 = vpop.permute.xlu0 %3511
    %v3513 = vsel %vm97, %v3502, %v3504
    %v3514 = vsel %vm97, %v3504, %v3506
    %v3515 = vsel %vm97, %v3508, %v3510
    %v3516 = vsel %vm97, %v3510, %v3512
    %v3520 = vsel %vm97, %v3493, 0
    %v3523 = vsel %vm97, %v3494, 0
    %v3525 = vsel %vm110, %v3515, 0
    %v3527 = vsel %vm110, %v3516, 0
    %3529 = vmatpush.msra.mxu0 0.0
    %3530 = vmatpush.msra.mxu0 0.0
    %3531 = vmatpush.msra.mxu0 0.0
    %3532 = vmatpush.msra.mxu0 0.0
    %3533 = vmatpush.msra.mxu0 0.0
    %3534 = vmatpush.msra.mxu0 0.0
    %3535 = vmatpush.msra.mxu0 0.0
    %3536 = vmatpush.msra.mxu0 0.0
    %3537 = vmatpush.msra.mxu0 0.0
    %3538 = vmatpush.msra.mxu0 0.0
    %3539 = vmatpush.msra.mxu0 0.0
    %3540 = vmatpush.msra.mxu0 0.0
    %3541 = vmatpush.msra.mxu0 0.0
    %3542 = vmatpush.msra.mxu0 0.0
    %3543 = vmatpush.msra.mxu0 %v3525
    %3544 = vmatpush.msra.mxu0 %v3513
    %3545 = vmatmul.f32.gmra.mxu0 %v3520
    %v3546 = vpop.f32.mrf.mxu0
    %v3547 = vadd.f32 0.0, %v3546
    %3548 = vmatmul.f32.gmra.mxu0 %v3523
    %v3549 = vpop.f32.mrf.mxu0
    %v3550 = vadd.f32 0.0, %v3549
    %3551 = vdwg.mxu0
    %3552 = vmatpush.msra.mxu0 0.0
    %3553 = vmatpush.msra.mxu0 0.0
    %3554 = vmatpush.msra.mxu0 0.0
    %3555 = vmatpush.msra.mxu0 0.0
    %3556 = vmatpush.msra.mxu0 0.0
    %3557 = vmatpush.msra.mxu0 0.0
    %3558 = vmatpush.msra.mxu0 0.0
    %3559 = vmatpush.msra.mxu0 0.0
    %3560 = vmatpush.msra.mxu0 0.0
    %3561 = vmatpush.msra.mxu0 0.0
    %3562 = vmatpush.msra.mxu0 0.0
    %3563 = vmatpush.msra.mxu0 0.0
    %3564 = vmatpush.msra.mxu0 0.0
    %3565 = vmatpush.msra.mxu0 0.0
    %3566 = vmatpush.msra.mxu0 %v3527
    %3567 = vmatpush.msra.mxu0 %v3514
    %3568 = vmatmul.f32.gmra.mxu0 %v3520
    %v3569 = vpop.f32.mrf.mxu0
    %v3570 = vadd.f32 0.0, %v3569
    %3571 = vmatmul.f32.gmra.mxu0 %v3523
    %v3572 = vpop.f32.mrf.mxu0
    %v3573 = vadd.f32 0.0, %v3572
    %3574 = vdwg.mxu0
    %3575 = vrot.lane.b32.xlu0 %v3483, 11
    %v3576 = vpop.permute.xlu0 %3575
    %3577 = vrot.lane.b32.xlu0 %v3484, 11
    %v3578 = vpop.permute.xlu0 %3577
    %3579 = vrot.lane.b32.xlu0 %v3485, 11
    %v3580 = vpop.permute.xlu0 %3579
    %3581 = vrot.lane.b32.xlu0 %v3486, 11
    %v3582 = vpop.permute.xlu0 %3581
    %3583 = vrot.lane.b32.xlu0 %v3487, 11
    %v3584 = vpop.permute.xlu0 %3583
    %3585 = vrot.lane.b32.xlu0 %v3488, 11
    %v3586 = vpop.permute.xlu0 %3585
    %v3587 = vsel %vm173, %v3576, %v3578
    %v3588 = vsel %vm173, %v3578, %v3580
    %v3589 = vsel %vm173, %v3582, %v3584
    %v3590 = vsel %vm173, %v3584, %v3586
    %v3594 = vsel %vm97, %v3490, 0
    %v3597 = vsel %vm97, %v3491, 0
    %v3599 = vsel %vm110, %v3589, 0
    %v3601 = vsel %vm110, %v3590, 0
    %3603 = vmatpush.msra.mxu0 0.0
    %3604 = vmatpush.msra.mxu0 0.0
    %3605 = vmatpush.msra.mxu0 0.0
    %3606 = vmatpush.msra.mxu0 0.0
    %3607 = vmatpush.msra.mxu0 0.0
    %3608 = vmatpush.msra.mxu0 0.0
    %3609 = vmatpush.msra.mxu0 0.0
    %3610 = vmatpush.msra.mxu0 0.0
    %3611 = vmatpush.msra.mxu0 0.0
    %3612 = vmatpush.msra.mxu0 0.0
    %3613 = vmatpush.msra.mxu0 0.0
    %3614 = vmatpush.msra.mxu0 0.0
    %3615 = vmatpush.msra.mxu0 0.0
    %3616 = vmatpush.msra.mxu0 0.0
    %3617 = vmatpush.msra.mxu0 %v3599
    %3618 = vmatpush.msra.mxu0 %v3587
    %3619 = vmatmul.f32.gmra.mxu0 %v3594
    %v3620 = vpop.f32.mrf.mxu0
    %v3621 = vadd.f32 %v3547, %v3620
    %3622 = vmatmul.f32.gmra.mxu0 %v3597
    %v3623 = vpop.f32.mrf.mxu0
    %v3624 = vadd.f32 %v3550, %v3623
    %3625 = vdwg.mxu0
    %3626 = vmatpush.msra.mxu0 0.0
    %3627 = vmatpush.msra.mxu0 0.0
    %3628 = vmatpush.msra.mxu0 0.0
    %3629 = vmatpush.msra.mxu0 0.0
    %3630 = vmatpush.msra.mxu0 0.0
    %3631 = vmatpush.msra.mxu0 0.0
    %3632 = vmatpush.msra.mxu0 0.0
    %3633 = vmatpush.msra.mxu0 0.0
    %3634 = vmatpush.msra.mxu0 0.0
    %3635 = vmatpush.msra.mxu0 0.0
    %3636 = vmatpush.msra.mxu0 0.0
    %3637 = vmatpush.msra.mxu0 0.0
    %3638 = vmatpush.msra.mxu0 0.0
    %3639 = vmatpush.msra.mxu0 0.0
    %3640 = vmatpush.msra.mxu0 %v3601
    %3641 = vmatpush.msra.mxu0 %v3588
    %3642 = vmatmul.f32.gmra.mxu0 %v3594
    %v3643 = vpop.f32.mrf.mxu0
    %v3644 = vadd.f32 %v3570, %v3643
    %3645 = vmatmul.f32.gmra.mxu0 %v3597
    %v3646 = vpop.f32.mrf.mxu0
    %v3647 = vadd.f32 %v3573, %v3646
    %3648 = vdwg.mxu0
    %s3649 = scalar_lea.vmem %s1, 608
    %v3650 = vld [vmem:[%s3649] sm:$0xff]
    %v3651 = vld [vmem:[%s3649 + $0x8] sm:$0x3]
    %3652 = vrot.lane.b32.xlu0 %v3483, 9
    %v3653 = vpop.permute.xlu0 %3652
    %3654 = vrot.lane.b32.xlu0 %v3484, 9
    %v3655 = vpop.permute.xlu0 %3654
    %3656 = vrot.lane.b32.xlu0 %v3485, 9
    %v3657 = vpop.permute.xlu0 %3656
    %3658 = vrot.lane.b32.xlu0 %v3486, 9
    %v3659 = vpop.permute.xlu0 %3658
    %3660 = vrot.lane.b32.xlu0 %v3487, 9
    %v3661 = vpop.permute.xlu0 %3660
    %3662 = vrot.lane.b32.xlu0 %v3488, 9
    %v3663 = vpop.permute.xlu0 %3662
    %v3664 = vsel %vm251, %v3653, %v3655
    %v3665 = vsel %vm251, %v3655, %v3657
    %v3666 = vsel %vm251, %v3659, %v3661
    %v3667 = vsel %vm251, %v3661, %v3663
    %v3671 = vsel %vm97, %v3650, 0
    %v3674 = vsel %vm97, %v3651, 0
    %v3676 = vsel %vm110, %v3666, 0
    %v3678 = vsel %vm110, %v3667, 0
    %3680 = vmatpush.msra.mxu0 0.0
    %3681 = vmatpush.msra.mxu0 0.0
    %3682 = vmatpush.msra.mxu0 0.0
    %3683 = vmatpush.msra.mxu0 0.0
    %3684 = vmatpush.msra.mxu0 0.0
    %3685 = vmatpush.msra.mxu0 0.0
    %3686 = vmatpush.msra.mxu0 0.0
    %3687 = vmatpush.msra.mxu0 0.0
    %3688 = vmatpush.msra.mxu0 0.0
    %3689 = vmatpush.msra.mxu0 0.0
    %3690 = vmatpush.msra.mxu0 0.0
    %3691 = vmatpush.msra.mxu0 0.0
    %3692 = vmatpush.msra.mxu0 0.0
    %3693 = vmatpush.msra.mxu0 0.0
    %3694 = vmatpush.msra.mxu0 %v3676
    %3695 = vmatpush.msra.mxu0 %v3664
    %3696 = vmatmul.f32.gmra.mxu0 %v3671
    %v3697 = vpop.f32.mrf.mxu0
    %v3698 = vadd.f32 0.0, %v3697
    %3699 = vmatmul.f32.gmra.mxu0 %v3674
    %v3700 = vpop.f32.mrf.mxu0
    %v3701 = vadd.f32 0.0, %v3700
    %3702 = vdwg.mxu0
    %3703 = vmatpush.msra.mxu0 0.0
    %3704 = vmatpush.msra.mxu0 0.0
    %3705 = vmatpush.msra.mxu0 0.0
    %3706 = vmatpush.msra.mxu0 0.0
    %3707 = vmatpush.msra.mxu0 0.0
    %3708 = vmatpush.msra.mxu0 0.0
    %3709 = vmatpush.msra.mxu0 0.0
    %3710 = vmatpush.msra.mxu0 0.0
    %3711 = vmatpush.msra.mxu0 0.0
    %3712 = vmatpush.msra.mxu0 0.0
    %3713 = vmatpush.msra.mxu0 0.0
    %3714 = vmatpush.msra.mxu0 0.0
    %3715 = vmatpush.msra.mxu0 0.0
    %3716 = vmatpush.msra.mxu0 0.0
    %3717 = vmatpush.msra.mxu0 %v3678
    %3718 = vmatpush.msra.mxu0 %v3665
    %3719 = vmatmul.f32.gmra.mxu0 %v3671
    %v3720 = vpop.f32.mrf.mxu0
    %v3721 = vadd.f32 0.0, %v3720
    %3722 = vmatmul.f32.gmra.mxu0 %v3674
    %v3723 = vpop.f32.mrf.mxu0
    %v3724 = vadd.f32 0.0, %v3723
    %3725 = vdwg.mxu0
    %v3726 = vadd.f32 %v3621, %v3698
    %v3727 = vadd.f32 %v3644, %v3721
    %v3728 = vadd.f32 %v3624, %v3701
    %v3729 = vadd.f32 %v3647, %v3724
    %s3730 = scalar_lea.vmem %s1, 624
    %v3731 = vld [vmem:[%s3730] sm:$0xff]
    %v3732 = vld [vmem:[%s3730 + $0x8] sm:$0x3]
    %3733 = vrot.lane.b32.xlu0 %v3483, 1
    %v3734 = vpop.permute.xlu0 %3733
    %3735 = vrot.lane.b32.xlu0 %v3484, 1
    %v3736 = vpop.permute.xlu0 %3735
    %3737 = vrot.lane.b32.xlu0 %v3485, 1
    %v3738 = vpop.permute.xlu0 %3737
    %3739 = vrot.lane.b32.xlu0 %v3486, 1
    %v3740 = vpop.permute.xlu0 %3739
    %3741 = vrot.lane.b32.xlu0 %v3487, 1
    %v3742 = vpop.permute.xlu0 %3741
    %3743 = vrot.lane.b32.xlu0 %v3488, 1
    %v3744 = vpop.permute.xlu0 %3743
    %v3745 = vsel %vm333, %v3734, %v3736
    %v3746 = vsel %vm333, %v3736, %v3738
    %v3747 = vsel %vm333, %v3740, %v3742
    %v3748 = vsel %vm333, %v3742, %v3744
    %v3752 = vsel %vm97, %v3731, 0
    %v3755 = vsel %vm97, %v3732, 0
    %v3757 = vsel %vm110, %v3747, 0
    %v3759 = vsel %vm110, %v3748, 0
    %3761 = vmatpush.msra.mxu0 0.0
    %3762 = vmatpush.msra.mxu0 0.0
    %3763 = vmatpush.msra.mxu0 0.0
    %3764 = vmatpush.msra.mxu0 0.0
    %3765 = vmatpush.msra.mxu0 0.0
    %3766 = vmatpush.msra.mxu0 0.0
    %3767 = vmatpush.msra.mxu0 0.0
    %3768 = vmatpush.msra.mxu0 0.0
    %3769 = vmatpush.msra.mxu0 0.0
    %3770 = vmatpush.msra.mxu0 0.0
    %3771 = vmatpush.msra.mxu0 0.0
    %3772 = vmatpush.msra.mxu0 0.0
    %3773 = vmatpush.msra.mxu0 0.0
    %3774 = vmatpush.msra.mxu0 0.0
    %3775 = vmatpush.msra.mxu0 %v3757
    %3776 = vmatpush.msra.mxu0 %v3745
    %3777 = vmatmul.f32.gmra.mxu0 %v3752
    %v3778 = vpop.f32.mrf.mxu0
    %v3779 = vadd.f32 0.0, %v3778
    %3780 = vmatmul.f32.gmra.mxu0 %v3755
    %v3781 = vpop.f32.mrf.mxu0
    %v3782 = vadd.f32 0.0, %v3781
    %3783 = vdwg.mxu0
    %3784 = vmatpush.msra.mxu0 0.0
    %3785 = vmatpush.msra.mxu0 0.0
    %3786 = vmatpush.msra.mxu0 0.0
    %3787 = vmatpush.msra.mxu0 0.0
    %3788 = vmatpush.msra.mxu0 0.0
    %3789 = vmatpush.msra.mxu0 0.0
    %3790 = vmatpush.msra.mxu0 0.0
    %3791 = vmatpush.msra.mxu0 0.0
    %3792 = vmatpush.msra.mxu0 0.0
    %3793 = vmatpush.msra.mxu0 0.0
    %3794 = vmatpush.msra.mxu0 0.0
    %3795 = vmatpush.msra.mxu0 0.0
    %3796 = vmatpush.msra.mxu0 0.0
    %3797 = vmatpush.msra.mxu0 0.0
    %3798 = vmatpush.msra.mxu0 %v3759
    %3799 = vmatpush.msra.mxu0 %v3746
    %3800 = vmatmul.f32.gmra.mxu0 %v3752
    %v3801 = vpop.f32.mrf.mxu0
    %v3802 = vadd.f32 0.0, %v3801
    %3803 = vmatmul.f32.gmra.mxu0 %v3755
    %v3804 = vpop.f32.mrf.mxu0
    %v3805 = vadd.f32 0.0, %v3804
    %3806 = vdwg.mxu0
    %v3807 = vadd.f32 %v3726, %v3779
    %v3808 = vadd.f32 %v3727, %v3802
    %v3809 = vadd.f32 %v3728, %v3782
    %v3810 = vadd.f32 %v3729, %v3805
    %s3811 = scalar_lea.vmem %s1, 640
    %v3812 = vld [vmem:[%s3811] sm:$0xff]
    %v3813 = vld [vmem:[%s3811 + $0x8] sm:$0x3]
    %v3815 = vsel %vm97, %v3812, 0
    %v3818 = vsel %vm97, %v3813, 0
    %v3820 = vsel %vm110, %v3487, 0
    %v3822 = vsel %vm110, %v3488, 0
    %3824 = vmatpush.msra.mxu0 0.0
    %3825 = vmatpush.msra.mxu0 0.0
    %3826 = vmatpush.msra.mxu0 0.0
    %3827 = vmatpush.msra.mxu0 0.0
    %3828 = vmatpush.msra.mxu0 0.0
    %3829 = vmatpush.msra.mxu0 0.0
    %3830 = vmatpush.msra.mxu0 0.0
    %3831 = vmatpush.msra.mxu0 0.0
    %3832 = vmatpush.msra.mxu0 0.0
    %3833 = vmatpush.msra.mxu0 0.0
    %3834 = vmatpush.msra.mxu0 0.0
    %3835 = vmatpush.msra.mxu0 0.0
    %3836 = vmatpush.msra.mxu0 0.0
    %3837 = vmatpush.msra.mxu0 0.0
    %3838 = vmatpush.msra.mxu0 %v3820
    %3839 = vmatpush.msra.mxu0 %v3484
    %3840 = vmatmul.f32.gmra.mxu0 %v3815
    %v3841 = vpop.f32.mrf.mxu0
    %v3842 = vadd.f32 0.0, %v3841
    %3843 = vmatmul.f32.gmra.mxu0 %v3818
    %v3844 = vpop.f32.mrf.mxu0
    %v3845 = vadd.f32 0.0, %v3844
    %3846 = vdwg.mxu0
    %3847 = vmatpush.msra.mxu0 0.0
    %3848 = vmatpush.msra.mxu0 0.0
    %3849 = vmatpush.msra.mxu0 0.0
    %3850 = vmatpush.msra.mxu0 0.0
    %3851 = vmatpush.msra.mxu0 0.0
    %3852 = vmatpush.msra.mxu0 0.0
    %3853 = vmatpush.msra.mxu0 0.0
    %3854 = vmatpush.msra.mxu0 0.0
    %3855 = vmatpush.msra.mxu0 0.0
    %3856 = vmatpush.msra.mxu0 0.0
    %3857 = vmatpush.msra.mxu0 0.0
    %3858 = vmatpush.msra.mxu0 0.0
    %3859 = vmatpush.msra.mxu0 0.0
    %3860 = vmatpush.msra.mxu0 0.0
    %3861 = vmatpush.msra.mxu0 %v3822
    %3862 = vmatpush.msra.mxu0 %v3485
    %3863 = vmatmul.f32.gmra.mxu0 %v3815
    %v3864 = vpop.f32.mrf.mxu0
    %v3865 = vadd.f32 0.0, %v3864
    %3866 = vmatmul.f32.gmra.mxu0 %v3818
    %v3867 = vpop.f32.mrf.mxu0
    %v3868 = vadd.f32 0.0, %v3867
    %3869 = vdwg.mxu0
    %v3870 = vadd.f32 %v3807, %v3842
    %v3871 = vadd.f32 %v3808, %v3865
    %v3872 = vadd.f32 %v3809, %v3845
    %v3873 = vadd.f32 %v3810, %v3868
    %v3874 = vld [vmem:[#allocation2 + $0x8] sm:$0xff]
    %v3875 = vld [vmem:[#allocation2 + $0x10] sm:$0xff]
    %v3876 = vld [vmem:[#allocation2 + $0x18] sm:$0xff]
    %v3877 = vld [vmem:[#allocation2 + $0x28] sm:$0x3]
    %v3878 = vld [vmem:[#allocation2 + $0x30] sm:$0x3]
    %v3879 = vld [vmem:[#allocation2 + $0x38] sm:$0x3]
    %s3880 = scalar_lea.vmem %s1, 656
    %v3881 = vld [vmem:[%s3880] sm:$0xff]
    %v3882 = vld [vmem:[%s3880 + $0x8] sm:$0x3]
    %3889 = vrot.lane.b32.xlu0 %v3874, 127
    %v3890 = vpop.permute.xlu0 %3889
    %3891 = vrot.lane.b32.xlu0 %v3875, 127
    %v3892 = vpop.permute.xlu0 %3891
    %3893 = vrot.lane.b32.xlu0 %v3876, 127
    %v3894 = vpop.permute.xlu0 %3893
    %3895 = vrot.lane.b32.xlu0 %v3877, 127
    %v3896 = vpop.permute.xlu0 %3895
    %3897 = vrot.lane.b32.xlu0 %v3878, 127
    %v3898 = vpop.permute.xlu0 %3897
    %3899 = vrot.lane.b32.xlu0 %v3879, 127
    %v3900 = vpop.permute.xlu0 %3899
    %v3901 = vsel %vm490, %v3890, %v3892
    %v3902 = vsel %vm490, %v3892, %v3894
    %v3903 = vsel %vm490, %v3896, %v3898
    %v3904 = vsel %vm490, %v3898, %v3900
    %v3908 = vsel %vm97, %v3881, 0
    %v3911 = vsel %vm97, %v3882, 0
    %v3913 = vsel %vm110, %v3903, 0
    %v3915 = vsel %vm110, %v3904, 0
    %3917 = vmatpush.msra.mxu0 0.0
    %3918 = vmatpush.msra.mxu0 0.0
    %3919 = vmatpush.msra.mxu0 0.0
    %3920 = vmatpush.msra.mxu0 0.0
    %3921 = vmatpush.msra.mxu0 0.0
    %3922 = vmatpush.msra.mxu0 0.0
    %3923 = vmatpush.msra.mxu0 0.0
    %3924 = vmatpush.msra.mxu0 0.0
    %3925 = vmatpush.msra.mxu0 0.0
    %3926 = vmatpush.msra.mxu0 0.0
    %3927 = vmatpush.msra.mxu0 0.0
    %3928 = vmatpush.msra.mxu0 0.0
    %3929 = vmatpush.msra.mxu0 0.0
    %3930 = vmatpush.msra.mxu0 0.0
    %3931 = vmatpush.msra.mxu0 %v3913
    %3932 = vmatpush.msra.mxu0 %v3901
    %3933 = vmatmul.f32.gmra.mxu0 %v3908
    %v3934 = vpop.f32.mrf.mxu0
    %v3935 = vadd.f32 0.0, %v3934
    %3936 = vmatmul.f32.gmra.mxu0 %v3911
    %v3937 = vpop.f32.mrf.mxu0
    %v3938 = vadd.f32 0.0, %v3937
    %3939 = vdwg.mxu0
    %3940 = vmatpush.msra.mxu0 0.0
    %3941 = vmatpush.msra.mxu0 0.0
    %3942 = vmatpush.msra.mxu0 0.0
    %3943 = vmatpush.msra.mxu0 0.0
    %3944 = vmatpush.msra.mxu0 0.0
    %3945 = vmatpush.msra.mxu0 0.0
    %3946 = vmatpush.msra.mxu0 0.0
    %3947 = vmatpush.msra.mxu0 0.0
    %3948 = vmatpush.msra.mxu0 0.0
    %3949 = vmatpush.msra.mxu0 0.0
    %3950 = vmatpush.msra.mxu0 0.0
    %3951 = vmatpush.msra.mxu0 0.0
    %3952 = vmatpush.msra.mxu0 0.0
    %3953 = vmatpush.msra.mxu0 0.0
    %3954 = vmatpush.msra.mxu0 %v3915
    %3955 = vmatpush.msra.mxu0 %v3902
    %3956 = vmatmul.f32.gmra.mxu0 %v3908
    %v3957 = vpop.f32.mrf.mxu0
    %v3958 = vadd.f32 0.0, %v3957
    %3959 = vmatmul.f32.gmra.mxu0 %v3911
    %v3960 = vpop.f32.mrf.mxu0
    %v3961 = vadd.f32 0.0, %v3960
    %3962 = vdwg.mxu0
    %v3963 = vadd.f32 %v3870, %v3935
    %v3964 = vadd.f32 %v3871, %v3958
    %v3965 = vadd.f32 %v3872, %v3938
    %v3966 = vadd.f32 %v3873, %v3961
    %s3967 = scalar_lea.vmem %s1, 672
    %v3968 = vld [vmem:[%s3967] sm:$0xff]
    %v3969 = vld [vmem:[%s3967 + $0x8] sm:$0x3]
    %3970 = vrot.lane.b32.xlu0 %v3874, 119
    %v3971 = vpop.permute.xlu0 %3970
    %3972 = vrot.lane.b32.xlu0 %v3875, 119
    %v3973 = vpop.permute.xlu0 %3972
    %3974 = vrot.lane.b32.xlu0 %v3876, 119
    %v3975 = vpop.permute.xlu0 %3974
    %3976 = vrot.lane.b32.xlu0 %v3877, 119
    %v3977 = vpop.permute.xlu0 %3976
    %3978 = vrot.lane.b32.xlu0 %v3878, 119
    %v3979 = vpop.permute.xlu0 %3978
    %3980 = vrot.lane.b32.xlu0 %v3879, 119
    %v3981 = vpop.permute.xlu0 %3980
    %v3982 = vsel %vm572, %v3971, %v3973
    %v3983 = vsel %vm572, %v3973, %v3975
    %v3984 = vsel %vm572, %v3977, %v3979
    %v3985 = vsel %vm572, %v3979, %v3981
    %v3989 = vsel %vm97, %v3968, 0
    %v3992 = vsel %vm97, %v3969, 0
    %v3994 = vsel %vm110, %v3984, 0
    %v3996 = vsel %vm110, %v3985, 0
    %3998 = vmatpush.msra.mxu0 0.0
    %3999 = vmatpush.msra.mxu0 0.0
    %4000 = vmatpush.msra.mxu0 0.0
    %4001 = vmatpush.msra.mxu0 0.0
    %4002 = vmatpush.msra.mxu0 0.0
    %4003 = vmatpush.msra.mxu0 0.0
    %4004 = vmatpush.msra.mxu0 0.0
    %4005 = vmatpush.msra.mxu0 0.0
    %4006 = vmatpush.msra.mxu0 0.0
    %4007 = vmatpush.msra.mxu0 0.0
    %4008 = vmatpush.msra.mxu0 0.0
    %4009 = vmatpush.msra.mxu0 0.0
    %4010 = vmatpush.msra.mxu0 0.0
    %4011 = vmatpush.msra.mxu0 0.0
    %4012 = vmatpush.msra.mxu0 %v3994
    %4013 = vmatpush.msra.mxu0 %v3982
    %4014 = vmatmul.f32.gmra.mxu0 %v3989
    %v4015 = vpop.f32.mrf.mxu0
    %v4016 = vadd.f32 0.0, %v4015
    %4017 = vmatmul.f32.gmra.mxu0 %v3992
    %v4018 = vpop.f32.mrf.mxu0
    %v4019 = vadd.f32 0.0, %v4018
    %4020 = vdwg.mxu0
    %4021 = vmatpush.msra.mxu0 0.0
    %4022 = vmatpush.msra.mxu0 0.0
    %4023 = vmatpush.msra.mxu0 0.0
    %4024 = vmatpush.msra.mxu0 0.0
    %4025 = vmatpush.msra.mxu0 0.0
    %4026 = vmatpush.msra.mxu0 0.0
    %4027 = vmatpush.msra.mxu0 0.0
    %4028 = vmatpush.msra.mxu0 0.0
    %4029 = vmatpush.msra.mxu0 0.0
    %4030 = vmatpush.msra.mxu0 0.0
    %4031 = vmatpush.msra.mxu0 0.0
    %4032 = vmatpush.msra.mxu0 0.0
    %4033 = vmatpush.msra.mxu0 0.0
    %4034 = vmatpush.msra.mxu0 0.0
    %4035 = vmatpush.msra.mxu0 %v3996
    %4036 = vmatpush.msra.mxu0 %v3983
    %4037 = vmatmul.f32.gmra.mxu0 %v3989
    %v4038 = vpop.f32.mrf.mxu0
    %v4039 = vadd.f32 0.0, %v4038
    %4040 = vmatmul.f32.gmra.mxu0 %v3992
    %v4041 = vpop.f32.mrf.mxu0
    %v4042 = vadd.f32 0.0, %v4041
    %4043 = vdwg.mxu0
    %v4044 = vadd.f32 %v3963, %v4016
    %v4045 = vadd.f32 %v3964, %v4039
    %v4046 = vadd.f32 %v3965, %v4019
    %v4047 = vadd.f32 %v3966, %v4042
    %s4048 = scalar_lea.vmem %s1, 688
    %v4049 = vld [vmem:[%s4048] sm:$0xff]
    %v4050 = vld [vmem:[%s4048 + $0x8] sm:$0x3]
    %4051 = vrot.lane.b32.xlu0 %v3874, 118
    %v4052 = vpop.permute.xlu0 %4051
    %4053 = vrot.lane.b32.xlu0 %v3875, 118
    %v4054 = vpop.permute.xlu0 %4053
    %4055 = vrot.lane.b32.xlu0 %v3876, 118
    %v4056 = vpop.permute.xlu0 %4055
    %4057 = vrot.lane.b32.xlu0 %v3877, 118
    %v4058 = vpop.permute.xlu0 %4057
    %4059 = vrot.lane.b32.xlu0 %v3878, 118
    %v4060 = vpop.permute.xlu0 %4059
    %4061 = vrot.lane.b32.xlu0 %v3879, 118
    %v4062 = vpop.permute.xlu0 %4061
    %v4063 = vsel %vm654, %v4052, %v4054
    %v4064 = vsel %vm654, %v4054, %v4056
    %v4065 = vsel %vm654, %v4058, %v4060
    %v4066 = vsel %vm654, %v4060, %v4062
    %v4070 = vsel %vm97, %v4049, 0
    %v4073 = vsel %vm97, %v4050, 0
    %v4075 = vsel %vm110, %v4065, 0
    %v4077 = vsel %vm110, %v4066, 0
    %4079 = vmatpush.msra.mxu0 0.0
    %4080 = vmatpush.msra.mxu0 0.0
    %4081 = vmatpush.msra.mxu0 0.0
    %4082 = vmatpush.msra.mxu0 0.0
    %4083 = vmatpush.msra.mxu0 0.0
    %4084 = vmatpush.msra.mxu0 0.0
    %4085 = vmatpush.msra.mxu0 0.0
    %4086 = vmatpush.msra.mxu0 0.0
    %4087 = vmatpush.msra.mxu0 0.0
    %4088 = vmatpush.msra.mxu0 0.0
    %4089 = vmatpush.msra.mxu0 0.0
    %4090 = vmatpush.msra.mxu0 0.0
    %4091 = vmatpush.msra.mxu0 0.0
    %4092 = vmatpush.msra.mxu0 0.0
    %4093 = vmatpush.msra.mxu0 %v4075
    %4094 = vmatpush.msra.mxu0 %v4063
    %4095 = vmatmul.f32.gmra.mxu0 %v4070
    %v4096 = vpop.f32.mrf.mxu0
    %v4097 = vadd.f32 0.0, %v4096
    %4098 = vmatmul.f32.gmra.mxu0 %v4073
    %v4099 = vpop.f32.mrf.mxu0
    %v4100 = vadd.f32 0.0, %v4099
    %4101 = vdwg.mxu0
    %4102 = vmatpush.msra.mxu0 0.0
    %4103 = vmatpush.msra.mxu0 0.0
    %4104 = vmatpush.msra.mxu0 0.0
    %4105 = vmatpush.msra.mxu0 0.0
    %4106 = vmatpush.msra.mxu0 0.0
    %4107 = vmatpush.msra.mxu0 0.0
    %4108 = vmatpush.msra.mxu0 0.0
    %4109 = vmatpush.msra.mxu0 0.0
    %4110 = vmatpush.msra.mxu0 0.0
    %4111 = vmatpush.msra.mxu0 0.0
    %4112 = vmatpush.msra.mxu0 0.0
    %4113 = vmatpush.msra.mxu0 0.0
    %4114 = vmatpush.msra.mxu0 0.0
    %4115 = vmatpush.msra.mxu0 0.0
    %4116 = vmatpush.msra.mxu0 %v4077
    %4117 = vmatpush.msra.mxu0 %v4064
    %4118 = vmatmul.f32.gmra.mxu0 %v4070
    %v4119 = vpop.f32.mrf.mxu0
    %v4120 = vadd.f32 0.0, %v4119
    %4121 = vmatmul.f32.gmra.mxu0 %v4073
    %v4122 = vpop.f32.mrf.mxu0
    %v4123 = vadd.f32 0.0, %v4122
    %4124 = vdwg.mxu0
    %v4125 = vadd.f32 %v4044, %v4097
    %v4126 = vadd.f32 %v4045, %v4120
    %v4127 = vadd.f32 %v4046, %v4100
    %v4128 = vadd.f32 %v4047, %v4123
    %s4129 = scalar_lea.vmem %s1, 704
    %v4130 = vld [vmem:[%s4129] sm:$0xff]
    %v4131 = vld [vmem:[%s4129 + $0x8] sm:$0x3]
    %4132 = vrot.lane.b32.xlu0 %v3874, 117
    %v4133 = vpop.permute.xlu0 %4132
    %4134 = vrot.lane.b32.xlu0 %v3875, 117
    %v4135 = vpop.permute.xlu0 %4134
    %4136 = vrot.lane.b32.xlu0 %v3876, 117
    %v4137 = vpop.permute.xlu0 %4136
    %4138 = vrot.lane.b32.xlu0 %v3877, 117
    %v4139 = vpop.permute.xlu0 %4138
    %4140 = vrot.lane.b32.xlu0 %v3878, 117
    %v4141 = vpop.permute.xlu0 %4140
    %4142 = vrot.lane.b32.xlu0 %v3879, 117
    %v4143 = vpop.permute.xlu0 %4142
    %v4144 = vsel %vm736, %v4133, %v4135
    %v4145 = vsel %vm736, %v4135, %v4137
    %v4146 = vsel %vm736, %v4139, %v4141
    %v4147 = vsel %vm736, %v4141, %v4143
    %v4151 = vsel %vm97, %v4130, 0
    %v4154 = vsel %vm97, %v4131, 0
    %v4156 = vsel %vm110, %v4146, 0
    %v4158 = vsel %vm110, %v4147, 0
    %4160 = vmatpush.msra.mxu0 0.0
    %4161 = vmatpush.msra.mxu0 0.0
    %4162 = vmatpush.msra.mxu0 0.0
    %4163 = vmatpush.msra.mxu0 0.0
    %4164 = vmatpush.msra.mxu0 0.0
    %4165 = vmatpush.msra.mxu0 0.0
    %4166 = vmatpush.msra.mxu0 0.0
    %4167 = vmatpush.msra.mxu0 0.0
    %4168 = vmatpush.msra.mxu0 0.0
    %4169 = vmatpush.msra.mxu0 0.0
    %4170 = vmatpush.msra.mxu0 0.0
    %4171 = vmatpush.msra.mxu0 0.0
    %4172 = vmatpush.msra.mxu0 0.0
    %4173 = vmatpush.msra.mxu0 0.0
    %4174 = vmatpush.msra.mxu0 %v4156
    %4175 = vmatpush.msra.mxu0 %v4144
    %4176 = vmatmul.f32.gmra.mxu0 %v4151
    %v4177 = vpop.f32.mrf.mxu0
    %v4178 = vadd.f32 0.0, %v4177
    %4179 = vmatmul.f32.gmra.mxu0 %v4154
    %v4180 = vpop.f32.mrf.mxu0
    %v4181 = vadd.f32 0.0, %v4180
    %4182 = vdwg.mxu0
    %4183 = vmatpush.msra.mxu0 0.0
    %4184 = vmatpush.msra.mxu0 0.0
    %4185 = vmatpush.msra.mxu0 0.0
    %4186 = vmatpush.msra.mxu0 0.0
    %4187 = vmatpush.msra.mxu0 0.0
    %4188 = vmatpush.msra.mxu0 0.0
    %4189 = vmatpush.msra.mxu0 0.0
    %4190 = vmatpush.msra.mxu0 0.0
    %4191 = vmatpush.msra.mxu0 0.0
    %4192 = vmatpush.msra.mxu0 0.0
    %4193 = vmatpush.msra.mxu0 0.0
    %4194 = vmatpush.msra.mxu0 0.0
    %4195 = vmatpush.msra.mxu0 0.0
    %4196 = vmatpush.msra.mxu0 0.0
    %4197 = vmatpush.msra.mxu0 %v4158
    %4198 = vmatpush.msra.mxu0 %v4145
    %4199 = vmatmul.f32.gmra.mxu0 %v4151
    %v4200 = vpop.f32.mrf.mxu0
    %v4201 = vadd.f32 0.0, %v4200
    %4202 = vmatmul.f32.gmra.mxu0 %v4154
    %v4203 = vpop.f32.mrf.mxu0
    %v4204 = vadd.f32 0.0, %v4203
    %4205 = vdwg.mxu0
    %v4206 = vadd.f32 %v4125, %v4178
    %v4207 = vadd.f32 %v4126, %v4201
    %v4208 = vadd.f32 %v4127, %v4181
    %v4209 = vadd.f32 %v4128, %v4204
    %4211 = vset.pattern.permute.xlu0 0
    %4212 = vperm.xlu0 %4211, %v3477
    %v4213 = vpop.permute.xlu0 %4212
    %4216 = vset.pattern.permute.xlu0 0
    %4217 = vperm.xlu0 %4216, %v3478
    %v4218 = vpop.permute.xlu0 %4217
    %v4220 = vadd.f32 %v4206, %v4213
    %v4221 = vadd.f32 %v4207, %v4213
    %v4222 = vadd.f32 %v4208, %v4218
    %v4223 = vadd.f32 %v4209, %v4218
    %s4224 = scalar_lea.vmem %s3, 64
    %v4225 = vld [vmem:[%s4224] sm:$0xff]
    %v4226 = vld [vmem:[%s4224 + $0x8] sm:$0x3]
    %s4227 = scalar_lea.vmem %s4, 64
    %v4228 = vld [vmem:[%s4227] sm:$0xff]
    %v4229 = vld [vmem:[%s4227 + $0x8] sm:$0x3]
    %v4230 = vmul.f32 %v4220, %v822
    %v4231 = vmul.f32 %v4221, %v823
    %v4232 = vmul.f32 %v4222, %v822
    %v4233 = vmul.f32 %v4223, %v823
    %v4234 = vadd.f32 %v4230, %v4231
    %4235 = vadd.xlane.f32.xlu0 %v4234
    %v4236 = vpop.xlane.xlu0 %4235
    %v4237 = vsel %vm110, %v4232, 0.0
    %v4238 = vsel %vm110, %v4233, 0.0
    %v4239 = vadd.f32 %v4237, %v4238
    %4240 = vadd.xlane.f32.xlu0 %v4239
    %v4241 = vpop.xlane.xlu0 %4240
    %v4242 = vmul.f32 %v4230, %v4230
    %v4243 = vmul.f32 %v4231, %v4231
    %v4244 = vmul.f32 %v4232, %v4232
    %v4245 = vmul.f32 %v4233, %v4233
    %v4246 = vadd.f32 %v4242, %v4243
    %4247 = vadd.xlane.f32.xlu0 %v4246
    %v4248 = vpop.xlane.xlu0 %4247
    %v4249 = vsel %vm110, %v4244, 0.0
    %v4250 = vsel %vm110, %v4245, 0.0
    %v4251 = vadd.f32 %v4249, %v4250
    %4252 = vadd.xlane.f32.xlu0 %v4251
    %v4253 = vpop.xlane.xlu0 %4252
    %v4254 = vmul.f32 %v4236, 0.0078125
    %v4255 = vmul.f32 %v4241, 0.0078125
    %v4256 = vmul.f32 %v4248, 0.0078125
    %v4257 = vmul.f32 %v4253, 0.0078125
    %v4258 = vmul.f32 %v4254, %v4254
    %v4259 = vmul.f32 %v4255, %v4255
    %v4260 = vsub.f32 %v4256, %v4258
    %v4261 = vsub.f32 %v4257, %v4259
    %v4262 = vadd.f32 %v4260, 1e-05
    %v4263 = vadd.f32 %v4261, 1e-05
    %v4264 = vrsqrt.pop %v4262
    %v4265 = vmul.f32 %v4264, %v4262
    %v4266 = vmul.f32 %v4265, %v4264
    %v4267 = vmul.f32 0.5, %v4266
    %v4268 = vsub.f32 1.5, %v4267
    %v4269 = vmul.f32 %v4264, %v4268
    %vm4270 = vweird.f32 %v4262
    %vm4271 = vweird.f32 %v4264
    %vm4272 = vmor %vm4270, %vm4271
    %v4273 = vsel %vm4272, %v4264, %v4269
    %v4274 = vrsqrt.pop %v4263
    %v4275 = vmul.f32 %v4274, %v4263
    %v4276 = vmul.f32 %v4275, %v4274
    %v4277 = vmul.f32 0.5, %v4276
    %v4278 = vsub.f32 1.5, %v4277
    %v4279 = vmul.f32 %v4274, %v4278
    %vm4280 = vweird.f32 %v4263
    %vm4281 = vweird.f32 %v4274
    %vm4282 = vmor %vm4280, %vm4281
    %v4283 = vsel %vm4282, %v4274, %v4279
    %v4284 = vmul.f32 %v4225, %v4273
    %v4285 = vmul.f32 %v4226, %v4283
    %v4286 = vmul.f32 %v4284, %v4254
    %v4287 = vmul.f32 %v4285, %v4255
    %v4288 = vsub.f32 %v4228, %v4286
    %v4289 = vsub.f32 %v4229, %v4287
    %4291 = vset.pattern.permute.xlu0 0
    %4292 = vperm.xlu0 %4291, %v4284
    %v4293 = vpop.permute.xlu0 %4292
    %4296 = vset.pattern.permute.xlu0 0
    %4297 = vperm.xlu0 %4296, %v4285
    %v4298 = vpop.permute.xlu0 %4297
    %v4300 = vmul.f32 %v4293, %v4220
    %v4301 = vmul.f32 %v4293, %v4221
    %v4302 = vmul.f32 %v4298, %v4222
    %v4303 = vmul.f32 %v4298, %v4223
    %4305 = vset.pattern.permute.xlu0 0
    %4306 = vperm.xlu0 %4305, %v4288
    %v4307 = vpop.permute.xlu0 %4306
    %4310 = vset.pattern.permute.xlu0 0
    %4311 = vperm.xlu0 %4310, %v4289
    %v4312 = vpop.permute.xlu0 %4311
    %v4314 = vadd.f32 %v4300, %v4307
    %v4315 = vadd.f32 %v4301, %v4307
    %v4316 = vadd.f32 %v4302, %v4312
    %v4317 = vadd.f32 %v4303, %v4312
    %v4318 = vadd.f32 %v4314, %v2622
    %v4319 = vadd.f32 %v4315, %v2623
    %v4320 = vadd.f32 %v4316, %v2624
    %v4321 = vadd.f32 %v4317, %v2625
    %v4322 = vmax.f32 %v4318, 0.0
    %v4323 = vmax.f32 %v4319, 0.0
    %v4324 = vmax.f32 %v4320, 0.0
    %v4325 = vmax.f32 %v4321, 0.0
    %v4326 = vmul.f32 %v4322, %v822
    %v4327 = vmul.f32 %v4323, %v823
    %v4328 = vmul.f32 %v4324, %v822
    %v4329 = vmul.f32 %v4325, %v823
    %s4330 = scalar_lea.vmem %s2, 80
    %v4331 = vld [vmem:[%s4330] sm:$0xff]
    %v4332 = vld [vmem:[%s4330 + $0x8] sm:$0x3]
    %4333 = vst [vmem:[#allocation2 + $0x8] sm:$0xff] %v4326
    %4334 = vst [vmem:[#allocation2 + $0x10] sm:$0xff] %v4327
    %4335 = vst [vmem:[#allocation2 + $0x28] sm:$0x3] %v4328
    %4336 = vst [vmem:[#allocation2 + $0x30] sm:$0x3] %v4329
    %v4337 = vld [vmem:[#allocation2] sm:$0xff]
    %v4338 = vld [vmem:[#allocation2 + $0x8] sm:$0xff]
    %v4339 = vld [vmem:[#allocation2 + $0x10] sm:$0xff]
    %v4340 = vld [vmem:[#allocation2 + $0x20] sm:$0x3]
    %v4341 = vld [vmem:[#allocation2 + $0x28] sm:$0x3]
    %v4342 = vld [vmem:[#allocation2 + $0x30] sm:$0x3]
    %s4343 = scalar_lea.vmem %s1, 720
    %v4344 = vld [vmem:[%s4343] sm:$0xff]
    %v4345 = vld [vmem:[%s4343 + $0x8] sm:$0x3]
    %s4346 = scalar_lea.vmem %s1, 736
    %v4347 = vld [vmem:[%s4346] sm:$0xff]
    %v4348 = vld [vmem:[%s4346 + $0x8] sm:$0x3]
    %4355 = vrot.lane.b32.xlu0 %v4337, 10
    %v4356 = vpop.permute.xlu0 %4355
    %4357 = vrot.lane.b32.xlu0 %v4338, 10
    %v4358 = vpop.permute.xlu0 %4357
    %4359 = vrot.lane.b32.xlu0 %v4339, 10
    %v4360 = vpop.permute.xlu0 %4359
    %4361 = vrot.lane.b32.xlu0 %v4340, 10
    %v4362 = vpop.permute.xlu0 %4361
    %4363 = vrot.lane.b32.xlu0 %v4341, 10
    %v4364 = vpop.permute.xlu0 %4363
    %4365 = vrot.lane.b32.xlu0 %v4342, 10
    %v4366 = vpop.permute.xlu0 %4365
    %v4367 = vsel %vm97, %v4356, %v4358
    %v4368 = vsel %vm97, %v4358, %v4360
    %v4369 = vsel %vm97, %v4362, %v4364
    %v4370 = vsel %vm97, %v4364, %v4366
    %v4374 = vsel %vm97, %v4347, 0
    %v4377 = vsel %vm97, %v4348, 0
    %v4379 = vsel %vm110, %v4369, 0
    %v4381 = vsel %vm110, %v4370, 0
    %4383 = vmatpush.msra.mxu0 0.0
    %4384 = vmatpush.msra.mxu0 0.0
    %4385 = vmatpush.msra.mxu0 0.0
    %4386 = vmatpush.msra.mxu0 0.0
    %4387 = vmatpush.msra.mxu0 0.0
    %4388 = vmatpush.msra.mxu0 0.0
    %4389 = vmatpush.msra.mxu0 0.0
    %4390 = vmatpush.msra.mxu0 0.0
    %4391 = vmatpush.msra.mxu0 0.0
    %4392 = vmatpush.msra.mxu0 0.0
    %4393 = vmatpush.msra.mxu0 0.0
    %4394 = vmatpush.msra.mxu0 0.0
    %4395 = vmatpush.msra.mxu0 0.0
    %4396 = vmatpush.msra.mxu0 0.0
    %4397 = vmatpush.msra.mxu0 %v4379
    %4398 = vmatpush.msra.mxu0 %v4367
    %4399 = vmatmul.f32.gmra.mxu0 %v4374
    %v4400 = vpop.f32.mrf.mxu0
    %v4401 = vadd.f32 0.0, %v4400
    %4402 = vmatmul.f32.gmra.mxu0 %v4377
    %v4403 = vpop.f32.mrf.mxu0
    %v4404 = vadd.f32 0.0, %v4403
    %4405 = vdwg.mxu0
    %4406 = vmatpush.msra.mxu0 0.0
    %4407 = vmatpush.msra.mxu0 0.0
    %4408 = vmatpush.msra.mxu0 0.0
    %4409 = vmatpush.msra.mxu0 0.0
    %4410 = vmatpush.msra.mxu0 0.0
    %4411 = vmatpush.msra.mxu0 0.0
    %4412 = vmatpush.msra.mxu0 0.0
    %4413 = vmatpush.msra.mxu0 0.0
    %4414 = vmatpush.msra.mxu0 0.0
    %4415 = vmatpush.msra.mxu0 0.0
    %4416 = vmatpush.msra.mxu0 0.0
    %4417 = vmatpush.msra.mxu0 0.0
    %4418 = vmatpush.msra.mxu0 0.0
    %4419 = vmatpush.msra.mxu0 0.0
    %4420 = vmatpush.msra.mxu0 %v4381
    %4421 = vmatpush.msra.mxu0 %v4368
    %4422 = vmatmul.f32.gmra.mxu0 %v4374
    %v4423 = vpop.f32.mrf.mxu0
    %v4424 = vadd.f32 0.0, %v4423
    %4425 = vmatmul.f32.gmra.mxu0 %v4377
    %v4426 = vpop.f32.mrf.mxu0
    %v4427 = vadd.f32 0.0, %v4426
    %4428 = vdwg.mxu0
    %4429 = vrot.lane.b32.xlu0 %v4337, 11
    %v4430 = vpop.permute.xlu0 %4429
    %4431 = vrot.lane.b32.xlu0 %v4338, 11
    %v4432 = vpop.permute.xlu0 %4431
    %4433 = vrot.lane.b32.xlu0 %v4339, 11
    %v4434 = vpop.permute.xlu0 %4433
    %4435 = vrot.lane.b32.xlu0 %v4340, 11
    %v4436 = vpop.permute.xlu0 %4435
    %4437 = vrot.lane.b32.xlu0 %v4341, 11
    %v4438 = vpop.permute.xlu0 %4437
    %4439 = vrot.lane.b32.xlu0 %v4342, 11
    %v4440 = vpop.permute.xlu0 %4439
    %v4441 = vsel %vm173, %v4430, %v4432
    %v4442 = vsel %vm173, %v4432, %v4434
    %v4443 = vsel %vm173, %v4436, %v4438
    %v4444 = vsel %vm173, %v4438, %v4440
    %v4448 = vsel %vm97, %v4344, 0
    %v4451 = vsel %vm97, %v4345, 0
    %v4453 = vsel %vm110, %v4443, 0
    %v4455 = vsel %vm110, %v4444, 0
    %4457 = vmatpush.msra.mxu0 0.0
    %4458 = vmatpush.msra.mxu0 0.0
    %4459 = vmatpush.msra.mxu0 0.0
    %4460 = vmatpush.msra.mxu0 0.0
    %4461 = vmatpush.msra.mxu0 0.0
    %4462 = vmatpush.msra.mxu0 0.0
    %4463 = vmatpush.msra.mxu0 0.0
    %4464 = vmatpush.msra.mxu0 0.0
    %4465 = vmatpush.msra.mxu0 0.0
    %4466 = vmatpush.msra.mxu0 0.0
    %4467 = vmatpush.msra.mxu0 0.0
    %4468 = vmatpush.msra.mxu0 0.0
    %4469 = vmatpush.msra.mxu0 0.0
    %4470 = vmatpush.msra.mxu0 0.0
    %4471 = vmatpush.msra.mxu0 %v4453
    %4472 = vmatpush.msra.mxu0 %v4441
    %4473 = vmatmul.f32.gmra.mxu0 %v4448
    %v4474 = vpop.f32.mrf.mxu0
    %v4475 = vadd.f32 %v4401, %v4474
    %4476 = vmatmul.f32.gmra.mxu0 %v4451
    %v4477 = vpop.f32.mrf.mxu0
    %v4478 = vadd.f32 %v4404, %v4477
    %4479 = vdwg.mxu0
    %4480 = vmatpush.msra.mxu0 0.0
    %4481 = vmatpush.msra.mxu0 0.0
    %4482 = vmatpush.msra.mxu0 0.0
    %4483 = vmatpush.msra.mxu0 0.0
    %4484 = vmatpush.msra.mxu0 0.0
    %4485 = vmatpush.msra.mxu0 0.0
    %4486 = vmatpush.msra.mxu0 0.0
    %4487 = vmatpush.msra.mxu0 0.0
    %4488 = vmatpush.msra.mxu0 0.0
    %4489 = vmatpush.msra.mxu0 0.0
    %4490 = vmatpush.msra.mxu0 0.0
    %4491 = vmatpush.msra.mxu0 0.0
    %4492 = vmatpush.msra.mxu0 0.0
    %4493 = vmatpush.msra.mxu0 0.0
    %4494 = vmatpush.msra.mxu0 %v4455
    %4495 = vmatpush.msra.mxu0 %v4442
    %4496 = vmatmul.f32.gmra.mxu0 %v4448
    %v4497 = vpop.f32.mrf.mxu0
    %v4498 = vadd.f32 %v4424, %v4497
    %4499 = vmatmul.f32.gmra.mxu0 %v4451
    %v4500 = vpop.f32.mrf.mxu0
    %v4501 = vadd.f32 %v4427, %v4500
    %4502 = vdwg.mxu0
    %s4503 = scalar_lea.vmem %s1, 752
    %v4504 = vld [vmem:[%s4503] sm:$0xff]
    %v4505 = vld [vmem:[%s4503 + $0x8] sm:$0x3]
    %4506 = vrot.lane.b32.xlu0 %v4337, 9
    %v4507 = vpop.permute.xlu0 %4506
    %4508 = vrot.lane.b32.xlu0 %v4338, 9
    %v4509 = vpop.permute.xlu0 %4508
    %4510 = vrot.lane.b32.xlu0 %v4339, 9
    %v4511 = vpop.permute.xlu0 %4510
    %4512 = vrot.lane.b32.xlu0 %v4340, 9
    %v4513 = vpop.permute.xlu0 %4512
    %4514 = vrot.lane.b32.xlu0 %v4341, 9
    %v4515 = vpop.permute.xlu0 %4514
    %4516 = vrot.lane.b32.xlu0 %v4342, 9
    %v4517 = vpop.permute.xlu0 %4516
    %v4518 = vsel %vm251, %v4507, %v4509
    %v4519 = vsel %vm251, %v4509, %v4511
    %v4520 = vsel %vm251, %v4513, %v4515
    %v4521 = vsel %vm251, %v4515, %v4517
    %v4525 = vsel %vm97, %v4504, 0
    %v4528 = vsel %vm97, %v4505, 0
    %v4530 = vsel %vm110, %v4520, 0
    %v4532 = vsel %vm110, %v4521, 0
    %4534 = vmatpush.msra.mxu0 0.0
    %4535 = vmatpush.msra.mxu0 0.0
    %4536 = vmatpush.msra.mxu0 0.0
    %4537 = vmatpush.msra.mxu0 0.0
    %4538 = vmatpush.msra.mxu0 0.0
    %4539 = vmatpush.msra.mxu0 0.0
    %4540 = vmatpush.msra.mxu0 0.0
    %4541 = vmatpush.msra.mxu0 0.0
    %4542 = vmatpush.msra.mxu0 0.0
    %4543 = vmatpush.msra.mxu0 0.0
    %4544 = vmatpush.msra.mxu0 0.0
    %4545 = vmatpush.msra.mxu0 0.0
    %4546 = vmatpush.msra.mxu0 0.0
    %4547 = vmatpush.msra.mxu0 0.0
    %4548 = vmatpush.msra.mxu0 %v4530
    %4549 = vmatpush.msra.mxu0 %v4518
    %4550 = vmatmul.f32.gmra.mxu0 %v4525
    %v4551 = vpop.f32.mrf.mxu0
    %v4552 = vadd.f32 0.0, %v4551
    %4553 = vmatmul.f32.gmra.mxu0 %v4528
    %v4554 = vpop.f32.mrf.mxu0
    %v4555 = vadd.f32 0.0, %v4554
    %4556 = vdwg.mxu0
    %4557 = vmatpush.msra.mxu0 0.0
    %4558 = vmatpush.msra.mxu0 0.0
    %4559 = vmatpush.msra.mxu0 0.0
    %4560 = vmatpush.msra.mxu0 0.0
    %4561 = vmatpush.msra.mxu0 0.0
    %4562 = vmatpush.msra.mxu0 0.0
    %4563 = vmatpush.msra.mxu0 0.0
    %4564 = vmatpush.msra.mxu0 0.0
    %4565 = vmatpush.msra.mxu0 0.0
    %4566 = vmatpush.msra.mxu0 0.0
    %4567 = vmatpush.msra.mxu0 0.0
    %4568 = vmatpush.msra.mxu0 0.0
    %4569 = vmatpush.msra.mxu0 0.0
    %4570 = vmatpush.msra.mxu0 0.0
    %4571 = vmatpush.msra.mxu0 %v4532
    %4572 = vmatpush.msra.mxu0 %v4519
    %4573 = vmatmul.f32.gmra.mxu0 %v4525
    %v4574 = vpop.f32.mrf.mxu0
    %v4575 = vadd.f32 0.0, %v4574
    %4576 = vmatmul.f32.gmra.mxu0 %v4528
    %v4577 = vpop.f32.mrf.mxu0
    %v4578 = vadd.f32 0.0, %v4577
    %4579 = vdwg.mxu0
    %v4580 = vadd.f32 %v4475, %v4552
    %v4581 = vadd.f32 %v4498, %v4575
    %v4582 = vadd.f32 %v4478, %v4555
    %v4583 = vadd.f32 %v4501, %v4578
    %s4584 = scalar_lea.vmem %s1, 768
    %v4585 = vld [vmem:[%s4584] sm:$0xff]
    %v4586 = vld [vmem:[%s4584 + $0x8] sm:$0x3]
    %4587 = vrot.lane.b32.xlu0 %v4337, 1
    %v4588 = vpop.permute.xlu0 %4587
    %4589 = vrot.lane.b32.xlu0 %v4338, 1
    %v4590 = vpop.permute.xlu0 %4589
    %4591 = vrot.lane.b32.xlu0 %v4339, 1
    %v4592 = vpop.permute.xlu0 %4591
    %4593 = vrot.lane.b32.xlu0 %v4340, 1
    %v4594 = vpop.permute.xlu0 %4593
    %4595 = vrot.lane.b32.xlu0 %v4341, 1
    %v4596 = vpop.permute.xlu0 %4595
    %4597 = vrot.lane.b32.xlu0 %v4342, 1
    %v4598 = vpop.permute.xlu0 %4597
    %v4599 = vsel %vm333, %v4588, %v4590
    %v4600 = vsel %vm333, %v4590, %v4592
    %v4601 = vsel %vm333, %v4594, %v4596
    %v4602 = vsel %vm333, %v4596, %v4598
    %v4606 = vsel %vm97, %v4585, 0
    %v4609 = vsel %vm97, %v4586, 0
    %v4611 = vsel %vm110, %v4601, 0
    %v4613 = vsel %vm110, %v4602, 0
    %4615 = vmatpush.msra.mxu0 0.0
    %4616 = vmatpush.msra.mxu0 0.0
    %4617 = vmatpush.msra.mxu0 0.0
    %4618 = vmatpush.msra.mxu0 0.0
    %4619 = vmatpush.msra.mxu0 0.0
    %4620 = vmatpush.msra.mxu0 0.0
    %4621 = vmatpush.msra.mxu0 0.0
    %4622 = vmatpush.msra.mxu0 0.0
    %4623 = vmatpush.msra.mxu0 0.0
    %4624 = vmatpush.msra.mxu0 0.0
    %4625 = vmatpush.msra.mxu0 0.0
    %4626 = vmatpush.msra.mxu0 0.0
    %4627 = vmatpush.msra.mxu0 0.0
    %4628 = vmatpush.msra.mxu0 0.0
    %4629 = vmatpush.msra.mxu0 %v4611
    %4630 = vmatpush.msra.mxu0 %v4599
    %4631 = vmatmul.f32.gmra.mxu0 %v4606
    %v4632 = vpop.f32.mrf.mxu0
    %v4633 = vadd.f32 0.0, %v4632
    %4634 = vmatmul.f32.gmra.mxu0 %v4609
    %v4635 = vpop.f32.mrf.mxu0
    %v4636 = vadd.f32 0.0, %v4635
    %4637 = vdwg.mxu0
    %4638 = vmatpush.msra.mxu0 0.0
    %4639 = vmatpush.msra.mxu0 0.0
    %4640 = vmatpush.msra.mxu0 0.0
    %4641 = vmatpush.msra.mxu0 0.0
    %4642 = vmatpush.msra.mxu0 0.0
    %4643 = vmatpush.msra.mxu0 0.0
    %4644 = vmatpush.msra.mxu0 0.0
    %4645 = vmatpush.msra.mxu0 0.0
    %4646 = vmatpush.msra.mxu0 0.0
    %4647 = vmatpush.msra.mxu0 0.0
    %4648 = vmatpush.msra.mxu0 0.0
    %4649 = vmatpush.msra.mxu0 0.0
    %4650 = vmatpush.msra.mxu0 0.0
    %4651 = vmatpush.msra.mxu0 0.0
    %4652 = vmatpush.msra.mxu0 %v4613
    %4653 = vmatpush.msra.mxu0 %v4600
    %4654 = vmatmul.f32.gmra.mxu0 %v4606
    %v4655 = vpop.f32.mrf.mxu0
    %v4656 = vadd.f32 0.0, %v4655
    %4657 = vmatmul.f32.gmra.mxu0 %v4609
    %v4658 = vpop.f32.mrf.mxu0
    %v4659 = vadd.f32 0.0, %v4658
    %4660 = vdwg.mxu0
    %v4661 = vadd.f32 %v4580, %v4633
    %v4662 = vadd.f32 %v4581, %v4656
    %v4663 = vadd.f32 %v4582, %v4636
    %v4664 = vadd.f32 %v4583, %v4659
    %s4665 = scalar_lea.vmem %s1, 784
    %v4666 = vld [vmem:[%s4665] sm:$0xff]
    %v4667 = vld [vmem:[%s4665 + $0x8] sm:$0x3]
    %v4669 = vsel %vm97, %v4666, 0
    %v4672 = vsel %vm97, %v4667, 0
    %v4674 = vsel %vm110, %v4341, 0
    %v4676 = vsel %vm110, %v4342, 0
    %4678 = vmatpush.msra.mxu0 0.0
    %4679 = vmatpush.msra.mxu0 0.0
    %4680 = vmatpush.msra.mxu0 0.0
    %4681 = vmatpush.msra.mxu0 0.0
    %4682 = vmatpush.msra.mxu0 0.0
    %4683 = vmatpush.msra.mxu0 0.0
    %4684 = vmatpush.msra.mxu0 0.0
    %4685 = vmatpush.msra.mxu0 0.0
    %4686 = vmatpush.msra.mxu0 0.0
    %4687 = vmatpush.msra.mxu0 0.0
    %4688 = vmatpush.msra.mxu0 0.0
    %4689 = vmatpush.msra.mxu0 0.0
    %4690 = vmatpush.msra.mxu0 0.0
    %4691 = vmatpush.msra.mxu0 0.0
    %4692 = vmatpush.msra.mxu0 %v4674
    %4693 = vmatpush.msra.mxu0 %v4338
    %4694 = vmatmul.f32.gmra.mxu0 %v4669
    %v4695 = vpop.f32.mrf.mxu0
    %v4696 = vadd.f32 0.0, %v4695
    %4697 = vmatmul.f32.gmra.mxu0 %v4672
    %v4698 = vpop.f32.mrf.mxu0
    %v4699 = vadd.f32 0.0, %v4698
    %4700 = vdwg.mxu0
    %4701 = vmatpush.msra.mxu0 0.0
    %4702 = vmatpush.msra.mxu0 0.0
    %4703 = vmatpush.msra.mxu0 0.0
    %4704 = vmatpush.msra.mxu0 0.0
    %4705 = vmatpush.msra.mxu0 0.0
    %4706 = vmatpush.msra.mxu0 0.0
    %4707 = vmatpush.msra.mxu0 0.0
    %4708 = vmatpush.msra.mxu0 0.0
    %4709 = vmatpush.msra.mxu0 0.0
    %4710 = vmatpush.msra.mxu0 0.0
    %4711 = vmatpush.msra.mxu0 0.0
    %4712 = vmatpush.msra.mxu0 0.0
    %4713 = vmatpush.msra.mxu0 0.0
    %4714 = vmatpush.msra.mxu0 0.0
    %4715 = vmatpush.msra.mxu0 %v4676
    %4716 = vmatpush.msra.mxu0 %v4339
    %4717 = vmatmul.f32.gmra.mxu0 %v4669
    %v4718 = vpop.f32.mrf.mxu0
    %v4719 = vadd.f32 0.0, %v4718
    %4720 = vmatmul.f32.gmra.mxu0 %v4672
    %v4721 = vpop.f32.mrf.mxu0
    %v4722 = vadd.f32 0.0, %v4721
    %4723 = vdwg.mxu0
    %v4724 = vadd.f32 %v4661, %v4696
    %v4725 = vadd.f32 %v4662, %v4719
    %v4726 = vadd.f32 %v4663, %v4699
    %v4727 = vadd.f32 %v4664, %v4722
    %v4728 = vld [vmem:[#allocation2 + $0x8] sm:$0xff]
    %v4729 = vld [vmem:[#allocation2 + $0x10] sm:$0xff]
    %v4730 = vld [vmem:[#allocation2 + $0x18] sm:$0xff]
    %v4731 = vld [vmem:[#allocation2 + $0x28] sm:$0x3]
    %v4732 = vld [vmem:[#allocation2 + $0x30] sm:$0x3]
    %v4733 = vld [vmem:[#allocation2 + $0x38] sm:$0x3]
    %s4734 = scalar_lea.vmem %s1, 800
    %v4735 = vld [vmem:[%s4734] sm:$0xff]
    %v4736 = vld [vmem:[%s4734 + $0x8] sm:$0x3]
    %4743 = vrot.lane.b32.xlu0 %v4728, 127
    %v4744 = vpop.permute.xlu0 %4743
    %4745 = vrot.lane.b32.xlu0 %v4729, 127
    %v4746 = vpop.permute.xlu0 %4745
    %4747 = vrot.lane.b32.xlu0 %v4730, 127
    %v4748 = vpop.permute.xlu0 %4747
    %4749 = vrot.lane.b32.xlu0 %v4731, 127
    %v4750 = vpop.permute.xlu0 %4749
    %4751 = vrot.lane.b32.xlu0 %v4732, 127
    %v4752 = vpop.permute.xlu0 %4751
    %4753 = vrot.lane.b32.xlu0 %v4733, 127
    %v4754 = vpop.permute.xlu0 %4753
    %v4755 = vsel %vm490, %v4744, %v4746
    %v4756 = vsel %vm490, %v4746, %v4748
    %v4757 = vsel %vm490, %v4750, %v4752
    %v4758 = vsel %vm490, %v4752, %v4754
    %v4762 = vsel %vm97, %v4735, 0
    %v4765 = vsel %vm97, %v4736, 0
    %v4767 = vsel %vm110, %v4757, 0
    %v4769 = vsel %vm110, %v4758, 0
    %4771 = vmatpush.msra.mxu0 0.0
    %4772 = vmatpush.msra.mxu0 0.0
    %4773 = vmatpush.msra.mxu0 0.0
    %4774 = vmatpush.msra.mxu0 0.0
    %4775 = vmatpush.msra.mxu0 0.0
    %4776 = vmatpush.msra.mxu0 0.0
    %4777 = vmatpush.msra.mxu0 0.0
    %4778 = vmatpush.msra.mxu0 0.0
    %4779 = vmatpush.msra.mxu0 0.0
    %4780 = vmatpush.msra.mxu0 0.0
    %4781 = vmatpush.msra.mxu0 0.0
    %4782 = vmatpush.msra.mxu0 0.0
    %4783 = vmatpush.msra.mxu0 0.0
    %4784 = vmatpush.msra.mxu0 0.0
    %4785 = vmatpush.msra.mxu0 %v4767
    %4786 = vmatpush.msra.mxu0 %v4755
    %4787 = vmatmul.f32.gmra.mxu0 %v4762
    %v4788 = vpop.f32.mrf.mxu0
    %v4789 = vadd.f32 0.0, %v4788
    %4790 = vmatmul.f32.gmra.mxu0 %v4765
    %v4791 = vpop.f32.mrf.mxu0
    %v4792 = vadd.f32 0.0, %v4791
    %4793 = vdwg.mxu0
    %4794 = vmatpush.msra.mxu0 0.0
    %4795 = vmatpush.msra.mxu0 0.0
    %4796 = vmatpush.msra.mxu0 0.0
    %4797 = vmatpush.msra.mxu0 0.0
    %4798 = vmatpush.msra.mxu0 0.0
    %4799 = vmatpush.msra.mxu0 0.0
    %4800 = vmatpush.msra.mxu0 0.0
    %4801 = vmatpush.msra.mxu0 0.0
    %4802 = vmatpush.msra.mxu0 0.0
    %4803 = vmatpush.msra.mxu0 0.0
    %4804 = vmatpush.msra.mxu0 0.0
    %4805 = vmatpush.msra.mxu0 0.0
    %4806 = vmatpush.msra.mxu0 0.0
    %4807 = vmatpush.msra.mxu0 0.0
    %4808 = vmatpush.msra.mxu0 %v4769
    %4809 = vmatpush.msra.mxu0 %v4756
    %4810 = vmatmul.f32.gmra.mxu0 %v4762
    %v4811 = vpop.f32.mrf.mxu0
    %v4812 = vadd.f32 0.0, %v4811
    %4813 = vmatmul.f32.gmra.mxu0 %v4765
    %v4814 = vpop.f32.mrf.mxu0
    %v4815 = vadd.f32 0.0, %v4814
    %4816 = vdwg.mxu0
    %v4817 = vadd.f32 %v4724, %v4789
    %v4818 = vadd.f32 %v4725, %v4812
    %v4819 = vadd.f32 %v4726, %v4792
    %v4820 = vadd.f32 %v4727, %v4815
    %s4821 = scalar_lea.vmem %s1, 816
    %v4822 = vld [vmem:[%s4821] sm:$0xff]
    %v4823 = vld [vmem:[%s4821 + $0x8] sm:$0x3]
    %4824 = vrot.lane.b32.xlu0 %v4728, 119
    %v4825 = vpop.permute.xlu0 %4824
    %4826 = vrot.lane.b32.xlu0 %v4729, 119
    %v4827 = vpop.permute.xlu0 %4826
    %4828 = vrot.lane.b32.xlu0 %v4730, 119
    %v4829 = vpop.permute.xlu0 %4828
    %4830 = vrot.lane.b32.xlu0 %v4731, 119
    %v4831 = vpop.permute.xlu0 %4830
    %4832 = vrot.lane.b32.xlu0 %v4732, 119
    %v4833 = vpop.permute.xlu0 %4832
    %4834 = vrot.lane.b32.xlu0 %v4733, 119
    %v4835 = vpop.permute.xlu0 %4834
    %v4836 = vsel %vm572, %v4825, %v4827
    %v4837 = vsel %vm572, %v4827, %v4829
    %v4838 = vsel %vm572, %v4831, %v4833
    %v4839 = vsel %vm572, %v4833, %v4835
    %v4843 = vsel %vm97, %v4822, 0
    %v4846 = vsel %vm97, %v4823, 0
    %v4848 = vsel %vm110, %v4838, 0
    %v4850 = vsel %vm110, %v4839, 0
    %4852 = vmatpush.msra.mxu0 0.0
    %4853 = vmatpush.msra.mxu0 0.0
    %4854 = vmatpush.msra.mxu0 0.0
    %4855 = vmatpush.msra.mxu0 0.0
    %4856 = vmatpush.msra.mxu0 0.0
    %4857 = vmatpush.msra.mxu0 0.0
    %4858 = vmatpush.msra.mxu0 0.0
    %4859 = vmatpush.msra.mxu0 0.0
    %4860 = vmatpush.msra.mxu0 0.0
    %4861 = vmatpush.msra.mxu0 0.0
    %4862 = vmatpush.msra.mxu0 0.0
    %4863 = vmatpush.msra.mxu0 0.0
    %4864 = vmatpush.msra.mxu0 0.0
    %4865 = vmatpush.msra.mxu0 0.0
    %4866 = vmatpush.msra.mxu0 %v4848
    %4867 = vmatpush.msra.mxu0 %v4836
    %4868 = vmatmul.f32.gmra.mxu0 %v4843
    %v4869 = vpop.f32.mrf.mxu0
    %v4870 = vadd.f32 0.0, %v4869
    %4871 = vmatmul.f32.gmra.mxu0 %v4846
    %v4872 = vpop.f32.mrf.mxu0
    %v4873 = vadd.f32 0.0, %v4872
    %4874 = vdwg.mxu0
    %4875 = vmatpush.msra.mxu0 0.0
    %4876 = vmatpush.msra.mxu0 0.0
    %4877 = vmatpush.msra.mxu0 0.0
    %4878 = vmatpush.msra.mxu0 0.0
    %4879 = vmatpush.msra.mxu0 0.0
    %4880 = vmatpush.msra.mxu0 0.0
    %4881 = vmatpush.msra.mxu0 0.0
    %4882 = vmatpush.msra.mxu0 0.0
    %4883 = vmatpush.msra.mxu0 0.0
    %4884 = vmatpush.msra.mxu0 0.0
    %4885 = vmatpush.msra.mxu0 0.0
    %4886 = vmatpush.msra.mxu0 0.0
    %4887 = vmatpush.msra.mxu0 0.0
    %4888 = vmatpush.msra.mxu0 0.0
    %4889 = vmatpush.msra.mxu0 %v4850
    %4890 = vmatpush.msra.mxu0 %v4837
    %4891 = vmatmul.f32.gmra.mxu0 %v4843
    %v4892 = vpop.f32.mrf.mxu0
    %v4893 = vadd.f32 0.0, %v4892
    %4894 = vmatmul.f32.gmra.mxu0 %v4846
    %v4895 = vpop.f32.mrf.mxu0
    %v4896 = vadd.f32 0.0, %v4895
    %4897 = vdwg.mxu0
    %v4898 = vadd.f32 %v4817, %v4870
    %v4899 = vadd.f32 %v4818, %v4893
    %v4900 = vadd.f32 %v4819, %v4873
    %v4901 = vadd.f32 %v4820, %v4896
    %s4902 = scalar_lea.vmem %s1, 832
    %v4903 = vld [vmem:[%s4902] sm:$0xff]
    %v4904 = vld [vmem:[%s4902 + $0x8] sm:$0x3]
    %4905 = vrot.lane.b32.xlu0 %v4728, 118
    %v4906 = vpop.permute.xlu0 %4905
    %4907 = vrot.lane.b32.xlu0 %v4729, 118
    %v4908 = vpop.permute.xlu0 %4907
    %4909 = vrot.lane.b32.xlu0 %v4730, 118
    %v4910 = vpop.permute.xlu0 %4909
    %4911 = vrot.lane.b32.xlu0 %v4731, 118
    %v4912 = vpop.permute.xlu0 %4911
    %4913 = vrot.lane.b32.xlu0 %v4732, 118
    %v4914 = vpop.permute.xlu0 %4913
    %4915 = vrot.lane.b32.xlu0 %v4733, 118
    %v4916 = vpop.permute.xlu0 %4915
    %v4917 = vsel %vm654, %v4906, %v4908
    %v4918 = vsel %vm654, %v4908, %v4910
    %v4919 = vsel %vm654, %v4912, %v4914
    %v4920 = vsel %vm654, %v4914, %v4916
    %v4924 = vsel %vm97, %v4903, 0
    %v4927 = vsel %vm97, %v4904, 0
    %v4929 = vsel %vm110, %v4919, 0
    %v4931 = vsel %vm110, %v4920, 0
    %4933 = vmatpush.msra.mxu0 0.0
    %4934 = vmatpush.msra.mxu0 0.0
    %4935 = vmatpush.msra.mxu0 0.0
    %4936 = vmatpush.msra.mxu0 0.0
    %4937 = vmatpush.msra.mxu0 0.0
    %4938 = vmatpush.msra.mxu0 0.0
    %4939 = vmatpush.msra.mxu0 0.0
    %4940 = vmatpush.msra.mxu0 0.0
    %4941 = vmatpush.msra.mxu0 0.0
    %4942 = vmatpush.msra.mxu0 0.0
    %4943 = vmatpush.msra.mxu0 0.0
    %4944 = vmatpush.msra.mxu0 0.0
    %4945 = vmatpush.msra.mxu0 0.0
    %4946 = vmatpush.msra.mxu0 0.0
    %4947 = vmatpush.msra.mxu0 %v4929
    %4948 = vmatpush.msra.mxu0 %v4917
    %4949 = vmatmul.f32.gmra.mxu0 %v4924
    %v4950 = vpop.f32.mrf.mxu0
    %v4951 = vadd.f32 0.0, %v4950
    %4952 = vmatmul.f32.gmra.mxu0 %v4927
    %v4953 = vpop.f32.mrf.mxu0
    %v4954 = vadd.f32 0.0, %v4953
    %4955 = vdwg.mxu0
    %4956 = vmatpush.msra.mxu0 0.0
    %4957 = vmatpush.msra.mxu0 0.0
    %4958 = vmatpush.msra.mxu0 0.0
    %4959 = vmatpush.msra.mxu0 0.0
    %4960 = vmatpush.msra.mxu0 0.0
    %4961 = vmatpush.msra.mxu0 0.0
    %4962 = vmatpush.msra.mxu0 0.0
    %4963 = vmatpush.msra.mxu0 0.0
    %4964 = vmatpush.msra.mxu0 0.0
    %4965 = vmatpush.msra.mxu0 0.0
    %4966 = vmatpush.msra.mxu0 0.0
    %4967 = vmatpush.msra.mxu0 0.0
    %4968 = vmatpush.msra.mxu0 0.0
    %4969 = vmatpush.msra.mxu0 0.0
    %4970 = vmatpush.msra.mxu0 %v4931
    %4971 = vmatpush.msra.mxu0 %v4918
    %4972 = vmatmul.f32.gmra.mxu0 %v4924
    %v4973 = vpop.f32.mrf.mxu0
    %v4974 = vadd.f32 0.0, %v4973
    %4975 = vmatmul.f32.gmra.mxu0 %v4927
    %v4976 = vpop.f32.mrf.mxu0
    %v4977 = vadd.f32 0.0, %v4976
    %4978 = vdwg.mxu0
    %v4979 = vadd.f32 %v4898, %v4951
    %v4980 = vadd.f32 %v4899, %v4974
    %v4981 = vadd.f32 %v4900, %v4954
    %v4982 = vadd.f32 %v4901, %v4977
    %s4983 = scalar_lea.vmem %s1, 848
    %v4984 = vld [vmem:[%s4983] sm:$0xff]
    %v4985 = vld [vmem:[%s4983 + $0x8] sm:$0x3]
    %4986 = vrot.lane.b32.xlu0 %v4728, 117
    %v4987 = vpop.permute.xlu0 %4986
    %4988 = vrot.lane.b32.xlu0 %v4729, 117
    %v4989 = vpop.permute.xlu0 %4988
    %4990 = vrot.lane.b32.xlu0 %v4730, 117
    %v4991 = vpop.permute.xlu0 %4990
    %4992 = vrot.lane.b32.xlu0 %v4731, 117
    %v4993 = vpop.permute.xlu0 %4992
    %4994 = vrot.lane.b32.xlu0 %v4732, 117
    %v4995 = vpop.permute.xlu0 %4994
    %4996 = vrot.lane.b32.xlu0 %v4733, 117
    %v4997 = vpop.permute.xlu0 %4996
    %v4998 = vsel %vm736, %v4987, %v4989
    %v4999 = vsel %vm736, %v4989, %v4991
    %v5000 = vsel %vm736, %v4993, %v4995
    %v5001 = vsel %vm736, %v4995, %v4997
    %v5005 = vsel %vm97, %v4984, 0
    %v5008 = vsel %vm97, %v4985, 0
    %v5010 = vsel %vm110, %v5000, 0
    %v5012 = vsel %vm110, %v5001, 0
    %5014 = vmatpush.msra.mxu0 0.0
    %5015 = vmatpush.msra.mxu0 0.0
    %5016 = vmatpush.msra.mxu0 0.0
    %5017 = vmatpush.msra.mxu0 0.0
    %5018 = vmatpush.msra.mxu0 0.0
    %5019 = vmatpush.msra.mxu0 0.0
    %5020 = vmatpush.msra.mxu0 0.0
    %5021 = vmatpush.msra.mxu0 0.0
    %5022 = vmatpush.msra.mxu0 0.0
    %5023 = vmatpush.msra.mxu0 0.0
    %5024 = vmatpush.msra.mxu0 0.0
    %5025 = vmatpush.msra.mxu0 0.0
    %5026 = vmatpush.msra.mxu0 0.0
    %5027 = vmatpush.msra.mxu0 0.0
    %5028 = vmatpush.msra.mxu0 %v5010
    %5029 = vmatpush.msra.mxu0 %v4998
    %5030 = vmatmul.f32.gmra.mxu0 %v5005
    %v5031 = vpop.f32.mrf.mxu0
    %v5032 = vadd.f32 0.0, %v5031
    %5033 = vmatmul.f32.gmra.mxu0 %v5008
    %v5034 = vpop.f32.mrf.mxu0
    %v5035 = vadd.f32 0.0, %v5034
    %5036 = vdwg.mxu0
    %5037 = vmatpush.msra.mxu0 0.0
    %5038 = vmatpush.msra.mxu0 0.0
    %5039 = vmatpush.msra.mxu0 0.0
    %5040 = vmatpush.msra.mxu0 0.0
    %5041 = vmatpush.msra.mxu0 0.0
    %5042 = vmatpush.msra.mxu0 0.0
    %5043 = vmatpush.msra.mxu0 0.0
    %5044 = vmatpush.msra.mxu0 0.0
    %5045 = vmatpush.msra.mxu0 0.0
    %5046 = vmatpush.msra.mxu0 0.0
    %5047 = vmatpush.msra.mxu0 0.0
    %5048 = vmatpush.msra.mxu0 0.0
    %5049 = vmatpush.msra.mxu0 0.0
    %5050 = vmatpush.msra.mxu0 0.0
    %5051 = vmatpush.msra.mxu0 %v5012
    %5052 = vmatpush.msra.mxu0 %v4999
    %5053 = vmatmul.f32.gmra.mxu0 %v5005
    %v5054 = vpop.f32.mrf.mxu0
    %v5055 = vadd.f32 0.0, %v5054
    %5056 = vmatmul.f32.gmra.mxu0 %v5008
    %v5057 = vpop.f32.mrf.mxu0
    %v5058 = vadd.f32 0.0, %v5057
    %5059 = vdwg.mxu0
    %v5060 = vadd.f32 %v4979, %v5032
    %v5061 = vadd.f32 %v4980, %v5055
    %v5062 = vadd.f32 %v4981, %v5035
    %v5063 = vadd.f32 %v4982, %v5058
    %5065 = vset.pattern.permute.xlu0 0
    %5066 = vperm.xlu0 %5065, %v4331
    %v5067 = vpop.permute.xlu0 %5066
    %5070 = vset.pattern.permute.xlu0 0
    %5071 = vperm.xlu0 %5070, %v4332
    %v5072 = vpop.permute.xlu0 %5071
    %v5074 = vadd.f32 %v5060, %v5067
    %v5075 = vadd.f32 %v5061, %v5067
    %v5076 = vadd.f32 %v5062, %v5072
    %v5077 = vadd.f32 %v5063, %v5072
    %s5078 = scalar_lea.vmem %s3, 80
    %v5079 = vld [vmem:[%s5078] sm:$0xff]
    %v5080 = vld [vmem:[%s5078 + $0x8] sm:$0x3]
    %s5081 = scalar_lea.vmem %s4, 80
    %v5082 = vld [vmem:[%s5081] sm:$0xff]
    %v5083 = vld [vmem:[%s5081 + $0x8] sm:$0x3]
    %v5084 = vmul.f32 %v5074, %v822
    %v5085 = vmul.f32 %v5075, %v823
    %v5086 = vmul.f32 %v5076, %v822
    %v5087 = vmul.f32 %v5077, %v823
    %v5088 = vadd.f32 %v5084, %v5085
    %5089 = vadd.xlane.f32.xlu0 %v5088
    %v5090 = vpop.xlane.xlu0 %5089
    %v5091 = vsel %vm110, %v5086, 0.0
    %v5092 = vsel %vm110, %v5087, 0.0
    %v5093 = vadd.f32 %v5091, %v5092
    %5094 = vadd.xlane.f32.xlu0 %v5093
    %v5095 = vpop.xlane.xlu0 %5094
    %v5096 = vmul.f32 %v5084, %v5084
    %v5097 = vmul.f32 %v5085, %v5085
    %v5098 = vmul.f32 %v5086, %v5086
    %v5099 = vmul.f32 %v5087, %v5087
    %v5100 = vadd.f32 %v5096, %v5097
    %5101 = vadd.xlane.f32.xlu0 %v5100
    %v5102 = vpop.xlane.xlu0 %5101
    %v5103 = vsel %vm110, %v5098, 0.0
    %v5104 = vsel %vm110, %v5099, 0.0
    %v5105 = vadd.f32 %v5103, %v5104
    %5106 = vadd.xlane.f32.xlu0 %v5105
    %v5107 = vpop.xlane.xlu0 %5106
    %v5108 = vmul.f32 %v5090, 0.0078125
    %v5109 = vmul.f32 %v5095, 0.0078125
    %v5110 = vmul.f32 %v5102, 0.0078125
    %v5111 = vmul.f32 %v5107, 0.0078125
    %v5112 = vmul.f32 %v5108, %v5108
    %v5113 = vmul.f32 %v5109, %v5109
    %v5114 = vsub.f32 %v5110, %v5112
    %v5115 = vsub.f32 %v5111, %v5113
    %v5116 = vadd.f32 %v5114, 1e-05
    %v5117 = vadd.f32 %v5115, 1e-05
    %v5118 = vrsqrt.pop %v5116
    %v5119 = vmul.f32 %v5118, %v5116
    %v5120 = vmul.f32 %v5119, %v5118
    %v5121 = vmul.f32 0.5, %v5120
    %v5122 = vsub.f32 1.5, %v5121
    %v5123 = vmul.f32 %v5118, %v5122
    %vm5124 = vweird.f32 %v5116
    %vm5125 = vweird.f32 %v5118
    %vm5126 = vmor %vm5124, %vm5125
    %v5127 = vsel %vm5126, %v5118, %v5123
    %v5128 = vrsqrt.pop %v5117
    %v5129 = vmul.f32 %v5128, %v5117
    %v5130 = vmul.f32 %v5129, %v5128
    %v5131 = vmul.f32 0.5, %v5130
    %v5132 = vsub.f32 1.5, %v5131
    %v5133 = vmul.f32 %v5128, %v5132
    %vm5134 = vweird.f32 %v5117
    %vm5135 = vweird.f32 %v5128
    %vm5136 = vmor %vm5134, %vm5135
    %v5137 = vsel %vm5136, %v5128, %v5133
    %v5138 = vmul.f32 %v5079, %v5127
    %v5139 = vmul.f32 %v5080, %v5137
    %v5140 = vmul.f32 %v5138, %v5108
    %v5141 = vmul.f32 %v5139, %v5109
    %v5142 = vsub.f32 %v5082, %v5140
    %v5143 = vsub.f32 %v5083, %v5141
    %5145 = vset.pattern.permute.xlu0 0
    %5146 = vperm.xlu0 %5145, %v5138
    %v5147 = vpop.permute.xlu0 %5146
    %5150 = vset.pattern.permute.xlu0 0
    %5151 = vperm.xlu0 %5150, %v5139
    %v5152 = vpop.permute.xlu0 %5151
    %v5154 = vmul.f32 %v5147, %v5074
    %v5155 = vmul.f32 %v5147, %v5075
    %v5156 = vmul.f32 %v5152, %v5076
    %v5157 = vmul.f32 %v5152, %v5077
    %5159 = vset.pattern.permute.xlu0 0
    %5160 = vperm.xlu0 %5159, %v5142
    %v5161 = vpop.permute.xlu0 %5160
    %5164 = vset.pattern.permute.xlu0 0
    %5165 = vperm.xlu0 %5164, %v5143
    %v5166 = vpop.permute.xlu0 %5165
    %v5168 = vadd.f32 %v5154, %v5161
    %v5169 = vadd.f32 %v5155, %v5161
    %v5170 = vadd.f32 %v5156, %v5166
    %v5171 = vadd.f32 %v5157, %v5166
    %v5172 = vmax.f32 %v5168, 0.0
    %v5173 = vmax.f32 %v5169, 0.0
    %v5174 = vmax.f32 %v5170, 0.0
    %v5175 = vmax.f32 %v5171, 0.0
    %v5176 = vmul.f32 %v5172, %v822
    %v5177 = vmul.f32 %v5173, %v823
    %v5178 = vmul.f32 %v5174, %v822
    %v5179 = vmul.f32 %v5175, %v823
    %s5180 = scalar_lea.vmem %s2, 96
    %v5181 = vld [vmem:[%s5180] sm:$0xff]
    %v5182 = vld [vmem:[%s5180 + $0x8] sm:$0x3]
    %5183 = vst [vmem:[#allocation2 + $0x8] sm:$0xff] %v5176
    %5184 = vst [vmem:[#allocation2 + $0x10] sm:$0xff] %v5177
    %5185 = vst [vmem:[#allocation2 + $0x28] sm:$0x3] %v5178
    %5186 = vst [vmem:[#allocation2 + $0x30] sm:$0x3] %v5179
    %v5187 = vld [vmem:[#allocation2] sm:$0xff]
    %v5188 = vld [vmem:[#allocation2 + $0x8] sm:$0xff]
    %v5189 = vld [vmem:[#allocation2 + $0x10] sm:$0xff]
    %v5190 = vld [vmem:[#allocation2 + $0x20] sm:$0x3]
    %v5191 = vld [vmem:[#allocation2 + $0x28] sm:$0x3]
    %v5192 = vld [vmem:[#allocation2 + $0x30] sm:$0x3]
    %s5193 = scalar_lea.vmem %s1, 864
    %v5194 = vld [vmem:[%s5193] sm:$0xff]
    %v5195 = vld [vmem:[%s5193 + $0x8] sm:$0x3]
    %s5196 = scalar_lea.vmem %s1, 880
    %v5197 = vld [vmem:[%s5196] sm:$0xff]
    %v5198 = vld [vmem:[%s5196 + $0x8] sm:$0x3]
    %5205 = vrot.lane.b32.xlu0 %v5187, 10
    %v5206 = vpop.permute.xlu0 %5205
    %5207 = vrot.lane.b32.xlu0 %v5188, 10
    %v5208 = vpop.permute.xlu0 %5207
    %5209 = vrot.lane.b32.xlu0 %v5189, 10
    %v5210 = vpop.permute.xlu0 %5209
    %5211 = vrot.lane.b32.xlu0 %v5190, 10
    %v5212 = vpop.permute.xlu0 %5211
    %5213 = vrot.lane.b32.xlu0 %v5191, 10
    %v5214 = vpop.permute.xlu0 %5213
    %5215 = vrot.lane.b32.xlu0 %v5192, 10
    %v5216 = vpop.permute.xlu0 %5215
    %v5217 = vsel %vm97, %v5206, %v5208
    %v5218 = vsel %vm97, %v5208, %v5210
    %v5219 = vsel %vm97, %v5212, %v5214
    %v5220 = vsel %vm97, %v5214, %v5216
    %v5224 = vsel %vm97, %v5197, 0
    %v5227 = vsel %vm97, %v5198, 0
    %v5229 = vsel %vm110, %v5219, 0
    %v5231 = vsel %vm110, %v5220, 0
    %5233 = vmatpush.msra.mxu0 0.0
    %5234 = vmatpush.msra.mxu0 0.0
    %5235 = vmatpush.msra.mxu0 0.0
    %5236 = vmatpush.msra.mxu0 0.0
    %5237 = vmatpush.msra.mxu0 0.0
    %5238 = vmatpush.msra.mxu0 0.0
    %5239 = vmatpush.msra.mxu0 0.0
    %5240 = vmatpush.msra.mxu0 0.0
    %5241 = vmatpush.msra.mxu0 0.0
    %5242 = vmatpush.msra.mxu0 0.0
    %5243 = vmatpush.msra.mxu0 0.0
    %5244 = vmatpush.msra.mxu0 0.0
    %5245 = vmatpush.msra.mxu0 0.0
    %5246 = vmatpush.msra.mxu0 0.0
    %5247 = vmatpush.msra.mxu0 %v5229
    %5248 = vmatpush.msra.mxu0 %v5217
    %5249 = vmatmul.f32.gmra.mxu0 %v5224
    %v5250 = vpop.f32.mrf.mxu0
    %v5251 = vadd.f32 0.0, %v5250
    %5252 = vmatmul.f32.gmra.mxu0 %v5227
    %v5253 = vpop.f32.mrf.mxu0
    %v5254 = vadd.f32 0.0, %v5253
    %5255 = vdwg.mxu0
    %5256 = vmatpush.msra.mxu0 0.0
    %5257 = vmatpush.msra.mxu0 0.0
    %5258 = vmatpush.msra.mxu0 0.0
    %5259 = vmatpush.msra.mxu0 0.0
    %5260 = vmatpush.msra.mxu0 0.0
    %5261 = vmatpush.msra.mxu0 0.0
    %5262 = vmatpush.msra.mxu0 0.0
    %5263 = vmatpush.msra.mxu0 0.0
    %5264 = vmatpush.msra.mxu0 0.0
    %5265 = vmatpush.msra.mxu0 0.0
    %5266 = vmatpush.msra.mxu0 0.0
    %5267 = vmatpush.msra.mxu0 0.0
    %5268 = vmatpush.msra.mxu0 0.0
    %5269 = vmatpush.msra.mxu0 0.0
    %5270 = vmatpush.msra.mxu0 %v5231
    %5271 = vmatpush.msra.mxu0 %v5218
    %5272 = vmatmul.f32.gmra.mxu0 %v5224
    %v5273 = vpop.f32.mrf.mxu0
    %v5274 = vadd.f32 0.0, %v5273
    %5275 = vmatmul.f32.gmra.mxu0 %v5227
    %v5276 = vpop.f32.mrf.mxu0
    %v5277 = vadd.f32 0.0, %v5276
    %5278 = vdwg.mxu0
    %5279 = vrot.lane.b32.xlu0 %v5187, 11
    %v5280 = vpop.permute.xlu0 %5279
    %5281 = vrot.lane.b32.xlu0 %v5188, 11
    %v5282 = vpop.permute.xlu0 %5281
    %5283 = vrot.lane.b32.xlu0 %v5189, 11
    %v5284 = vpop.permute.xlu0 %5283
    %5285 = vrot.lane.b32.xlu0 %v5190, 11
    %v5286 = vpop.permute.xlu0 %5285
    %5287 = vrot.lane.b32.xlu0 %v5191, 11
    %v5288 = vpop.permute.xlu0 %5287
    %5289 = vrot.lane.b32.xlu0 %v5192, 11
    %v5290 = vpop.permute.xlu0 %5289
    %v5291 = vsel %vm173, %v5280, %v5282
    %v5292 = vsel %vm173, %v5282, %v5284
    %v5293 = vsel %vm173, %v5286, %v5288
    %v5294 = vsel %vm173, %v5288, %v5290
    %v5298 = vsel %vm97, %v5194, 0
    %v5301 = vsel %vm97, %v5195, 0
    %v5303 = vsel %vm110, %v5293, 0
    %v5305 = vsel %vm110, %v5294, 0
    %5307 = vmatpush.msra.mxu0 0.0
    %5308 = vmatpush.msra.mxu0 0.0
    %5309 = vmatpush.msra.mxu0 0.0
    %5310 = vmatpush.msra.mxu0 0.0
    %5311 = vmatpush.msra.mxu0 0.0
    %5312 = vmatpush.msra.mxu0 0.0
    %5313 = vmatpush.msra.mxu0 0.0
    %5314 = vmatpush.msra.mxu0 0.0
    %5315 = vmatpush.msra.mxu0 0.0
    %5316 = vmatpush.msra.mxu0 0.0
    %5317 = vmatpush.msra.mxu0 0.0
    %5318 = vmatpush.msra.mxu0 0.0
    %5319 = vmatpush.msra.mxu0 0.0
    %5320 = vmatpush.msra.mxu0 0.0
    %5321 = vmatpush.msra.mxu0 %v5303
    %5322 = vmatpush.msra.mxu0 %v5291
    %5323 = vmatmul.f32.gmra.mxu0 %v5298
    %v5324 = vpop.f32.mrf.mxu0
    %v5325 = vadd.f32 %v5251, %v5324
    %5326 = vmatmul.f32.gmra.mxu0 %v5301
    %v5327 = vpop.f32.mrf.mxu0
    %v5328 = vadd.f32 %v5254, %v5327
    %5329 = vdwg.mxu0
    %5330 = vmatpush.msra.mxu0 0.0
    %5331 = vmatpush.msra.mxu0 0.0
    %5332 = vmatpush.msra.mxu0 0.0
    %5333 = vmatpush.msra.mxu0 0.0
    %5334 = vmatpush.msra.mxu0 0.0
    %5335 = vmatpush.msra.mxu0 0.0
    %5336 = vmatpush.msra.mxu0 0.0
    %5337 = vmatpush.msra.mxu0 0.0
    %5338 = vmatpush.msra.mxu0 0.0
    %5339 = vmatpush.msra.mxu0 0.0
    %5340 = vmatpush.msra.mxu0 0.0
    %5341 = vmatpush.msra.mxu0 0.0
    %5342 = vmatpush.msra.mxu0 0.0
    %5343 = vmatpush.msra.mxu0 0.0
    %5344 = vmatpush.msra.mxu0 %v5305
    %5345 = vmatpush.msra.mxu0 %v5292
    %5346 = vmatmul.f32.gmra.mxu0 %v5298
    %v5347 = vpop.f32.mrf.mxu0
    %v5348 = vadd.f32 %v5274, %v5347
    %5349 = vmatmul.f32.gmra.mxu0 %v5301
    %v5350 = vpop.f32.mrf.mxu0
    %v5351 = vadd.f32 %v5277, %v5350
    %5352 = vdwg.mxu0
    %s5353 = scalar_lea.vmem %s1, 896
    %v5354 = vld [vmem:[%s5353] sm:$0xff]
    %v5355 = vld [vmem:[%s5353 + $0x8] sm:$0x3]
    %5356 = vrot.lane.b32.xlu0 %v5187, 9
    %v5357 = vpop.permute.xlu0 %5356
    %5358 = vrot.lane.b32.xlu0 %v5188, 9
    %v5359 = vpop.permute.xlu0 %5358
    %5360 = vrot.lane.b32.xlu0 %v5189, 9
    %v5361 = vpop.permute.xlu0 %5360
    %5362 = vrot.lane.b32.xlu0 %v5190, 9
    %v5363 = vpop.permute.xlu0 %5362
    %5364 = vrot.lane.b32.xlu0 %v5191, 9
    %v5365 = vpop.permute.xlu0 %5364
    %5366 = vrot.lane.b32.xlu0 %v5192, 9
    %v5367 = vpop.permute.xlu0 %5366
    %v5368 = vsel %vm251, %v5357, %v5359
    %v5369 = vsel %vm251, %v5359, %v5361
    %v5370 = vsel %vm251, %v5363, %v5365
    %v5371 = vsel %vm251, %v5365, %v5367
    %v5375 = vsel %vm97, %v5354, 0
    %v5378 = vsel %vm97, %v5355, 0
    %v5380 = vsel %vm110, %v5370, 0
    %v5382 = vsel %vm110, %v5371, 0
    %5384 = vmatpush.msra.mxu0 0.0
    %5385 = vmatpush.msra.mxu0 0.0
    %5386 = vmatpush.msra.mxu0 0.0
    %5387 = vmatpush.msra.mxu0 0.0
    %5388 = vmatpush.msra.mxu0 0.0
    %5389 = vmatpush.msra.mxu0 0.0
    %5390 = vmatpush.msra.mxu0 0.0
    %5391 = vmatpush.msra.mxu0 0.0
    %5392 = vmatpush.msra.mxu0 0.0
    %5393 = vmatpush.msra.mxu0 0.0
    %5394 = vmatpush.msra.mxu0 0.0
    %5395 = vmatpush.msra.mxu0 0.0
    %5396 = vmatpush.msra.mxu0 0.0
    %5397 = vmatpush.msra.mxu0 0.0
    %5398 = vmatpush.msra.mxu0 %v5380
    %5399 = vmatpush.msra.mxu0 %v5368
    %5400 = vmatmul.f32.gmra.mxu0 %v5375
    %v5401 = vpop.f32.mrf.mxu0
    %v5402 = vadd.f32 0.0, %v5401
    %5403 = vmatmul.f32.gmra.mxu0 %v5378
    %v5404 = vpop.f32.mrf.mxu0
    %v5405 = vadd.f32 0.0, %v5404
    %5406 = vdwg.mxu0
    %5407 = vmatpush.msra.mxu0 0.0
    %5408 = vmatpush.msra.mxu0 0.0
    %5409 = vmatpush.msra.mxu0 0.0
    %5410 = vmatpush.msra.mxu0 0.0
    %5411 = vmatpush.msra.mxu0 0.0
    %5412 = vmatpush.msra.mxu0 0.0
    %5413 = vmatpush.msra.mxu0 0.0
    %5414 = vmatpush.msra.mxu0 0.0
    %5415 = vmatpush.msra.mxu0 0.0
    %5416 = vmatpush.msra.mxu0 0.0
    %5417 = vmatpush.msra.mxu0 0.0
    %5418 = vmatpush.msra.mxu0 0.0
    %5419 = vmatpush.msra.mxu0 0.0
    %5420 = vmatpush.msra.mxu0 0.0
    %5421 = vmatpush.msra.mxu0 %v5382
    %5422 = vmatpush.msra.mxu0 %v5369
    %5423 = vmatmul.f32.gmra.mxu0 %v5375
    %v5424 = vpop.f32.mrf.mxu0
    %v5425 = vadd.f32 0.0, %v5424
    %5426 = vmatmul.f32.gmra.mxu0 %v5378
    %v5427 = vpop.f32.mrf.mxu0
    %v5428 = vadd.f32 0.0, %v5427
    %5429 = vdwg.mxu0
    %v5430 = vadd.f32 %v5325, %v5402
    %v5431 = vadd.f32 %v5348, %v5425
    %v5432 = vadd.f32 %v5328, %v5405
    %v5433 = vadd.f32 %v5351, %v5428
    %s5434 = scalar_lea.vmem %s1, 912
    %v5435 = vld [vmem:[%s5434] sm:$0xff]
    %v5436 = vld [vmem:[%s5434 + $0x8] sm:$0x3]
    %5437 = vrot.lane.b32.xlu0 %v5187, 1
    %v5438 = vpop.permute.xlu0 %5437
    %5439 = vrot.lane.b32.xlu0 %v5188, 1
    %v5440 = vpop.permute.xlu0 %5439
    %5441 = vrot.lane.b32.xlu0 %v5189, 1
    %v5442 = vpop.permute.xlu0 %5441
    %5443 = vrot.lane.b32.xlu0 %v5190, 1
    %v5444 = vpop.permute.xlu0 %5443
    %5445 = vrot.lane.b32.xlu0 %v5191, 1
    %v5446 = vpop.permute.xlu0 %5445
    %5447 = vrot.lane.b32.xlu0 %v5192, 1
    %v5448 = vpop.permute.xlu0 %5447
    %v5449 = vsel %vm333, %v5438, %v5440
    %v5450 = vsel %vm333, %v5440, %v5442
    %v5451 = vsel %vm333, %v5444, %v5446
    %v5452 = vsel %vm333, %v5446, %v5448
    %v5456 = vsel %vm97, %v5435, 0
    %v5459 = vsel %vm97, %v5436, 0
    %v5461 = vsel %vm110, %v5451, 0
    %v5463 = vsel %vm110, %v5452, 0
    %5465 = vmatpush.msra.mxu0 0.0
    %5466 = vmatpush.msra.mxu0 0.0
    %5467 = vmatpush.msra.mxu0 0.0
    %5468 = vmatpush.msra.mxu0 0.0
    %5469 = vmatpush.msra.mxu0 0.0
    %5470 = vmatpush.msra.mxu0 0.0
    %5471 = vmatpush.msra.mxu0 0.0
    %5472 = vmatpush.msra.mxu0 0.0
    %5473 = vmatpush.msra.mxu0 0.0
    %5474 = vmatpush.msra.mxu0 0.0
    %5475 = vmatpush.msra.mxu0 0.0
    %5476 = vmatpush.msra.mxu0 0.0
    %5477 = vmatpush.msra.mxu0 0.0
    %5478 = vmatpush.msra.mxu0 0.0
    %5479 = vmatpush.msra.mxu0 %v5461
    %5480 = vmatpush.msra.mxu0 %v5449
    %5481 = vmatmul.f32.gmra.mxu0 %v5456
    %v5482 = vpop.f32.mrf.mxu0
    %v5483 = vadd.f32 0.0, %v5482
    %5484 = vmatmul.f32.gmra.mxu0 %v5459
    %v5485 = vpop.f32.mrf.mxu0
    %v5486 = vadd.f32 0.0, %v5485
    %5487 = vdwg.mxu0
    %5488 = vmatpush.msra.mxu0 0.0
    %5489 = vmatpush.msra.mxu0 0.0
    %5490 = vmatpush.msra.mxu0 0.0
    %5491 = vmatpush.msra.mxu0 0.0
    %5492 = vmatpush.msra.mxu0 0.0
    %5493 = vmatpush.msra.mxu0 0.0
    %5494 = vmatpush.msra.mxu0 0.0
    %5495 = vmatpush.msra.mxu0 0.0
    %5496 = vmatpush.msra.mxu0 0.0
    %5497 = vmatpush.msra.mxu0 0.0
    %5498 = vmatpush.msra.mxu0 0.0
    %5499 = vmatpush.msra.mxu0 0.0
    %5500 = vmatpush.msra.mxu0 0.0
    %5501 = vmatpush.msra.mxu0 0.0
    %5502 = vmatpush.msra.mxu0 %v5463
    %5503 = vmatpush.msra.mxu0 %v5450
    %5504 = vmatmul.f32.gmra.mxu0 %v5456
    %v5505 = vpop.f32.mrf.mxu0
    %v5506 = vadd.f32 0.0, %v5505
    %5507 = vmatmul.f32.gmra.mxu0 %v5459
    %v5508 = vpop.f32.mrf.mxu0
    %v5509 = vadd.f32 0.0, %v5508
    %5510 = vdwg.mxu0
    %v5511 = vadd.f32 %v5430, %v5483
    %v5512 = vadd.f32 %v5431, %v5506
    %v5513 = vadd.f32 %v5432, %v5486
    %v5514 = vadd.f32 %v5433, %v5509
    %s5515 = scalar_lea.vmem %s1, 928
    %v5516 = vld [vmem:[%s5515] sm:$0xff]
    %v5517 = vld [vmem:[%s5515 + $0x8] sm:$0x3]
    %v5519 = vsel %vm97, %v5516, 0
    %v5522 = vsel %vm97, %v5517, 0
    %v5524 = vsel %vm110, %v5191, 0
    %v5526 = vsel %vm110, %v5192, 0
    %5528 = vmatpush.msra.mxu0 0.0
    %5529 = vmatpush.msra.mxu0 0.0
    %5530 = vmatpush.msra.mxu0 0.0
    %5531 = vmatpush.msra.mxu0 0.0
    %5532 = vmatpush.msra.mxu0 0.0
    %5533 = vmatpush.msra.mxu0 0.0
    %5534 = vmatpush.msra.mxu0 0.0
    %5535 = vmatpush.msra.mxu0 0.0
    %5536 = vmatpush.msra.mxu0 0.0
    %5537 = vmatpush.msra.mxu0 0.0
    %5538 = vmatpush.msra.mxu0 0.0
    %5539 = vmatpush.msra.mxu0 0.0
    %5540 = vmatpush.msra.mxu0 0.0
    %5541 = vmatpush.msra.mxu0 0.0
    %5542 = vmatpush.msra.mxu0 %v5524
    %5543 = vmatpush.msra.mxu0 %v5188
    %5544 = vmatmul.f32.gmra.mxu0 %v5519
    %v5545 = vpop.f32.mrf.mxu0
    %v5546 = vadd.f32 0.0, %v5545
    %5547 = vmatmul.f32.gmra.mxu0 %v5522
    %v5548 = vpop.f32.mrf.mxu0
    %v5549 = vadd.f32 0.0, %v5548
    %5550 = vdwg.mxu0
    %5551 = vmatpush.msra.mxu0 0.0
    %5552 = vmatpush.msra.mxu0 0.0
    %5553 = vmatpush.msra.mxu0 0.0
    %5554 = vmatpush.msra.mxu0 0.0
    %5555 = vmatpush.msra.mxu0 0.0
    %5556 = vmatpush.msra.mxu0 0.0
    %5557 = vmatpush.msra.mxu0 0.0
    %5558 = vmatpush.msra.mxu0 0.0
    %5559 = vmatpush.msra.mxu0 0.0
    %5560 = vmatpush.msra.mxu0 0.0
    %5561 = vmatpush.msra.mxu0 0.0
    %5562 = vmatpush.msra.mxu0 0.0
    %5563 = vmatpush.msra.mxu0 0.0
    %5564 = vmatpush.msra.mxu0 0.0
    %5565 = vmatpush.msra.mxu0 %v5526
    %5566 = vmatpush.msra.mxu0 %v5189
    %5567 = vmatmul.f32.gmra.mxu0 %v5519
    %v5568 = vpop.f32.mrf.mxu0
    %v5569 = vadd.f32 0.0, %v5568
    %5570 = vmatmul.f32.gmra.mxu0 %v5522
    %v5571 = vpop.f32.mrf.mxu0
    %v5572 = vadd.f32 0.0, %v5571
    %5573 = vdwg.mxu0
    %v5574 = vadd.f32 %v5511, %v5546
    %v5575 = vadd.f32 %v5512, %v5569
    %v5576 = vadd.f32 %v5513, %v5549
    %v5577 = vadd.f32 %v5514, %v5572
    %v5578 = vld [vmem:[#allocation2 + $0x8] sm:$0xff]
    %v5579 = vld [vmem:[#allocation2 + $0x10] sm:$0xff]
    %v5580 = vld [vmem:[#allocation2 + $0x18] sm:$0xff]
    %v5581 = vld [vmem:[#allocation2 + $0x28] sm:$0x3]
    %v5582 = vld [vmem:[#allocation2 + $0x30] sm:$0x3]
    %v5583 = vld [vmem:[#allocation2 + $0x38] sm:$0x3]
    %s5584 = scalar_lea.vmem %s1, 944
    %v5585 = vld [vmem:[%s5584] sm:$0xff]
    %v5586 = vld [vmem:[%s5584 + $0x8] sm:$0x3]
    %5593 = vrot.lane.b32.xlu0 %v5578, 127
    %v5594 = vpop.permute.xlu0 %5593
    %5595 = vrot.lane.b32.xlu0 %v5579, 127
    %v5596 = vpop.permute.xlu0 %5595
    %5597 = vrot.lane.b32.xlu0 %v5580, 127
    %v5598 = vpop.permute.xlu0 %5597
    %5599 = vrot.lane.b32.xlu0 %v5581, 127
    %v5600 = vpop.permute.xlu0 %5599
    %5601 = vrot.lane.b32.xlu0 %v5582, 127
    %v5602 = vpop.permute.xlu0 %5601
    %5603 = vrot.lane.b32.xlu0 %v5583, 127
    %v5604 = vpop.permute.xlu0 %5603
    %v5605 = vsel %vm490, %v5594, %v5596
    %v5606 = vsel %vm490, %v5596, %v5598
    %v5607 = vsel %vm490, %v5600, %v5602
    %v5608 = vsel %vm490, %v5602, %v5604
    %v5612 = vsel %vm97, %v5585, 0
    %v5615 = vsel %vm97, %v5586, 0
    %v5617 = vsel %vm110, %v5607, 0
    %v5619 = vsel %vm110, %v5608, 0
    %5621 = vmatpush.msra.mxu0 0.0
    %5622 = vmatpush.msra.mxu0 0.0
    %5623 = vmatpush.msra.mxu0 0.0
    %5624 = vmatpush.msra.mxu0 0.0
    %5625 = vmatpush.msra.mxu0 0.0
    %5626 = vmatpush.msra.mxu0 0.0
    %5627 = vmatpush.msra.mxu0 0.0
    %5628 = vmatpush.msra.mxu0 0.0
    %5629 = vmatpush.msra.mxu0 0.0
    %5630 = vmatpush.msra.mxu0 0.0
    %5631 = vmatpush.msra.mxu0 0.0
    %5632 = vmatpush.msra.mxu0 0.0
    %5633 = vmatpush.msra.mxu0 0.0
    %5634 = vmatpush.msra.mxu0 0.0
    %5635 = vmatpush.msra.mxu0 %v5617
    %5636 = vmatpush.msra.mxu0 %v5605
    %5637 = vmatmul.f32.gmra.mxu0 %v5612
    %v5638 = vpop.f32.mrf.mxu0
    %v5639 = vadd.f32 0.0, %v5638
    %5640 = vmatmul.f32.gmra.mxu0 %v5615
    %v5641 = vpop.f32.mrf.mxu0
    %v5642 = vadd.f32 0.0, %v5641
    %5643 = vdwg.mxu0
    %5644 = vmatpush.msra.mxu0 0.0
    %5645 = vmatpush.msra.mxu0 0.0
    %5646 = vmatpush.msra.mxu0 0.0
    %5647 = vmatpush.msra.mxu0 0.0
    %5648 = vmatpush.msra.mxu0 0.0
    %5649 = vmatpush.msra.mxu0 0.0
    %5650 = vmatpush.msra.mxu0 0.0
    %5651 = vmatpush.msra.mxu0 0.0
    %5652 = vmatpush.msra.mxu0 0.0
    %5653 = vmatpush.msra.mxu0 0.0
    %5654 = vmatpush.msra.mxu0 0.0
    %5655 = vmatpush.msra.mxu0 0.0
    %5656 = vmatpush.msra.mxu0 0.0
    %5657 = vmatpush.msra.mxu0 0.0
    %5658 = vmatpush.msra.mxu0 %v5619
    %5659 = vmatpush.msra.mxu0 %v5606
    %5660 = vmatmul.f32.gmra.mxu0 %v5612
    %v5661 = vpop.f32.mrf.mxu0
    %v5662 = vadd.f32 0.0, %v5661
    %5663 = vmatmul.f32.gmra.mxu0 %v5615
    %v5664 = vpop.f32.mrf.mxu0
    %v5665 = vadd.f32 0.0, %v5664
    %5666 = vdwg.mxu0
    %v5667 = vadd.f32 %v5574, %v5639
    %v5668 = vadd.f32 %v5575, %v5662
    %v5669 = vadd.f32 %v5576, %v5642
    %v5670 = vadd.f32 %v5577, %v5665
    %s5671 = scalar_lea.vmem %s1, 960
    %v5672 = vld [vmem:[%s5671] sm:$0xff]
    %v5673 = vld [vmem:[%s5671 + $0x8] sm:$0x3]
    %5674 = vrot.lane.b32.xlu0 %v5578, 119
    %v5675 = vpop.permute.xlu0 %5674
    %5676 = vrot.lane.b32.xlu0 %v5579, 119
    %v5677 = vpop.permute.xlu0 %5676
    %5678 = vrot.lane.b32.xlu0 %v5580, 119
    %v5679 = vpop.permute.xlu0 %5678
    %5680 = vrot.lane.b32.xlu0 %v5581, 119
    %v5681 = vpop.permute.xlu0 %5680
    %5682 = vrot.lane.b32.xlu0 %v5582, 119
    %v5683 = vpop.permute.xlu0 %5682
    %5684 = vrot.lane.b32.xlu0 %v5583, 119
    %v5685 = vpop.permute.xlu0 %5684
    %v5686 = vsel %vm572, %v5675, %v5677
    %v5687 = vsel %vm572, %v5677, %v5679
    %v5688 = vsel %vm572, %v5681, %v5683
    %v5689 = vsel %vm572, %v5683, %v5685
    %v5693 = vsel %vm97, %v5672, 0
    %v5696 = vsel %vm97, %v5673, 0
    %v5698 = vsel %vm110, %v5688, 0
    %v5700 = vsel %vm110, %v5689, 0
    %5702 = vmatpush.msra.mxu0 0.0
    %5703 = vmatpush.msra.mxu0 0.0
    %5704 = vmatpush.msra.mxu0 0.0
    %5705 = vmatpush.msra.mxu0 0.0
    %5706 = vmatpush.msra.mxu0 0.0
    %5707 = vmatpush.msra.mxu0 0.0
    %5708 = vmatpush.msra.mxu0 0.0
    %5709 = vmatpush.msra.mxu0 0.0
    %5710 = vmatpush.msra.mxu0 0.0
    %5711 = vmatpush.msra.mxu0 0.0
    %5712 = vmatpush.msra.mxu0 0.0
    %5713 = vmatpush.msra.mxu0 0.0
    %5714 = vmatpush.msra.mxu0 0.0
    %5715 = vmatpush.msra.mxu0 0.0
    %5716 = vmatpush.msra.mxu0 %v5698
    %5717 = vmatpush.msra.mxu0 %v5686
    %5718 = vmatmul.f32.gmra.mxu0 %v5693
    %v5719 = vpop.f32.mrf.mxu0
    %v5720 = vadd.f32 0.0, %v5719
    %5721 = vmatmul.f32.gmra.mxu0 %v5696
    %v5722 = vpop.f32.mrf.mxu0
    %v5723 = vadd.f32 0.0, %v5722
    %5724 = vdwg.mxu0
    %5725 = vmatpush.msra.mxu0 0.0
    %5726 = vmatpush.msra.mxu0 0.0
    %5727 = vmatpush.msra.mxu0 0.0
    %5728 = vmatpush.msra.mxu0 0.0
    %5729 = vmatpush.msra.mxu0 0.0
    %5730 = vmatpush.msra.mxu0 0.0
    %5731 = vmatpush.msra.mxu0 0.0
    %5732 = vmatpush.msra.mxu0 0.0
    %5733 = vmatpush.msra.mxu0 0.0
    %5734 = vmatpush.msra.mxu0 0.0
    %5735 = vmatpush.msra.mxu0 0.0
    %5736 = vmatpush.msra.mxu0 0.0
    %5737 = vmatpush.msra.mxu0 0.0
    %5738 = vmatpush.msra.mxu0 0.0
    %5739 = vmatpush.msra.mxu0 %v5700
    %5740 = vmatpush.msra.mxu0 %v5687
    %5741 = vmatmul.f32.gmra.mxu0 %v5693
    %v5742 = vpop.f32.mrf.mxu0
    %v5743 = vadd.f32 0.0, %v5742
    %5744 = vmatmul.f32.gmra.mxu0 %v5696
    %v5745 = vpop.f32.mrf.mxu0
    %v5746 = vadd.f32 0.0, %v5745
    %5747 = vdwg.mxu0
    %v5748 = vadd.f32 %v5667, %v5720
    %v5749 = vadd.f32 %v5668, %v5743
    %v5750 = vadd.f32 %v5669, %v5723
    %v5751 = vadd.f32 %v5670, %v5746
    %s5752 = scalar_lea.vmem %s1, 976
    %v5753 = vld [vmem:[%s5752] sm:$0xff]
    %v5754 = vld [vmem:[%s5752 + $0x8] sm:$0x3]
    %5755 = vrot.lane.b32.xlu0 %v5578, 118
    %v5756 = vpop.permute.xlu0 %5755
    %5757 = vrot.lane.b32.xlu0 %v5579, 118
    %v5758 = vpop.permute.xlu0 %5757
    %5759 = vrot.lane.b32.xlu0 %v5580, 118
    %v5760 = vpop.permute.xlu0 %5759
    %5761 = vrot.lane.b32.xlu0 %v5581, 118
    %v5762 = vpop.permute.xlu0 %5761
    %5763 = vrot.lane.b32.xlu0 %v5582, 118
    %v5764 = vpop.permute.xlu0 %5763
    %5765 = vrot.lane.b32.xlu0 %v5583, 118
    %v5766 = vpop.permute.xlu0 %5765
    %v5767 = vsel %vm654, %v5756, %v5758
    %v5768 = vsel %vm654, %v5758, %v5760
    %v5769 = vsel %vm654, %v5762, %v5764
    %v5770 = vsel %vm654, %v5764, %v5766
    %v5774 = vsel %vm97, %v5753, 0
    %v5777 = vsel %vm97, %v5754, 0
    %v5779 = vsel %vm110, %v5769, 0
    %v5781 = vsel %vm110, %v5770, 0
    %5783 = vmatpush.msra.mxu0 0.0
    %5784 = vmatpush.msra.mxu0 0.0
    %5785 = vmatpush.msra.mxu0 0.0
    %5786 = vmatpush.msra.mxu0 0.0
    %5787 = vmatpush.msra.mxu0 0.0
    %5788 = vmatpush.msra.mxu0 0.0
    %5789 = vmatpush.msra.mxu0 0.0
    %5790 = vmatpush.msra.mxu0 0.0
    %5791 = vmatpush.msra.mxu0 0.0
    %5792 = vmatpush.msra.mxu0 0.0
    %5793 = vmatpush.msra.mxu0 0.0
    %5794 = vmatpush.msra.mxu0 0.0
    %5795 = vmatpush.msra.mxu0 0.0
    %5796 = vmatpush.msra.mxu0 0.0
    %5797 = vmatpush.msra.mxu0 %v5779
    %5798 = vmatpush.msra.mxu0 %v5767
    %5799 = vmatmul.f32.gmra.mxu0 %v5774
    %v5800 = vpop.f32.mrf.mxu0
    %v5801 = vadd.f32 0.0, %v5800
    %5802 = vmatmul.f32.gmra.mxu0 %v5777
    %v5803 = vpop.f32.mrf.mxu0
    %v5804 = vadd.f32 0.0, %v5803
    %5805 = vdwg.mxu0
    %5806 = vmatpush.msra.mxu0 0.0
    %5807 = vmatpush.msra.mxu0 0.0
    %5808 = vmatpush.msra.mxu0 0.0
    %5809 = vmatpush.msra.mxu0 0.0
    %5810 = vmatpush.msra.mxu0 0.0
    %5811 = vmatpush.msra.mxu0 0.0
    %5812 = vmatpush.msra.mxu0 0.0
    %5813 = vmatpush.msra.mxu0 0.0
    %5814 = vmatpush.msra.mxu0 0.0
    %5815 = vmatpush.msra.mxu0 0.0
    %5816 = vmatpush.msra.mxu0 0.0
    %5817 = vmatpush.msra.mxu0 0.0
    %5818 = vmatpush.msra.mxu0 0.0
    %5819 = vmatpush.msra.mxu0 0.0
    %5820 = vmatpush.msra.mxu0 %v5781
    %5821 = vmatpush.msra.mxu0 %v5768
    %5822 = vmatmul.f32.gmra.mxu0 %v5774
    %v5823 = vpop.f32.mrf.mxu0
    %v5824 = vadd.f32 0.0, %v5823
    %5825 = vmatmul.f32.gmra.mxu0 %v5777
    %v5826 = vpop.f32.mrf.mxu0
    %v5827 = vadd.f32 0.0, %v5826
    %5828 = vdwg.mxu0
    %v5829 = vadd.f32 %v5748, %v5801
    %v5830 = vadd.f32 %v5749, %v5824
    %v5831 = vadd.f32 %v5750, %v5804
    %v5832 = vadd.f32 %v5751, %v5827
    %s5833 = scalar_lea.vmem %s1, 992
    %v5834 = vld [vmem:[%s5833] sm:$0xff]
    %v5835 = vld [vmem:[%s5833 + $0x8] sm:$0x3]
    %5836 = vrot.lane.b32.xlu0 %v5578, 117
    %v5837 = vpop.permute.xlu0 %5836
    %5838 = vrot.lane.b32.xlu0 %v5579, 117
    %v5839 = vpop.permute.xlu0 %5838
    %5840 = vrot.lane.b32.xlu0 %v5580, 117
    %v5841 = vpop.permute.xlu0 %5840
    %5842 = vrot.lane.b32.xlu0 %v5581, 117
    %v5843 = vpop.permute.xlu0 %5842
    %5844 = vrot.lane.b32.xlu0 %v5582, 117
    %v5845 = vpop.permute.xlu0 %5844
    %5846 = vrot.lane.b32.xlu0 %v5583, 117
    %v5847 = vpop.permute.xlu0 %5846
    %v5848 = vsel %vm736, %v5837, %v5839
    %v5849 = vsel %vm736, %v5839, %v5841
    %v5850 = vsel %vm736, %v5843, %v5845
    %v5851 = vsel %vm736, %v5845, %v5847
    %v5855 = vsel %vm97, %v5834, 0
    %v5858 = vsel %vm97, %v5835, 0
    %v5860 = vsel %vm110, %v5850, 0
    %v5862 = vsel %vm110, %v5851, 0
    %5864 = vmatpush.msra.mxu0 0.0
    %5865 = vmatpush.msra.mxu0 0.0
    %5866 = vmatpush.msra.mxu0 0.0
    %5867 = vmatpush.msra.mxu0 0.0
    %5868 = vmatpush.msra.mxu0 0.0
    %5869 = vmatpush.msra.mxu0 0.0
    %5870 = vmatpush.msra.mxu0 0.0
    %5871 = vmatpush.msra.mxu0 0.0
    %5872 = vmatpush.msra.mxu0 0.0
    %5873 = vmatpush.msra.mxu0 0.0
    %5874 = vmatpush.msra.mxu0 0.0
    %5875 = vmatpush.msra.mxu0 0.0
    %5876 = vmatpush.msra.mxu0 0.0
    %5877 = vmatpush.msra.mxu0 0.0
    %5878 = vmatpush.msra.mxu0 %v5860
    %5879 = vmatpush.msra.mxu0 %v5848
    %5880 = vmatmul.f32.gmra.mxu0 %v5855
    %v5881 = vpop.f32.mrf.mxu0
    %v5882 = vadd.f32 0.0, %v5881
    %5883 = vmatmul.f32.gmra.mxu0 %v5858
    %v5884 = vpop.f32.mrf.mxu0
    %v5885 = vadd.f32 0.0, %v5884
    %5886 = vdwg.mxu0
    %5887 = vmatpush.msra.mxu0 0.0
    %5888 = vmatpush.msra.mxu0 0.0
    %5889 = vmatpush.msra.mxu0 0.0
    %5890 = vmatpush.msra.mxu0 0.0
    %5891 = vmatpush.msra.mxu0 0.0
    %5892 = vmatpush.msra.mxu0 0.0
    %5893 = vmatpush.msra.mxu0 0.0
    %5894 = vmatpush.msra.mxu0 0.0
    %5895 = vmatpush.msra.mxu0 0.0
    %5896 = vmatpush.msra.mxu0 0.0
    %5897 = vmatpush.msra.mxu0 0.0
    %5898 = vmatpush.msra.mxu0 0.0
    %5899 = vmatpush.msra.mxu0 0.0
    %5900 = vmatpush.msra.mxu0 0.0
    %5901 = vmatpush.msra.mxu0 %v5862
    %5902 = vmatpush.msra.mxu0 %v5849
    %5903 = vmatmul.f32.gmra.mxu0 %v5855
    %v5904 = vpop.f32.mrf.mxu0
    %v5905 = vadd.f32 0.0, %v5904
    %5906 = vmatmul.f32.gmra.mxu0 %v5858
    %v5907 = vpop.f32.mrf.mxu0
    %v5908 = vadd.f32 0.0, %v5907
    %5909 = vdwg.mxu0
    %v5910 = vadd.f32 %v5829, %v5882
    %v5911 = vadd.f32 %v5830, %v5905
    %v5912 = vadd.f32 %v5831, %v5885
    %v5913 = vadd.f32 %v5832, %v5908
    %5915 = vset.pattern.permute.xlu0 0
    %5916 = vperm.xlu0 %5915, %v5181
    %v5917 = vpop.permute.xlu0 %5916
    %5920 = vset.pattern.permute.xlu0 0
    %5921 = vperm.xlu0 %5920, %v5182
    %v5922 = vpop.permute.xlu0 %5921
    %v5924 = vadd.f32 %v5910, %v5917
    %v5925 = vadd.f32 %v5911, %v5917
    %v5926 = vadd.f32 %v5912, %v5922
    %v5927 = vadd.f32 %v5913, %v5922
    %s5928 = scalar_lea.vmem %s3, 96
    %v5929 = vld [vmem:[%s5928] sm:$0xff]
    %v5930 = vld [vmem:[%s5928 + $0x8] sm:$0x3]
    %s5931 = scalar_lea.vmem %s4, 96
    %v5932 = vld [vmem:[%s5931] sm:$0xff]
    %v5933 = vld [vmem:[%s5931 + $0x8] sm:$0x3]
    %v5934 = vmul.f32 %v5924, %v822
    %v5935 = vmul.f32 %v5925, %v823
    %v5936 = vmul.f32 %v5926, %v822
    %v5937 = vmul.f32 %v5927, %v823
    %v5938 = vadd.f32 %v5934, %v5935
    %5939 = vadd.xlane.f32.xlu0 %v5938
    %v5940 = vpop.xlane.xlu0 %5939
    %v5941 = vsel %vm110, %v5936, 0.0
    %v5942 = vsel %vm110, %v5937, 0.0
    %v5943 = vadd.f32 %v5941, %v5942
    %5944 = vadd.xlane.f32.xlu0 %v5943
    %v5945 = vpop.xlane.xlu0 %5944
    %v5946 = vmul.f32 %v5934, %v5934
    %v5947 = vmul.f32 %v5935, %v5935
    %v5948 = vmul.f32 %v5936, %v5936
    %v5949 = vmul.f32 %v5937, %v5937
    %v5950 = vadd.f32 %v5946, %v5947
    %5951 = vadd.xlane.f32.xlu0 %v5950
    %v5952 = vpop.xlane.xlu0 %5951
    %v5953 = vsel %vm110, %v5948, 0.0
    %v5954 = vsel %vm110, %v5949, 0.0
    %v5955 = vadd.f32 %v5953, %v5954
    %5956 = vadd.xlane.f32.xlu0 %v5955
    %v5957 = vpop.xlane.xlu0 %5956
    %v5958 = vmul.f32 %v5940, 0.0078125
    %v5959 = vmul.f32 %v5945, 0.0078125
    %v5960 = vmul.f32 %v5952, 0.0078125
    %v5961 = vmul.f32 %v5957, 0.0078125
    %v5962 = vmul.f32 %v5958, %v5958
    %v5963 = vmul.f32 %v5959, %v5959
    %v5964 = vsub.f32 %v5960, %v5962
    %v5965 = vsub.f32 %v5961, %v5963
    %v5966 = vadd.f32 %v5964, 1e-05
    %v5967 = vadd.f32 %v5965, 1e-05
    %v5968 = vrsqrt.pop %v5966
    %v5969 = vmul.f32 %v5968, %v5966
    %v5970 = vmul.f32 %v5969, %v5968
    %v5971 = vmul.f32 0.5, %v5970
    %v5972 = vsub.f32 1.5, %v5971
    %v5973 = vmul.f32 %v5968, %v5972
    %vm5974 = vweird.f32 %v5966
    %vm5975 = vweird.f32 %v5968
    %vm5976 = vmor %vm5974, %vm5975
    %v5977 = vsel %vm5976, %v5968, %v5973
    %v5978 = vrsqrt.pop %v5967
    %v5979 = vmul.f32 %v5978, %v5967
    %v5980 = vmul.f32 %v5979, %v5978
    %v5981 = vmul.f32 0.5, %v5980
    %v5982 = vsub.f32 1.5, %v5981
    %v5983 = vmul.f32 %v5978, %v5982
    %vm5984 = vweird.f32 %v5967
    %vm5985 = vweird.f32 %v5978
    %vm5986 = vmor %vm5984, %vm5985
    %v5987 = vsel %vm5986, %v5978, %v5983
    %v5988 = vmul.f32 %v5929, %v5977
    %v5989 = vmul.f32 %v5930, %v5987
    %v5990 = vmul.f32 %v5988, %v5958
    %v5991 = vmul.f32 %v5989, %v5959
    %v5992 = vsub.f32 %v5932, %v5990
    %v5993 = vsub.f32 %v5933, %v5991
    %5995 = vset.pattern.permute.xlu0 0
    %5996 = vperm.xlu0 %5995, %v5988
    %v5997 = vpop.permute.xlu0 %5996
    %6000 = vset.pattern.permute.xlu0 0
    %6001 = vperm.xlu0 %6000, %v5989
    %v6002 = vpop.permute.xlu0 %6001
    %v6004 = vmul.f32 %v5997, %v5924
    %v6005 = vmul.f32 %v5997, %v5925
    %v6006 = vmul.f32 %v6002, %v5926
    %v6007 = vmul.f32 %v6002, %v5927
    %6009 = vset.pattern.permute.xlu0 0
    %6010 = vperm.xlu0 %6009, %v5992
    %v6011 = vpop.permute.xlu0 %6010
    %6014 = vset.pattern.permute.xlu0 0
    %6015 = vperm.xlu0 %6014, %v5993
    %v6016 = vpop.permute.xlu0 %6015
    %v6018 = vadd.f32 %v6004, %v6011
    %v6019 = vadd.f32 %v6005, %v6011
    %v6020 = vadd.f32 %v6006, %v6016
    %v6021 = vadd.f32 %v6007, %v6016
    %v6022 = vadd.f32 %v6018, %v4326
    %v6023 = vadd.f32 %v6019, %v4327
    %v6024 = vadd.f32 %v6020, %v4328
    %v6025 = vadd.f32 %v6021, %v4329
    %v6026 = vmax.f32 %v6022, 0.0
    %v6027 = vmax.f32 %v6023, 0.0
    %v6028 = vmax.f32 %v6024, 0.0
    %v6029 = vmax.f32 %v6025, 0.0
    %v6030 = vmul.f32 %v6026, %v822
    %v6031 = vmul.f32 %v6027, %v823
    %v6032 = vmul.f32 %v6028, %v822
    %v6033 = vmul.f32 %v6029, %v823
    %v6034 = vld [vmem:[%s6] sm:$0x3]
    %6035 = vst [vmem:[#allocation2 + $0x8] sm:$0xff] %v6030
    %6036 = vst [vmem:[#allocation2 + $0x10] sm:$0xff] %v6031
    %6037 = vst [vmem:[#allocation2 + $0x28] sm:$0x3] %v6032
    %6038 = vst [vmem:[#allocation2 + $0x30] sm:$0x3] %v6033
    %v6039 = vld [vmem:[#allocation2] sm:$0xff]
    %v6040 = vld [vmem:[#allocation2 + $0x8] sm:$0xff]
    %v6041 = vld [vmem:[#allocation2 + $0x10] sm:$0xff]
    %v6042 = vld [vmem:[#allocation2 + $0x20] sm:$0x3]
    %v6043 = vld [vmem:[#allocation2 + $0x28] sm:$0x3]
    %v6044 = vld [vmem:[#allocation2 + $0x30] sm:$0x3]
    %v6045 = vld [vmem:[%s5] sm:$0x3]
    %s6046 = scalar_lea.vmem %s5, 2
    %v6047 = vld [vmem:[%s6046] sm:$0x3]
    %6054 = vrot.lane.b32.xlu0 %v6039, 10
    %v6055 = vpop.permute.xlu0 %6054
    %6056 = vrot.lane.b32.xlu0 %v6040, 10
    %v6057 = vpop.permute.xlu0 %6056
    %6058 = vrot.lane.b32.xlu0 %v6041, 10
    %v6059 = vpop.permute.xlu0 %6058
    %6060 = vrot.lane.b32.xlu0 %v6042, 10
    %v6061 = vpop.permute.xlu0 %6060
    %6062 = vrot.lane.b32.xlu0 %v6043, 10
    %v6063 = vpop.permute.xlu0 %6062
    %6064 = vrot.lane.b32.xlu0 %v6044, 10
    %v6065 = vpop.permute.xlu0 %6064
    %v6066 = vsel %vm97, %v6055, %v6057
    %v6067 = vsel %vm97, %v6057, %v6059
    %v6068 = vsel %vm97, %v6061, %v6063
    %v6069 = vsel %vm97, %v6063, %v6065
    %v6073 = vsel %vm97, %v6047, 0
    %v6075 = vsel %vm110, %v6068, 0
    %v6077 = vsel %vm110, %v6069, 0
    %6079 = vmatpush.msra.mxu0 0.0
    %6080 = vmatpush.msra.mxu0 0.0
    %6081 = vmatpush.msra.mxu0 0.0
    %6082 = vmatpush.msra.mxu0 0.0
    %6083 = vmatpush.msra.mxu0 0.0
    %6084 = vmatpush.msra.mxu0 0.0
    %6085 = vmatpush.msra.mxu0 0.0
    %6086 = vmatpush.msra.mxu0 0.0
    %6087 = vmatpush.msra.mxu0 0.0
    %6088 = vmatpush.msra.mxu0 0.0
    %6089 = vmatpush.msra.mxu0 0.0
    %6090 = vmatpush.msra.mxu0 0.0
    %6091 = vmatpush.msra.mxu0 0.0
    %6092 = vmatpush.msra.mxu0 0.0
    %6093 = vmatpush.msra.mxu0 %v6075
    %6094 = vmatpush.msra.mxu0 %v6066
    %6095 = vmatmul.f32.gmra.mxu0 %v6073
    %v6096 = vpop.f32.mrf.mxu0
    %v6097 = vadd.f32 0.0, %v6096
    %6098 = vdwg.mxu0
    %6099 = vmatpush.msra.mxu0 0.0
    %6100 = vmatpush.msra.mxu0 0.0
    %6101 = vmatpush.msra.mxu0 0.0
    %6102 = vmatpush.msra.mxu0 0.0
    %6103 = vmatpush.msra.mxu0 0.0
    %6104 = vmatpush.msra.mxu0 0.0
    %6105 = vmatpush.msra.mxu0 0.0
    %6106 = vmatpush.msra.mxu0 0.0
    %6107 = vmatpush.msra.mxu0 0.0
    %6108 = vmatpush.msra.mxu0 0.0
    %6109 = vmatpush.msra.mxu0 0.0
    %6110 = vmatpush.msra.mxu0 0.0
    %6111 = vmatpush.msra.mxu0 0.0
    %6112 = vmatpush.msra.mxu0 0.0
    %6113 = vmatpush.msra.mxu0 %v6077
    %6114 = vmatpush.msra.mxu0 %v6067
    %6115 = vmatmul.f32.gmra.mxu0 %v6073
    %v6116 = vpop.f32.mrf.mxu0
    %v6117 = vadd.f32 0.0, %v6116
    %6118 = vdwg.mxu0
    %6119 = vrot.lane.b32.xlu0 %v6039, 11
    %v6120 = vpop.permute.xlu0 %6119
    %6121 = vrot.lane.b32.xlu0 %v6040, 11
    %v6122 = vpop.permute.xlu0 %6121
    %6123 = vrot.lane.b32.xlu0 %v6041, 11
    %v6124 = vpop.permute.xlu0 %6123
    %6125 = vrot.lane.b32.xlu0 %v6042, 11
    %v6126 = vpop.permute.xlu0 %6125
    %6127 = vrot.lane.b32.xlu0 %v6043, 11
    %v6128 = vpop.permute.xlu0 %6127
    %6129 = vrot.lane.b32.xlu0 %v6044, 11
    %v6130 = vpop.permute.xlu0 %6129
    %v6131 = vsel %vm173, %v6120, %v6122
    %v6132 = vsel %vm173, %v6122, %v6124
    %v6133 = vsel %vm173, %v6126, %v6128
    %v6134 = vsel %vm173, %v6128, %v6130
    %v6138 = vsel %vm97, %v6045, 0
    %v6140 = vsel %vm110, %v6133, 0
    %v6142 = vsel %vm110, %v6134, 0
    %6144 = vmatpush.msra.mxu0 0.0
    %6145 = vmatpush.msra.mxu0 0.0
    %6146 = vmatpush.msra.mxu0 0.0
    %6147 = vmatpush.msra.mxu0 0.0
    %6148 = vmatpush.msra.mxu0 0.0
    %6149 = vmatpush.msra.mxu0 0.0
    %6150 = vmatpush.msra.mxu0 0.0
    %6151 = vmatpush.msra.mxu0 0.0
    %6152 = vmatpush.msra.mxu0 0.0
    %6153 = vmatpush.msra.mxu0 0.0
    %6154 = vmatpush.msra.mxu0 0.0
    %6155 = vmatpush.msra.mxu0 0.0
    %6156 = vmatpush.msra.mxu0 0.0
    %6157 = vmatpush.msra.mxu0 0.0
    %6158 = vmatpush.msra.mxu0 %v6140
    %6159 = vmatpush.msra.mxu0 %v6131
    %6160 = vmatmul.f32.gmra.mxu0 %v6138
    %v6161 = vpop.f32.mrf.mxu0
    %v6162 = vadd.f32 %v6097, %v6161
    %6163 = vdwg.mxu0
    %6164 = vmatpush.msra.mxu0 0.0
    %6165 = vmatpush.msra.mxu0 0.0
    %6166 = vmatpush.msra.mxu0 0.0
    %6167 = vmatpush.msra.mxu0 0.0
    %6168 = vmatpush.msra.mxu0 0.0
    %6169 = vmatpush.msra.mxu0 0.0
    %6170 = vmatpush.msra.mxu0 0.0
    %6171 = vmatpush.msra.mxu0 0.0
    %6172 = vmatpush.msra.mxu0 0.0
    %6173 = vmatpush.msra.mxu0 0.0
    %6174 = vmatpush.msra.mxu0 0.0
    %6175 = vmatpush.msra.mxu0 0.0
    %6176 = vmatpush.msra.mxu0 0.0
    %6177 = vmatpush.msra.mxu0 0.0
    %6178 = vmatpush.msra.mxu0 %v6142
    %6179 = vmatpush.msra.mxu0 %v6132
    %6180 = vmatmul.f32.gmra.mxu0 %v6138
    %v6181 = vpop.f32.mrf.mxu0
    %v6182 = vadd.f32 %v6117, %v6181
    %6183 = vdwg.mxu0
    %s6184 = scalar_lea.vmem %s5, 4
    %v6185 = vld [vmem:[%s6184] sm:$0x3]
    %6186 = vrot.lane.b32.xlu0 %v6039, 9
    %v6187 = vpop.permute.xlu0 %6186
    %6188 = vrot.lane.b32.xlu0 %v6040, 9
    %v6189 = vpop.permute.xlu0 %6188
    %6190 = vrot.lane.b32.xlu0 %v6041, 9
    %v6191 = vpop.permute.xlu0 %6190
    %6192 = vrot.lane.b32.xlu0 %v6042, 9
    %v6193 = vpop.permute.xlu0 %6192
    %6194 = vrot.lane.b32.xlu0 %v6043, 9
    %v6195 = vpop.permute.xlu0 %6194
    %6196 = vrot.lane.b32.xlu0 %v6044, 9
    %v6197 = vpop.permute.xlu0 %6196
    %v6198 = vsel %vm251, %v6187, %v6189
    %v6199 = vsel %vm251, %v6189, %v6191
    %v6200 = vsel %vm251, %v6193, %v6195
    %v6201 = vsel %vm251, %v6195, %v6197
    %v6205 = vsel %vm97, %v6185, 0
    %v6207 = vsel %vm110, %v6200, 0
    %v6209 = vsel %vm110, %v6201, 0
    %6211 = vmatpush.msra.mxu0 0.0
    %6212 = vmatpush.msra.mxu0 0.0
    %6213 = vmatpush.msra.mxu0 0.0
    %6214 = vmatpush.msra.mxu0 0.0
    %6215 = vmatpush.msra.mxu0 0.0
    %6216 = vmatpush.msra.mxu0 0.0
    %6217 = vmatpush.msra.mxu0 0.0
    %6218 = vmatpush.msra.mxu0 0.0
    %6219 = vmatpush.msra.mxu0 0.0
    %6220 = vmatpush.msra.mxu0 0.0
    %6221 = vmatpush.msra.mxu0 0.0
    %6222 = vmatpush.msra.mxu0 0.0
    %6223 = vmatpush.msra.mxu0 0.0
    %6224 = vmatpush.msra.mxu0 0.0
    %6225 = vmatpush.msra.mxu0 %v6207
    %6226 = vmatpush.msra.mxu0 %v6198
    %6227 = vmatmul.f32.gmra.mxu0 %v6205
    %v6228 = vpop.f32.mrf.mxu0
    %v6229 = vadd.f32 0.0, %v6228
    %6230 = vdwg.mxu0
    %6231 = vmatpush.msra.mxu0 0.0
    %6232 = vmatpush.msra.mxu0 0.0
    %6233 = vmatpush.msra.mxu0 0.0
    %6234 = vmatpush.msra.mxu0 0.0
    %6235 = vmatpush.msra.mxu0 0.0
    %6236 = vmatpush.msra.mxu0 0.0
    %6237 = vmatpush.msra.mxu0 0.0
    %6238 = vmatpush.msra.mxu0 0.0
    %6239 = vmatpush.msra.mxu0 0.0
    %6240 = vmatpush.msra.mxu0 0.0
    %6241 = vmatpush.msra.mxu0 0.0
    %6242 = vmatpush.msra.mxu0 0.0
    %6243 = vmatpush.msra.mxu0 0.0
    %6244 = vmatpush.msra.mxu0 0.0
    %6245 = vmatpush.msra.mxu0 %v6209
    %6246 = vmatpush.msra.mxu0 %v6199
    %6247 = vmatmul.f32.gmra.mxu0 %v6205
    %v6248 = vpop.f32.mrf.mxu0
    %v6249 = vadd.f32 0.0, %v6248
    %6250 = vdwg.mxu0
    %v6251 = vadd.f32 %v6162, %v6229
    %v6252 = vadd.f32 %v6182, %v6249
    %s6253 = scalar_lea.vmem %s5, 6
    %v6254 = vld [vmem:[%s6253] sm:$0x3]
    %6255 = vrot.lane.b32.xlu0 %v6039, 1
    %v6256 = vpop.permute.xlu0 %6255
    %6257 = vrot.lane.b32.xlu0 %v6040, 1
    %v6258 = vpop.permute.xlu0 %6257
    %6259 = vrot.lane.b32.xlu0 %v6041, 1
    %v6260 = vpop.permute.xlu0 %6259
    %6261 = vrot.lane.b32.xlu0 %v6042, 1
    %v6262 = vpop.permute.xlu0 %6261
    %6263 = vrot.lane.b32.xlu0 %v6043, 1
    %v6264 = vpop.permute.xlu0 %6263
    %6265 = vrot.lane.b32.xlu0 %v6044, 1
    %v6266 = vpop.permute.xlu0 %6265
    %v6267 = vsel %vm333, %v6256, %v6258
    %v6268 = vsel %vm333, %v6258, %v6260
    %v6269 = vsel %vm333, %v6262, %v6264
    %v6270 = vsel %vm333, %v6264, %v6266
    %v6274 = vsel %vm97, %v6254, 0
    %v6276 = vsel %vm110, %v6269, 0
    %v6278 = vsel %vm110, %v6270, 0
    %6280 = vmatpush.msra.mxu0 0.0
    %6281 = vmatpush.msra.mxu0 0.0
    %6282 = vmatpush.msra.mxu0 0.0
    %6283 = vmatpush.msra.mxu0 0.0
    %6284 = vmatpush.msra.mxu0 0.0
    %6285 = vmatpush.msra.mxu0 0.0
    %6286 = vmatpush.msra.mxu0 0.0
    %6287 = vmatpush.msra.mxu0 0.0
    %6288 = vmatpush.msra.mxu0 0.0
    %6289 = vmatpush.msra.mxu0 0.0
    %6290 = vmatpush.msra.mxu0 0.0
    %6291 = vmatpush.msra.mxu0 0.0
    %6292 = vmatpush.msra.mxu0 0.0
    %6293 = vmatpush.msra.mxu0 0.0
    %6294 = vmatpush.msra.mxu0 %v6276
    %6295 = vmatpush.msra.mxu0 %v6267
    %6296 = vmatmul.f32.gmra.mxu0 %v6274
    %v6297 = vpop.f32.mrf.mxu0
    %v6298 = vadd.f32 0.0, %v6297
    %6299 = vdwg.mxu0
    %6300 = vmatpush.msra.mxu0 0.0
    %6301 = vmatpush.msra.mxu0 0.0
    %6302 = vmatpush.msra.mxu0 0.0
    %6303 = vmatpush.msra.mxu0 0.0
    %6304 = vmatpush.msra.mxu0 0.0
    %6305 = vmatpush.msra.mxu0 0.0
    %6306 = vmatpush.msra.mxu0 0.0
    %6307 = vmatpush.msra.mxu0 0.0
    %6308 = vmatpush.msra.mxu0 0.0
    %6309 = vmatpush.msra.mxu0 0.0
    %6310 = vmatpush.msra.mxu0 0.0
    %6311 = vmatpush.msra.mxu0 0.0
    %6312 = vmatpush.msra.mxu0 0.0
    %6313 = vmatpush.msra.mxu0 0.0
    %6314 = vmatpush.msra.mxu0 %v6278
    %6315 = vmatpush.msra.mxu0 %v6268
    %6316 = vmatmul.f32.gmra.mxu0 %v6274
    %v6317 = vpop.f32.mrf.mxu0
    %v6318 = vadd.f32 0.0, %v6317
    %6319 = vdwg.mxu0
    %v6320 = vadd.f32 %v6251, %v6298
    %v6321 = vadd.f32 %v6252, %v6318
    %s6322 = scalar_lea.vmem %s5, 8
    %v6323 = vld [vmem:[%s6322] sm:$0x3]
    %v6325 = vsel %vm97, %v6323, 0
    %v6327 = vsel %vm110, %v6043, 0
    %v6329 = vsel %vm110, %v6044, 0
    %6331 = vmatpush.msra.mxu0 0.0
    %6332 = vmatpush.msra.mxu0 0.0
    %6333 = vmatpush.msra.mxu0 0.0
    %6334 = vmatpush.msra.mxu0 0.0
    %6335 = vmatpush.msra.mxu0 0.0
    %6336 = vmatpush.msra.mxu0 0.0
    %6337 = vmatpush.msra.mxu0 0.0
    %6338 = vmatpush.msra.mxu0 0.0
    %6339 = vmatpush.msra.mxu0 0.0
    %6340 = vmatpush.msra.mxu0 0.0
    %6341 = vmatpush.msra.mxu0 0.0
    %6342 = vmatpush.msra.mxu0 0.0
    %6343 = vmatpush.msra.mxu0 0.0
    %6344 = vmatpush.msra.mxu0 0.0
    %6345 = vmatpush.msra.mxu0 %v6327
    %6346 = vmatpush.msra.mxu0 %v6040
    %6347 = vmatmul.f32.gmra.mxu0 %v6325
    %v6348 = vpop.f32.mrf.mxu0
    %v6349 = vadd.f32 0.0, %v6348
    %6350 = vdwg.mxu0
    %6351 = vmatpush.msra.mxu0 0.0
    %6352 = vmatpush.msra.mxu0 0.0
    %6353 = vmatpush.msra.mxu0 0.0
    %6354 = vmatpush.msra.mxu0 0.0
    %6355 = vmatpush.msra.mxu0 0.0
    %6356 = vmatpush.msra.mxu0 0.0
    %6357 = vmatpush.msra.mxu0 0.0
    %6358 = vmatpush.msra.mxu0 0.0
    %6359 = vmatpush.msra.mxu0 0.0
    %6360 = vmatpush.msra.mxu0 0.0
    %6361 = vmatpush.msra.mxu0 0.0
    %6362 = vmatpush.msra.mxu0 0.0
    %6363 = vmatpush.msra.mxu0 0.0
    %6364 = vmatpush.msra.mxu0 0.0
    %6365 = vmatpush.msra.mxu0 %v6329
    %6366 = vmatpush.msra.mxu0 %v6041
    %6367 = vmatmul.f32.gmra.mxu0 %v6325
    %v6368 = vpop.f32.mrf.mxu0
    %v6369 = vadd.f32 0.0, %v6368
    %6370 = vdwg.mxu0
    %v6371 = vadd.f32 %v6320, %v6349
    %v6372 = vadd.f32 %v6321, %v6369
    %v6373 = vld [vmem:[#allocation2 + $0x8] sm:$0xff]
    %v6374 = vld [vmem:[#allocation2 + $0x10] sm:$0xff]
    %v6375 = vld [vmem:[#allocation2 + $0x18] sm:$0xff]
    %v6376 = vld [vmem:[#allocation2 + $0x28] sm:$0x3]
    %v6377 = vld [vmem:[#allocation2 + $0x30] sm:$0x3]
    %v6378 = vld [vmem:[#allocation2 + $0x38] sm:$0x3]
    %s6379 = scalar_lea.vmem %s5, 10
    %v6380 = vld [vmem:[%s6379] sm:$0x3]
    %6387 = vrot.lane.b32.xlu0 %v6373, 127
    %v6388 = vpop.permute.xlu0 %6387
    %6389 = vrot.lane.b32.xlu0 %v6374, 127
    %v6390 = vpop.permute.xlu0 %6389
    %6391 = vrot.lane.b32.xlu0 %v6375, 127
    %v6392 = vpop.permute.xlu0 %6391
    %6393 = vrot.lane.b32.xlu0 %v6376, 127
    %v6394 = vpop.permute.xlu0 %6393
    %6395 = vrot.lane.b32.xlu0 %v6377, 127
    %v6396 = vpop.permute.xlu0 %6395
    %6397 = vrot.lane.b32.xlu0 %v6378, 127
    %v6398 = vpop.permute.xlu0 %6397
    %v6399 = vsel %vm490, %v6388, %v6390
    %v6400 = vsel %vm490, %v6390, %v6392
    %v6401 = vsel %vm490, %v6394, %v6396
    %v6402 = vsel %vm490, %v6396, %v6398
    %v6406 = vsel %vm97, %v6380, 0
    %v6408 = vsel %vm110, %v6401, 0
    %v6410 = vsel %vm110, %v6402, 0
    %6412 = vmatpush.msra.mxu0 0.0
    %6413 = vmatpush.msra.mxu0 0.0
    %6414 = vmatpush.msra.mxu0 0.0
    %6415 = vmatpush.msra.mxu0 0.0
    %6416 = vmatpush.msra.mxu0 0.0
    %6417 = vmatpush.msra.mxu0 0.0
    %6418 = vmatpush.msra.mxu0 0.0
    %6419 = vmatpush.msra.mxu0 0.0
    %6420 = vmatpush.msra.mxu0 0.0
    %6421 = vmatpush.msra.mxu0 0.0
    %6422 = vmatpush.msra.mxu0 0.0
    %6423 = vmatpush.msra.mxu0 0.0
    %6424 = vmatpush.msra.mxu0 0.0
    %6425 = vmatpush.msra.mxu0 0.0
    %6426 = vmatpush.msra.mxu0 %v6408
    %6427 = vmatpush.msra.mxu0 %v6399
    %6428 = vmatmul.f32.gmra.mxu0 %v6406
    %v6429 = vpop.f32.mrf.mxu0
    %v6430 = vadd.f32 0.0, %v6429
    %6431 = vdwg.mxu0
    %6432 = vmatpush.msra.mxu0 0.0
    %6433 = vmatpush.msra.mxu0 0.0
    %6434 = vmatpush.msra.mxu0 0.0
    %6435 = vmatpush.msra.mxu0 0.0
    %6436 = vmatpush.msra.mxu0 0.0
    %6437 = vmatpush.msra.mxu0 0.0
    %6438 = vmatpush.msra.mxu0 0.0
    %6439 = vmatpush.msra.mxu0 0.0
    %6440 = vmatpush.msra.mxu0 0.0
    %6441 = vmatpush.msra.mxu0 0.0
    %6442 = vmatpush.msra.mxu0 0.0
    %6443 = vmatpush.msra.mxu0 0.0
    %6444 = vmatpush.msra.mxu0 0.0
    %6445 = vmatpush.msra.mxu0 0.0
    %6446 = vmatpush.msra.mxu0 %v6410
    %6447 = vmatpush.msra.mxu0 %v6400
    %6448 = vmatmul.f32.gmra.mxu0 %v6406
    %v6449 = vpop.f32.mrf.mxu0
    %v6450 = vadd.f32 0.0, %v6449
    %6451 = vdwg.mxu0
    %v6452 = vadd.f32 %v6371, %v6430
    %v6453 = vadd.f32 %v6372, %v6450
    %s6454 = scalar_lea.vmem %s5, 12
    %v6455 = vld [vmem:[%s6454] sm:$0x3]
    %6456 = vrot.lane.b32.xlu0 %v6373, 119
    %v6457 = vpop.permute.xlu0 %6456
    %6458 = vrot.lane.b32.xlu0 %v6374, 119
    %v6459 = vpop.permute.xlu0 %6458
    %6460 = vrot.lane.b32.xlu0 %v6375, 119
    %v6461 = vpop.permute.xlu0 %6460
    %6462 = vrot.lane.b32.xlu0 %v6376, 119
    %v6463 = vpop.permute.xlu0 %6462
    %6464 = vrot.lane.b32.xlu0 %v6377, 119
    %v6465 = vpop.permute.xlu0 %6464
    %6466 = vrot.lane.b32.xlu0 %v6378, 119
    %v6467 = vpop.permute.xlu0 %6466
    %v6468 = vsel %vm572, %v6457, %v6459
    %v6469 = vsel %vm572, %v6459, %v6461
    %v6470 = vsel %vm572, %v6463, %v6465
    %v6471 = vsel %vm572, %v6465, %v6467
    %v6475 = vsel %vm97, %v6455, 0
    %v6477 = vsel %vm110, %v6470, 0
    %v6479 = vsel %vm110, %v6471, 0
    %6481 = vmatpush.msra.mxu0 0.0
    %6482 = vmatpush.msra.mxu0 0.0
    %6483 = vmatpush.msra.mxu0 0.0
    %6484 = vmatpush.msra.mxu0 0.0
    %6485 = vmatpush.msra.mxu0 0.0
    %6486 = vmatpush.msra.mxu0 0.0
    %6487 = vmatpush.msra.mxu0 0.0
    %6488 = vmatpush.msra.mxu0 0.0
    %6489 = vmatpush.msra.mxu0 0.0
    %6490 = vmatpush.msra.mxu0 0.0
    %6491 = vmatpush.msra.mxu0 0.0
    %6492 = vmatpush.msra.mxu0 0.0
    %6493 = vmatpush.msra.mxu0 0.0
    %6494 = vmatpush.msra.mxu0 0.0
    %6495 = vmatpush.msra.mxu0 %v6477
    %6496 = vmatpush.msra.mxu0 %v6468
    %6497 = vmatmul.f32.gmra.mxu0 %v6475
    %v6498 = vpop.f32.mrf.mxu0
    %v6499 = vadd.f32 0.0, %v6498
    %6500 = vdwg.mxu0
    %6501 = vmatpush.msra.mxu0 0.0
    %6502 = vmatpush.msra.mxu0 0.0
    %6503 = vmatpush.msra.mxu0 0.0
    %6504 = vmatpush.msra.mxu0 0.0
    %6505 = vmatpush.msra.mxu0 0.0
    %6506 = vmatpush.msra.mxu0 0.0
    %6507 = vmatpush.msra.mxu0 0.0
    %6508 = vmatpush.msra.mxu0 0.0
    %6509 = vmatpush.msra.mxu0 0.0
    %6510 = vmatpush.msra.mxu0 0.0
    %6511 = vmatpush.msra.mxu0 0.0
    %6512 = vmatpush.msra.mxu0 0.0
    %6513 = vmatpush.msra.mxu0 0.0
    %6514 = vmatpush.msra.mxu0 0.0
    %6515 = vmatpush.msra.mxu0 %v6479
    %6516 = vmatpush.msra.mxu0 %v6469
    %6517 = vmatmul.f32.gmra.mxu0 %v6475
    %v6518 = vpop.f32.mrf.mxu0
    %v6519 = vadd.f32 0.0, %v6518
    %6520 = vdwg.mxu0
    %v6521 = vadd.f32 %v6452, %v6499
    %v6522 = vadd.f32 %v6453, %v6519
    %s6523 = scalar_lea.vmem %s5, 14
    %v6524 = vld [vmem:[%s6523] sm:$0x3]
    %6525 = vrot.lane.b32.xlu0 %v6373, 118
    %v6526 = vpop.permute.xlu0 %6525
    %6527 = vrot.lane.b32.xlu0 %v6374, 118
    %v6528 = vpop.permute.xlu0 %6527
    %6529 = vrot.lane.b32.xlu0 %v6375, 118
    %v6530 = vpop.permute.xlu0 %6529
    %6531 = vrot.lane.b32.xlu0 %v6376, 118
    %v6532 = vpop.permute.xlu0 %6531
    %6533 = vrot.lane.b32.xlu0 %v6377, 118
    %v6534 = vpop.permute.xlu0 %6533
    %6535 = vrot.lane.b32.xlu0 %v6378, 118
    %v6536 = vpop.permute.xlu0 %6535
    %v6537 = vsel %vm654, %v6526, %v6528
    %v6538 = vsel %vm654, %v6528, %v6530
    %v6539 = vsel %vm654, %v6532, %v6534
    %v6540 = vsel %vm654, %v6534, %v6536
    %v6544 = vsel %vm97, %v6524, 0
    %v6546 = vsel %vm110, %v6539, 0
    %v6548 = vsel %vm110, %v6540, 0
    %6550 = vmatpush.msra.mxu0 0.0
    %6551 = vmatpush.msra.mxu0 0.0
    %6552 = vmatpush.msra.mxu0 0.0
    %6553 = vmatpush.msra.mxu0 0.0
    %6554 = vmatpush.msra.mxu0 0.0
    %6555 = vmatpush.msra.mxu0 0.0
    %6556 = vmatpush.msra.mxu0 0.0
    %6557 = vmatpush.msra.mxu0 0.0
    %6558 = vmatpush.msra.mxu0 0.0
    %6559 = vmatpush.msra.mxu0 0.0
    %6560 = vmatpush.msra.mxu0 0.0
    %6561 = vmatpush.msra.mxu0 0.0
    %6562 = vmatpush.msra.mxu0 0.0
    %6563 = vmatpush.msra.mxu0 0.0
    %6564 = vmatpush.msra.mxu0 %v6546
    %6565 = vmatpush.msra.mxu0 %v6537
    %6566 = vmatmul.f32.gmra.mxu0 %v6544
    %v6567 = vpop.f32.mrf.mxu0
    %v6568 = vadd.f32 0.0, %v6567
    %6569 = vdwg.mxu0
    %6570 = vmatpush.msra.mxu0 0.0
    %6571 = vmatpush.msra.mxu0 0.0
    %6572 = vmatpush.msra.mxu0 0.0
    %6573 = vmatpush.msra.mxu0 0.0
    %6574 = vmatpush.msra.mxu0 0.0
    %6575 = vmatpush.msra.mxu0 0.0
    %6576 = vmatpush.msra.mxu0 0.0
    %6577 = vmatpush.msra.mxu0 0.0
    %6578 = vmatpush.msra.mxu0 0.0
    %6579 = vmatpush.msra.mxu0 0.0
    %6580 = vmatpush.msra.mxu0 0.0
    %6581 = vmatpush.msra.mxu0 0.0
    %6582 = vmatpush.msra.mxu0 0.0
    %6583 = vmatpush.msra.mxu0 0.0
    %6584 = vmatpush.msra.mxu0 %v6548
    %6585 = vmatpush.msra.mxu0 %v6538
    %6586 = vmatmul.f32.gmra.mxu0 %v6544
    %v6587 = vpop.f32.mrf.mxu0
    %v6588 = vadd.f32 0.0, %v6587
    %6589 = vdwg.mxu0
    %v6590 = vadd.f32 %v6521, %v6568
    %v6591 = vadd.f32 %v6522, %v6588
    %s6592 = scalar_lea.vmem %s5, 16
    %v6593 = vld [vmem:[%s6592] sm:$0x3]
    %6594 = vrot.lane.b32.xlu0 %v6373, 117
    %v6595 = vpop.permute.xlu0 %6594
    %6596 = vrot.lane.b32.xlu0 %v6374, 117
    %v6597 = vpop.permute.xlu0 %6596
    %6598 = vrot.lane.b32.xlu0 %v6375, 117
    %v6599 = vpop.permute.xlu0 %6598
    %6600 = vrot.lane.b32.xlu0 %v6376, 117
    %v6601 = vpop.permute.xlu0 %6600
    %6602 = vrot.lane.b32.xlu0 %v6377, 117
    %v6603 = vpop.permute.xlu0 %6602
    %6604 = vrot.lane.b32.xlu0 %v6378, 117
    %v6605 = vpop.permute.xlu0 %6604
    %v6606 = vsel %vm736, %v6595, %v6597
    %v6607 = vsel %vm736, %v6597, %v6599
    %v6608 = vsel %vm736, %v6601, %v6603
    %v6609 = vsel %vm736, %v6603, %v6605
    %v6613 = vsel %vm97, %v6593, 0
    %v6615 = vsel %vm110, %v6608, 0
    %v6617 = vsel %vm110, %v6609, 0
    %6619 = vmatpush.msra.mxu0 0.0
    %6620 = vmatpush.msra.mxu0 0.0
    %6621 = vmatpush.msra.mxu0 0.0
    %6622 = vmatpush.msra.mxu0 0.0
    %6623 = vmatpush.msra.mxu0 0.0
    %6624 = vmatpush.msra.mxu0 0.0
    %6625 = vmatpush.msra.mxu0 0.0
    %6626 = vmatpush.msra.mxu0 0.0
    %6627 = vmatpush.msra.mxu0 0.0
    %6628 = vmatpush.msra.mxu0 0.0
    %6629 = vmatpush.msra.mxu0 0.0
    %6630 = vmatpush.msra.mxu0 0.0
    %6631 = vmatpush.msra.mxu0 0.0
    %6632 = vmatpush.msra.mxu0 0.0
    %6633 = vmatpush.msra.mxu0 %v6615
    %6634 = vmatpush.msra.mxu0 %v6606
    %6635 = vmatmul.f32.gmra.mxu0 %v6613
    %v6636 = vpop.f32.mrf.mxu0
    %v6637 = vadd.f32 0.0, %v6636
    %6638 = vdwg.mxu0
    %6639 = vmatpush.msra.mxu0 0.0
    %6640 = vmatpush.msra.mxu0 0.0
    %6641 = vmatpush.msra.mxu0 0.0
    %6642 = vmatpush.msra.mxu0 0.0
    %6643 = vmatpush.msra.mxu0 0.0
    %6644 = vmatpush.msra.mxu0 0.0
    %6645 = vmatpush.msra.mxu0 0.0
    %6646 = vmatpush.msra.mxu0 0.0
    %6647 = vmatpush.msra.mxu0 0.0
    %6648 = vmatpush.msra.mxu0 0.0
    %6649 = vmatpush.msra.mxu0 0.0
    %6650 = vmatpush.msra.mxu0 0.0
    %6651 = vmatpush.msra.mxu0 0.0
    %6652 = vmatpush.msra.mxu0 0.0
    %6653 = vmatpush.msra.mxu0 %v6617
    %6654 = vmatpush.msra.mxu0 %v6607
    %6655 = vmatmul.f32.gmra.mxu0 %v6613
    %v6656 = vpop.f32.mrf.mxu0
    %v6657 = vadd.f32 0.0, %v6656
    %6658 = vdwg.mxu0
    %v6659 = vadd.f32 %v6590, %v6637
    %v6660 = vadd.f32 %v6591, %v6657
    %6662 = vset.pattern.permute.xlu0 0
    %6663 = vperm.xlu0 %6662, %v6034
    %v6664 = vpop.permute.xlu0 %6663
    %v6666 = vadd.f32 %v6659, %v6664
    %v6667 = vadd.f32 %v6660, %v6664
    %v6668 = vld [vmem:[%s6] sm:$0x3]
    %v6669 = vmul.f32 %v6666, %v822
    %v6670 = vmul.f32 %v6667, %v823
    %v6671 = vsel %vm110, %v6669, 0.0
    %v6672 = vsel %vm110, %v6670, 0.0
    %v6673 = vadd.f32 %v6671, %v6672
    %6674 = vadd.xlane.f32.xlu0 %v6673
    %v6675 = vpop.xlane.xlu0 %6674
    %v6676 = vmul.f32 %v6669, %v6669
    %v6677 = vmul.f32 %v6670, %v6670
    %v6678 = vsel %vm110, %v6676, 0.0
    %v6679 = vsel %vm110, %v6677, 0.0
    %v6680 = vadd.f32 %v6678, %v6679
    %6681 = vadd.xlane.f32.xlu0 %v6680
    %v6682 = vpop.xlane.xlu0 %6681
    %v6683 = vmul.f32 %v6675, 0.0078125
    %v6684 = vmul.f32 %v6682, 0.0078125
    %v6685 = vmul.f32 %v6683, %v6683
    %v6686 = vsub.f32 %v6684, %v6685
    %v6687 = vadd.f32 %v6686, 1e-05
    %v6688 = vrsqrt.pop %v6687
    %v6689 = vmul.f32 %v6688, %v6687
    %v6690 = vmul.f32 %v6689, %v6688
    %v6691 = vmul.f32 0.5, %v6690
    %v6692 = vsub.f32 1.5, %v6691
    %v6693 = vmul.f32 %v6688, %v6692
    %vm6694 = vweird.f32 %v6687
    %vm6695 = vweird.f32 %v6688
    %vm6696 = vmor %vm6694, %vm6695
    %v6697 = vsel %vm6696, %v6688, %v6693
    %v6698 = vmul.f32 %v6668, %v6697
    %v6699 = vmul.f32 %v6698, %v6683
    %6701 = vrot.lane.b32.xlu0 %v6699, 1
    %v6702 = vpop.permute.xlu0 %6701
    %v6704 = vsub.f32 %v6668, %v6702
    %6706 = vset.pattern.permute.xlu0 1
    %6707 = vperm.xlu0 %6706, %v6698
    %v6708 = vpop.permute.xlu0 %6707
    %v6710 = vmul.f32 %v6708, %v6666
    %v6711 = vmul.f32 %v6708, %v6667
    %6713 = vset.pattern.permute.xlu0 2
    %6714 = vperm.xlu0 %6713, %v6704
    %v6715 = vpop.permute.xlu0 %6714
    %v6717 = vadd.f32 %v6710, %v6715
    %v6718 = vadd.f32 %v6711, %v6715
    %v6720 = vrot.slane %v6718, 7
    %vm6722 = vcmask 1040384
    %v6723 = vsel %vm6722, %v6717, %v6720
    %v6725 = vrot.slane %v6717, 1
    %v6727 = vsel %vm6722, %v6725, %v6718
    %v6728 = vld [vmem:[%s7] sm:$0xff]
    %v6729 = vld [vmem:[%s7 + $0x8] sm:$0xff]
    %v6730 = vld [vmem:[%s7 + $0x10] sm:$0xff]
    %v6731 = vld [vmem:[%s7 + $0x18] sm:$0xff]
    %v6732 = vld [vmem:[%s7 + $0x20] sm:$0xff]
    %v6733 = vld [vmem:[%s7 + $0x28] sm:$0xff]
    %v6734 = vld [vmem:[%s7 + $0x30] sm:$0xff]
    %v6735 = vld [vmem:[%s7 + $0x38] sm:$0xff]
    %v6736 = vld [vmem:[%s7 + $0x40] sm:$0xff]
    %v6737 = vld [vmem:[%s7 + $0x48] sm:$0xff]
    %v6738 = vld [vmem:[%s7 + $0x50] sm:$0xff]
    %v6739 = vld [vmem:[%s7 + $0x58] sm:$0xff]
    %v6740 = vld [vmem:[%s7 + $0x60] sm:$0xff]
    %v6741 = vld [vmem:[%s7 + $0x68] sm:$0xff]
    %v6742 = vld [vmem:[%s7 + $0x70] sm:$0xff]
    %v6743 = vld [vmem:[%s7 + $0x78] sm:$0xff]
    %6744 = vmatpush.msra.mxu0 %v6743
    %6745 = vmatpush.msra.mxu0 %v6742
    %6746 = vmatpush.msra.mxu0 %v6741
    %6747 = vmatpush.msra.mxu0 %v6740
    %6748 = vmatpush.msra.mxu0 %v6739
    %6749 = vmatpush.msra.mxu0 %v6738
    %6750 = vmatpush.msra.mxu0 %v6737
    %6751 = vmatpush.msra.mxu0 %v6736
    %6752 = vmatpush.msra.mxu0 %v6735
    %6753 = vmatpush.msra.mxu0 %v6734
    %6754 = vmatpush.msra.mxu0 %v6733
    %6755 = vmatpush.msra.mxu0 %v6732
    %6756 = vmatpush.msra.mxu0 %v6731
    %6757 = vmatpush.msra.mxu0 %v6730
    %6758 = vmatpush.msra.mxu0 %v6729
    %6759 = vmatpush.msra.mxu0 %v6728
    %6760 = vmatmul.f32.gmra.mxu0 %v6723
    %v6761 = vpop.f32.mrf.mxu0
    %v6762 = vadd.f32 0.0, %v6761
    %6763 = vdwg.mxu0
    %v6764 = vtanh.pop %v6762
    %vm6765 = vcmask 517120
    %6766 = vst.msk [vmem:[#allocation4] sm:$0x3] %vm6765, %v6764
    %v6767 = vmax.f32 %v6727, 0.0
    %6768 = vmatpush.msra.mxu0 %v6743
    %6769 = vmatpush.msra.mxu0 %v6742
    %6770 = vmatpush.msra.mxu0 %v6741
    %6771 = vmatpush.msra.mxu0 %v6740
    %6772 = vmatpush.msra.mxu0 %v6739
    %6773 = vmatpush.msra.mxu0 %v6738
    %6774 = vmatpush.msra.mxu0 %v6737
    %6775 = vmatpush.msra.mxu0 %v6736
    %6776 = vmatpush.msra.mxu0 %v6735
    %6777 = vmatpush.msra.mxu0 %v6734
    %6778 = vmatpush.msra.mxu0 %v6733
    %6779 = vmatpush.msra.mxu0 %v6732
    %6780 = vmatpush.msra.mxu0 %v6731
    %6781 = vmatpush.msra.mxu0 %v6730
    %6782 = vmatpush.msra.mxu0 %v6729
    %6783 = vmatpush.msra.mxu0 %v6728
    %6784 = vmatmul.f32.gmra.mxu0 %v6767
    %v6785 = vpop.f32.mrf.mxu0
    %v6786 = vadd.f32 0.0, %v6785
    %6787 = vdwg.mxu0
    %v6788 = vld [vmem:[%s9] sm:$0xff]
    %v6789 = vld [vmem:[%s9 + $0x8] sm:$0xff]
    %v6790 = vld [vmem:[%s9 + $0x10] sm:$0xff]
    %v6791 = vld [vmem:[%s9 + $0x18] sm:$0xff]
    %v6792 = vld [vmem:[%s9 + $0x20] sm:$0xff]
    %v6793 = vld [vmem:[%s9 + $0x28] sm:$0xff]
    %v6794 = vld [vmem:[%s9 + $0x30] sm:$0xff]
    %v6795 = vld [vmem:[%s9 + $0x38] sm:$0xff]
    %v6796 = vld [vmem:[%s10] sm:$0x1]
    %v6798 = vperm.slane %v6796, 0
    %vm6800 = vcmask 523264
    %v6802 = vsel %vm6800, %v6786, 0
    %6804 = vmatpush.msra.mxu0 0.0
    %6805 = vmatpush.msra.mxu0 0.0
    %6806 = vmatpush.msra.mxu0 0.0
    %6807 = vmatpush.msra.mxu0 0.0
    %6808 = vmatpush.msra.mxu0 0.0
    %6809 = vmatpush.msra.mxu0 0.0
    %6810 = vmatpush.msra.mxu0 0.0
    %6811 = vmatpush.msra.mxu0 0.0
    %6812 = vmatpush.msra.mxu0 %v6795
    %6813 = vmatpush.msra.mxu0 %v6794
    %6814 = vmatpush.msra.mxu0 %v6793
    %6815 = vmatpush.msra.mxu0 %v6792
    %6816 = vmatpush.msra.mxu0 %v6791
    %6817 = vmatpush.msra.mxu0 %v6790
    %6818 = vmatpush.msra.mxu0 %v6789
    %6819 = vmatpush.msra.mxu0 %v6788
    %6820 = vmatmul.f32.gmra.mxu0 %v6802
    %v6821 = vpop.f32.mrf.mxu0
    %v6822 = vadd.f32 %v6798, %v6821
    %6823 = vdwg.mxu0
    %v6824 = vmax.f32 %v6822, 0.0
    %v6825 = vld [vmem:[%s11] sm:$0xff]
    %v6826 = vld [vmem:[%s11 + $0x8] sm:$0xff]
    %v6827 = vld [vmem:[%s11 + $0x10] sm:$0xff]
    %v6828 = vld [vmem:[%s11 + $0x18] sm:$0xff]
    %v6829 = vld [vmem:[%s11 + $0x20] sm:$0xff]
    %v6830 = vld [vmem:[%s11 + $0x28] sm:$0xff]
    %v6831 = vld [vmem:[%s11 + $0x30] sm:$0xff]
    %v6832 = vld [vmem:[%s11 + $0x38] sm:$0xff]
    %v6833 = vld [vmem:[#allocation3] sm:$0x1]
    %v6835 = vperm.slane %v6833, 0
    %v6838 = vsel %vm6800, %v6824, 0
    %6840 = vmatpush.msra.mxu0 0.0
    %6841 = vmatpush.msra.mxu0 0.0
    %6842 = vmatpush.msra.mxu0 0.0
    %6843 = vmatpush.msra.mxu0 0.0
    %6844 = vmatpush.msra.mxu0 0.0
    %6845 = vmatpush.msra.mxu0 0.0
    %6846 = vmatpush.msra.mxu0 0.0
    %6847 = vmatpush.msra.mxu0 0.0
    %6848 = vmatpush.msra.mxu0 %v6832
    %6849 = vmatpush.msra.mxu0 %v6831
    %6850 = vmatpush.msra.mxu0 %v6830
    %6851 = vmatpush.msra.mxu0 %v6829
    %6852 = vmatpush.msra.mxu0 %v6828
    %6853 = vmatpush.msra.mxu0 %v6827
    %6854 = vmatpush.msra.mxu0 %v6826
    %6855 = vmatpush.msra.mxu0 %v6825
    %6856 = vmatmul.f32.gmra.mxu0 %v6838
    %v6857 = vpop.f32.mrf.mxu0
    %v6858 = vadd.f32 %v6835, %v6857
    %6859 = vdwg.mxu0
    %v6860 = vtanh.pop %v6858
    %vm6861 = vcmask 1024
    %6862 = vst.msk [vmem:[%s14] sm:$0x3] %vm6861, %v6860
    // Predicated region
    $region54: #{neuralnet_cnn_forward.1} parent=1 // pred_check
      _
    $region55: #{neuralnet_cnn_forward.1} parent=1 // pred_check_branch
      %6864 = sbr.rel (0) target = $region57
    $region56: #{neuralnet_cnn_forward.1} parent=1 // pred_region
      %6866 = vsyncadd [#allocation5], 0
      %s6868 = sshll.u32 [#allocation4], 4
      %s6869 = int_to_ptr.vmem [resolvable:$true] %s6868
      %s6870 = sshll.u32 %s13, 4
      %s6871 = int_to_ptr.hbm [resolvable:$true] %s6870
      %6873 = dma.vmem_to_hbm [thread:$0]  %s6869, 32, %s6871, [#allocation5]
    $region57: #{neuralnet_cnn_forward.1} parent=1 // pred_fallthru
      _
    // Predicated region
    $region58: #{neuralnet_cnn_forward.1} parent=1 // pred_check
      _
    $region59: #{neuralnet_cnn_forward.1} parent=1 // pred_check_branch
      %6875 = sbr.rel (0) target = $region61
    $region60: #{neuralnet_cnn_forward.1} parent=1 // pred_region
      _
    $region61: #{neuralnet_cnn_forward.1} parent=1 // pred_fallthru
      _
    // Predicated region
    $region62: #{neuralnet_cnn_forward.1} parent=1 // pred_check
      _
    $region63: #{neuralnet_cnn_forward.1} parent=1 // pred_check_branch
      %6877 = sbr.rel (0) target = $region65
    $region64: #{neuralnet_cnn_forward.1} parent=1 // pred_region
      %6879 = dma.done [#allocation5], 32
    $region65: #{neuralnet_cnn_forward.1} parent=1 // pred_fallthru
      _
    // Predicated region
    $region66: #{neuralnet_cnn_forward.1} parent=1 // pred_check
      _
    $region67: #{neuralnet_cnn_forward.1} parent=1 // pred_check_branch
      %6881 = sbr.rel (0) target = $region69
    $region68: #{neuralnet_cnn_forward.1} parent=1 // pred_region
      _
    $region69: #{neuralnet_cnn_forward.1} parent=1 // pred_fallthru
      _
    %6882 = vsyncpa [#allocation5], 1

</llo_original>
